<compile_context>
chip_gen: v7x
topology: tpu7x:2x2x1
jax: 0.10.0
libtpu: 0.0.40
codegen_flags: <defaults>
</compile_context>

<pallas_src>
import numpy as np
import jax
import jax.numpy as jnp
from jax.experimental import pallas as pl
from jax.experimental.pallas import tpu as pltpu


def make_skconv_kernel(H, W, F, M, pad):
    HW = H * W

    def kernel(xpad_ref, convw_ref, convb_ref, fcw_ref, fcb_ref,
               fcsw_ref, fcsb_ref, o_ref, feats_ref, s_ref):
        m = pl.program_id(1)

        @pl.when(m == 0)
        def _init():
            s_ref[...] = jnp.zeros_like(s_ref)

        # ---- branch m: grouped dilated 3x3 conv as ONE im2col matmul ----
        # (static per-branch slices selected via pl.when on the grid index)
        for mm in range(M):
            @pl.when(m == mm)
            def _branch(mm=mm):
                dil = mm + 1
                cols = []
                for ki in range(3):
                    for kj in range(3):
                        r0 = pad + (ki - 1) * dil
                        c0 = pad + (kj - 1) * dil
                        patch = xpad_ref[0, r0:r0 + H, c0:c0 + W, :]   # bf16
                        cols.append(patch.reshape(HW, F))
                slab = jnp.concatenate(cols, axis=-1)                  # (HW, 9F)
                acc = jnp.dot(slab, convw_ref[0],
                              preferred_element_type=jnp.float32)      # (HW, F)
                # BN scale already folded into the weights -> bias + ReLU only
                feat = jnp.maximum(acc + convb_ref[mm:mm + 1, :], 0.0)
                # incremental global average pool (GAP(U) == sum_m GAP(feat_m))
                s_ref[...] += jnp.sum(feat, axis=0, keepdims=True)
                feats_ref[mm, :, :] = feat.astype(feats_ref.dtype)

        # ---- epilogue: fc -> per-branch 1x1 -> softmax -> weighted sum ----
        @pl.when(m == M - 1)
        def _epilogue():
            s = s_ref[...] * (1.0 / HW)                                # (1, F)
            z = jnp.dot(s, fcw_ref[...],
                        preferred_element_type=jnp.float32) + fcb_ref[...]
            z = jnp.maximum(z, 0.0)                                    # (1, d)
            logits = jnp.concatenate(
                [jnp.dot(z, fcsw_ref[mm],
                         preferred_element_type=jnp.float32)
                 + fcsb_ref[mm:mm + 1, :] for mm in range(M)],
                axis=0)                                                # (M, F)
            amax = jnp.max(logits, axis=0, keepdims=True)
            e = jnp.exp(logits - amax)
            attn = e * pl.reciprocal(jnp.sum(e, axis=0, keepdims=True),
                                     approx=True)                      # (M, F)
            out = feats_ref[0, :, :].astype(jnp.float32) * attn[0:1, :]
            for mm in range(1, M):
                out = out + (feats_ref[mm, :, :].astype(jnp.float32)
                             * attn[mm:mm + 1, :])
            o_ref[...] = out.reshape(1, H, W, F)

    return kernel


def skconv_forward(x_nchw, params, M):
    B, F, H, W = x_nchw.shape
    d = params['fc_w_k'].shape[1]
    pad = M                                   # max dilation among branches
    Hp, Wp = H + 2 * pad, W + 2 * pad
    HW = H * W

    # NCHW -> NHWC, zero-pad spatial, cast to bf16 (halves HBM->VMEM traffic).
    x_pad = jnp.pad(jnp.transpose(x_nchw, (0, 2, 3, 1)),
                    ((0, 0), (pad, pad), (pad, pad), (0, 0))).astype(jnp.bfloat16)

    def full_spec(a):
        nd = a.ndim
        return pl.BlockSpec(a.shape, lambda b, m, _nd=nd: (0,) * _nd)

    kernel = make_skconv_kernel(H, W, F, M, pad)

    flops = 2 * B * M * HW * (9 * F) * F + 2 * B * (F * d + M * d * F)
    bytes_accessed = (int(x_pad.size) * 2 + int(params['conv_w_k'].size) * 2
                      + B * H * W * F * 4
                      + sum(int(params[k].size) * 4 for k in
                            ('conv_b_k', 'fc_w_k', 'fc_b_k', 'fcs_w_k', 'fcs_b_k')))
    cost = pl.CostEstimate(flops=flops, transcendentals=B * M * F,
                           bytes_accessed=bytes_accessed)

    # NOTE: output channel width F=64 is below the 128-lane vreg width, so
    # output stores are partially masked; padding channels to 128 at the
    # wrapper would make them lane-dense (matters most on v5e).
    out_nhwc = pl.pallas_call(
        kernel,
        out_shape=jax.ShapeDtypeStruct((B, H, W, F), jnp.float32),
        grid_spec=pltpu.PrefetchScalarGridSpec(
            num_scalar_prefetch=0,
            grid=(B, M),
            in_specs=[
                # padded image: constant across m -> no re-DMA within a batch
                pl.BlockSpec((1, Hp, Wp, F), lambda b, m: (b, 0, 0, 0)),
                # per-branch im2col weights (BN scale folded, bf16)
                pl.BlockSpec((1, 9 * F, F), lambda b, m: (m, 0, 0)),
                full_spec(params['conv_b_k']),
                full_spec(params['fc_w_k']),
                full_spec(params['fc_b_k']),
                full_spec(params['fcs_w_k']),
                full_spec(params['fcs_b_k']),
            ],
            out_specs=pl.BlockSpec((1, H, W, F), lambda b, m: (b, 0, 0, 0)),
            scratch_shapes=[pltpu.VMEM((M, HW, F), jnp.bfloat16),   # branch feats
                            pltpu.VMEM((1, F), jnp.float32)]),      # GAP accum
        compiler_params=pltpu.CompilerParams(
            dimension_semantics=("parallel", "arbitrary"),
            vmem_limit_bytes=32 * 1024 * 1024),
        cost_estimate=cost,
    )(x_pad, params['conv_w_k'], params['conv_b_k'],
      params['fc_w_k'], params['fc_b_k'],
      params['fcs_w_k'], params['fcs_b_k'])
    return jnp.transpose(out_nhwc, (0, 3, 1, 2))   # back to NCHW


def skconv_reference(x, p, M, G):
    """Pure-JAX reference matching the PyTorch forward (BN in inference)."""
    B, F, H, W = x.shape
    feats = []
    for m in range(M):
        dil = m + 1
        y = jax.lax.conv_general_dilated(
            x, p['conv_w'][m], window_strides=(1, 1),
            padding=((dil, dil), (dil, dil)), rhs_dilation=(dil, dil),
            feature_group_count=G,
            dimension_numbers=('NCHW', 'OIHW', 'NCHW'))
        y = y * p['conv_scale'][m].reshape(1, F, 1, 1) \
              + p['conv_bias'][m].reshape(1, F, 1, 1)
        feats.append(jnp.maximum(y, 0.0))
    feats = jnp.stack(feats, axis=1)                 # (B, M, F, H, W)
    U = feats.sum(axis=1)
    S = U.mean(axis=(2, 3))                          # (B, F)
    Z = jnp.maximum(S @ p['fc_w_t'] * p['fc_scale'] + p['fc_bias'], 0.0)
    logits = jnp.stack([Z @ p['fcs_w_t'][m] + p['fcs_b'][m]
                        for m in range(M)], axis=1)  # (B, M, F)
    attn = jax.nn.softmax(logits, axis=1)
    return (feats * attn[:, :, :, None, None]).sum(axis=1)


def build_params(key, F, M, G, r, L):
    Cg = F // G
    d = max(F // r, L)
    eps = 1e-5
    ks = jax.random.split(key, 13)

    conv_w = jax.random.normal(ks[0], (M, F, Cg, 3, 3), jnp.float32) * 0.2
    conv_gamma = 1.0 + 0.1 * jax.random.normal(ks[1], (M, F), jnp.float32)
    conv_beta = 0.1 * jax.random.normal(ks[2], (M, F), jnp.float32)
    conv_mean = 0.1 * jax.random.normal(ks[3], (M, F), jnp.float32)
    conv_var = 1.0 + 0.1 * jnp.abs(jax.random.normal(ks[4], (M, F), jnp.float32))
    conv_scale = conv_gamma / jnp.sqrt(conv_var + eps)
    conv_bias = conv_beta - conv_mean * conv_scale

    fc_w = jax.random.normal(ks[5], (d, F), jnp.float32) * 0.2
    fc_gamma = 1.0 + 0.1 * jax.random.normal(ks[6], (d,), jnp.float32)
    fc_beta = 0.1 * jax.random.normal(ks[7], (d,), jnp.float32)
    fc_mean = 0.1 * jax.random.normal(ks[8], (d,), jnp.float32)
    fc_var = 1.0 + 0.1 * jnp.abs(jax.random.normal(ks[9], (d,), jnp.float32))
    fc_s = fc_gamma / jnp.sqrt(fc_var + eps)
    fc_scale = fc_s.reshape(1, d)
    fc_bias = (fc_beta - fc_mean * fc_s).reshape(1, d)

    fcs_w = jax.random.normal(ks[10], (M, F, d), jnp.float32) * 0.2
    fcs_b = 0.1 * jax.random.normal(ks[11], (M, F), jnp.float32)

    fc_w_t = jnp.transpose(fc_w)                     # (F, d)
    fcs_w_t = jnp.transpose(fcs_w, (0, 2, 1))        # (M, d, F)

    # ---- kernel-side weights ------------------------------------------------
    # Grouped 3x3 weights -> per-tap block-diagonal dense layout with rows
    # ordered (tap, in_channel), folded BN scale baked into output columns,
    # stored bf16 for the MXU.
    w_np = np.asarray(conv_w)                        # (M, F, Cg, 3, 3)
    dense = np.zeros((M, 9, F, F), np.float32)
    for m in range(M):
        for o in range(F):
            g = o // Cg
            dense[m, :, g * Cg:(g + 1) * Cg, o] = w_np[m, o].reshape(Cg, 9).T
    dense = dense * np.asarray(conv_scale)[:, None, None, :]
    conv_w_k = jnp.asarray(dense.reshape(M, 9 * F, F), jnp.bfloat16)

    params = dict(
        # reference-side (unfolded, f32)
        conv_w=conv_w, conv_scale=conv_scale, conv_bias=conv_bias,
        fc_w_t=fc_w_t, fc_scale=fc_scale, fc_bias=fc_bias,
        fcs_w_t=fcs_w_t, fcs_b=fcs_b,
        # kernel-side (BN scales folded; conv weights bf16 im2col layout)
        conv_w_k=conv_w_k,                           # (M, 9F, F) bf16
        conv_b_k=conv_bias,                          # (M, F) f32
        fc_w_k=fc_w_t * fc_scale,                    # (F, d) f32 (scale folded)
        fc_b_k=fc_bias,                              # (1, d) f32
        fcs_w_k=fcs_w_t,                             # (M, d, F) f32
        fcs_b_k=fcs_b,                               # (M, F) f32
    )
    return params, ks[12]


if __name__ == "__main__":
    # Small but valid SKConv config: features divisible by G, d = max(F/r, L).
    B, F, H, W = 2, 64, 16, 16
    M, G, r, L = 2, 32, 16, 32

    params, xkey = build_params(jax.random.PRNGKey(0), F, M, G, r, L)
    x = jax.random.normal(xkey, (B, F, H, W), jnp.float32)

    out = skconv_forward(x, params, M)
    out = jax.block_until_ready(out)

    ref = skconv_reference(x, params, M, G)
    # bf16 MXU operands (inputs + conv weights) -> looser tolerance than f32.
    np.testing.assert_allclose(np.asarray(out), np.asarray(ref),
                               rtol=3e-2, atol=3e-2)
    print("KERNEL_OK")
</pallas_src>

<mosaic_0001>
module attributes {stable_mosaic.version = 11 : i64} {
  func.func @kernel(%arg0: i32, %arg1: i32, %arg2: memref<1x20x20x64xbf16, #tpu.memory_space<vmem>>, %arg3: memref<1x576x64xbf16, #tpu.memory_space<vmem>>, %arg4: memref<2x64xf32, #tpu.memory_space<vmem>>, %arg5: memref<64x32xf32, #tpu.memory_space<vmem>>, %arg6: memref<1x32xf32, #tpu.memory_space<vmem>>, %arg7: memref<2x32x64xf32, #tpu.memory_space<vmem>>, %arg8: memref<2x64xf32, #tpu.memory_space<vmem>>, %arg9: memref<1x16x16x64xf32, #tpu.memory_space<vmem>>, %arg10: memref<2x256x64xbf16, #tpu.memory_space<vmem>>, %arg11: memref<1x64xf32, #tpu.memory_space<vmem>>) attributes {dimension_semantics = [#tpu.dimension_semantics<parallel>, #tpu.dimension_semantics<arbitrary>], iteration_bounds = array<i64: 2, 2>, scalar_prefetch = 0 : i64, scratch_operands = 2 : i64, tpu.core_type = #tpu.core_type<tc>, window_params = [{transform_indices = @transform_0, window_bounds = array<i64: 1, 20, 20, 64>}, {transform_indices = @transform_1, window_bounds = array<i64: 1, 576, 64>}, {pipeline_mode = #tpu.pipeline_mode<synchronous>, transform_indices = @transform_2, window_bounds = array<i64: 2, 64>}, {pipeline_mode = #tpu.pipeline_mode<synchronous>, transform_indices = @transform_3, window_bounds = array<i64: 64, 32>}, {pipeline_mode = #tpu.pipeline_mode<synchronous>, transform_indices = @transform_4, window_bounds = array<i64: 1, 32>}, {pipeline_mode = #tpu.pipeline_mode<synchronous>, transform_indices = @transform_5, window_bounds = array<i64: 2, 32, 64>}, {pipeline_mode = #tpu.pipeline_mode<synchronous>, transform_indices = @transform_6, window_bounds = array<i64: 2, 64>}, {transform_indices = @transform_7, window_bounds = array<i64: 1, 16, 16, 64>}]} {
    %c0_i32 = arith.constant 0 : i32
    %0 = arith.cmpi eq, %arg1, %c0_i32 : i32
    %1 = arith.extui %0 : i1 to i32
    %c0_i32_0 = arith.constant 0 : i32
    %2 = arith.cmpi ne, %1, %c0_i32_0 : i32
    scf.if %2 {
      %cst = arith.constant 0.000000e+00 : f32
      %12 = vector.broadcast %cst : f32 to vector<1x64xf32>
      %c0 = arith.constant 0 : index
      %c0_6 = arith.constant 0 : index
      %13 = vector.load %arg11[%c0, %c0_6] : memref<1x64xf32, #tpu.memory_space<vmem>>, vector<1x64xf32>
      tpu.vector_store %arg11[%c0, %c0_6], %12 {strides = array<i32>} : memref<1x64xf32, #tpu.memory_space<vmem>>, vector<1x64xf32>,
    } else {
    }
    %c0_i32_1 = arith.constant 0 : i32
    %3 = arith.cmpi eq, %arg1, %c0_i32_1 : i32
    %4 = arith.extui %3 : i1 to i32
    %c0_i32_2 = arith.constant 0 : i32
    %5 = arith.cmpi ne, %4, %c0_i32_2 : i32
    scf.if %5 {
      %c0 = arith.constant 0 : index
      %c1 = arith.constant 1 : index
      %c1_6 = arith.constant 1 : index
      %c0_7 = arith.constant 0 : index
      %12 = vector.load %arg2[%c0, %c1, %c1_6, %c0_7] : memref<1x20x20x64xbf16, #tpu.memory_space<vmem>>, vector<1x16x16x64xbf16>
      %13 = vector.shape_cast %12 : vector<1x16x16x64xbf16> to vector<16x16x64xbf16>
      %14 = vector.shape_cast %13 : vector<16x16x64xbf16> to vector<256x64xbf16>
      %c0_8 = arith.constant 0 : index
      %c1_9 = arith.constant 1 : index
      %c2 = arith.constant 2 : index
      %c0_10 = arith.constant 0 : index
      %15 = vector.load %arg2[%c0_8, %c1_9, %c2, %c0_10] : memref<1x20x20x64xbf16, #tpu.memory_space<vmem>>, vector<1x16x16x64xbf16>
      %16 = vector.shape_cast %15 : vector<1x16x16x64xbf16> to vector<16x16x64xbf16>
      %17 = vector.shape_cast %16 : vector<16x16x64xbf16> to vector<256x64xbf16>
      %c0_11 = arith.constant 0 : index
      %c1_12 = arith.constant 1 : index
      %c3 = arith.constant 3 : index
      %c0_13 = arith.constant 0 : index
      %18 = vector.load %arg2[%c0_11, %c1_12, %c3, %c0_13] : memref<1x20x20x64xbf16, #tpu.memory_space<vmem>>, vector<1x16x16x64xbf16>
      %19 = vector.shape_cast %18 : vector<1x16x16x64xbf16> to vector<16x16x64xbf16>
      %20 = vector.shape_cast %19 : vector<16x16x64xbf16> to vector<256x64xbf16>
      %c0_14 = arith.constant 0 : index
      %c2_15 = arith.constant 2 : index
      %c1_16 = arith.constant 1 : index
      %c0_17 = arith.constant 0 : index
      %21 = vector.load %arg2[%c0_14, %c2_15, %c1_16, %c0_17] : memref<1x20x20x64xbf16, #tpu.memory_space<vmem>>, vector<1x16x16x64xbf16>
      %22 = vector.shape_cast %21 : vector<1x16x16x64xbf16> to vector<16x16x64xbf16>
      %23 = vector.shape_cast %22 : vector<16x16x64xbf16> to vector<256x64xbf16>
      %c0_18 = arith.constant 0 : index
      %c2_19 = arith.constant 2 : index
      %c2_20 = arith.constant 2 : index
      %c0_21 = arith.constant 0 : index
      %24 = vector.load %arg2[%c0_18, %c2_19, %c2_20, %c0_21] : memref<1x20x20x64xbf16, #tpu.memory_space<vmem>>, vector<1x16x16x64xbf16>
      %25 = vector.shape_cast %24 : vector<1x16x16x64xbf16> to vector<16x16x64xbf16>
      %26 = vector.shape_cast %25 : vector<16x16x64xbf16> to vector<256x64xbf16>
      %c0_22 = arith.constant 0 : index
      %c2_23 = arith.constant 2 : index
      %c3_24 = arith.constant 3 : index
      %c0_25 = arith.constant 0 : index
      %27 = vector.load %arg2[%c0_22, %c2_23, %c3_24, %c0_25] : memref<1x20x20x64xbf16, #tpu.memory_space<vmem>>, vector<1x16x16x64xbf16>
      %28 = vector.shape_cast %27 : vector<1x16x16x64xbf16> to vector<16x16x64xbf16>
      %29 = vector.shape_cast %28 : vector<16x16x64xbf16> to vector<256x64xbf16>
      %c0_26 = arith.constant 0 : index
      %c3_27 = arith.constant 3 : index
      %c1_28 = arith.constant 1 : index
      %c0_29 = arith.constant 0 : index
      %30 = vector.load %arg2[%c0_26, %c3_27, %c1_28, %c0_29] : memref<1x20x20x64xbf16, #tpu.memory_space<vmem>>, vector<1x16x16x64xbf16>
      %31 = vector.shape_cast %30 : vector<1x16x16x64xbf16> to vector<16x16x64xbf16>
      %32 = vector.shape_cast %31 : vector<16x16x64xbf16> to vector<256x64xbf16>
      %c0_30 = arith.constant 0 : index
      %c3_31 = arith.constant 3 : index
      %c2_32 = arith.constant 2 : index
      %c0_33 = arith.constant 0 : index
      %33 = vector.load %arg2[%c0_30, %c3_31, %c2_32, %c0_33] : memref<1x20x20x64xbf16, #tpu.memory_space<vmem>>, vector<1x16x16x64xbf16>
      %34 = vector.shape_cast %33 : vector<1x16x16x64xbf16> to vector<16x16x64xbf16>
      %35 = vector.shape_cast %34 : vector<16x16x64xbf16> to vector<256x64xbf16>
      %c0_34 = arith.constant 0 : index
      %c3_35 = arith.constant 3 : index
      %c3_36 = arith.constant 3 : index
      %c0_37 = arith.constant 0 : index
      %36 = vector.load %arg2[%c0_34, %c3_35, %c3_36, %c0_37] : memref<1x20x20x64xbf16, #tpu.memory_space<vmem>>, vector<1x16x16x64xbf16>
      %37 = vector.shape_cast %36 : vector<1x16x16x64xbf16> to vector<16x16x64xbf16>
      %38 = vector.shape_cast %37 : vector<16x16x64xbf16> to vector<256x64xbf16>
      %39 = tpu.concatenate %14, %17, %20, %23, %26, %29, %32, %35, %38 in 1 : vector<256x64xbf16>, vector<256x64xbf16>, vector<256x64xbf16>, vector<256x64xbf16>, vector<256x64xbf16>, vector<256x64xbf16>, vector<256x64xbf16>, vector<256x64xbf16>, vector<256x64xbf16> -> vector<256x576xbf16>
      %c0_38 = arith.constant 0 : index
      %c0_39 = arith.constant 0 : index
      %c0_40 = arith.constant 0 : index
      %40 = vector.load %arg3[%c0_38, %c0_39, %c0_40] : memref<1x576x64xbf16, #tpu.memory_space<vmem>>, vector<1x576x64xbf16>
      %41 = vector.shape_cast %40 : vector<1x576x64xbf16> to vector<576x64xbf16>
      %cst = arith.constant dense<0.000000e+00> : vector<256x64xf32>
      %42 = tpu.matmul %39, %41, %cst {dimension_numbers = #tpu.dot_dimension_numbers<[1], [0], [0], [1], [0, 0, 1, 1], [], []>} : vector<256x576xbf16>, vector<576x64xbf16>, vector<256x64xf32> -> vector<256x64xf32>
      %c0_41 = arith.constant 0 : index
      %c0_42 = arith.constant 0 : index
      %43 = vector.load %arg4[%c0_41, %c0_42] : memref<2x64xf32, #tpu.memory_space<vmem>>, vector<1x64xf32>
      %44 = vector.broadcast %43 : vector<1x64xf32> to vector<256x64xf32>
      %45 = arith.addf %42, %44 : vector<256x64xf32>
      %cst_43 = arith.constant 0.000000e+00 : f32
      %46 = vector.broadcast %cst_43 : f32 to vector<256x64xf32>
      %47 = arith.maximumf %45, %46 : vector<256x64xf32>
      %c0_44 = arith.constant 0 : index
      %c0_45 = arith.constant 0 : index
      %48 = vector.load %arg11[%c0_44, %c0_45] : memref<1x64xf32, #tpu.memory_space<vmem>>, vector<1x64xf32>
      %cst_46 = arith.constant dense<0.000000e+00> : vector<64xf32>
      %49 = vector.multi_reduction <add>, %47, %cst_46 [0] : vector<256x64xf32> to vector<64xf32>
      %50 = vector.shape_cast %49 : vector<64xf32> to vector<1x64xf32>
      %51 = arith.addf %48, %50 : vector<1x64xf32>
      %c0_47 = arith.constant 0 : index
      %c0_48 = arith.constant 0 : index
      %52 = vector.load %arg11[%c0_47, %c0_48] : memref<1x64xf32, #tpu.memory_space<vmem>>, vector<1x64xf32>
      tpu.vector_store %arg11[%c0_47, %c0_48], %51 {strides = array<i32>} : memref<1x64xf32, #tpu.memory_space<vmem>>, vector<1x64xf32>,
      %53 = arith.truncf %47 : vector<256x64xf32> to vector<256x64xbf16>
      %c0_49 = arith.constant 0 : index
      %c0_50 = arith.constant 0 : index
      %c0_51 = arith.constant 0 : index
      %54 = vector.load %arg10[%c0_49, %c0_50, %c0_51] : memref<2x256x64xbf16, #tpu.memory_space<vmem>>, vector<1x256x64xbf16>
      %55 = vector.shape_cast %54 : vector<1x256x64xbf16> to vector<256x64xbf16>
      %56 = vector.shape_cast %53 : vector<256x64xbf16> to vector<1x256x64xbf16>
      tpu.vector_store %arg10[%c0_49, %c0_50, %c0_51], %56 {strides = array<i32>} : memref<2x256x64xbf16, #tpu.memory_space<vmem>>, vector<1x256x64xbf16>,
    } else {
    }
    %c1_i32 = arith.constant 1 : i32
    %6 = arith.cmpi eq, %arg1, %c1_i32 : i32
    %7 = arith.extui %6 : i1 to i32
    %c0_i32_3 = arith.constant 0 : i32
    %8 = arith.cmpi ne, %7, %c0_i32_3 : i32
    scf.if %8 {
      %c0 = arith.constant 0 : index
      %c0_6 = arith.constant 0 : index
      %c0_7 = arith.constant 0 : index
      %c0_8 = arith.constant 0 : index
      %12 = vector.load %arg2[%c0, %c0_6, %c0_7, %c0_8] : memref<1x20x20x64xbf16, #tpu.memory_space<vmem>>, vector<1x16x16x64xbf16>
      %13 = vector.shape_cast %12 : vector<1x16x16x64xbf16> to vector<16x16x64xbf16>
      %14 = vector.shape_cast %13 : vector<16x16x64xbf16> to vector<256x64xbf16>
      %c0_9 = arith.constant 0 : index
      %c0_10 = arith.constant 0 : index
      %c2 = arith.constant 2 : index
      %c0_11 = arith.constant 0 : index
      %15 = vector.load %arg2[%c0_9, %c0_10, %c2, %c0_11] : memref<1x20x20x64xbf16, #tpu.memory_space<vmem>>, vector<1x16x16x64xbf16>
      %16 = vector.shape_cast %15 : vector<1x16x16x64xbf16> to vector<16x16x64xbf16>
      %17 = vector.shape_cast %16 : vector<16x16x64xbf16> to vector<256x64xbf16>
      %c0_12 = arith.constant 0 : index
      %c0_13 = arith.constant 0 : index
      %c4 = arith.constant 4 : index
      %c0_14 = arith.constant 0 : index
      %18 = vector.load %arg2[%c0_12, %c0_13, %c4, %c0_14] : memref<1x20x20x64xbf16, #tpu.memory_space<vmem>>, vector<1x16x16x64xbf16>
      %19 = vector.shape_cast %18 : vector<1x16x16x64xbf16> to vector<16x16x64xbf16>
      %20 = vector.shape_cast %19 : vector<16x16x64xbf16> to vector<256x64xbf16>
      %c0_15 = arith.constant 0 : index
      %c2_16 = arith.constant 2 : index
      %c0_17 = arith.constant 0 : index
      %c0_18 = arith.constant 0 : index
      %21 = vector.load %arg2[%c0_15, %c2_16, %c0_17, %c0_18] : memref<1x20x20x64xbf16, #tpu.memory_space<vmem>>, vector<1x16x16x64xbf16>
      %22 = vector.shape_cast %21 : vector<1x16x16x64xbf16> to vector<16x16x64xbf16>
      %23 = vector.shape_cast %22 : vector<16x16x64xbf16> to vector<256x64xbf16>
      %c0_19 = arith.constant 0 : index
      %c2_20 = arith.constant 2 : index
      %c2_21 = arith.constant 2 : index
      %c0_22 = arith.constant 0 : index
      %24 = vector.load %arg2[%c0_19, %c2_20, %c2_21, %c0_22] : memref<1x20x20x64xbf16, #tpu.memory_space<vmem>>, vector<1x16x16x64xbf16>
      %25 = vector.shape_cast %24 : vector<1x16x16x64xbf16> to vector<16x16x64xbf16>
      %26 = vector.shape_cast %25 : vector<16x16x64xbf16> to vector<256x64xbf16>
      %c0_23 = arith.constant 0 : index
      %c2_24 = arith.constant 2 : index
      %c4_25 = arith.constant 4 : index
      %c0_26 = arith.constant 0 : index
      %27 = vector.load %arg2[%c0_23, %c2_24, %c4_25, %c0_26] : memref<1x20x20x64xbf16, #tpu.memory_space<vmem>>, vector<1x16x16x64xbf16>
      %28 = vector.shape_cast %27 : vector<1x16x16x64xbf16> to vector<16x16x64xbf16>
      %29 = vector.shape_cast %28 : vector<16x16x64xbf16> to vector<256x64xbf16>
      %c0_27 = arith.constant 0 : index
      %c4_28 = arith.constant 4 : index
      %c0_29 = arith.constant 0 : index
      %c0_30 = arith.constant 0 : index
      %30 = vector.load %arg2[%c0_27, %c4_28, %c0_29, %c0_30] : memref<1x20x20x64xbf16, #tpu.memory_space<vmem>>, vector<1x16x16x64xbf16>
      %31 = vector.shape_cast %30 : vector<1x16x16x64xbf16> to vector<16x16x64xbf16>
      %32 = vector.shape_cast %31 : vector<16x16x64xbf16> to vector<256x64xbf16>
      %c0_31 = arith.constant 0 : index
      %c4_32 = arith.constant 4 : index
      %c2_33 = arith.constant 2 : index
      %c0_34 = arith.constant 0 : index
      %33 = vector.load %arg2[%c0_31, %c4_32, %c2_33, %c0_34] : memref<1x20x20x64xbf16, #tpu.memory_space<vmem>>, vector<1x16x16x64xbf16>
      %34 = vector.shape_cast %33 : vector<1x16x16x64xbf16> to vector<16x16x64xbf16>
      %35 = vector.shape_cast %34 : vector<16x16x64xbf16> to vector<256x64xbf16>
      %c0_35 = arith.constant 0 : index
      %c4_36 = arith.constant 4 : index
      %c4_37 = arith.constant 4 : index
      %c0_38 = arith.constant 0 : index
      %36 = vector.load %arg2[%c0_35, %c4_36, %c4_37, %c0_38] : memref<1x20x20x64xbf16, #tpu.memory_space<vmem>>, vector<1x16x16x64xbf16>
      %37 = vector.shape_cast %36 : vector<1x16x16x64xbf16> to vector<16x16x64xbf16>
      %38 = vector.shape_cast %37 : vector<16x16x64xbf16> to vector<256x64xbf16>
      %39 = tpu.concatenate %14, %17, %20, %23, %26, %29, %32, %35, %38 in 1 : vector<256x64xbf16>, vector<256x64xbf16>, vector<256x64xbf16>, vector<256x64xbf16>, vector<256x64xbf16>, vector<256x64xbf16>, vector<256x64xbf16>, vector<256x64xbf16>, vector<256x64xbf16> -> vector<256x576xbf16>
      %c0_39 = arith.constant 0 : index
      %c0_40 = arith.constant 0 : index
      %c0_41 = arith.constant 0 : index
      %40 = vector.load %arg3[%c0_39, %c0_40, %c0_41] : memref<1x576x64xbf16, #tpu.memory_space<vmem>>, vector<1x576x64xbf16>
      %41 = vector.shape_cast %40 : vector<1x576x64xbf16> to vector<576x64xbf16>
      %cst = arith.constant dense<0.000000e+00> : vector<256x64xf32>
      %42 = tpu.matmul %39, %41, %cst {dimension_numbers = #tpu.dot_dimension_numbers<[1], [0], [0], [1], [0, 0, 1, 1], [], []>} : vector<256x576xbf16>, vector<576x64xbf16>, vector<256x64xf32> -> vector<256x64xf32>
      %c1 = arith.constant 1 : index
      %c0_42 = arith.constant 0 : index
      %43 = vector.load %arg4[%c1, %c0_42] : memref<2x64xf32, #tpu.memory_space<vmem>>, vector<1x64xf32>
      %44 = vector.broadcast %43 : vector<1x64xf32> to vector<256x64xf32>
      %45 = arith.addf %42, %44 : vector<256x64xf32>
      %cst_43 = arith.constant 0.000000e+00 : f32
      %46 = vector.broadcast %cst_43 : f32 to vector<256x64xf32>
      %47 = arith.maximumf %45, %46 : vector<256x64xf32>
      %c0_44 = arith.constant 0 : index
      %c0_45 = arith.constant 0 : index
      %48 = vector.load %arg11[%c0_44, %c0_45] : memref<1x64xf32, #tpu.memory_space<vmem>>, vector<1x64xf32>
      %cst_46 = arith.constant dense<0.000000e+00> : vector<64xf32>
      %49 = vector.multi_reduction <add>, %47, %cst_46 [0] : vector<256x64xf32> to vector<64xf32>
      %50 = vector.shape_cast %49 : vector<64xf32> to vector<1x64xf32>
      %51 = arith.addf %48, %50 : vector<1x64xf32>
      %c0_47 = arith.constant 0 : index
      %c0_48 = arith.constant 0 : index
      %52 = vector.load %arg11[%c0_47, %c0_48] : memref<1x64xf32, #tpu.memory_space<vmem>>, vector<1x64xf32>
      tpu.vector_store %arg11[%c0_47, %c0_48], %51 {strides = array<i32>} : memref<1x64xf32, #tpu.memory_space<vmem>>, vector<1x64xf32>,
      %53 = arith.truncf %47 : vector<256x64xf32> to vector<256x64xbf16>
      %c1_49 = arith.constant 1 : index
      %c0_50 = arith.constant 0 : index
      %c0_51 = arith.constant 0 : index
      %54 = vector.load %arg10[%c1_49, %c0_50, %c0_51] : memref<2x256x64xbf16, #tpu.memory_space<vmem>>, vector<1x256x64xbf16>
      %55 = vector.shape_cast %54 : vector<1x256x64xbf16> to vector<256x64xbf16>
      %56 = vector.shape_cast %53 : vector<256x64xbf16> to vector<1x256x64xbf16>
      tpu.vector_store %arg10[%c1_49, %c0_50, %c0_51], %56 {strides = array<i32>} : memref<2x256x64xbf16, #tpu.memory_space<vmem>>, vector<1x256x64xbf16>,
    } else {
    }
    %c1_i32_4 = arith.constant 1 : i32
    %9 = arith.cmpi eq, %arg1, %c1_i32_4 : i32
    %10 = arith.extui %9 : i1 to i32
    %c0_i32_5 = arith.constant 0 : i32
    %11 = arith.cmpi ne, %10, %c0_i32_5 : i32
    scf.if %11 {
      %c0 = arith.constant 0 : index
      %c0_6 = arith.constant 0 : index
      %12 = vector.load %arg11[%c0, %c0_6] : memref<1x64xf32, #tpu.memory_space<vmem>>, vector<1x64xf32>
      %cst = arith.constant 3.906250e-03 : f32
      %13 = vector.broadcast %cst : f32 to vector<1x64xf32>
      %14 = arith.mulf %12, %13 : vector<1x64xf32>
      %c0_7 = arith.constant 0 : index
      %c0_8 = arith.constant 0 : index
      %15 = vector.load %arg5[%c0_7, %c0_8] : memref<64x32xf32, #tpu.memory_space<vmem>>, vector<64x32xf32>
      %cst_9 = arith.constant dense<0.000000e+00> : vector<1x32xf32>
      %16 = tpu.matmul %14, %15, %cst_9 {dimension_numbers = #tpu.dot_dimension_numbers<[1], [0], [0], [1], [0, 0, 1, 1], [], []>} : vector<1x64xf32>, vector<64x32xf32>, vector<1x32xf32> -> vector<1x32xf32>
      %c0_10 = arith.constant 0 : index
      %c0_11 = arith.constant 0 : index
      %17 = vector.load %arg6[%c0_10, %c0_11] : memref<1x32xf32, #tpu.memory_space<vmem>>, vector<1x32xf32>
      %18 = arith.addf %16, %17 : vector<1x32xf32>
      %cst_12 = arith.constant 0.000000e+00 : f32
      %19 = vector.broadcast %cst_12 : f32 to vector<1x32xf32>
      %20 = arith.maximumf %18, %19 : vector<1x32xf32>
      %c0_13 = arith.constant 0 : index
      %c0_14 = arith.constant 0 : index
      %c0_15 = arith.constant 0 : index
      %21 = vector.load %arg7[%c0_13, %c0_14, %c0_15] : memref<2x32x64xf32, #tpu.memory_space<vmem>>, vector<1x32x64xf32>
      %22 = vector.shape_cast %21 : vector<1x32x64xf32> to vector<32x64xf32>
      %cst_16 = arith.constant dense<0.000000e+00> : vector<1x64xf32>
      %23 = tpu.matmul %20, %22, %cst_16 {dimension_numbers = #tpu.dot_dimension_numbers<[1], [0], [0], [1], [0, 0, 1, 1], [], []>} : vector<1x32xf32>, vector<32x64xf32>, vector<1x64xf32> -> vector<1x64xf32>
      %c0_17 = arith.constant 0 : index
      %c0_18 = arith.constant 0 : index
      %24 = vector.load %arg8[%c0_17, %c0_18] : memref<2x64xf32, #tpu.memory_space<vmem>>, vector<1x64xf32>
      %25 = arith.addf %23, %24 : vector<1x64xf32>
      %c1 = arith.constant 1 : index
      %c0_19 = arith.constant 0 : index
      %c0_20 = arith.constant 0 : index
      %26 = vector.load %arg7[%c1, %c0_19, %c0_20] : memref<2x32x64xf32, #tpu.memory_space<vmem>>, vector<1x32x64xf32>
      %27 = vector.shape_cast %26 : vector<1x32x64xf32> to vector<32x64xf32>
      %cst_21 = arith.constant dense<0.000000e+00> : vector<1x64xf32>
      %28 = tpu.matmul %20, %27, %cst_21 {dimension_numbers = #tpu.dot_dimension_numbers<[1], [0], [0], [1], [0, 0, 1, 1], [], []>} : vector<1x32xf32>, vector<32x64xf32>, vector<1x64xf32> -> vector<1x64xf32>
      %c1_22 = arith.constant 1 : index
      %c0_23 = arith.constant 0 : index
      %29 = vector.load %arg8[%c1_22, %c0_23] : memref<2x64xf32, #tpu.memory_space<vmem>>, vector<1x64xf32>
      %30 = arith.addf %28, %29 : vector<1x64xf32>
      %31 = tpu.concatenate %25, %30 in 0 : vector<1x64xf32>, vector<1x64xf32> -> vector<2x64xf32>
      %cst_24 = arith.constant dense<0xFF800000> : vector<64xf32>
      %32 = vector.multi_reduction <maximumf>, %31, %cst_24 [0] : vector<2x64xf32> to vector<64xf32>
      %33 = vector.shape_cast %32 : vector<64xf32> to vector<1x64xf32>
      %34 = vector.broadcast %33 : vector<1x64xf32> to vector<2x64xf32>
      %35 = arith.subf %31, %34 : vector<2x64xf32>
      %36 = math.exp %35 : vector<2x64xf32>
      %cst_25 = arith.constant dense<0.000000e+00> : vector<64xf32>
      %37 = vector.multi_reduction <add>, %36, %cst_25 [0] : vector<2x64xf32> to vector<64xf32>
      %38 = vector.shape_cast %37 : vector<64xf32> to vector<1x64xf32>
      %39 = tpu.reciprocal %38 {approx = true} : vector<1x64xf32> -> vector<1x64xf32>
      %40 = vector.broadcast %39 : vector<1x64xf32> to vector<2x64xf32>
      %41 = arith.mulf %36, %40 : vector<2x64xf32>
      %c0_26 = arith.constant 0 : index
      %c0_27 = arith.constant 0 : index
      %c0_28 = arith.constant 0 : index
      %42 = vector.load %arg10[%c0_26, %c0_27, %c0_28] : memref<2x256x64xbf16, #tpu.memory_space<vmem>>, vector<1x256x64xbf16>
      %43 = vector.shape_cast %42 : vector<1x256x64xbf16> to vector<256x64xbf16>
      %44 = arith.extf %43 : vector<256x64xbf16> to vector<256x64xf32>
      %45 = vector.extract_strided_slice %41 {offsets = [0, 0], sizes = [1, 64], strides = [1, 1]} : vector<2x64xf32> to vector<1x64xf32>
      %46 = vector.broadcast %45 : vector<1x64xf32> to vector<256x64xf32>
      %47 = arith.mulf %44, %46 : vector<256x64xf32>
      %c1_29 = arith.constant 1 : index
      %c0_30 = arith.constant 0 : index
      %c0_31 = arith.constant 0 : index
      %48 = vector.load %arg10[%c1_29, %c0_30, %c0_31] : memref<2x256x64xbf16, #tpu.memory_space<vmem>>, vector<1x256x64xbf16>
      %49 = vector.shape_cast %48 : vector<1x256x64xbf16> to vector<256x64xbf16>
      %50 = arith.extf %49 : vector<256x64xbf16> to vector<256x64xf32>
      %51 = vector.extract_strided_slice %41 {offsets = [1, 0], sizes = [1, 64], strides = [1, 1]} : vector<2x64xf32> to vector<1x64xf32>
      %52 = vector.broadcast %51 : vector<1x64xf32> to vector<256x64xf32>
      %53 = arith.mulf %50, %52 : vector<256x64xf32>
      %54 = arith.addf %47, %53 : vector<256x64xf32>
      %55 = vector.shape_cast %54 : vector<256x64xf32> to vector<1x16x16x64xf32>
      %c0_32 = arith.constant 0 : index
      %c0_33 = arith.constant 0 : index
      %c0_34 = arith.constant 0 : index
      %c0_35 = arith.constant 0 : index
      %56 = vector.load %arg9[%c0_32, %c0_33, %c0_34, %c0_35] : memref<1x16x16x64xf32, #tpu.memory_space<vmem>>, vector<1x16x16x64xf32>
      tpu.vector_store %arg9[%c0_32, %c0_33, %c0_34, %c0_35], %55 {strides = array<i32>} : memref<1x16x16x64xf32, #tpu.memory_space<vmem>>, vector<1x16x16x64xf32>,
    } else {
    }
    return
  }
  func.func @transform_0(%arg0: i32, %arg1: i32) -> (i32, i32, i32, i32) {
    %c0_i32 = arith.constant 0 : i32
    %c0_i32_0 = arith.constant 0 : i32
    %c0_i32_1 = arith.constant 0 : i32
    %c0_i32_2 = arith.constant 0 : i32
    return %arg0, %c0_i32, %c0_i32_0, %c0_i32_1 : i32, i32, i32, i32
  }
  func.func @transform_1(%arg0: i32, %arg1: i32) -> (i32, i32, i32) {
    %c0_i32 = arith.constant 0 : i32
    %c0_i32_0 = arith.constant 0 : i32
    %c0_i32_1 = arith.constant 0 : i32
    return %arg1, %c0_i32, %c0_i32_0 : i32, i32, i32
  }
  func.func @transform_2(%arg0: i32, %arg1: i32) -> (i32, i32) {
    %c0_i32 = arith.constant 0 : i32
    %c0_i32_0 = arith.constant 0 : i32
    %c0_i32_1 = arith.constant 0 : i32
    return %c0_i32, %c0_i32_0 : i32, i32
  }
  func.func @transform_3(%arg0: i32, %arg1: i32) -> (i32, i32) {
    %c0_i32 = arith.constant 0 : i32
    %c0_i32_0 = arith.constant 0 : i32
    %c0_i32_1 = arith.constant 0 : i32
    return %c0_i32, %c0_i32_0 : i32, i32
  }
  func.func @transform_4(%arg0: i32, %arg1: i32) -> (i32, i32) {
    %c0_i32 = arith.constant 0 : i32
    %c0_i32_0 = arith.constant 0 : i32
    %c0_i32_1 = arith.constant 0 : i32
    return %c0_i32, %c0_i32_0 : i32, i32
  }
  func.func @transform_5(%arg0: i32, %arg1: i32) -> (i32, i32, i32) {
    %c0_i32 = arith.constant 0 : i32
    %c0_i32_0 = arith.constant 0 : i32
    %c0_i32_1 = arith.constant 0 : i32
    %c0_i32_2 = arith.constant 0 : i32
    return %c0_i32, %c0_i32_0, %c0_i32_1 : i32, i32, i32
  }
  func.func @transform_6(%arg0: i32, %arg1: i32) -> (i32, i32) {
    %c0_i32 = arith.constant 0 : i32
    %c0_i32_0 = arith.constant 0 : i32
    %c0_i32_1 = arith.constant 0 : i32
    return %c0_i32, %c0_i32_0 : i32, i32
  }
  func.func @transform_7(%arg0: i32, %arg1: i32) -> (i32, i32, i32, i32) {
    %c0_i32 = arith.constant 0 : i32
    %c0_i32_0 = arith.constant 0 : i32
    %c0_i32_1 = arith.constant 0 : i32
    %c0_i32_2 = arith.constant 0 : i32
    return %arg0, %c0_i32, %c0_i32_0, %c0_i32_1 : i32, i32, i32, i32
  }
}

</mosaic_0001>

<llo_original>
// kernel: tpu_custom_call.1
$region0: #{tpu_custom_call.1}
  #allocation0 [shape = 'u32[]', space=smem, size = 0x4, offset = 0x4, fixed_abs, tag = 'smem constant byte address 0x4 - core index']
  #allocation1 [shape = 'u32[144,128]{1,0:T(1,128)}', space=vmem, size = 0x12000, scoped, tag = 'internal scratch']
  #allocation2 [shape = 'bf16[2,256,64]{2,1,0:T(16,128)(2,1)}', space=vmem, size = 0x20000, scoped, tag = 'scratch operand']
  #allocation3 [shape = 'f32[1,64]{1,0:T(1,128)}', space=vmem, size = 0x200, scoped, tag = 'scratch operand']
  %s0 = inlined_call_operand.vmem [shape: bf16[2,20,20,64], index: 0, kind: input, shape index: {}]
  %s1 = inlined_call_operand.vmem [shape: bf16[2,576,64], index: 1, kind: input, shape index: {}]
  %s2 = inlined_call_operand.vmem [shape: f32[2,64], index: 2, kind: input, shape index: {}]
  %s3 = inlined_call_operand.vmem [shape: f32[64,32], index: 3, kind: input, shape index: {}]
  %s4 = inlined_call_operand.vmem [shape: f32[1,32], index: 4, kind: input, shape index: {}]
  %s5 = inlined_call_operand.vmem [shape: f32[2,32,64], index: 5, kind: input, shape index: {}]
  %s6 = inlined_call_operand.vmem [shape: f32[2,64], index: 6, kind: input, shape index: {}]
  %s7 = inlined_call_operand.hbm [shape: f32[2,16,16,64], index: 7, kind: output, shape index: {}]
  %s8 = sld [smem:[#allocation0]]
  $region69: #{tpu_custom_call.1} parent=0
    _
  %s10 = ssub.s32 1, %s8
  %s11 = scalar_select 0, %s10, %s8
  $region1: #{tpu_custom_call.1} parent=0
    #allocation4 [shape = 'u8[262144]{0}', space=vmem, size = 0x40000, scoped, tag = 'output window, operand 0']
    #allocation5 [shape = 's32[2]{0}', space=sflag, size = 0x8, scoped, tag = 'scoped memory for tpu_custom_call.1']
    %12 = vsyncpa [#allocation5], 0
    %s13 = scalar_lea.sflag [#allocation5], 1
    %14 = vsyncpa %s13, 0
    loop: start=0, step=1, limit=6
    $region2: #{tpu_custom_call.1} parent=1 // loop_pre_header
      _
    $region3: #{tpu_custom_call.1} parent=1 // loop_header
      %s16 = sphi 0, %s20
      %p17 = scmp.ge.s32.totalorder %s16, 6
      %s23 = sphi 0, %s35
      %s24 = sphi 0, %s31
      %s25 = sphi 0, %s23
      %s26 = sphi 0, %s24
      %s27 = sphi 0, %s25
      %s28 = sphi 0, %s26
      %s38 = sphi 0, %s40
      %s41 = sphi 0, %s38
      %s42 = sphi 0, %s41
      %s58 = sphi 0, %s42
      %s64 = sphi 0, %s66
      %s67 = sphi 0, %s64
      %s68 = sphi 0, %s67
      %s84 = sphi 0, %s68
      %s88 = sphi 0, %s88
      %s90 = sphi 0, %s88
      %s91 = sphi 0, %s90
      %s105 = sphi 0, %s91
      %s109 = sphi 0, %s109
      %s111 = sphi 0, %s109
      %s112 = sphi 0, %s111
      %s126 = sphi 0, %s112
      %s130 = sphi 0, %s130
      %s132 = sphi 0, %s130
      %s133 = sphi 0, %s132
      %s147 = sphi 0, %s133
      %s151 = sphi 0, %s151
      %s153 = sphi 0, %s151
      %s154 = sphi 0, %s153
      %s168 = sphi 0, %s154
      %s172 = sphi 0, %s172
      %s174 = sphi 0, %s172
      %s175 = sphi 0, %s174
      %s189 = sphi 0, %s175
      %s195 = sphi 0, %s197
      %s198 = sphi 0, %s195
      %s199 = sphi 0, %s198
      %s215 = sphi 0, %s199
    $region4: #{tpu_custom_call.1} parent=1 // loop_header_branch
      %19 = sbr.rel (%p17) target = $region8
    $region5: #{tpu_custom_call.1} parent=1 // loop_body
      %s21 = ssub.s32 %s16, 1
      %s22 = ssub.s32 %s16, 2
      %s29 = sadd.s32 1, %s24
      %p30 = scmp.ge.s32.totalorder %s29, 2
      %s31 = scalar_select %p30, 0, %s29
      %s32 = sadd.s32 1, %s23
      %s33 = scalar_select %p30, %s32, %s23
      %p34 = scmp.ge.s32.totalorder %s33, 2
      %s35 = scalar_select %p34, 0, %s33
      %s36 = ssub.s32 %s23, %s35
      %p37 = scmp.eq.s32.totalorder %s36, 0
      %s39 = sadd.s32 %s38, 1
      %s40 = scalar_select %p37, %s38, %s39
      %p43 = pneg %p37
      %p44 = scmp.eq.s32.totalorder %s16, 3
      %p45 = por %p43, %p44
      %p46 = scmp.ne.s32.totalorder %s38, %s41
      %p47 = scmp.eq.s32.totalorder %s16, 0
      %p48 = por %p46, %p47
      %p49 = scmp.ne.s32.totalorder %s38, %s41
      %p50 = scmp.eq.s32.totalorder %s21, 3
      %p51 = por %p49, %p50
      %p52 = scmp.ne.s32.totalorder %s41, %s42
      %p53 = scmp.eq.s32.totalorder %s21, 0
      %p54 = por %p52, %p53
      %p55 = scmp.ne.s32.totalorder %s41, %s42
      %p56 = scmp.eq.s32.totalorder %s22, 3
      %p57 = por %p55, %p56
      %p59 = scmp.ne.s32.totalorder %s42, %s58
      %p60 = scmp.eq.s32.totalorder %s22, 0
      %p61 = por %p59, %p60
      %s62 = ssub.s32 %s24, %s31
      %p63 = scmp.eq.s32.totalorder %s62, 0
      %s65 = sadd.s32 %s64, 1
      %s66 = scalar_select %p63, %s64, %s65
      %p69 = pneg %p63
      %p70 = scmp.eq.s32.totalorder %s16, 3
      %p71 = por %p69, %p70
      %p72 = scmp.ne.s32.totalorder %s64, %s67
      %p73 = scmp.eq.s32.totalorder %s16, 0
      %p74 = por %p72, %p73
      %p75 = scmp.ne.s32.totalorder %s64, %s67
      %p76 = scmp.eq.s32.totalorder %s21, 3
      %p77 = por %p75, %p76
      %p78 = scmp.ne.s32.totalorder %s67, %s68
      %p79 = scmp.eq.s32.totalorder %s21, 0
      %p80 = por %p78, %p79
      %p81 = scmp.ne.s32.totalorder %s67, %s68
      %p82 = scmp.eq.s32.totalorder %s22, 3
      %p83 = por %p81, %p82
      %p85 = scmp.ne.s32.totalorder %s68, %s84
      %p86 = scmp.eq.s32.totalorder %s22, 0
      %p87 = por %p85, %p86
      %s89 = sadd.s32 %s88, 1
      %p92 = scmp.eq.s32.totalorder %s16, 3
      %p93 = scmp.ne.s32.totalorder %s88, %s90
      %p94 = scmp.eq.s32.totalorder %s16, 0
      %p95 = por %p93, %p94
      %p96 = scmp.ne.s32.totalorder %s88, %s90
      %p97 = scmp.eq.s32.totalorder %s21, 3
      %p98 = por %p96, %p97
      %p99 = scmp.ne.s32.totalorder %s90, %s91
      %p100 = scmp.eq.s32.totalorder %s21, 0
      %p101 = por %p99, %p100
      %p102 = scmp.ne.s32.totalorder %s90, %s91
      %p103 = scmp.eq.s32.totalorder %s22, 3
      %p104 = por %p102, %p103
      %p106 = scmp.ne.s32.totalorder %s91, %s105
      %p107 = scmp.eq.s32.totalorder %s22, 0
      %p108 = por %p106, %p107
      %s110 = sadd.s32 %s109, 1
      %p113 = scmp.eq.s32.totalorder %s16, 3
      %p114 = scmp.ne.s32.totalorder %s109, %s111
      %p115 = scmp.eq.s32.totalorder %s16, 0
      %p116 = por %p114, %p115
      %p117 = scmp.ne.s32.totalorder %s109, %s111
      %p118 = scmp.eq.s32.totalorder %s21, 3
      %p119 = por %p117, %p118
      %p120 = scmp.ne.s32.totalorder %s111, %s112
      %p121 = scmp.eq.s32.totalorder %s21, 0
      %p122 = por %p120, %p121
      %p123 = scmp.ne.s32.totalorder %s111, %s112
      %p124 = scmp.eq.s32.totalorder %s22, 3
      %p125 = por %p123, %p124
      %p127 = scmp.ne.s32.totalorder %s112, %s126
      %p128 = scmp.eq.s32.totalorder %s22, 0
      %p129 = por %p127, %p128
      %s131 = sadd.s32 %s130, 1
      %p134 = scmp.eq.s32.totalorder %s16, 3
      %p135 = scmp.ne.s32.totalorder %s130, %s132
      %p136 = scmp.eq.s32.totalorder %s16, 0
      %p137 = por %p135, %p136
      %p138 = scmp.ne.s32.totalorder %s130, %s132
      %p139 = scmp.eq.s32.totalorder %s21, 3
      %p140 = por %p138, %p139
      %p141 = scmp.ne.s32.totalorder %s132, %s133
      %p142 = scmp.eq.s32.totalorder %s21, 0
      %p143 = por %p141, %p142
      %p144 = scmp.ne.s32.totalorder %s132, %s133
      %p145 = scmp.eq.s32.totalorder %s22, 3
      %p146 = por %p144, %p145
      %p148 = scmp.ne.s32.totalorder %s133, %s147
      %p149 = scmp.eq.s32.totalorder %s22, 0
      %p150 = por %p148, %p149
      %s152 = sadd.s32 %s151, 1
      %p155 = scmp.eq.s32.totalorder %s16, 3
      %p156 = scmp.ne.s32.totalorder %s151, %s153
      %p157 = scmp.eq.s32.totalorder %s16, 0
      %p158 = por %p156, %p157
      %p159 = scmp.ne.s32.totalorder %s151, %s153
      %p160 = scmp.eq.s32.totalorder %s21, 3
      %p161 = por %p159, %p160
      %p162 = scmp.ne.s32.totalorder %s153, %s154
      %p163 = scmp.eq.s32.totalorder %s21, 0
      %p164 = por %p162, %p163
      %p165 = scmp.ne.s32.totalorder %s153, %s154
      %p166 = scmp.eq.s32.totalorder %s22, 3
      %p167 = por %p165, %p166
      %p169 = scmp.ne.s32.totalorder %s154, %s168
      %p170 = scmp.eq.s32.totalorder %s22, 0
      %p171 = por %p169, %p170
      %s173 = sadd.s32 %s172, 1
      %p176 = scmp.eq.s32.totalorder %s16, 3
      %p177 = scmp.ne.s32.totalorder %s172, %s174
      %p178 = scmp.eq.s32.totalorder %s16, 0
      %p179 = por %p177, %p178
      %p180 = scmp.ne.s32.totalorder %s172, %s174
      %p181 = scmp.eq.s32.totalorder %s21, 3
      %p182 = por %p180, %p181
      %p183 = scmp.ne.s32.totalorder %s174, %s175
      %p184 = scmp.eq.s32.totalorder %s21, 0
      %p185 = por %p183, %p184
      %p186 = scmp.ne.s32.totalorder %s174, %s175
      %p187 = scmp.eq.s32.totalorder %s22, 3
      %p188 = por %p186, %p187
      %p190 = scmp.ne.s32.totalorder %s175, %s189
      %p191 = scmp.eq.s32.totalorder %s22, 0
      %p192 = por %p190, %p191
      %s193 = ssub.s32 %s23, %s35
      %p194 = scmp.eq.s32.totalorder %s193, 0
      %s196 = sadd.s32 %s195, 1
      %s197 = scalar_select %p194, %s195, %s196
      %p200 = pneg %p194
      %p201 = scmp.eq.s32.totalorder %s16, 3
      %p202 = por %p200, %p201
      %p203 = scmp.ne.s32.totalorder %s195, %s198
      %p204 = scmp.eq.s32.totalorder %s16, 0
      %p205 = por %p203, %p204
      %p206 = scmp.ne.s32.totalorder %s195, %s198
      %p207 = scmp.eq.s32.totalorder %s21, 3
      %p208 = por %p206, %p207
      %p209 = scmp.ne.s32.totalorder %s198, %s199
      %p210 = scmp.eq.s32.totalorder %s21, 0
      %p211 = por %p209, %p210
      %p212 = scmp.ne.s32.totalorder %s198, %s199
      %p213 = scmp.eq.s32.totalorder %s22, 3
      %p214 = por %p212, %p213
      %p216 = scmp.ne.s32.totalorder %s199, %s215
      %p217 = scmp.eq.s32.totalorder %s22, 0
      %p218 = por %p216, %p217
      %p219 = scmp.le.s32.totalorder 1, %s16
      %p220 = scmp.lt.s32.totalorder %s16, 5
      %p221 = pnand %p219, %p220
      %p222 = pneg %p221
      // Predicated region
      $region9: #{tpu_custom_call.1} parent=5 // pred_check
        _
      $region10: #{tpu_custom_call.1} parent=5 // pred_check_branch
        %224 = sbr.rel (%p221) target = $region12
      $region11: #{tpu_custom_call.1} parent=5 // pred_region
        %s225 = ssub.s32 %s16, 1
        // Predicated region
        $region13: #{tpu_custom_call.1} parent=11 // pred_check
          %p226 = pneg %p101
        $region14: #{tpu_custom_call.1} parent=11 // pred_check_branch
          %228 = sbr.rel (%p226) target = $region16
        $region15: #{tpu_custom_call.1} parent=11 // pred_region
          _
        $region16: #{tpu_custom_call.1} parent=11 // pred_fallthru
          _
        // Predicated region
        $region17: #{tpu_custom_call.1} parent=11 // pred_check
          %p229 = pneg %p122
        $region18: #{tpu_custom_call.1} parent=11 // pred_check_branch
          %231 = sbr.rel (%p229) target = $region20
        $region19: #{tpu_custom_call.1} parent=11 // pred_region
          _
        $region20: #{tpu_custom_call.1} parent=11 // pred_fallthru
          _
        // Predicated region
        $region21: #{tpu_custom_call.1} parent=11 // pred_check
          %p232 = pneg %p143
        $region22: #{tpu_custom_call.1} parent=11 // pred_check_branch
          %234 = sbr.rel (%p232) target = $region24
        $region23: #{tpu_custom_call.1} parent=11 // pred_region
          _
        $region24: #{tpu_custom_call.1} parent=11 // pred_fallthru
          _
        // Predicated region
        $region25: #{tpu_custom_call.1} parent=11 // pred_check
          %p235 = pneg %p164
        $region26: #{tpu_custom_call.1} parent=11 // pred_check_branch
          %237 = sbr.rel (%p235) target = $region28
        $region27: #{tpu_custom_call.1} parent=11 // pred_region
          _
        $region28: #{tpu_custom_call.1} parent=11 // pred_fallthru
          _
        // Predicated region
        $region29: #{tpu_custom_call.1} parent=11 // pred_check
          %p238 = pneg %p185
        $region30: #{tpu_custom_call.1} parent=11 // pred_check_branch
          %240 = sbr.rel (%p238) target = $region32
        $region31: #{tpu_custom_call.1} parent=11 // pred_region
          _
        $region32: #{tpu_custom_call.1} parent=11 // pred_fallthru
          _
      $region12: #{tpu_custom_call.1} parent=5 // pred_fallthru
        _
      %p241 = scmp.lt.s32.totalorder %s16, 4
      // Predicated region
      $region33: #{tpu_custom_call.1} parent=5 // pred_check
        %p242 = pneg %p241
      $region34: #{tpu_custom_call.1} parent=5 // pred_check_branch
        %244 = sbr.rel (%p242) target = $region36
      $region35: #{tpu_custom_call.1} parent=5 // pred_region
        // Predicated region
        $region37: #{tpu_custom_call.1} parent=35 // pred_check
          %p245 = pneg %p48
        $region38: #{tpu_custom_call.1} parent=35 // pred_check_branch
          %247 = sbr.rel (%p245) target = $region40
        $region39: #{tpu_custom_call.1} parent=35 // pred_region
          %p248 = scmp.lt.s32.totalorder %s23, 1
          %s249 = scalar_select %p248, %s23, 1
          %s250 = smul.addr %s249, 60
          %s251 = smul.addr %s250, 4
          %s252 = scalar_lea.vmem %s0, %s251
        $region40: #{tpu_custom_call.1} parent=35 // pred_fallthru
          _
        // Predicated region
        $region41: #{tpu_custom_call.1} parent=35 // pred_check
          %p253 = pneg %p74
        $region42: #{tpu_custom_call.1} parent=35 // pred_check_branch
          %255 = sbr.rel (%p253) target = $region44
        $region43: #{tpu_custom_call.1} parent=35 // pred_region
          %p256 = scmp.lt.s32.totalorder %s24, 1
          %s257 = scalar_select %p256, %s24, 1
          %s258 = smul.addr %s257, 72
          %s259 = smul.addr %s258, 4
          %s260 = scalar_lea.vmem %s1, %s259
        $region44: #{tpu_custom_call.1} parent=35 // pred_fallthru
          _
      $region36: #{tpu_custom_call.1} parent=5 // pred_fallthru
        _
      %p261 = scmp.le.s32.totalorder 1, %s16
      %p262 = scmp.lt.s32.totalorder %s16, 5
      %p263 = pnand %p261, %p262
      %p264 = pneg %p263
      // Predicated region
      $region45: #{tpu_custom_call.1} parent=5 // pred_check
        _
      $region46: #{tpu_custom_call.1} parent=5 // pred_check_branch
        %266 = sbr.rel (%p263) target = $region48
      $region47: #{tpu_custom_call.1} parent=5 // pred_region
        %s267 = ssub.s32 %s16, 1
        %p268 = scmp.lt.s32.totalorder %s25, 1
        %s269 = scalar_select %p268, %s25, 1
        %s270 = smul.addr %s269, 60
        %s271 = smul.addr %s270, 4
        %s272 = scalar_lea.vmem %s0, %s271
        %p273 = pneg %p54
        %p274 = pneg %p51
        %p275 = scmp.lt.s32.totalorder %s26, 1
        %s276 = scalar_select %p275, %s26, 1
        %s277 = smul.addr %s276, 72
        %s278 = smul.addr %s277, 4
        %s279 = scalar_lea.vmem %s1, %s278
        %p280 = pneg %p80
        %p281 = pneg %p77
        %p282 = pneg %p101
        %p283 = pneg %p98
        %p284 = pneg %p122
        %p285 = pneg %p119
        %p286 = pneg %p143
        %p287 = pneg %p140
        %p288 = pneg %p164
        %p289 = pneg %p161
        %p290 = pneg %p185
        %p291 = pneg %p182
        %p292 = pneg %p211
        %p293 = pneg %p208
        %s294 = sand.u32 %s198, 1
        %s295 = scalar_lea.sflag [#allocation5], %s294
        %s296 = sand.u32 %s198, 1
        %s297 = smul.addr %s296, 256
        %s298 = scalar_lea.vmem [#allocation4], %s297
        %p299 = scmp.lt.s32.totalorder %s25, 1
        %s300 = scalar_select %p299, %s25, 1
        %s301 = smul.addr %s300, 60
        %s302 = smul.addr %s301, 4
        %s303 = scalar_lea.vmem %s0, %s302
        %p304 = scmp.lt.s32.totalorder %s26, 1
        %s305 = scalar_select %p304, %s26, 1
        %s306 = smul.addr %s305, 72
        %s307 = smul.addr %s306, 4
        %s308 = scalar_lea.vmem %s1, %s307
        %p310 = scmp.eq.s32.totalorder %s26, 0
        // Predicated region
        $region49: #{tpu_custom_call.1} parent=47 // pred_check
          %p311 = pneg %p310
        $region50: #{tpu_custom_call.1} parent=47 // pred_check_branch
          %313 = sbr.rel (%p311) target = $region52
        $region51: #{tpu_custom_call.1} parent=47 // pred_region
          %vm314 = vcmask 516096
          %315 = vst.msk [vmem:[#allocation3] sm:$0x1] %vm314, 0.0
          %s316 = scalar_lea.vmem %s303, 12
          %v317 = vld [vmem:[%s316] sm:$0xf]
          %v318 = vld [vmem:[%s316 + $0x4] sm:$0xf]
          %v319 = vld [vmem:[%s316 + $0x8] sm:$0x1]
          %v320 = vld [vmem:[%s316 + $0xc] sm:$0xf]
          %v321 = vld [vmem:[%s316 + $0x10] sm:$0xf]
          %v322 = vld [vmem:[%s316 + $0x14] sm:$0x1]
          %v323 = vld [vmem:[%s316 + $0x18] sm:$0xf]
          %v324 = vld [vmem:[%s316 + $0x1c] sm:$0xf]
          %v325 = vld [vmem:[%s316 + $0x20] sm:$0x1]
          %v326 = vld [vmem:[%s316 + $0x24] sm:$0xf]
          %v327 = vld [vmem:[%s316 + $0x28] sm:$0xf]
          %v328 = vld [vmem:[%s316 + $0x2c] sm:$0x1]
          %v329 = vld [vmem:[%s316 + $0x30] sm:$0xf]
          %v330 = vld [vmem:[%s316 + $0x34] sm:$0xf]
          %v331 = vld [vmem:[%s316 + $0x38] sm:$0x1]
          %v332 = vld [vmem:[%s316 + $0x3c] sm:$0xf]
          %v333 = vld [vmem:[%s316 + $0x40] sm:$0xf]
          %v334 = vld [vmem:[%s316 + $0x44] sm:$0x1]
          %v335 = vld [vmem:[%s316 + $0x48] sm:$0xf]
          %v336 = vld [vmem:[%s316 + $0x4c] sm:$0xf]
          %v337 = vld [vmem:[%s316 + $0x50] sm:$0x1]
          %v338 = vld [vmem:[%s316 + $0x54] sm:$0xf]
          %v339 = vld [vmem:[%s316 + $0x58] sm:$0xf]
          %v340 = vld [vmem:[%s316 + $0x5c] sm:$0x1]
          %v341 = vld [vmem:[%s316 + $0x60] sm:$0xf]
          %v342 = vld [vmem:[%s316 + $0x64] sm:$0xf]
          %v343 = vld [vmem:[%s316 + $0x68] sm:$0x1]
          %v344 = vld [vmem:[%s316 + $0x6c] sm:$0xf]
          %v345 = vld [vmem:[%s316 + $0x70] sm:$0xf]
          %v346 = vld [vmem:[%s316 + $0x74] sm:$0x1]
          %v347 = vld [vmem:[%s316 + $0x78] sm:$0xf]
          %v348 = vld [vmem:[%s316 + $0x7c] sm:$0xf]
          %v349 = vld [vmem:[%s316 + $0x80] sm:$0x1]
          %v350 = vld [vmem:[%s316 + $0x84] sm:$0xf]
          %v351 = vld [vmem:[%s316 + $0x88] sm:$0xf]
          %v352 = vld [vmem:[%s316 + $0x8c] sm:$0x1]
          %v353 = vld [vmem:[%s316 + $0x90] sm:$0xf]
          %v354 = vld [vmem:[%s316 + $0x94] sm:$0xf]
          %v355 = vld [vmem:[%s316 + $0x98] sm:$0x1]
          %v356 = vld [vmem:[%s316 + $0x9c] sm:$0xf]
          %v357 = vld [vmem:[%s316 + $0xa0] sm:$0xf]
          %v358 = vld [vmem:[%s316 + $0xa4] sm:$0x1]
          %v359 = vld [vmem:[%s316 + $0xa8] sm:$0xf]
          %v360 = vld [vmem:[%s316 + $0xac] sm:$0xf]
          %v361 = vld [vmem:[%s316 + $0xb0] sm:$0x1]
          %v362 = vld [vmem:[%s316 + $0xb4] sm:$0xf]
          %v363 = vld [vmem:[%s316 + $0xb8] sm:$0xf]
          %v364 = vld [vmem:[%s316 + $0xbc] sm:$0x1]
          %vm365 = vsmask.f32 3328
          %vm366 = vsmask.f32 7440
          %vm367 = vmor %vm365, %vm366
          %v369 = vshrl.u32 %v317, 16
          %v371 = vrot.slane %v369, 4
          %v372 = vshll.u32 %v317, 16
          %v374 = vrot.slane %v372, 5
          %v375 = vor.u32 %v371, %v374
          %v376 = vrot.slane %v375, 4
          %v378 = vshll.u32 %v318, 16
          %v380 = vrot.slane %v378, 5
          %v381 = vsel %vm367, %v376, %v380
          %v382 = vshrl.u32 %v318, 16
          %v384 = vrot.slane %v382, 4
          %v385 = vor.u32 %v384, %v380
          %v386 = vrot.slane %v385, 4
          %v388 = vshll.u32 %v319, 16
          %v390 = vrot.slane %v388, 5
          %v391 = vsel %vm367, %v386, %v390
          %v393 = vshrl.u32 %v320, 16
          %v395 = vrot.slane %v393, 4
          %v396 = vshll.u32 %v320, 16
          %v398 = vrot.slane %v396, 5
          %v399 = vor.u32 %v395, %v398
          %v400 = vrot.slane %v399, 4
          %v402 = vshll.u32 %v321, 16
          %v404 = vrot.slane %v402, 5
          %v405 = vsel %vm367, %v400, %v404
          %v406 = vshrl.u32 %v321, 16
          %v408 = vrot.slane %v406, 4
          %v409 = vor.u32 %v408, %v404
          %v410 = vrot.slane %v409, 4
          %v412 = vshll.u32 %v322, 16
          %v414 = vrot.slane %v412, 5
          %v415 = vsel %vm367, %v410, %v414
          %v417 = vshrl.u32 %v323, 16
          %v419 = vrot.slane %v417, 4
          %v420 = vshll.u32 %v323, 16
          %v422 = vrot.slane %v420, 5
          %v423 = vor.u32 %v419, %v422
          %v424 = vrot.slane %v423, 4
          %v426 = vshll.u32 %v324, 16
          %v428 = vrot.slane %v426, 5
          %v429 = vsel %vm367, %v424, %v428
          %v430 = vshrl.u32 %v324, 16
          %v432 = vrot.slane %v430, 4
          %v433 = vor.u32 %v432, %v428
          %v434 = vrot.slane %v433, 4
          %v436 = vshll.u32 %v325, 16
          %v438 = vrot.slane %v436, 5
          %v439 = vsel %vm367, %v434, %v438
          %v441 = vshrl.u32 %v326, 16
          %v443 = vrot.slane %v441, 4
          %v444 = vshll.u32 %v326, 16
          %v446 = vrot.slane %v444, 5
          %v447 = vor.u32 %v443, %v446
          %v448 = vrot.slane %v447, 4
          %v450 = vshll.u32 %v327, 16
          %v452 = vrot.slane %v450, 5
          %v453 = vsel %vm367, %v448, %v452
          %v454 = vshrl.u32 %v327, 16
          %v456 = vrot.slane %v454, 4
          %v457 = vor.u32 %v456, %v452
          %v458 = vrot.slane %v457, 4
          %v460 = vshll.u32 %v328, 16
          %v462 = vrot.slane %v460, 5
          %v463 = vsel %vm367, %v458, %v462
          %v465 = vshrl.u32 %v329, 16
          %v467 = vrot.slane %v465, 4
          %v468 = vshll.u32 %v329, 16
          %v470 = vrot.slane %v468, 5
          %v471 = vor.u32 %v467, %v470
          %v472 = vrot.slane %v471, 4
          %v474 = vshll.u32 %v330, 16
          %v476 = vrot.slane %v474, 5
          %v477 = vsel %vm367, %v472, %v476
          %v478 = vshrl.u32 %v330, 16
          %v480 = vrot.slane %v478, 4
          %v481 = vor.u32 %v480, %v476
          %v482 = vrot.slane %v481, 4
          %v484 = vshll.u32 %v331, 16
          %v486 = vrot.slane %v484, 5
          %v487 = vsel %vm367, %v482, %v486
          %v489 = vshrl.u32 %v332, 16
          %v491 = vrot.slane %v489, 4
          %v492 = vshll.u32 %v332, 16
          %v494 = vrot.slane %v492, 5
          %v495 = vor.u32 %v491, %v494
          %v496 = vrot.slane %v495, 4
          %v498 = vshll.u32 %v333, 16
          %v500 = vrot.slane %v498, 5
          %v501 = vsel %vm367, %v496, %v500
          %v502 = vshrl.u32 %v333, 16
          %v504 = vrot.slane %v502, 4
          %v505 = vor.u32 %v504, %v500
          %v506 = vrot.slane %v505, 4
          %v508 = vshll.u32 %v334, 16
          %v510 = vrot.slane %v508, 5
          %v511 = vsel %vm367, %v506, %v510
          %v513 = vshrl.u32 %v335, 16
          %v515 = vrot.slane %v513, 4
          %v516 = vshll.u32 %v335, 16
          %v518 = vrot.slane %v516, 5
          %v519 = vor.u32 %v515, %v518
          %v520 = vrot.slane %v519, 4
          %v522 = vshll.u32 %v336, 16
          %v524 = vrot.slane %v522, 5
          %v525 = vsel %vm367, %v520, %v524
          %v526 = vshrl.u32 %v336, 16
          %v528 = vrot.slane %v526, 4
          %v529 = vor.u32 %v528, %v524
          %v530 = vrot.slane %v529, 4
          %v532 = vshll.u32 %v337, 16
          %v534 = vrot.slane %v532, 5
          %v535 = vsel %vm367, %v530, %v534
          %v537 = vshrl.u32 %v338, 16
          %v539 = vrot.slane %v537, 4
          %v540 = vshll.u32 %v338, 16
          %v542 = vrot.slane %v540, 5
          %v543 = vor.u32 %v539, %v542
          %v544 = vrot.slane %v543, 4
          %v546 = vshll.u32 %v339, 16
          %v548 = vrot.slane %v546, 5
          %v549 = vsel %vm367, %v544, %v548
          %v550 = vshrl.u32 %v339, 16
          %v552 = vrot.slane %v550, 4
          %v553 = vor.u32 %v552, %v548
          %v554 = vrot.slane %v553, 4
          %v556 = vshll.u32 %v340, 16
          %v558 = vrot.slane %v556, 5
          %v559 = vsel %vm367, %v554, %v558
          %v561 = vshrl.u32 %v341, 16
          %v563 = vrot.slane %v561, 4
          %v564 = vshll.u32 %v341, 16
          %v566 = vrot.slane %v564, 5
          %v567 = vor.u32 %v563, %v566
          %v568 = vrot.slane %v567, 4
          %v570 = vshll.u32 %v342, 16
          %v572 = vrot.slane %v570, 5
          %v573 = vsel %vm367, %v568, %v572
          %v574 = vshrl.u32 %v342, 16
          %v576 = vrot.slane %v574, 4
          %v577 = vor.u32 %v576, %v572
          %v578 = vrot.slane %v577, 4
          %v580 = vshll.u32 %v343, 16
          %v582 = vrot.slane %v580, 5
          %v583 = vsel %vm367, %v578, %v582
          %v585 = vshrl.u32 %v344, 16
          %v587 = vrot.slane %v585, 4
          %v588 = vshll.u32 %v344, 16
          %v590 = vrot.slane %v588, 5
          %v591 = vor.u32 %v587, %v590
          %v592 = vrot.slane %v591, 4
          %v594 = vshll.u32 %v345, 16
          %v596 = vrot.slane %v594, 5
          %v597 = vsel %vm367, %v592, %v596
          %v598 = vshrl.u32 %v345, 16
          %v600 = vrot.slane %v598, 4
          %v601 = vor.u32 %v600, %v596
          %v602 = vrot.slane %v601, 4
          %v604 = vshll.u32 %v346, 16
          %v606 = vrot.slane %v604, 5
          %v607 = vsel %vm367, %v602, %v606
          %v609 = vshrl.u32 %v347, 16
          %v611 = vrot.slane %v609, 4
          %v612 = vshll.u32 %v347, 16
          %v614 = vrot.slane %v612, 5
          %v615 = vor.u32 %v611, %v614
          %v616 = vrot.slane %v615, 4
          %v618 = vshll.u32 %v348, 16
          %v620 = vrot.slane %v618, 5
          %v621 = vsel %vm367, %v616, %v620
          %v622 = vshrl.u32 %v348, 16
          %v624 = vrot.slane %v622, 4
          %v625 = vor.u32 %v624, %v620
          %v626 = vrot.slane %v625, 4
          %v628 = vshll.u32 %v349, 16
          %v630 = vrot.slane %v628, 5
          %v631 = vsel %vm367, %v626, %v630
          %v633 = vshrl.u32 %v350, 16
          %v635 = vrot.slane %v633, 4
          %v636 = vshll.u32 %v350, 16
          %v638 = vrot.slane %v636, 5
          %v639 = vor.u32 %v635, %v638
          %v640 = vrot.slane %v639, 4
          %v642 = vshll.u32 %v351, 16
          %v644 = vrot.slane %v642, 5
          %v645 = vsel %vm367, %v640, %v644
          %v646 = vshrl.u32 %v351, 16
          %v648 = vrot.slane %v646, 4
          %v649 = vor.u32 %v648, %v644
          %v650 = vrot.slane %v649, 4
          %v652 = vshll.u32 %v352, 16
          %v654 = vrot.slane %v652, 5
          %v655 = vsel %vm367, %v650, %v654
          %v657 = vshrl.u32 %v353, 16
          %v659 = vrot.slane %v657, 4
          %v660 = vshll.u32 %v353, 16
          %v662 = vrot.slane %v660, 5
          %v663 = vor.u32 %v659, %v662
          %v664 = vrot.slane %v663, 4
          %v666 = vshll.u32 %v354, 16
          %v668 = vrot.slane %v666, 5
          %v669 = vsel %vm367, %v664, %v668
          %v670 = vshrl.u32 %v354, 16
          %v672 = vrot.slane %v670, 4
          %v673 = vor.u32 %v672, %v668
          %v674 = vrot.slane %v673, 4
          %v676 = vshll.u32 %v355, 16
          %v678 = vrot.slane %v676, 5
          %v679 = vsel %vm367, %v674, %v678
          %v681 = vshrl.u32 %v356, 16
          %v683 = vrot.slane %v681, 4
          %v684 = vshll.u32 %v356, 16
          %v686 = vrot.slane %v684, 5
          %v687 = vor.u32 %v683, %v686
          %v688 = vrot.slane %v687, 4
          %v690 = vshll.u32 %v357, 16
          %v692 = vrot.slane %v690, 5
          %v693 = vsel %vm367, %v688, %v692
          %v694 = vshrl.u32 %v357, 16
          %v696 = vrot.slane %v694, 4
          %v697 = vor.u32 %v696, %v692
          %v698 = vrot.slane %v697, 4
          %v700 = vshll.u32 %v358, 16
          %v702 = vrot.slane %v700, 5
          %v703 = vsel %vm367, %v698, %v702
          %v705 = vshrl.u32 %v359, 16
          %v707 = vrot.slane %v705, 4
          %v708 = vshll.u32 %v359, 16
          %v710 = vrot.slane %v708, 5
          %v711 = vor.u32 %v707, %v710
          %v712 = vrot.slane %v711, 4
          %v714 = vshll.u32 %v360, 16
          %v716 = vrot.slane %v714, 5
          %v717 = vsel %vm367, %v712, %v716
          %v718 = vshrl.u32 %v360, 16
          %v720 = vrot.slane %v718, 4
          %v721 = vor.u32 %v720, %v716
          %v722 = vrot.slane %v721, 4
          %v724 = vshll.u32 %v361, 16
          %v726 = vrot.slane %v724, 5
          %v727 = vsel %vm367, %v722, %v726
          %v729 = vshrl.u32 %v362, 16
          %v731 = vrot.slane %v729, 4
          %v732 = vshll.u32 %v362, 16
          %v734 = vrot.slane %v732, 5
          %v735 = vor.u32 %v731, %v734
          %v736 = vrot.slane %v735, 4
          %v738 = vshll.u32 %v363, 16
          %v740 = vrot.slane %v738, 5
          %v741 = vsel %vm367, %v736, %v740
          %v742 = vshrl.u32 %v363, 16
          %v744 = vrot.slane %v742, 4
          %v745 = vor.u32 %v744, %v740
          %v746 = vrot.slane %v745, 4
          %v748 = vshll.u32 %v364, 16
          %v750 = vrot.slane %v748, 5
          %v751 = vsel %vm367, %v746, %v750
          %v752 = vld [vmem:[%s316] sm:$0xe]
          %v753 = vld [vmem:[%s316 + $0xc] sm:$0xe]
          %v754 = vld [vmem:[%s316 + $0x18] sm:$0xe]
          %v755 = vld [vmem:[%s316 + $0x24] sm:$0xe]
          %v756 = vld [vmem:[%s316 + $0x30] sm:$0xe]
          %v757 = vld [vmem:[%s316 + $0x3c] sm:$0xe]
          %v758 = vld [vmem:[%s316 + $0x48] sm:$0xe]
          %v759 = vld [vmem:[%s316 + $0x54] sm:$0xe]
          %v760 = vld [vmem:[%s316 + $0x60] sm:$0xe]
          %v761 = vld [vmem:[%s316 + $0x6c] sm:$0xe]
          %v762 = vld [vmem:[%s316 + $0x78] sm:$0xe]
          %v763 = vld [vmem:[%s316 + $0x84] sm:$0xe]
          %v764 = vld [vmem:[%s316 + $0x90] sm:$0xe]
          %v765 = vld [vmem:[%s316 + $0x9c] sm:$0xe]
          %v766 = vld [vmem:[%s316 + $0xa8] sm:$0xe]
          %v767 = vld [vmem:[%s316 + $0xb4] sm:$0xe]
          %vm816 = vcmask 1042432
          %vm817 = vcmask 1046532
          %vm818 = vmor %vm816, %vm817
          %v819 = vrot.slane %v752, 5
          %v820 = vrot.slane %v819, 4
          %v821 = vrot.slane %v318, 5
          %v822 = vsel %vm818, %v820, %v821
          %v823 = vrot.slane %v821, 4
          %v824 = vrot.slane %v319, 5
          %v825 = vsel %vm818, %v823, %v824
          %v826 = vrot.slane %v753, 5
          %v827 = vrot.slane %v826, 4
          %v828 = vrot.slane %v321, 5
          %v829 = vsel %vm818, %v827, %v828
          %v830 = vrot.slane %v828, 4
          %v831 = vrot.slane %v322, 5
          %v832 = vsel %vm818, %v830, %v831
          %v833 = vrot.slane %v754, 5
          %v834 = vrot.slane %v833, 4
          %v835 = vrot.slane %v324, 5
          %v836 = vsel %vm818, %v834, %v835
          %v837 = vrot.slane %v835, 4
          %v838 = vrot.slane %v325, 5
          %v839 = vsel %vm818, %v837, %v838
          %v840 = vrot.slane %v755, 5
          %v841 = vrot.slane %v840, 4
          %v842 = vrot.slane %v327, 5
          %v843 = vsel %vm818, %v841, %v842
          %v844 = vrot.slane %v842, 4
          %v845 = vrot.slane %v328, 5
          %v846 = vsel %vm818, %v844, %v845
          %v847 = vrot.slane %v756, 5
          %v848 = vrot.slane %v847, 4
          %v849 = vrot.slane %v330, 5
          %v850 = vsel %vm818, %v848, %v849
          %v851 = vrot.slane %v849, 4
          %v852 = vrot.slane %v331, 5
          %v853 = vsel %vm818, %v851, %v852
          %v854 = vrot.slane %v757, 5
          %v855 = vrot.slane %v854, 4
          %v856 = vrot.slane %v333, 5
          %v857 = vsel %vm818, %v855, %v856
          %v858 = vrot.slane %v856, 4
          %v859 = vrot.slane %v334, 5
          %v860 = vsel %vm818, %v858, %v859
          %v861 = vrot.slane %v758, 5
          %v862 = vrot.slane %v861, 4
          %v863 = vrot.slane %v336, 5
          %v864 = vsel %vm818, %v862, %v863
          %v865 = vrot.slane %v863, 4
          %v866 = vrot.slane %v337, 5
          %v867 = vsel %vm818, %v865, %v866
          %v868 = vrot.slane %v759, 5
          %v869 = vrot.slane %v868, 4
          %v870 = vrot.slane %v339, 5
          %v871 = vsel %vm818, %v869, %v870
          %v872 = vrot.slane %v870, 4
          %v873 = vrot.slane %v340, 5
          %v874 = vsel %vm818, %v872, %v873
          %v875 = vrot.slane %v760, 5
          %v876 = vrot.slane %v875, 4
          %v877 = vrot.slane %v342, 5
          %v878 = vsel %vm818, %v876, %v877
          %v879 = vrot.slane %v877, 4
          %v880 = vrot.slane %v343, 5
          %v881 = vsel %vm818, %v879, %v880
          %v882 = vrot.slane %v761, 5
          %v883 = vrot.slane %v882, 4
          %v884 = vrot.slane %v345, 5
          %v885 = vsel %vm818, %v883, %v884
          %v886 = vrot.slane %v884, 4
          %v887 = vrot.slane %v346, 5
          %v888 = vsel %vm818, %v886, %v887
          %v889 = vrot.slane %v762, 5
          %v890 = vrot.slane %v889, 4
          %v891 = vrot.slane %v348, 5
          %v892 = vsel %vm818, %v890, %v891
          %v893 = vrot.slane %v891, 4
          %v894 = vrot.slane %v349, 5
          %v895 = vsel %vm818, %v893, %v894
          %v896 = vrot.slane %v763, 5
          %v897 = vrot.slane %v896, 4
          %v898 = vrot.slane %v351, 5
          %v899 = vsel %vm818, %v897, %v898
          %v900 = vrot.slane %v898, 4
          %v901 = vrot.slane %v352, 5
          %v902 = vsel %vm818, %v900, %v901
          %v903 = vrot.slane %v764, 5
          %v904 = vrot.slane %v903, 4
          %v905 = vrot.slane %v354, 5
          %v906 = vsel %vm818, %v904, %v905
          %v907 = vrot.slane %v905, 4
          %v908 = vrot.slane %v355, 5
          %v909 = vsel %vm818, %v907, %v908
          %v910 = vrot.slane %v765, 5
          %v911 = vrot.slane %v910, 4
          %v912 = vrot.slane %v357, 5
          %v913 = vsel %vm818, %v911, %v912
          %v914 = vrot.slane %v912, 4
          %v915 = vrot.slane %v358, 5
          %v916 = vsel %vm818, %v914, %v915
          %v917 = vrot.slane %v766, 5
          %v918 = vrot.slane %v917, 4
          %v919 = vrot.slane %v360, 5
          %v920 = vsel %vm818, %v918, %v919
          %v921 = vrot.slane %v919, 4
          %v922 = vrot.slane %v361, 5
          %v923 = vsel %vm818, %v921, %v922
          %v924 = vrot.slane %v767, 5
          %v925 = vrot.slane %v924, 4
          %v926 = vrot.slane %v363, 5
          %v927 = vsel %vm818, %v925, %v926
          %v928 = vrot.slane %v926, 4
          %v929 = vrot.slane %v364, 5
          %v930 = vsel %vm818, %v928, %v929
          %v931 = vld [vmem:[%s316 + $0x8] sm:$0x3]
          %v932 = vld [vmem:[%s316 + $0x14] sm:$0x3]
          %v933 = vld [vmem:[%s316 + $0x20] sm:$0x3]
          %v934 = vld [vmem:[%s316 + $0x2c] sm:$0x3]
          %v935 = vld [vmem:[%s316 + $0x38] sm:$0x3]
          %v936 = vld [vmem:[%s316 + $0x44] sm:$0x3]
          %v937 = vld [vmem:[%s316 + $0x50] sm:$0x3]
          %v938 = vld [vmem:[%s316 + $0x5c] sm:$0x3]
          %v939 = vld [vmem:[%s316 + $0x68] sm:$0x3]
          %v940 = vld [vmem:[%s316 + $0x74] sm:$0x3]
          %v941 = vld [vmem:[%s316 + $0x80] sm:$0x3]
          %v942 = vld [vmem:[%s316 + $0x8c] sm:$0x3]
          %v943 = vld [vmem:[%s316 + $0x98] sm:$0x3]
          %v944 = vld [vmem:[%s316 + $0xa4] sm:$0x3]
          %v945 = vld [vmem:[%s316 + $0xb0] sm:$0x3]
          %v946 = vld [vmem:[%s316 + $0xbc] sm:$0x3]
          %vm947 = vsmask.f32 2304
          %vm948 = vsmask.f32 6416
          %vm949 = vmor %vm947, %vm948
          %v951 = vshrl.u32 %v752, 16
          %v953 = vrot.slane %v951, 5
          %v954 = vshll.u32 %v752, 16
          %v956 = vrot.slane %v954, 6
          %v957 = vor.u32 %v953, %v956
          %v958 = vrot.slane %v957, 4
          %v959 = vrot.slane %v382, 5
          %v960 = vrot.slane %v378, 6
          %v961 = vor.u32 %v959, %v960
          %v962 = vsel %vm949, %v958, %v961
          %v963 = vrot.slane %v961, 4
          %v965 = vshrl.u32 %v931, 16
          %v967 = vrot.slane %v965, 5
          %v968 = vshll.u32 %v931, 16
          %v970 = vrot.slane %v968, 6
          %v971 = vor.u32 %v967, %v970
          %v972 = vsel %vm949, %v963, %v971
          %v974 = vshrl.u32 %v753, 16
          %v976 = vrot.slane %v974, 5
          %v977 = vshll.u32 %v753, 16
          %v979 = vrot.slane %v977, 6
          %v980 = vor.u32 %v976, %v979
          %v981 = vrot.slane %v980, 4
          %v982 = vrot.slane %v406, 5
          %v983 = vrot.slane %v402, 6
          %v984 = vor.u32 %v982, %v983
          %v985 = vsel %vm949, %v981, %v984
          %v986 = vrot.slane %v984, 4
          %v988 = vshrl.u32 %v932, 16
          %v990 = vrot.slane %v988, 5
          %v991 = vshll.u32 %v932, 16
          %v993 = vrot.slane %v991, 6
          %v994 = vor.u32 %v990, %v993
          %v995 = vsel %vm949, %v986, %v994
          %v997 = vshrl.u32 %v754, 16
          %v999 = vrot.slane %v997, 5
          %v1000 = vshll.u32 %v754, 16
          %v1002 = vrot.slane %v1000, 6
          %v1003 = vor.u32 %v999, %v1002
          %v1004 = vrot.slane %v1003, 4
          %v1005 = vrot.slane %v430, 5
          %v1006 = vrot.slane %v426, 6
          %v1007 = vor.u32 %v1005, %v1006
          %v1008 = vsel %vm949, %v1004, %v1007
          %v1009 = vrot.slane %v1007, 4
          %v1011 = vshrl.u32 %v933, 16
          %v1013 = vrot.slane %v1011, 5
          %v1014 = vshll.u32 %v933, 16
          %v1016 = vrot.slane %v1014, 6
          %v1017 = vor.u32 %v1013, %v1016
          %v1018 = vsel %vm949, %v1009, %v1017
          %v1020 = vshrl.u32 %v755, 16
          %v1022 = vrot.slane %v1020, 5
          %v1023 = vshll.u32 %v755, 16
          %v1025 = vrot.slane %v1023, 6
          %v1026 = vor.u32 %v1022, %v1025
          %v1027 = vrot.slane %v1026, 4
          %v1028 = vrot.slane %v454, 5
          %v1029 = vrot.slane %v450, 6
          %v1030 = vor.u32 %v1028, %v1029
          %v1031 = vsel %vm949, %v1027, %v1030
          %v1032 = vrot.slane %v1030, 4
          %v1034 = vshrl.u32 %v934, 16
          %v1036 = vrot.slane %v1034, 5
          %v1037 = vshll.u32 %v934, 16
          %v1039 = vrot.slane %v1037, 6
          %v1040 = vor.u32 %v1036, %v1039
          %v1041 = vsel %vm949, %v1032, %v1040
          %v1043 = vshrl.u32 %v756, 16
          %v1045 = vrot.slane %v1043, 5
          %v1046 = vshll.u32 %v756, 16
          %v1048 = vrot.slane %v1046, 6
          %v1049 = vor.u32 %v1045, %v1048
          %v1050 = vrot.slane %v1049, 4
          %v1051 = vrot.slane %v478, 5
          %v1052 = vrot.slane %v474, 6
          %v1053 = vor.u32 %v1051, %v1052
          %v1054 = vsel %vm949, %v1050, %v1053
          %v1055 = vrot.slane %v1053, 4
          %v1057 = vshrl.u32 %v935, 16
          %v1059 = vrot.slane %v1057, 5
          %v1060 = vshll.u32 %v935, 16
          %v1062 = vrot.slane %v1060, 6
          %v1063 = vor.u32 %v1059, %v1062
          %v1064 = vsel %vm949, %v1055, %v1063
          %v1066 = vshrl.u32 %v757, 16
          %v1068 = vrot.slane %v1066, 5
          %v1069 = vshll.u32 %v757, 16
          %v1071 = vrot.slane %v1069, 6
          %v1072 = vor.u32 %v1068, %v1071
          %v1073 = vrot.slane %v1072, 4
          %v1074 = vrot.slane %v502, 5
          %v1075 = vrot.slane %v498, 6
          %v1076 = vor.u32 %v1074, %v1075
          %v1077 = vsel %vm949, %v1073, %v1076
          %v1078 = vrot.slane %v1076, 4
          %v1080 = vshrl.u32 %v936, 16
          %v1082 = vrot.slane %v1080, 5
          %v1083 = vshll.u32 %v936, 16
          %v1085 = vrot.slane %v1083, 6
          %v1086 = vor.u32 %v1082, %v1085
          %v1087 = vsel %vm949, %v1078, %v1086
          %v1089 = vshrl.u32 %v758, 16
          %v1091 = vrot.slane %v1089, 5
          %v1092 = vshll.u32 %v758, 16
          %v1094 = vrot.slane %v1092, 6
          %v1095 = vor.u32 %v1091, %v1094
          %v1096 = vrot.slane %v1095, 4
          %v1097 = vrot.slane %v526, 5
          %v1098 = vrot.slane %v522, 6
          %v1099 = vor.u32 %v1097, %v1098
          %v1100 = vsel %vm949, %v1096, %v1099
          %v1101 = vrot.slane %v1099, 4
          %v1103 = vshrl.u32 %v937, 16
          %v1105 = vrot.slane %v1103, 5
          %v1106 = vshll.u32 %v937, 16
          %v1108 = vrot.slane %v1106, 6
          %v1109 = vor.u32 %v1105, %v1108
          %v1110 = vsel %vm949, %v1101, %v1109
          %v1112 = vshrl.u32 %v759, 16
          %v1114 = vrot.slane %v1112, 5
          %v1115 = vshll.u32 %v759, 16
          %v1117 = vrot.slane %v1115, 6
          %v1118 = vor.u32 %v1114, %v1117
          %v1119 = vrot.slane %v1118, 4
          %v1120 = vrot.slane %v550, 5
          %v1121 = vrot.slane %v546, 6
          %v1122 = vor.u32 %v1120, %v1121
          %v1123 = vsel %vm949, %v1119, %v1122
          %v1124 = vrot.slane %v1122, 4
          %v1126 = vshrl.u32 %v938, 16
          %v1128 = vrot.slane %v1126, 5
          %v1129 = vshll.u32 %v938, 16
          %v1131 = vrot.slane %v1129, 6
          %v1132 = vor.u32 %v1128, %v1131
          %v1133 = vsel %vm949, %v1124, %v1132
          %v1135 = vshrl.u32 %v760, 16
          %v1137 = vrot.slane %v1135, 5
          %v1138 = vshll.u32 %v760, 16
          %v1140 = vrot.slane %v1138, 6
          %v1141 = vor.u32 %v1137, %v1140
          %v1142 = vrot.slane %v1141, 4
          %v1143 = vrot.slane %v574, 5
          %v1144 = vrot.slane %v570, 6
          %v1145 = vor.u32 %v1143, %v1144
          %v1146 = vsel %vm949, %v1142, %v1145
          %v1147 = vrot.slane %v1145, 4
          %v1149 = vshrl.u32 %v939, 16
          %v1151 = vrot.slane %v1149, 5
          %v1152 = vshll.u32 %v939, 16
          %v1154 = vrot.slane %v1152, 6
          %v1155 = vor.u32 %v1151, %v1154
          %v1156 = vsel %vm949, %v1147, %v1155
          %v1158 = vshrl.u32 %v761, 16
          %v1160 = vrot.slane %v1158, 5
          %v1161 = vshll.u32 %v761, 16
          %v1163 = vrot.slane %v1161, 6
          %v1164 = vor.u32 %v1160, %v1163
          %v1165 = vrot.slane %v1164, 4
          %v1166 = vrot.slane %v598, 5
          %v1167 = vrot.slane %v594, 6
          %v1168 = vor.u32 %v1166, %v1167
          %v1169 = vsel %vm949, %v1165, %v1168
          %v1170 = vrot.slane %v1168, 4
          %v1172 = vshrl.u32 %v940, 16
          %v1174 = vrot.slane %v1172, 5
          %v1175 = vshll.u32 %v940, 16
          %v1177 = vrot.slane %v1175, 6
          %v1178 = vor.u32 %v1174, %v1177
          %v1179 = vsel %vm949, %v1170, %v1178
          %v1181 = vshrl.u32 %v762, 16
          %v1183 = vrot.slane %v1181, 5
          %v1184 = vshll.u32 %v762, 16
          %v1186 = vrot.slane %v1184, 6
          %v1187 = vor.u32 %v1183, %v1186
          %v1188 = vrot.slane %v1187, 4
          %v1189 = vrot.slane %v622, 5
          %v1190 = vrot.slane %v618, 6
          %v1191 = vor.u32 %v1189, %v1190
          %v1192 = vsel %vm949, %v1188, %v1191
          %v1193 = vrot.slane %v1191, 4
          %v1195 = vshrl.u32 %v941, 16
          %v1197 = vrot.slane %v1195, 5
          %v1198 = vshll.u32 %v941, 16
          %v1200 = vrot.slane %v1198, 6
          %v1201 = vor.u32 %v1197, %v1200
          %v1202 = vsel %vm949, %v1193, %v1201
          %v1204 = vshrl.u32 %v763, 16
          %v1206 = vrot.slane %v1204, 5
          %v1207 = vshll.u32 %v763, 16
          %v1209 = vrot.slane %v1207, 6
          %v1210 = vor.u32 %v1206, %v1209
          %v1211 = vrot.slane %v1210, 4
          %v1212 = vrot.slane %v646, 5
          %v1213 = vrot.slane %v642, 6
          %v1214 = vor.u32 %v1212, %v1213
          %v1215 = vsel %vm949, %v1211, %v1214
          %v1216 = vrot.slane %v1214, 4
          %v1218 = vshrl.u32 %v942, 16
          %v1220 = vrot.slane %v1218, 5
          %v1221 = vshll.u32 %v942, 16
          %v1223 = vrot.slane %v1221, 6
          %v1224 = vor.u32 %v1220, %v1223
          %v1225 = vsel %vm949, %v1216, %v1224
          %v1227 = vshrl.u32 %v764, 16
          %v1229 = vrot.slane %v1227, 5
          %v1230 = vshll.u32 %v764, 16
          %v1232 = vrot.slane %v1230, 6
          %v1233 = vor.u32 %v1229, %v1232
          %v1234 = vrot.slane %v1233, 4
          %v1235 = vrot.slane %v670, 5
          %v1236 = vrot.slane %v666, 6
          %v1237 = vor.u32 %v1235, %v1236
          %v1238 = vsel %vm949, %v1234, %v1237
          %v1239 = vrot.slane %v1237, 4
          %v1241 = vshrl.u32 %v943, 16
          %v1243 = vrot.slane %v1241, 5
          %v1244 = vshll.u32 %v943, 16
          %v1246 = vrot.slane %v1244, 6
          %v1247 = vor.u32 %v1243, %v1246
          %v1248 = vsel %vm949, %v1239, %v1247
          %v1250 = vshrl.u32 %v765, 16
          %v1252 = vrot.slane %v1250, 5
          %v1253 = vshll.u32 %v765, 16
          %v1255 = vrot.slane %v1253, 6
          %v1256 = vor.u32 %v1252, %v1255
          %v1257 = vrot.slane %v1256, 4
          %v1258 = vrot.slane %v694, 5
          %v1259 = vrot.slane %v690, 6
          %v1260 = vor.u32 %v1258, %v1259
          %v1261 = vsel %vm949, %v1257, %v1260
          %v1262 = vrot.slane %v1260, 4
          %v1264 = vshrl.u32 %v944, 16
          %v1266 = vrot.slane %v1264, 5
          %v1267 = vshll.u32 %v944, 16
          %v1269 = vrot.slane %v1267, 6
          %v1270 = vor.u32 %v1266, %v1269
          %v1271 = vsel %vm949, %v1262, %v1270
          %v1273 = vshrl.u32 %v766, 16
          %v1275 = vrot.slane %v1273, 5
          %v1276 = vshll.u32 %v766, 16
          %v1278 = vrot.slane %v1276, 6
          %v1279 = vor.u32 %v1275, %v1278
          %v1280 = vrot.slane %v1279, 4
          %v1281 = vrot.slane %v718, 5
          %v1282 = vrot.slane %v714, 6
          %v1283 = vor.u32 %v1281, %v1282
          %v1284 = vsel %vm949, %v1280, %v1283
          %v1285 = vrot.slane %v1283, 4
          %v1287 = vshrl.u32 %v945, 16
          %v1289 = vrot.slane %v1287, 5
          %v1290 = vshll.u32 %v945, 16
          %v1292 = vrot.slane %v1290, 6
          %v1293 = vor.u32 %v1289, %v1292
          %v1294 = vsel %vm949, %v1285, %v1293
          %v1296 = vshrl.u32 %v767, 16
          %v1298 = vrot.slane %v1296, 5
          %v1299 = vshll.u32 %v767, 16
          %v1301 = vrot.slane %v1299, 6
          %v1302 = vor.u32 %v1298, %v1301
          %v1303 = vrot.slane %v1302, 4
          %v1304 = vrot.slane %v742, 5
          %v1305 = vrot.slane %v738, 6
          %v1306 = vor.u32 %v1304, %v1305
          %v1307 = vsel %vm949, %v1303, %v1306
          %v1308 = vrot.slane %v1306, 4
          %v1310 = vshrl.u32 %v946, 16
          %v1312 = vrot.slane %v1310, 5
          %v1313 = vshll.u32 %v946, 16
          %v1315 = vrot.slane %v1313, 6
          %v1316 = vor.u32 %v1312, %v1315
          %v1317 = vsel %vm949, %v1308, %v1316
          %s1318 = scalar_lea.vmem %s303, 24
          %v1319 = vld [vmem:[%s1318] sm:$0xf]
          %v1320 = vld [vmem:[%s1318 + $0x4] sm:$0xf]
          %v1321 = vld [vmem:[%s1318 + $0x8] sm:$0x1]
          %v1322 = vld [vmem:[%s1318 + $0xc] sm:$0xf]
          %v1323 = vld [vmem:[%s1318 + $0x10] sm:$0xf]
          %v1324 = vld [vmem:[%s1318 + $0x14] sm:$0x1]
          %v1325 = vld [vmem:[%s1318 + $0x18] sm:$0xf]
          %v1326 = vld [vmem:[%s1318 + $0x1c] sm:$0xf]
          %v1327 = vld [vmem:[%s1318 + $0x20] sm:$0x1]
          %v1328 = vld [vmem:[%s1318 + $0x24] sm:$0xf]
          %v1329 = vld [vmem:[%s1318 + $0x28] sm:$0xf]
          %v1330 = vld [vmem:[%s1318 + $0x2c] sm:$0x1]
          %v1331 = vld [vmem:[%s1318 + $0x30] sm:$0xf]
          %v1332 = vld [vmem:[%s1318 + $0x34] sm:$0xf]
          %v1333 = vld [vmem:[%s1318 + $0x38] sm:$0x1]
          %v1334 = vld [vmem:[%s1318 + $0x3c] sm:$0xf]
          %v1335 = vld [vmem:[%s1318 + $0x40] sm:$0xf]
          %v1336 = vld [vmem:[%s1318 + $0x44] sm:$0x1]
          %v1337 = vld [vmem:[%s1318 + $0x48] sm:$0xf]
          %v1338 = vld [vmem:[%s1318 + $0x4c] sm:$0xf]
          %v1339 = vld [vmem:[%s1318 + $0x50] sm:$0x1]
          %v1340 = vld [vmem:[%s1318 + $0x54] sm:$0xf]
          %v1341 = vld [vmem:[%s1318 + $0x58] sm:$0xf]
          %v1342 = vld [vmem:[%s1318 + $0x5c] sm:$0x1]
          %v1343 = vld [vmem:[%s1318 + $0x60] sm:$0xf]
          %v1344 = vld [vmem:[%s1318 + $0x64] sm:$0xf]
          %v1345 = vld [vmem:[%s1318 + $0x68] sm:$0x1]
          %v1346 = vld [vmem:[%s1318 + $0x6c] sm:$0xf]
          %v1347 = vld [vmem:[%s1318 + $0x70] sm:$0xf]
          %v1348 = vld [vmem:[%s1318 + $0x74] sm:$0x1]
          %v1349 = vld [vmem:[%s1318 + $0x78] sm:$0xf]
          %v1350 = vld [vmem:[%s1318 + $0x7c] sm:$0xf]
          %v1351 = vld [vmem:[%s1318 + $0x80] sm:$0x1]
          %v1352 = vld [vmem:[%s1318 + $0x84] sm:$0xf]
          %v1353 = vld [vmem:[%s1318 + $0x88] sm:$0xf]
          %v1354 = vld [vmem:[%s1318 + $0x8c] sm:$0x1]
          %v1355 = vld [vmem:[%s1318 + $0x90] sm:$0xf]
          %v1356 = vld [vmem:[%s1318 + $0x94] sm:$0xf]
          %v1357 = vld [vmem:[%s1318 + $0x98] sm:$0x1]
          %v1358 = vld [vmem:[%s1318 + $0x9c] sm:$0xf]
          %v1359 = vld [vmem:[%s1318 + $0xa0] sm:$0xf]
          %v1360 = vld [vmem:[%s1318 + $0xa4] sm:$0x1]
          %v1361 = vld [vmem:[%s1318 + $0xa8] sm:$0xf]
          %v1362 = vld [vmem:[%s1318 + $0xac] sm:$0xf]
          %v1363 = vld [vmem:[%s1318 + $0xb0] sm:$0x1]
          %v1364 = vld [vmem:[%s1318 + $0xb4] sm:$0xf]
          %v1365 = vld [vmem:[%s1318 + $0xb8] sm:$0xf]
          %v1366 = vld [vmem:[%s1318 + $0xbc] sm:$0x1]
          %v1368 = vshrl.u32 %v1319, 16
          %v1370 = vrot.slane %v1368, 4
          %v1371 = vshll.u32 %v1319, 16
          %v1373 = vrot.slane %v1371, 5
          %v1374 = vor.u32 %v1370, %v1373
          %v1375 = vrot.slane %v1374, 4
          %v1377 = vshll.u32 %v1320, 16
          %v1379 = vrot.slane %v1377, 5
          %v1380 = vsel %vm367, %v1375, %v1379
          %v1381 = vshrl.u32 %v1320, 16
          %v1383 = vrot.slane %v1381, 4
          %v1384 = vor.u32 %v1383, %v1379
          %v1385 = vrot.slane %v1384, 4
          %v1387 = vshll.u32 %v1321, 16
          %v1389 = vrot.slane %v1387, 5
          %v1390 = vsel %vm367, %v1385, %v1389
          %v1392 = vshrl.u32 %v1322, 16
          %v1394 = vrot.slane %v1392, 4
          %v1395 = vshll.u32 %v1322, 16
          %v1397 = vrot.slane %v1395, 5
          %v1398 = vor.u32 %v1394, %v1397
          %v1399 = vrot.slane %v1398, 4
          %v1401 = vshll.u32 %v1323, 16
          %v1403 = vrot.slane %v1401, 5
          %v1404 = vsel %vm367, %v1399, %v1403
          %v1405 = vshrl.u32 %v1323, 16
          %v1407 = vrot.slane %v1405, 4
          %v1408 = vor.u32 %v1407, %v1403
          %v1409 = vrot.slane %v1408, 4
          %v1411 = vshll.u32 %v1324, 16
          %v1413 = vrot.slane %v1411, 5
          %v1414 = vsel %vm367, %v1409, %v1413
          %v1416 = vshrl.u32 %v1325, 16
          %v1418 = vrot.slane %v1416, 4
          %v1419 = vshll.u32 %v1325, 16
          %v1421 = vrot.slane %v1419, 5
          %v1422 = vor.u32 %v1418, %v1421
          %v1423 = vrot.slane %v1422, 4
          %v1425 = vshll.u32 %v1326, 16
          %v1427 = vrot.slane %v1425, 5
          %v1428 = vsel %vm367, %v1423, %v1427
          %v1429 = vshrl.u32 %v1326, 16
          %v1431 = vrot.slane %v1429, 4
          %v1432 = vor.u32 %v1431, %v1427
          %v1433 = vrot.slane %v1432, 4
          %v1435 = vshll.u32 %v1327, 16
          %v1437 = vrot.slane %v1435, 5
          %v1438 = vsel %vm367, %v1433, %v1437
          %v1440 = vshrl.u32 %v1328, 16
          %v1442 = vrot.slane %v1440, 4
          %v1443 = vshll.u32 %v1328, 16
          %v1445 = vrot.slane %v1443, 5
          %v1446 = vor.u32 %v1442, %v1445
          %v1447 = vrot.slane %v1446, 4
          %v1449 = vshll.u32 %v1329, 16
          %v1451 = vrot.slane %v1449, 5
          %v1452 = vsel %vm367, %v1447, %v1451
          %v1453 = vshrl.u32 %v1329, 16
          %v1455 = vrot.slane %v1453, 4
          %v1456 = vor.u32 %v1455, %v1451
          %v1457 = vrot.slane %v1456, 4
          %v1459 = vshll.u32 %v1330, 16
          %v1461 = vrot.slane %v1459, 5
          %v1462 = vsel %vm367, %v1457, %v1461
          %v1464 = vshrl.u32 %v1331, 16
          %v1466 = vrot.slane %v1464, 4
          %v1467 = vshll.u32 %v1331, 16
          %v1469 = vrot.slane %v1467, 5
          %v1470 = vor.u32 %v1466, %v1469
          %v1471 = vrot.slane %v1470, 4
          %v1473 = vshll.u32 %v1332, 16
          %v1475 = vrot.slane %v1473, 5
          %v1476 = vsel %vm367, %v1471, %v1475
          %v1477 = vshrl.u32 %v1332, 16
          %v1479 = vrot.slane %v1477, 4
          %v1480 = vor.u32 %v1479, %v1475
          %v1481 = vrot.slane %v1480, 4
          %v1483 = vshll.u32 %v1333, 16
          %v1485 = vrot.slane %v1483, 5
          %v1486 = vsel %vm367, %v1481, %v1485
          %v1488 = vshrl.u32 %v1334, 16
          %v1490 = vrot.slane %v1488, 4
          %v1491 = vshll.u32 %v1334, 16
          %v1493 = vrot.slane %v1491, 5
          %v1494 = vor.u32 %v1490, %v1493
          %v1495 = vrot.slane %v1494, 4
          %v1497 = vshll.u32 %v1335, 16
          %v1499 = vrot.slane %v1497, 5
          %v1500 = vsel %vm367, %v1495, %v1499
          %v1501 = vshrl.u32 %v1335, 16
          %v1503 = vrot.slane %v1501, 4
          %v1504 = vor.u32 %v1503, %v1499
          %v1505 = vrot.slane %v1504, 4
          %v1507 = vshll.u32 %v1336, 16
          %v1509 = vrot.slane %v1507, 5
          %v1510 = vsel %vm367, %v1505, %v1509
          %v1512 = vshrl.u32 %v1337, 16
          %v1514 = vrot.slane %v1512, 4
          %v1515 = vshll.u32 %v1337, 16
          %v1517 = vrot.slane %v1515, 5
          %v1518 = vor.u32 %v1514, %v1517
          %v1519 = vrot.slane %v1518, 4
          %v1521 = vshll.u32 %v1338, 16
          %v1523 = vrot.slane %v1521, 5
          %v1524 = vsel %vm367, %v1519, %v1523
          %v1525 = vshrl.u32 %v1338, 16
          %v1527 = vrot.slane %v1525, 4
          %v1528 = vor.u32 %v1527, %v1523
          %v1529 = vrot.slane %v1528, 4
          %v1531 = vshll.u32 %v1339, 16
          %v1533 = vrot.slane %v1531, 5
          %v1534 = vsel %vm367, %v1529, %v1533
          %v1536 = vshrl.u32 %v1340, 16
          %v1538 = vrot.slane %v1536, 4
          %v1539 = vshll.u32 %v1340, 16
          %v1541 = vrot.slane %v1539, 5
          %v1542 = vor.u32 %v1538, %v1541
          %v1543 = vrot.slane %v1542, 4
          %v1545 = vshll.u32 %v1341, 16
          %v1547 = vrot.slane %v1545, 5
          %v1548 = vsel %vm367, %v1543, %v1547
          %v1549 = vshrl.u32 %v1341, 16
          %v1551 = vrot.slane %v1549, 4
          %v1552 = vor.u32 %v1551, %v1547
          %v1553 = vrot.slane %v1552, 4
          %v1555 = vshll.u32 %v1342, 16
          %v1557 = vrot.slane %v1555, 5
          %v1558 = vsel %vm367, %v1553, %v1557
          %v1560 = vshrl.u32 %v1343, 16
          %v1562 = vrot.slane %v1560, 4
          %v1563 = vshll.u32 %v1343, 16
          %v1565 = vrot.slane %v1563, 5
          %v1566 = vor.u32 %v1562, %v1565
          %v1567 = vrot.slane %v1566, 4
          %v1569 = vshll.u32 %v1344, 16
          %v1571 = vrot.slane %v1569, 5
          %v1572 = vsel %vm367, %v1567, %v1571
          %v1573 = vshrl.u32 %v1344, 16
          %v1575 = vrot.slane %v1573, 4
          %v1576 = vor.u32 %v1575, %v1571
          %v1577 = vrot.slane %v1576, 4
          %v1579 = vshll.u32 %v1345, 16
          %v1581 = vrot.slane %v1579, 5
          %v1582 = vsel %vm367, %v1577, %v1581
          %v1584 = vshrl.u32 %v1346, 16
          %v1586 = vrot.slane %v1584, 4
          %v1587 = vshll.u32 %v1346, 16
          %v1589 = vrot.slane %v1587, 5
          %v1590 = vor.u32 %v1586, %v1589
          %v1591 = vrot.slane %v1590, 4
          %v1593 = vshll.u32 %v1347, 16
          %v1595 = vrot.slane %v1593, 5
          %v1596 = vsel %vm367, %v1591, %v1595
          %v1597 = vshrl.u32 %v1347, 16
          %v1599 = vrot.slane %v1597, 4
          %v1600 = vor.u32 %v1599, %v1595
          %v1601 = vrot.slane %v1600, 4
          %v1603 = vshll.u32 %v1348, 16
          %v1605 = vrot.slane %v1603, 5
          %v1606 = vsel %vm367, %v1601, %v1605
          %v1608 = vshrl.u32 %v1349, 16
          %v1610 = vrot.slane %v1608, 4
          %v1611 = vshll.u32 %v1349, 16
          %v1613 = vrot.slane %v1611, 5
          %v1614 = vor.u32 %v1610, %v1613
          %v1615 = vrot.slane %v1614, 4
          %v1617 = vshll.u32 %v1350, 16
          %v1619 = vrot.slane %v1617, 5
          %v1620 = vsel %vm367, %v1615, %v1619
          %v1621 = vshrl.u32 %v1350, 16
          %v1623 = vrot.slane %v1621, 4
          %v1624 = vor.u32 %v1623, %v1619
          %v1625 = vrot.slane %v1624, 4
          %v1627 = vshll.u32 %v1351, 16
          %v1629 = vrot.slane %v1627, 5
          %v1630 = vsel %vm367, %v1625, %v1629
          %v1632 = vshrl.u32 %v1352, 16
          %v1634 = vrot.slane %v1632, 4
          %v1635 = vshll.u32 %v1352, 16
          %v1637 = vrot.slane %v1635, 5
          %v1638 = vor.u32 %v1634, %v1637
          %v1639 = vrot.slane %v1638, 4
          %v1641 = vshll.u32 %v1353, 16
          %v1643 = vrot.slane %v1641, 5
          %v1644 = vsel %vm367, %v1639, %v1643
          %v1645 = vshrl.u32 %v1353, 16
          %v1647 = vrot.slane %v1645, 4
          %v1648 = vor.u32 %v1647, %v1643
          %v1649 = vrot.slane %v1648, 4
          %v1651 = vshll.u32 %v1354, 16
          %v1653 = vrot.slane %v1651, 5
          %v1654 = vsel %vm367, %v1649, %v1653
          %v1656 = vshrl.u32 %v1355, 16
          %v1658 = vrot.slane %v1656, 4
          %v1659 = vshll.u32 %v1355, 16
          %v1661 = vrot.slane %v1659, 5
          %v1662 = vor.u32 %v1658, %v1661
          %v1663 = vrot.slane %v1662, 4
          %v1665 = vshll.u32 %v1356, 16
          %v1667 = vrot.slane %v1665, 5
          %v1668 = vsel %vm367, %v1663, %v1667
          %v1669 = vshrl.u32 %v1356, 16
          %v1671 = vrot.slane %v1669, 4
          %v1672 = vor.u32 %v1671, %v1667
          %v1673 = vrot.slane %v1672, 4
          %v1675 = vshll.u32 %v1357, 16
          %v1677 = vrot.slane %v1675, 5
          %v1678 = vsel %vm367, %v1673, %v1677
          %v1680 = vshrl.u32 %v1358, 16
          %v1682 = vrot.slane %v1680, 4
          %v1683 = vshll.u32 %v1358, 16
          %v1685 = vrot.slane %v1683, 5
          %v1686 = vor.u32 %v1682, %v1685
          %v1687 = vrot.slane %v1686, 4
          %v1689 = vshll.u32 %v1359, 16
          %v1691 = vrot.slane %v1689, 5
          %v1692 = vsel %vm367, %v1687, %v1691
          %v1693 = vshrl.u32 %v1359, 16
          %v1695 = vrot.slane %v1693, 4
          %v1696 = vor.u32 %v1695, %v1691
          %v1697 = vrot.slane %v1696, 4
          %v1699 = vshll.u32 %v1360, 16
          %v1701 = vrot.slane %v1699, 5
          %v1702 = vsel %vm367, %v1697, %v1701
          %v1704 = vshrl.u32 %v1361, 16
          %v1706 = vrot.slane %v1704, 4
          %v1707 = vshll.u32 %v1361, 16
          %v1709 = vrot.slane %v1707, 5
          %v1710 = vor.u32 %v1706, %v1709
          %v1711 = vrot.slane %v1710, 4
          %v1713 = vshll.u32 %v1362, 16
          %v1715 = vrot.slane %v1713, 5
          %v1716 = vsel %vm367, %v1711, %v1715
          %v1717 = vshrl.u32 %v1362, 16
          %v1719 = vrot.slane %v1717, 4
          %v1720 = vor.u32 %v1719, %v1715
          %v1721 = vrot.slane %v1720, 4
          %v1723 = vshll.u32 %v1363, 16
          %v1725 = vrot.slane %v1723, 5
          %v1726 = vsel %vm367, %v1721, %v1725
          %v1728 = vshrl.u32 %v1364, 16
          %v1730 = vrot.slane %v1728, 4
          %v1731 = vshll.u32 %v1364, 16
          %v1733 = vrot.slane %v1731, 5
          %v1734 = vor.u32 %v1730, %v1733
          %v1735 = vrot.slane %v1734, 4
          %v1737 = vshll.u32 %v1365, 16
          %v1739 = vrot.slane %v1737, 5
          %v1740 = vsel %vm367, %v1735, %v1739
          %v1741 = vshrl.u32 %v1365, 16
          %v1743 = vrot.slane %v1741, 4
          %v1744 = vor.u32 %v1743, %v1739
          %v1745 = vrot.slane %v1744, 4
          %v1747 = vshll.u32 %v1366, 16
          %v1749 = vrot.slane %v1747, 5
          %v1750 = vsel %vm367, %v1745, %v1749
          %v1751 = vld [vmem:[%s1318] sm:$0xe]
          %v1752 = vld [vmem:[%s1318 + $0xc] sm:$0xe]
          %v1753 = vld [vmem:[%s1318 + $0x18] sm:$0xe]
          %v1754 = vld [vmem:[%s1318 + $0x24] sm:$0xe]
          %v1755 = vld [vmem:[%s1318 + $0x30] sm:$0xe]
          %v1756 = vld [vmem:[%s1318 + $0x3c] sm:$0xe]
          %v1757 = vld [vmem:[%s1318 + $0x48] sm:$0xe]
          %v1758 = vld [vmem:[%s1318 + $0x54] sm:$0xe]
          %v1759 = vld [vmem:[%s1318 + $0x60] sm:$0xe]
          %v1760 = vld [vmem:[%s1318 + $0x6c] sm:$0xe]
          %v1761 = vld [vmem:[%s1318 + $0x78] sm:$0xe]
          %v1762 = vld [vmem:[%s1318 + $0x84] sm:$0xe]
          %v1763 = vld [vmem:[%s1318 + $0x90] sm:$0xe]
          %v1764 = vld [vmem:[%s1318 + $0x9c] sm:$0xe]
          %v1765 = vld [vmem:[%s1318 + $0xa8] sm:$0xe]
          %v1766 = vld [vmem:[%s1318 + $0xb4] sm:$0xe]
          %v1815 = vrot.slane %v1751, 5
          %v1816 = vrot.slane %v1815, 4
          %v1817 = vrot.slane %v1320, 5
          %v1818 = vsel %vm818, %v1816, %v1817
          %v1819 = vrot.slane %v1817, 4
          %v1820 = vrot.slane %v1321, 5
          %v1821 = vsel %vm818, %v1819, %v1820
          %v1822 = vrot.slane %v1752, 5
          %v1823 = vrot.slane %v1822, 4
          %v1824 = vrot.slane %v1323, 5
          %v1825 = vsel %vm818, %v1823, %v1824
          %v1826 = vrot.slane %v1824, 4
          %v1827 = vrot.slane %v1324, 5
          %v1828 = vsel %vm818, %v1826, %v1827
          %v1829 = vrot.slane %v1753, 5
          %v1830 = vrot.slane %v1829, 4
          %v1831 = vrot.slane %v1326, 5
          %v1832 = vsel %vm818, %v1830, %v1831
          %v1833 = vrot.slane %v1831, 4
          %v1834 = vrot.slane %v1327, 5
          %v1835 = vsel %vm818, %v1833, %v1834
          %v1836 = vrot.slane %v1754, 5
          %v1837 = vrot.slane %v1836, 4
          %v1838 = vrot.slane %v1329, 5
          %v1839 = vsel %vm818, %v1837, %v1838
          %v1840 = vrot.slane %v1838, 4
          %v1841 = vrot.slane %v1330, 5
          %v1842 = vsel %vm818, %v1840, %v1841
          %v1843 = vrot.slane %v1755, 5
          %v1844 = vrot.slane %v1843, 4
          %v1845 = vrot.slane %v1332, 5
          %v1846 = vsel %vm818, %v1844, %v1845
          %v1847 = vrot.slane %v1845, 4
          %v1848 = vrot.slane %v1333, 5
          %v1849 = vsel %vm818, %v1847, %v1848
          %v1850 = vrot.slane %v1756, 5
          %v1851 = vrot.slane %v1850, 4
          %v1852 = vrot.slane %v1335, 5
          %v1853 = vsel %vm818, %v1851, %v1852
          %v1854 = vrot.slane %v1852, 4
          %v1855 = vrot.slane %v1336, 5
          %v1856 = vsel %vm818, %v1854, %v1855
          %v1857 = vrot.slane %v1757, 5
          %v1858 = vrot.slane %v1857, 4
          %v1859 = vrot.slane %v1338, 5
          %v1860 = vsel %vm818, %v1858, %v1859
          %v1861 = vrot.slane %v1859, 4
          %v1862 = vrot.slane %v1339, 5
          %v1863 = vsel %vm818, %v1861, %v1862
          %v1864 = vrot.slane %v1758, 5
          %v1865 = vrot.slane %v1864, 4
          %v1866 = vrot.slane %v1341, 5
          %v1867 = vsel %vm818, %v1865, %v1866
          %v1868 = vrot.slane %v1866, 4
          %v1869 = vrot.slane %v1342, 5
          %v1870 = vsel %vm818, %v1868, %v1869
          %v1871 = vrot.slane %v1759, 5
          %v1872 = vrot.slane %v1871, 4
          %v1873 = vrot.slane %v1344, 5
          %v1874 = vsel %vm818, %v1872, %v1873
          %v1875 = vrot.slane %v1873, 4
          %v1876 = vrot.slane %v1345, 5
          %v1877 = vsel %vm818, %v1875, %v1876
          %v1878 = vrot.slane %v1760, 5
          %v1879 = vrot.slane %v1878, 4
          %v1880 = vrot.slane %v1347, 5
          %v1881 = vsel %vm818, %v1879, %v1880
          %v1882 = vrot.slane %v1880, 4
          %v1883 = vrot.slane %v1348, 5
          %v1884 = vsel %vm818, %v1882, %v1883
          %v1885 = vrot.slane %v1761, 5
          %v1886 = vrot.slane %v1885, 4
          %v1887 = vrot.slane %v1350, 5
          %v1888 = vsel %vm818, %v1886, %v1887
          %v1889 = vrot.slane %v1887, 4
          %v1890 = vrot.slane %v1351, 5
          %v1891 = vsel %vm818, %v1889, %v1890
          %v1892 = vrot.slane %v1762, 5
          %v1893 = vrot.slane %v1892, 4
          %v1894 = vrot.slane %v1353, 5
          %v1895 = vsel %vm818, %v1893, %v1894
          %v1896 = vrot.slane %v1894, 4
          %v1897 = vrot.slane %v1354, 5
          %v1898 = vsel %vm818, %v1896, %v1897
          %v1899 = vrot.slane %v1763, 5
          %v1900 = vrot.slane %v1899, 4
          %v1901 = vrot.slane %v1356, 5
          %v1902 = vsel %vm818, %v1900, %v1901
          %v1903 = vrot.slane %v1901, 4
          %v1904 = vrot.slane %v1357, 5
          %v1905 = vsel %vm818, %v1903, %v1904
          %v1906 = vrot.slane %v1764, 5
          %v1907 = vrot.slane %v1906, 4
          %v1908 = vrot.slane %v1359, 5
          %v1909 = vsel %vm818, %v1907, %v1908
          %v1910 = vrot.slane %v1908, 4
          %v1911 = vrot.slane %v1360, 5
          %v1912 = vsel %vm818, %v1910, %v1911
          %v1913 = vrot.slane %v1765, 5
          %v1914 = vrot.slane %v1913, 4
          %v1915 = vrot.slane %v1362, 5
          %v1916 = vsel %vm818, %v1914, %v1915
          %v1917 = vrot.slane %v1915, 4
          %v1918 = vrot.slane %v1363, 5
          %v1919 = vsel %vm818, %v1917, %v1918
          %v1920 = vrot.slane %v1766, 5
          %v1921 = vrot.slane %v1920, 4
          %v1922 = vrot.slane %v1365, 5
          %v1923 = vsel %vm818, %v1921, %v1922
          %v1924 = vrot.slane %v1922, 4
          %v1925 = vrot.slane %v1366, 5
          %v1926 = vsel %vm818, %v1924, %v1925
          %v1927 = vld [vmem:[%s1318 + $0x8] sm:$0x3]
          %v1928 = vld [vmem:[%s1318 + $0x14] sm:$0x3]
          %v1929 = vld [vmem:[%s1318 + $0x20] sm:$0x3]
          %v1930 = vld [vmem:[%s1318 + $0x2c] sm:$0x3]
          %v1931 = vld [vmem:[%s1318 + $0x38] sm:$0x3]
          %v1932 = vld [vmem:[%s1318 + $0x44] sm:$0x3]
          %v1933 = vld [vmem:[%s1318 + $0x50] sm:$0x3]
          %v1934 = vld [vmem:[%s1318 + $0x5c] sm:$0x3]
          %v1935 = vld [vmem:[%s1318 + $0x68] sm:$0x3]
          %v1936 = vld [vmem:[%s1318 + $0x74] sm:$0x3]
          %v1937 = vld [vmem:[%s1318 + $0x80] sm:$0x3]
          %v1938 = vld [vmem:[%s1318 + $0x8c] sm:$0x3]
          %v1939 = vld [vmem:[%s1318 + $0x98] sm:$0x3]
          %v1940 = vld [vmem:[%s1318 + $0xa4] sm:$0x3]
          %v1941 = vld [vmem:[%s1318 + $0xb0] sm:$0x3]
          %v1942 = vld [vmem:[%s1318 + $0xbc] sm:$0x3]
          %v1944 = vshrl.u32 %v1751, 16
          %v1946 = vrot.slane %v1944, 5
          %v1947 = vshll.u32 %v1751, 16
          %v1949 = vrot.slane %v1947, 6
          %v1950 = vor.u32 %v1946, %v1949
          %v1951 = vrot.slane %v1950, 4
          %v1952 = vrot.slane %v1381, 5
          %v1953 = vrot.slane %v1377, 6
          %v1954 = vor.u32 %v1952, %v1953
          %v1955 = vsel %vm949, %v1951, %v1954
          %v1956 = vrot.slane %v1954, 4
          %v1958 = vshrl.u32 %v1927, 16
          %v1960 = vrot.slane %v1958, 5
          %v1961 = vshll.u32 %v1927, 16
          %v1963 = vrot.slane %v1961, 6
          %v1964 = vor.u32 %v1960, %v1963
          %v1965 = vsel %vm949, %v1956, %v1964
          %v1967 = vshrl.u32 %v1752, 16
          %v1969 = vrot.slane %v1967, 5
          %v1970 = vshll.u32 %v1752, 16
          %v1972 = vrot.slane %v1970, 6
          %v1973 = vor.u32 %v1969, %v1972
          %v1974 = vrot.slane %v1973, 4
          %v1975 = vrot.slane %v1405, 5
          %v1976 = vrot.slane %v1401, 6
          %v1977 = vor.u32 %v1975, %v1976
          %v1978 = vsel %vm949, %v1974, %v1977
          %v1979 = vrot.slane %v1977, 4
          %v1981 = vshrl.u32 %v1928, 16
          %v1983 = vrot.slane %v1981, 5
          %v1984 = vshll.u32 %v1928, 16
          %v1986 = vrot.slane %v1984, 6
          %v1987 = vor.u32 %v1983, %v1986
          %v1988 = vsel %vm949, %v1979, %v1987
          %v1990 = vshrl.u32 %v1753, 16
          %v1992 = vrot.slane %v1990, 5
          %v1993 = vshll.u32 %v1753, 16
          %v1995 = vrot.slane %v1993, 6
          %v1996 = vor.u32 %v1992, %v1995
          %v1997 = vrot.slane %v1996, 4
          %v1998 = vrot.slane %v1429, 5
          %v1999 = vrot.slane %v1425, 6
          %v2000 = vor.u32 %v1998, %v1999
          %v2001 = vsel %vm949, %v1997, %v2000
          %v2002 = vrot.slane %v2000, 4
          %v2004 = vshrl.u32 %v1929, 16
          %v2006 = vrot.slane %v2004, 5
          %v2007 = vshll.u32 %v1929, 16
          %v2009 = vrot.slane %v2007, 6
          %v2010 = vor.u32 %v2006, %v2009
          %v2011 = vsel %vm949, %v2002, %v2010
          %v2013 = vshrl.u32 %v1754, 16
          %v2015 = vrot.slane %v2013, 5
          %v2016 = vshll.u32 %v1754, 16
          %v2018 = vrot.slane %v2016, 6
          %v2019 = vor.u32 %v2015, %v2018
          %v2020 = vrot.slane %v2019, 4
          %v2021 = vrot.slane %v1453, 5
          %v2022 = vrot.slane %v1449, 6
          %v2023 = vor.u32 %v2021, %v2022
          %v2024 = vsel %vm949, %v2020, %v2023
          %v2025 = vrot.slane %v2023, 4
          %v2027 = vshrl.u32 %v1930, 16
          %v2029 = vrot.slane %v2027, 5
          %v2030 = vshll.u32 %v1930, 16
          %v2032 = vrot.slane %v2030, 6
          %v2033 = vor.u32 %v2029, %v2032
          %v2034 = vsel %vm949, %v2025, %v2033
          %v2036 = vshrl.u32 %v1755, 16
          %v2038 = vrot.slane %v2036, 5
          %v2039 = vshll.u32 %v1755, 16
          %v2041 = vrot.slane %v2039, 6
          %v2042 = vor.u32 %v2038, %v2041
          %v2043 = vrot.slane %v2042, 4
          %v2044 = vrot.slane %v1477, 5
          %v2045 = vrot.slane %v1473, 6
          %v2046 = vor.u32 %v2044, %v2045
          %v2047 = vsel %vm949, %v2043, %v2046
          %v2048 = vrot.slane %v2046, 4
          %v2050 = vshrl.u32 %v1931, 16
          %v2052 = vrot.slane %v2050, 5
          %v2053 = vshll.u32 %v1931, 16
          %v2055 = vrot.slane %v2053, 6
          %v2056 = vor.u32 %v2052, %v2055
          %v2057 = vsel %vm949, %v2048, %v2056
          %v2059 = vshrl.u32 %v1756, 16
          %v2061 = vrot.slane %v2059, 5
          %v2062 = vshll.u32 %v1756, 16
          %v2064 = vrot.slane %v2062, 6
          %v2065 = vor.u32 %v2061, %v2064
          %v2066 = vrot.slane %v2065, 4
          %v2067 = vrot.slane %v1501, 5
          %v2068 = vrot.slane %v1497, 6
          %v2069 = vor.u32 %v2067, %v2068
          %v2070 = vsel %vm949, %v2066, %v2069
          %v2071 = vrot.slane %v2069, 4
          %v2073 = vshrl.u32 %v1932, 16
          %v2075 = vrot.slane %v2073, 5
          %v2076 = vshll.u32 %v1932, 16
          %v2078 = vrot.slane %v2076, 6
          %v2079 = vor.u32 %v2075, %v2078
          %v2080 = vsel %vm949, %v2071, %v2079
          %v2082 = vshrl.u32 %v1757, 16
          %v2084 = vrot.slane %v2082, 5
          %v2085 = vshll.u32 %v1757, 16
          %v2087 = vrot.slane %v2085, 6
          %v2088 = vor.u32 %v2084, %v2087
          %v2089 = vrot.slane %v2088, 4
          %v2090 = vrot.slane %v1525, 5
          %v2091 = vrot.slane %v1521, 6
          %v2092 = vor.u32 %v2090, %v2091
          %v2093 = vsel %vm949, %v2089, %v2092
          %v2094 = vrot.slane %v2092, 4
          %v2096 = vshrl.u32 %v1933, 16
          %v2098 = vrot.slane %v2096, 5
          %v2099 = vshll.u32 %v1933, 16
          %v2101 = vrot.slane %v2099, 6
          %v2102 = vor.u32 %v2098, %v2101
          %v2103 = vsel %vm949, %v2094, %v2102
          %v2105 = vshrl.u32 %v1758, 16
          %v2107 = vrot.slane %v2105, 5
          %v2108 = vshll.u32 %v1758, 16
          %v2110 = vrot.slane %v2108, 6
          %v2111 = vor.u32 %v2107, %v2110
          %v2112 = vrot.slane %v2111, 4
          %v2113 = vrot.slane %v1549, 5
          %v2114 = vrot.slane %v1545, 6
          %v2115 = vor.u32 %v2113, %v2114
          %v2116 = vsel %vm949, %v2112, %v2115
          %v2117 = vrot.slane %v2115, 4
          %v2119 = vshrl.u32 %v1934, 16
          %v2121 = vrot.slane %v2119, 5
          %v2122 = vshll.u32 %v1934, 16
          %v2124 = vrot.slane %v2122, 6
          %v2125 = vor.u32 %v2121, %v2124
          %v2126 = vsel %vm949, %v2117, %v2125
          %v2128 = vshrl.u32 %v1759, 16
          %v2130 = vrot.slane %v2128, 5
          %v2131 = vshll.u32 %v1759, 16
          %v2133 = vrot.slane %v2131, 6
          %v2134 = vor.u32 %v2130, %v2133
          %v2135 = vrot.slane %v2134, 4
          %v2136 = vrot.slane %v1573, 5
          %v2137 = vrot.slane %v1569, 6
          %v2138 = vor.u32 %v2136, %v2137
          %v2139 = vsel %vm949, %v2135, %v2138
          %v2140 = vrot.slane %v2138, 4
          %v2142 = vshrl.u32 %v1935, 16
          %v2144 = vrot.slane %v2142, 5
          %v2145 = vshll.u32 %v1935, 16
          %v2147 = vrot.slane %v2145, 6
          %v2148 = vor.u32 %v2144, %v2147
          %v2149 = vsel %vm949, %v2140, %v2148
          %v2151 = vshrl.u32 %v1760, 16
          %v2153 = vrot.slane %v2151, 5
          %v2154 = vshll.u32 %v1760, 16
          %v2156 = vrot.slane %v2154, 6
          %v2157 = vor.u32 %v2153, %v2156
          %v2158 = vrot.slane %v2157, 4
          %v2159 = vrot.slane %v1597, 5
          %v2160 = vrot.slane %v1593, 6
          %v2161 = vor.u32 %v2159, %v2160
          %v2162 = vsel %vm949, %v2158, %v2161
          %v2163 = vrot.slane %v2161, 4
          %v2165 = vshrl.u32 %v1936, 16
          %v2167 = vrot.slane %v2165, 5
          %v2168 = vshll.u32 %v1936, 16
          %v2170 = vrot.slane %v2168, 6
          %v2171 = vor.u32 %v2167, %v2170
          %v2172 = vsel %vm949, %v2163, %v2171
          %v2174 = vshrl.u32 %v1761, 16
          %v2176 = vrot.slane %v2174, 5
          %v2177 = vshll.u32 %v1761, 16
          %v2179 = vrot.slane %v2177, 6
          %v2180 = vor.u32 %v2176, %v2179
          %v2181 = vrot.slane %v2180, 4
          %v2182 = vrot.slane %v1621, 5
          %v2183 = vrot.slane %v1617, 6
          %v2184 = vor.u32 %v2182, %v2183
          %v2185 = vsel %vm949, %v2181, %v2184
          %v2186 = vrot.slane %v2184, 4
          %v2188 = vshrl.u32 %v1937, 16
          %v2190 = vrot.slane %v2188, 5
          %v2191 = vshll.u32 %v1937, 16
          %v2193 = vrot.slane %v2191, 6
          %v2194 = vor.u32 %v2190, %v2193
          %v2195 = vsel %vm949, %v2186, %v2194
          %v2197 = vshrl.u32 %v1762, 16
          %v2199 = vrot.slane %v2197, 5
          %v2200 = vshll.u32 %v1762, 16
          %v2202 = vrot.slane %v2200, 6
          %v2203 = vor.u32 %v2199, %v2202
          %v2204 = vrot.slane %v2203, 4
          %v2205 = vrot.slane %v1645, 5
          %v2206 = vrot.slane %v1641, 6
          %v2207 = vor.u32 %v2205, %v2206
          %v2208 = vsel %vm949, %v2204, %v2207
          %v2209 = vrot.slane %v2207, 4
          %v2211 = vshrl.u32 %v1938, 16
          %v2213 = vrot.slane %v2211, 5
          %v2214 = vshll.u32 %v1938, 16
          %v2216 = vrot.slane %v2214, 6
          %v2217 = vor.u32 %v2213, %v2216
          %v2218 = vsel %vm949, %v2209, %v2217
          %v2220 = vshrl.u32 %v1763, 16
          %v2222 = vrot.slane %v2220, 5
          %v2223 = vshll.u32 %v1763, 16
          %v2225 = vrot.slane %v2223, 6
          %v2226 = vor.u32 %v2222, %v2225
          %v2227 = vrot.slane %v2226, 4
          %v2228 = vrot.slane %v1669, 5
          %v2229 = vrot.slane %v1665, 6
          %v2230 = vor.u32 %v2228, %v2229
          %v2231 = vsel %vm949, %v2227, %v2230
          %v2232 = vrot.slane %v2230, 4
          %v2234 = vshrl.u32 %v1939, 16
          %v2236 = vrot.slane %v2234, 5
          %v2237 = vshll.u32 %v1939, 16
          %v2239 = vrot.slane %v2237, 6
          %v2240 = vor.u32 %v2236, %v2239
          %v2241 = vsel %vm949, %v2232, %v2240
          %v2243 = vshrl.u32 %v1764, 16
          %v2245 = vrot.slane %v2243, 5
          %v2246 = vshll.u32 %v1764, 16
          %v2248 = vrot.slane %v2246, 6
          %v2249 = vor.u32 %v2245, %v2248
          %v2250 = vrot.slane %v2249, 4
          %v2251 = vrot.slane %v1693, 5
          %v2252 = vrot.slane %v1689, 6
          %v2253 = vor.u32 %v2251, %v2252
          %v2254 = vsel %vm949, %v2250, %v2253
          %v2255 = vrot.slane %v2253, 4
          %v2257 = vshrl.u32 %v1940, 16
          %v2259 = vrot.slane %v2257, 5
          %v2260 = vshll.u32 %v1940, 16
          %v2262 = vrot.slane %v2260, 6
          %v2263 = vor.u32 %v2259, %v2262
          %v2264 = vsel %vm949, %v2255, %v2263
          %v2266 = vshrl.u32 %v1765, 16
          %v2268 = vrot.slane %v2266, 5
          %v2269 = vshll.u32 %v1765, 16
          %v2271 = vrot.slane %v2269, 6
          %v2272 = vor.u32 %v2268, %v2271
          %v2273 = vrot.slane %v2272, 4
          %v2274 = vrot.slane %v1717, 5
          %v2275 = vrot.slane %v1713, 6
          %v2276 = vor.u32 %v2274, %v2275
          %v2277 = vsel %vm949, %v2273, %v2276
          %v2278 = vrot.slane %v2276, 4
          %v2280 = vshrl.u32 %v1941, 16
          %v2282 = vrot.slane %v2280, 5
          %v2283 = vshll.u32 %v1941, 16
          %v2285 = vrot.slane %v2283, 6
          %v2286 = vor.u32 %v2282, %v2285
          %v2287 = vsel %vm949, %v2278, %v2286
          %v2289 = vshrl.u32 %v1766, 16
          %v2291 = vrot.slane %v2289, 5
          %v2292 = vshll.u32 %v1766, 16
          %v2294 = vrot.slane %v2292, 6
          %v2295 = vor.u32 %v2291, %v2294
          %v2296 = vrot.slane %v2295, 4
          %v2297 = vrot.slane %v1741, 5
          %v2298 = vrot.slane %v1737, 6
          %v2299 = vor.u32 %v2297, %v2298
          %v2300 = vsel %vm949, %v2296, %v2299
          %v2301 = vrot.slane %v2299, 4
          %v2303 = vshrl.u32 %v1942, 16
          %v2305 = vrot.slane %v2303, 5
          %v2306 = vshll.u32 %v1942, 16
          %v2308 = vrot.slane %v2306, 6
          %v2309 = vor.u32 %v2305, %v2308
          %v2310 = vsel %vm949, %v2301, %v2309
          %s2311 = scalar_lea.vmem %s303, 36
          %v2312 = vld [vmem:[%s2311] sm:$0xf]
          %v2313 = vld [vmem:[%s2311 + $0x4] sm:$0xf]
          %v2314 = vld [vmem:[%s2311 + $0x8] sm:$0x1]
          %v2315 = vld [vmem:[%s2311 + $0xc] sm:$0xf]
          %v2316 = vld [vmem:[%s2311 + $0x10] sm:$0xf]
          %v2317 = vld [vmem:[%s2311 + $0x14] sm:$0x1]
          %v2318 = vld [vmem:[%s2311 + $0x18] sm:$0xf]
          %v2319 = vld [vmem:[%s2311 + $0x1c] sm:$0xf]
          %v2320 = vld [vmem:[%s2311 + $0x20] sm:$0x1]
          %v2321 = vld [vmem:[%s2311 + $0x24] sm:$0xf]
          %v2322 = vld [vmem:[%s2311 + $0x28] sm:$0xf]
          %v2323 = vld [vmem:[%s2311 + $0x2c] sm:$0x1]
          %v2324 = vld [vmem:[%s2311 + $0x30] sm:$0xf]
          %v2325 = vld [vmem:[%s2311 + $0x34] sm:$0xf]
          %v2326 = vld [vmem:[%s2311 + $0x38] sm:$0x1]
          %v2327 = vld [vmem:[%s2311 + $0x3c] sm:$0xf]
          %v2328 = vld [vmem:[%s2311 + $0x40] sm:$0xf]
          %v2329 = vld [vmem:[%s2311 + $0x44] sm:$0x1]
          %v2330 = vld [vmem:[%s2311 + $0x48] sm:$0xf]
          %v2331 = vld [vmem:[%s2311 + $0x4c] sm:$0xf]
          %v2332 = vld [vmem:[%s2311 + $0x50] sm:$0x1]
          %v2333 = vld [vmem:[%s2311 + $0x54] sm:$0xf]
          %v2334 = vld [vmem:[%s2311 + $0x58] sm:$0xf]
          %v2335 = vld [vmem:[%s2311 + $0x5c] sm:$0x1]
          %v2336 = vld [vmem:[%s2311 + $0x60] sm:$0xf]
          %v2337 = vld [vmem:[%s2311 + $0x64] sm:$0xf]
          %v2338 = vld [vmem:[%s2311 + $0x68] sm:$0x1]
          %v2339 = vld [vmem:[%s2311 + $0x6c] sm:$0xf]
          %v2340 = vld [vmem:[%s2311 + $0x70] sm:$0xf]
          %v2341 = vld [vmem:[%s2311 + $0x74] sm:$0x1]
          %v2342 = vld [vmem:[%s2311 + $0x78] sm:$0xf]
          %v2343 = vld [vmem:[%s2311 + $0x7c] sm:$0xf]
          %v2344 = vld [vmem:[%s2311 + $0x80] sm:$0x1]
          %v2345 = vld [vmem:[%s2311 + $0x84] sm:$0xf]
          %v2346 = vld [vmem:[%s2311 + $0x88] sm:$0xf]
          %v2347 = vld [vmem:[%s2311 + $0x8c] sm:$0x1]
          %v2348 = vld [vmem:[%s2311 + $0x90] sm:$0xf]
          %v2349 = vld [vmem:[%s2311 + $0x94] sm:$0xf]
          %v2350 = vld [vmem:[%s2311 + $0x98] sm:$0x1]
          %v2351 = vld [vmem:[%s2311 + $0x9c] sm:$0xf]
          %v2352 = vld [vmem:[%s2311 + $0xa0] sm:$0xf]
          %v2353 = vld [vmem:[%s2311 + $0xa4] sm:$0x1]
          %v2354 = vld [vmem:[%s2311 + $0xa8] sm:$0xf]
          %v2355 = vld [vmem:[%s2311 + $0xac] sm:$0xf]
          %v2356 = vld [vmem:[%s2311 + $0xb0] sm:$0x1]
          %v2357 = vld [vmem:[%s2311 + $0xb4] sm:$0xf]
          %v2358 = vld [vmem:[%s2311 + $0xb8] sm:$0xf]
          %v2359 = vld [vmem:[%s2311 + $0xbc] sm:$0x1]
          %v2361 = vshrl.u32 %v2312, 16
          %v2363 = vrot.slane %v2361, 4
          %v2364 = vshll.u32 %v2312, 16
          %v2366 = vrot.slane %v2364, 5
          %v2367 = vor.u32 %v2363, %v2366
          %v2368 = vrot.slane %v2367, 4
          %v2370 = vshll.u32 %v2313, 16
          %v2372 = vrot.slane %v2370, 5
          %v2373 = vsel %vm367, %v2368, %v2372
          %v2374 = vshrl.u32 %v2313, 16
          %v2376 = vrot.slane %v2374, 4
          %v2377 = vor.u32 %v2376, %v2372
          %v2378 = vrot.slane %v2377, 4
          %v2380 = vshll.u32 %v2314, 16
          %v2382 = vrot.slane %v2380, 5
          %v2383 = vsel %vm367, %v2378, %v2382
          %v2385 = vshrl.u32 %v2315, 16
          %v2387 = vrot.slane %v2385, 4
          %v2388 = vshll.u32 %v2315, 16
          %v2390 = vrot.slane %v2388, 5
          %v2391 = vor.u32 %v2387, %v2390
          %v2392 = vrot.slane %v2391, 4
          %v2394 = vshll.u32 %v2316, 16
          %v2396 = vrot.slane %v2394, 5
          %v2397 = vsel %vm367, %v2392, %v2396
          %v2398 = vshrl.u32 %v2316, 16
          %v2400 = vrot.slane %v2398, 4
          %v2401 = vor.u32 %v2400, %v2396
          %v2402 = vrot.slane %v2401, 4
          %v2404 = vshll.u32 %v2317, 16
          %v2406 = vrot.slane %v2404, 5
          %v2407 = vsel %vm367, %v2402, %v2406
          %v2409 = vshrl.u32 %v2318, 16
          %v2411 = vrot.slane %v2409, 4
          %v2412 = vshll.u32 %v2318, 16
          %v2414 = vrot.slane %v2412, 5
          %v2415 = vor.u32 %v2411, %v2414
          %v2416 = vrot.slane %v2415, 4
          %v2418 = vshll.u32 %v2319, 16
          %v2420 = vrot.slane %v2418, 5
          %v2421 = vsel %vm367, %v2416, %v2420
          %v2422 = vshrl.u32 %v2319, 16
          %v2424 = vrot.slane %v2422, 4
          %v2425 = vor.u32 %v2424, %v2420
          %v2426 = vrot.slane %v2425, 4
          %v2428 = vshll.u32 %v2320, 16
          %v2430 = vrot.slane %v2428, 5
          %v2431 = vsel %vm367, %v2426, %v2430
          %v2433 = vshrl.u32 %v2321, 16
          %v2435 = vrot.slane %v2433, 4
          %v2436 = vshll.u32 %v2321, 16
          %v2438 = vrot.slane %v2436, 5
          %v2439 = vor.u32 %v2435, %v2438
          %v2440 = vrot.slane %v2439, 4
          %v2442 = vshll.u32 %v2322, 16
          %v2444 = vrot.slane %v2442, 5
          %v2445 = vsel %vm367, %v2440, %v2444
          %v2446 = vshrl.u32 %v2322, 16
          %v2448 = vrot.slane %v2446, 4
          %v2449 = vor.u32 %v2448, %v2444
          %v2450 = vrot.slane %v2449, 4
          %v2452 = vshll.u32 %v2323, 16
          %v2454 = vrot.slane %v2452, 5
          %v2455 = vsel %vm367, %v2450, %v2454
          %v2457 = vshrl.u32 %v2324, 16
          %v2459 = vrot.slane %v2457, 4
          %v2460 = vshll.u32 %v2324, 16
          %v2462 = vrot.slane %v2460, 5
          %v2463 = vor.u32 %v2459, %v2462
          %v2464 = vrot.slane %v2463, 4
          %v2466 = vshll.u32 %v2325, 16
          %v2468 = vrot.slane %v2466, 5
          %v2469 = vsel %vm367, %v2464, %v2468
          %v2470 = vshrl.u32 %v2325, 16
          %v2472 = vrot.slane %v2470, 4
          %v2473 = vor.u32 %v2472, %v2468
          %v2474 = vrot.slane %v2473, 4
          %v2476 = vshll.u32 %v2326, 16
          %v2478 = vrot.slane %v2476, 5
          %v2479 = vsel %vm367, %v2474, %v2478
          %v2481 = vshrl.u32 %v2327, 16
          %v2483 = vrot.slane %v2481, 4
          %v2484 = vshll.u32 %v2327, 16
          %v2486 = vrot.slane %v2484, 5
          %v2487 = vor.u32 %v2483, %v2486
          %v2488 = vrot.slane %v2487, 4
          %v2490 = vshll.u32 %v2328, 16
          %v2492 = vrot.slane %v2490, 5
          %v2493 = vsel %vm367, %v2488, %v2492
          %v2494 = vshrl.u32 %v2328, 16
          %v2496 = vrot.slane %v2494, 4
          %v2497 = vor.u32 %v2496, %v2492
          %v2498 = vrot.slane %v2497, 4
          %v2500 = vshll.u32 %v2329, 16
          %v2502 = vrot.slane %v2500, 5
          %v2503 = vsel %vm367, %v2498, %v2502
          %v2505 = vshrl.u32 %v2330, 16
          %v2507 = vrot.slane %v2505, 4
          %v2508 = vshll.u32 %v2330, 16
          %v2510 = vrot.slane %v2508, 5
          %v2511 = vor.u32 %v2507, %v2510
          %v2512 = vrot.slane %v2511, 4
          %v2514 = vshll.u32 %v2331, 16
          %v2516 = vrot.slane %v2514, 5
          %v2517 = vsel %vm367, %v2512, %v2516
          %v2518 = vshrl.u32 %v2331, 16
          %v2520 = vrot.slane %v2518, 4
          %v2521 = vor.u32 %v2520, %v2516
          %v2522 = vrot.slane %v2521, 4
          %v2524 = vshll.u32 %v2332, 16
          %v2526 = vrot.slane %v2524, 5
          %v2527 = vsel %vm367, %v2522, %v2526
          %v2529 = vshrl.u32 %v2333, 16
          %v2531 = vrot.slane %v2529, 4
          %v2532 = vshll.u32 %v2333, 16
          %v2534 = vrot.slane %v2532, 5
          %v2535 = vor.u32 %v2531, %v2534
          %v2536 = vrot.slane %v2535, 4
          %v2538 = vshll.u32 %v2334, 16
          %v2540 = vrot.slane %v2538, 5
          %v2541 = vsel %vm367, %v2536, %v2540
          %v2542 = vshrl.u32 %v2334, 16
          %v2544 = vrot.slane %v2542, 4
          %v2545 = vor.u32 %v2544, %v2540
          %v2546 = vrot.slane %v2545, 4
          %v2548 = vshll.u32 %v2335, 16
          %v2550 = vrot.slane %v2548, 5
          %v2551 = vsel %vm367, %v2546, %v2550
          %v2553 = vshrl.u32 %v2336, 16
          %v2555 = vrot.slane %v2553, 4
          %v2556 = vshll.u32 %v2336, 16
          %v2558 = vrot.slane %v2556, 5
          %v2559 = vor.u32 %v2555, %v2558
          %v2560 = vrot.slane %v2559, 4
          %v2562 = vshll.u32 %v2337, 16
          %v2564 = vrot.slane %v2562, 5
          %v2565 = vsel %vm367, %v2560, %v2564
          %v2566 = vshrl.u32 %v2337, 16
          %v2568 = vrot.slane %v2566, 4
          %v2569 = vor.u32 %v2568, %v2564
          %v2570 = vrot.slane %v2569, 4
          %v2572 = vshll.u32 %v2338, 16
          %v2574 = vrot.slane %v2572, 5
          %v2575 = vsel %vm367, %v2570, %v2574
          %v2577 = vshrl.u32 %v2339, 16
          %v2579 = vrot.slane %v2577, 4
          %v2580 = vshll.u32 %v2339, 16
          %v2582 = vrot.slane %v2580, 5
          %v2583 = vor.u32 %v2579, %v2582
          %v2584 = vrot.slane %v2583, 4
          %v2586 = vshll.u32 %v2340, 16
          %v2588 = vrot.slane %v2586, 5
          %v2589 = vsel %vm367, %v2584, %v2588
          %v2590 = vshrl.u32 %v2340, 16
          %v2592 = vrot.slane %v2590, 4
          %v2593 = vor.u32 %v2592, %v2588
          %v2594 = vrot.slane %v2593, 4
          %v2596 = vshll.u32 %v2341, 16
          %v2598 = vrot.slane %v2596, 5
          %v2599 = vsel %vm367, %v2594, %v2598
          %v2601 = vshrl.u32 %v2342, 16
          %v2603 = vrot.slane %v2601, 4
          %v2604 = vshll.u32 %v2342, 16
          %v2606 = vrot.slane %v2604, 5
          %v2607 = vor.u32 %v2603, %v2606
          %v2608 = vrot.slane %v2607, 4
          %v2610 = vshll.u32 %v2343, 16
          %v2612 = vrot.slane %v2610, 5
          %v2613 = vsel %vm367, %v2608, %v2612
          %v2614 = vshrl.u32 %v2343, 16
          %v2616 = vrot.slane %v2614, 4
          %v2617 = vor.u32 %v2616, %v2612
          %v2618 = vrot.slane %v2617, 4
          %v2620 = vshll.u32 %v2344, 16
          %v2622 = vrot.slane %v2620, 5
          %v2623 = vsel %vm367, %v2618, %v2622
          %v2625 = vshrl.u32 %v2345, 16
          %v2627 = vrot.slane %v2625, 4
          %v2628 = vshll.u32 %v2345, 16
          %v2630 = vrot.slane %v2628, 5
          %v2631 = vor.u32 %v2627, %v2630
          %v2632 = vrot.slane %v2631, 4
          %v2634 = vshll.u32 %v2346, 16
          %v2636 = vrot.slane %v2634, 5
          %v2637 = vsel %vm367, %v2632, %v2636
          %v2638 = vshrl.u32 %v2346, 16
          %v2640 = vrot.slane %v2638, 4
          %v2641 = vor.u32 %v2640, %v2636
          %v2642 = vrot.slane %v2641, 4
          %v2644 = vshll.u32 %v2347, 16
          %v2646 = vrot.slane %v2644, 5
          %v2647 = vsel %vm367, %v2642, %v2646
          %v2649 = vshrl.u32 %v2348, 16
          %v2651 = vrot.slane %v2649, 4
          %v2652 = vshll.u32 %v2348, 16
          %v2654 = vrot.slane %v2652, 5
          %v2655 = vor.u32 %v2651, %v2654
          %v2656 = vrot.slane %v2655, 4
          %v2658 = vshll.u32 %v2349, 16
          %v2660 = vrot.slane %v2658, 5
          %v2661 = vsel %vm367, %v2656, %v2660
          %v2662 = vshrl.u32 %v2349, 16
          %v2664 = vrot.slane %v2662, 4
          %v2665 = vor.u32 %v2664, %v2660
          %v2666 = vrot.slane %v2665, 4
          %v2668 = vshll.u32 %v2350, 16
          %v2670 = vrot.slane %v2668, 5
          %v2671 = vsel %vm367, %v2666, %v2670
          %v2673 = vshrl.u32 %v2351, 16
          %v2675 = vrot.slane %v2673, 4
          %v2676 = vshll.u32 %v2351, 16
          %v2678 = vrot.slane %v2676, 5
          %v2679 = vor.u32 %v2675, %v2678
          %v2680 = vrot.slane %v2679, 4
          %v2682 = vshll.u32 %v2352, 16
          %v2684 = vrot.slane %v2682, 5
          %v2685 = vsel %vm367, %v2680, %v2684
          %v2686 = vshrl.u32 %v2352, 16
          %v2688 = vrot.slane %v2686, 4
          %v2689 = vor.u32 %v2688, %v2684
          %v2690 = vrot.slane %v2689, 4
          %v2692 = vshll.u32 %v2353, 16
          %v2694 = vrot.slane %v2692, 5
          %v2695 = vsel %vm367, %v2690, %v2694
          %v2697 = vshrl.u32 %v2354, 16
          %v2699 = vrot.slane %v2697, 4
          %v2700 = vshll.u32 %v2354, 16
          %v2702 = vrot.slane %v2700, 5
          %v2703 = vor.u32 %v2699, %v2702
          %v2704 = vrot.slane %v2703, 4
          %v2706 = vshll.u32 %v2355, 16
          %v2708 = vrot.slane %v2706, 5
          %v2709 = vsel %vm367, %v2704, %v2708
          %v2710 = vshrl.u32 %v2355, 16
          %v2712 = vrot.slane %v2710, 4
          %v2713 = vor.u32 %v2712, %v2708
          %v2714 = vrot.slane %v2713, 4
          %v2716 = vshll.u32 %v2356, 16
          %v2718 = vrot.slane %v2716, 5
          %v2719 = vsel %vm367, %v2714, %v2718
          %v2721 = vshrl.u32 %v2357, 16
          %v2723 = vrot.slane %v2721, 4
          %v2724 = vshll.u32 %v2357, 16
          %v2726 = vrot.slane %v2724, 5
          %v2727 = vor.u32 %v2723, %v2726
          %v2728 = vrot.slane %v2727, 4
          %v2730 = vshll.u32 %v2358, 16
          %v2732 = vrot.slane %v2730, 5
          %v2733 = vsel %vm367, %v2728, %v2732
          %v2734 = vshrl.u32 %v2358, 16
          %v2736 = vrot.slane %v2734, 4
          %v2737 = vor.u32 %v2736, %v2732
          %v2738 = vrot.slane %v2737, 4
          %v2740 = vshll.u32 %v2359, 16
          %v2742 = vrot.slane %v2740, 5
          %v2743 = vsel %vm367, %v2738, %v2742
          %v2744 = vld [vmem:[%s2311] sm:$0xe]
          %v2745 = vld [vmem:[%s2311 + $0xc] sm:$0xe]
          %v2746 = vld [vmem:[%s2311 + $0x18] sm:$0xe]
          %v2747 = vld [vmem:[%s2311 + $0x24] sm:$0xe]
          %v2748 = vld [vmem:[%s2311 + $0x30] sm:$0xe]
          %v2749 = vld [vmem:[%s2311 + $0x3c] sm:$0xe]
          %v2750 = vld [vmem:[%s2311 + $0x48] sm:$0xe]
          %v2751 = vld [vmem:[%s2311 + $0x54] sm:$0xe]
          %v2752 = vld [vmem:[%s2311 + $0x60] sm:$0xe]
          %v2753 = vld [vmem:[%s2311 + $0x6c] sm:$0xe]
          %v2754 = vld [vmem:[%s2311 + $0x78] sm:$0xe]
          %v2755 = vld [vmem:[%s2311 + $0x84] sm:$0xe]
          %v2756 = vld [vmem:[%s2311 + $0x90] sm:$0xe]
          %v2757 = vld [vmem:[%s2311 + $0x9c] sm:$0xe]
          %v2758 = vld [vmem:[%s2311 + $0xa8] sm:$0xe]
          %v2759 = vld [vmem:[%s2311 + $0xb4] sm:$0xe]
          %v2808 = vrot.slane %v2744, 5
          %v2809 = vrot.slane %v2808, 4
          %v2810 = vrot.slane %v2313, 5
          %v2811 = vsel %vm818, %v2809, %v2810
          %v2812 = vrot.slane %v2810, 4
          %v2813 = vrot.slane %v2314, 5
          %v2814 = vsel %vm818, %v2812, %v2813
          %v2815 = vrot.slane %v2745, 5
          %v2816 = vrot.slane %v2815, 4
          %v2817 = vrot.slane %v2316, 5
          %v2818 = vsel %vm818, %v2816, %v2817
          %v2819 = vrot.slane %v2817, 4
          %v2820 = vrot.slane %v2317, 5
          %v2821 = vsel %vm818, %v2819, %v2820
          %v2822 = vrot.slane %v2746, 5
          %v2823 = vrot.slane %v2822, 4
          %v2824 = vrot.slane %v2319, 5
          %v2825 = vsel %vm818, %v2823, %v2824
          %v2826 = vrot.slane %v2824, 4
          %v2827 = vrot.slane %v2320, 5
          %v2828 = vsel %vm818, %v2826, %v2827
          %v2829 = vrot.slane %v2747, 5
          %v2830 = vrot.slane %v2829, 4
          %v2831 = vrot.slane %v2322, 5
          %v2832 = vsel %vm818, %v2830, %v2831
          %v2833 = vrot.slane %v2831, 4
          %v2834 = vrot.slane %v2323, 5
          %v2835 = vsel %vm818, %v2833, %v2834
          %v2836 = vrot.slane %v2748, 5
          %v2837 = vrot.slane %v2836, 4
          %v2838 = vrot.slane %v2325, 5
          %v2839 = vsel %vm818, %v2837, %v2838
          %v2840 = vrot.slane %v2838, 4
          %v2841 = vrot.slane %v2326, 5
          %v2842 = vsel %vm818, %v2840, %v2841
          %v2843 = vrot.slane %v2749, 5
          %v2844 = vrot.slane %v2843, 4
          %v2845 = vrot.slane %v2328, 5
          %v2846 = vsel %vm818, %v2844, %v2845
          %v2847 = vrot.slane %v2845, 4
          %v2848 = vrot.slane %v2329, 5
          %v2849 = vsel %vm818, %v2847, %v2848
          %v2850 = vrot.slane %v2750, 5
          %v2851 = vrot.slane %v2850, 4
          %v2852 = vrot.slane %v2331, 5
          %v2853 = vsel %vm818, %v2851, %v2852
          %v2854 = vrot.slane %v2852, 4
          %v2855 = vrot.slane %v2332, 5
          %v2856 = vsel %vm818, %v2854, %v2855
          %v2857 = vrot.slane %v2751, 5
          %v2858 = vrot.slane %v2857, 4
          %v2859 = vrot.slane %v2334, 5
          %v2860 = vsel %vm818, %v2858, %v2859
          %v2861 = vrot.slane %v2859, 4
          %v2862 = vrot.slane %v2335, 5
          %v2863 = vsel %vm818, %v2861, %v2862
          %v2864 = vrot.slane %v2752, 5
          %v2865 = vrot.slane %v2864, 4
          %v2866 = vrot.slane %v2337, 5
          %v2867 = vsel %vm818, %v2865, %v2866
          %v2868 = vrot.slane %v2866, 4
          %v2869 = vrot.slane %v2338, 5
          %v2870 = vsel %vm818, %v2868, %v2869
          %v2871 = vrot.slane %v2753, 5
          %v2872 = vrot.slane %v2871, 4
          %v2873 = vrot.slane %v2340, 5
          %v2874 = vsel %vm818, %v2872, %v2873
          %v2875 = vrot.slane %v2873, 4
          %v2876 = vrot.slane %v2341, 5
          %v2877 = vsel %vm818, %v2875, %v2876
          %v2878 = vrot.slane %v2754, 5
          %v2879 = vrot.slane %v2878, 4
          %v2880 = vrot.slane %v2343, 5
          %v2881 = vsel %vm818, %v2879, %v2880
          %v2882 = vrot.slane %v2880, 4
          %v2883 = vrot.slane %v2344, 5
          %v2884 = vsel %vm818, %v2882, %v2883
          %v2885 = vrot.slane %v2755, 5
          %v2886 = vrot.slane %v2885, 4
          %v2887 = vrot.slane %v2346, 5
          %v2888 = vsel %vm818, %v2886, %v2887
          %v2889 = vrot.slane %v2887, 4
          %v2890 = vrot.slane %v2347, 5
          %v2891 = vsel %vm818, %v2889, %v2890
          %v2892 = vrot.slane %v2756, 5
          %v2893 = vrot.slane %v2892, 4
          %v2894 = vrot.slane %v2349, 5
          %v2895 = vsel %vm818, %v2893, %v2894
          %v2896 = vrot.slane %v2894, 4
          %v2897 = vrot.slane %v2350, 5
          %v2898 = vsel %vm818, %v2896, %v2897
          %v2899 = vrot.slane %v2757, 5
          %v2900 = vrot.slane %v2899, 4
          %v2901 = vrot.slane %v2352, 5
          %v2902 = vsel %vm818, %v2900, %v2901
          %v2903 = vrot.slane %v2901, 4
          %v2904 = vrot.slane %v2353, 5
          %v2905 = vsel %vm818, %v2903, %v2904
          %v2906 = vrot.slane %v2758, 5
          %v2907 = vrot.slane %v2906, 4
          %v2908 = vrot.slane %v2355, 5
          %v2909 = vsel %vm818, %v2907, %v2908
          %v2910 = vrot.slane %v2908, 4
          %v2911 = vrot.slane %v2356, 5
          %v2912 = vsel %vm818, %v2910, %v2911
          %v2913 = vrot.slane %v2759, 5
          %v2914 = vrot.slane %v2913, 4
          %v2915 = vrot.slane %v2358, 5
          %v2916 = vsel %vm818, %v2914, %v2915
          %v2917 = vrot.slane %v2915, 4
          %v2918 = vrot.slane %v2359, 5
          %v2919 = vsel %vm818, %v2917, %v2918
          %v2920 = vld [vmem:[%s2311 + $0x8] sm:$0x3]
          %v2921 = vld [vmem:[%s2311 + $0x14] sm:$0x3]
          %v2922 = vld [vmem:[%s2311 + $0x20] sm:$0x3]
          %v2923 = vld [vmem:[%s2311 + $0x2c] sm:$0x3]
          %v2924 = vld [vmem:[%s2311 + $0x38] sm:$0x3]
          %v2925 = vld [vmem:[%s2311 + $0x44] sm:$0x3]
          %v2926 = vld [vmem:[%s2311 + $0x50] sm:$0x3]
          %v2927 = vld [vmem:[%s2311 + $0x5c] sm:$0x3]
          %v2928 = vld [vmem:[%s2311 + $0x68] sm:$0x3]
          %v2929 = vld [vmem:[%s2311 + $0x74] sm:$0x3]
          %v2930 = vld [vmem:[%s2311 + $0x80] sm:$0x3]
          %v2931 = vld [vmem:[%s2311 + $0x8c] sm:$0x3]
          %v2932 = vld [vmem:[%s2311 + $0x98] sm:$0x3]
          %v2933 = vld [vmem:[%s2311 + $0xa4] sm:$0x3]
          %v2934 = vld [vmem:[%s2311 + $0xb0] sm:$0x3]
          %v2935 = vld [vmem:[%s2311 + $0xbc] sm:$0x3]
          %v2937 = vshrl.u32 %v2744, 16
          %v2939 = vrot.slane %v2937, 5
          %v2940 = vshll.u32 %v2744, 16
          %v2942 = vrot.slane %v2940, 6
          %v2943 = vor.u32 %v2939, %v2942
          %v2944 = vrot.slane %v2943, 4
          %v2945 = vrot.slane %v2374, 5
          %v2946 = vrot.slane %v2370, 6
          %v2947 = vor.u32 %v2945, %v2946
          %v2948 = vsel %vm949, %v2944, %v2947
          %v2949 = vrot.slane %v2947, 4
          %v2951 = vshrl.u32 %v2920, 16
          %v2953 = vrot.slane %v2951, 5
          %v2954 = vshll.u32 %v2920, 16
          %v2956 = vrot.slane %v2954, 6
          %v2957 = vor.u32 %v2953, %v2956
          %v2958 = vsel %vm949, %v2949, %v2957
          %v2960 = vshrl.u32 %v2745, 16
          %v2962 = vrot.slane %v2960, 5
          %v2963 = vshll.u32 %v2745, 16
          %v2965 = vrot.slane %v2963, 6
          %v2966 = vor.u32 %v2962, %v2965
          %v2967 = vrot.slane %v2966, 4
          %v2968 = vrot.slane %v2398, 5
          %v2969 = vrot.slane %v2394, 6
          %v2970 = vor.u32 %v2968, %v2969
          %v2971 = vsel %vm949, %v2967, %v2970
          %v2972 = vrot.slane %v2970, 4
          %v2974 = vshrl.u32 %v2921, 16
          %v2976 = vrot.slane %v2974, 5
          %v2977 = vshll.u32 %v2921, 16
          %v2979 = vrot.slane %v2977, 6
          %v2980 = vor.u32 %v2976, %v2979
          %v2981 = vsel %vm949, %v2972, %v2980
          %v2983 = vshrl.u32 %v2746, 16
          %v2985 = vrot.slane %v2983, 5
          %v2986 = vshll.u32 %v2746, 16
          %v2988 = vrot.slane %v2986, 6
          %v2989 = vor.u32 %v2985, %v2988
          %v2990 = vrot.slane %v2989, 4
          %v2991 = vrot.slane %v2422, 5
          %v2992 = vrot.slane %v2418, 6
          %v2993 = vor.u32 %v2991, %v2992
          %v2994 = vsel %vm949, %v2990, %v2993
          %v2995 = vrot.slane %v2993, 4
          %v2997 = vshrl.u32 %v2922, 16
          %v2999 = vrot.slane %v2997, 5
          %v3000 = vshll.u32 %v2922, 16
          %v3002 = vrot.slane %v3000, 6
          %v3003 = vor.u32 %v2999, %v3002
          %v3004 = vsel %vm949, %v2995, %v3003
          %v3006 = vshrl.u32 %v2747, 16
          %v3008 = vrot.slane %v3006, 5
          %v3009 = vshll.u32 %v2747, 16
          %v3011 = vrot.slane %v3009, 6
          %v3012 = vor.u32 %v3008, %v3011
          %v3013 = vrot.slane %v3012, 4
          %v3014 = vrot.slane %v2446, 5
          %v3015 = vrot.slane %v2442, 6
          %v3016 = vor.u32 %v3014, %v3015
          %v3017 = vsel %vm949, %v3013, %v3016
          %v3018 = vrot.slane %v3016, 4
          %v3020 = vshrl.u32 %v2923, 16
          %v3022 = vrot.slane %v3020, 5
          %v3023 = vshll.u32 %v2923, 16
          %v3025 = vrot.slane %v3023, 6
          %v3026 = vor.u32 %v3022, %v3025
          %v3027 = vsel %vm949, %v3018, %v3026
          %v3029 = vshrl.u32 %v2748, 16
          %v3031 = vrot.slane %v3029, 5
          %v3032 = vshll.u32 %v2748, 16
          %v3034 = vrot.slane %v3032, 6
          %v3035 = vor.u32 %v3031, %v3034
          %v3036 = vrot.slane %v3035, 4
          %v3037 = vrot.slane %v2470, 5
          %v3038 = vrot.slane %v2466, 6
          %v3039 = vor.u32 %v3037, %v3038
          %v3040 = vsel %vm949, %v3036, %v3039
          %v3041 = vrot.slane %v3039, 4
          %v3043 = vshrl.u32 %v2924, 16
          %v3045 = vrot.slane %v3043, 5
          %v3046 = vshll.u32 %v2924, 16
          %v3048 = vrot.slane %v3046, 6
          %v3049 = vor.u32 %v3045, %v3048
          %v3050 = vsel %vm949, %v3041, %v3049
          %v3052 = vshrl.u32 %v2749, 16
          %v3054 = vrot.slane %v3052, 5
          %v3055 = vshll.u32 %v2749, 16
          %v3057 = vrot.slane %v3055, 6
          %v3058 = vor.u32 %v3054, %v3057
          %v3059 = vrot.slane %v3058, 4
          %v3060 = vrot.slane %v2494, 5
          %v3061 = vrot.slane %v2490, 6
          %v3062 = vor.u32 %v3060, %v3061
          %v3063 = vsel %vm949, %v3059, %v3062
          %v3064 = vrot.slane %v3062, 4
          %v3066 = vshrl.u32 %v2925, 16
          %v3068 = vrot.slane %v3066, 5
          %v3069 = vshll.u32 %v2925, 16
          %v3071 = vrot.slane %v3069, 6
          %v3072 = vor.u32 %v3068, %v3071
          %v3073 = vsel %vm949, %v3064, %v3072
          %v3075 = vshrl.u32 %v2750, 16
          %v3077 = vrot.slane %v3075, 5
          %v3078 = vshll.u32 %v2750, 16
          %v3080 = vrot.slane %v3078, 6
          %v3081 = vor.u32 %v3077, %v3080
          %v3082 = vrot.slane %v3081, 4
          %v3083 = vrot.slane %v2518, 5
          %v3084 = vrot.slane %v2514, 6
          %v3085 = vor.u32 %v3083, %v3084
          %v3086 = vsel %vm949, %v3082, %v3085
          %v3087 = vrot.slane %v3085, 4
          %v3089 = vshrl.u32 %v2926, 16
          %v3091 = vrot.slane %v3089, 5
          %v3092 = vshll.u32 %v2926, 16
          %v3094 = vrot.slane %v3092, 6
          %v3095 = vor.u32 %v3091, %v3094
          %v3096 = vsel %vm949, %v3087, %v3095
          %v3098 = vshrl.u32 %v2751, 16
          %v3100 = vrot.slane %v3098, 5
          %v3101 = vshll.u32 %v2751, 16
          %v3103 = vrot.slane %v3101, 6
          %v3104 = vor.u32 %v3100, %v3103
          %v3105 = vrot.slane %v3104, 4
          %v3106 = vrot.slane %v2542, 5
          %v3107 = vrot.slane %v2538, 6
          %v3108 = vor.u32 %v3106, %v3107
          %v3109 = vsel %vm949, %v3105, %v3108
          %v3110 = vrot.slane %v3108, 4
          %v3112 = vshrl.u32 %v2927, 16
          %v3114 = vrot.slane %v3112, 5
          %v3115 = vshll.u32 %v2927, 16
          %v3117 = vrot.slane %v3115, 6
          %v3118 = vor.u32 %v3114, %v3117
          %v3119 = vsel %vm949, %v3110, %v3118
          %v3121 = vshrl.u32 %v2752, 16
          %v3123 = vrot.slane %v3121, 5
          %v3124 = vshll.u32 %v2752, 16
          %v3126 = vrot.slane %v3124, 6
          %v3127 = vor.u32 %v3123, %v3126
          %v3128 = vrot.slane %v3127, 4
          %v3129 = vrot.slane %v2566, 5
          %v3130 = vrot.slane %v2562, 6
          %v3131 = vor.u32 %v3129, %v3130
          %v3132 = vsel %vm949, %v3128, %v3131
          %v3133 = vrot.slane %v3131, 4
          %v3135 = vshrl.u32 %v2928, 16
          %v3137 = vrot.slane %v3135, 5
          %v3138 = vshll.u32 %v2928, 16
          %v3140 = vrot.slane %v3138, 6
          %v3141 = vor.u32 %v3137, %v3140
          %v3142 = vsel %vm949, %v3133, %v3141
          %v3144 = vshrl.u32 %v2753, 16
          %v3146 = vrot.slane %v3144, 5
          %v3147 = vshll.u32 %v2753, 16
          %v3149 = vrot.slane %v3147, 6
          %v3150 = vor.u32 %v3146, %v3149
          %v3151 = vrot.slane %v3150, 4
          %v3152 = vrot.slane %v2590, 5
          %v3153 = vrot.slane %v2586, 6
          %v3154 = vor.u32 %v3152, %v3153
          %v3155 = vsel %vm949, %v3151, %v3154
          %v3156 = vrot.slane %v3154, 4
          %v3158 = vshrl.u32 %v2929, 16
          %v3160 = vrot.slane %v3158, 5
          %v3161 = vshll.u32 %v2929, 16
          %v3163 = vrot.slane %v3161, 6
          %v3164 = vor.u32 %v3160, %v3163
          %v3165 = vsel %vm949, %v3156, %v3164
          %v3167 = vshrl.u32 %v2754, 16
          %v3169 = vrot.slane %v3167, 5
          %v3170 = vshll.u32 %v2754, 16
          %v3172 = vrot.slane %v3170, 6
          %v3173 = vor.u32 %v3169, %v3172
          %v3174 = vrot.slane %v3173, 4
          %v3175 = vrot.slane %v2614, 5
          %v3176 = vrot.slane %v2610, 6
          %v3177 = vor.u32 %v3175, %v3176
          %v3178 = vsel %vm949, %v3174, %v3177
          %v3179 = vrot.slane %v3177, 4
          %v3181 = vshrl.u32 %v2930, 16
          %v3183 = vrot.slane %v3181, 5
          %v3184 = vshll.u32 %v2930, 16
          %v3186 = vrot.slane %v3184, 6
          %v3187 = vor.u32 %v3183, %v3186
          %v3188 = vsel %vm949, %v3179, %v3187
          %v3190 = vshrl.u32 %v2755, 16
          %v3192 = vrot.slane %v3190, 5
          %v3193 = vshll.u32 %v2755, 16
          %v3195 = vrot.slane %v3193, 6
          %v3196 = vor.u32 %v3192, %v3195
          %v3197 = vrot.slane %v3196, 4
          %v3198 = vrot.slane %v2638, 5
          %v3199 = vrot.slane %v2634, 6
          %v3200 = vor.u32 %v3198, %v3199
          %v3201 = vsel %vm949, %v3197, %v3200
          %v3202 = vrot.slane %v3200, 4
          %v3204 = vshrl.u32 %v2931, 16
          %v3206 = vrot.slane %v3204, 5
          %v3207 = vshll.u32 %v2931, 16
          %v3209 = vrot.slane %v3207, 6
          %v3210 = vor.u32 %v3206, %v3209
          %v3211 = vsel %vm949, %v3202, %v3210
          %v3213 = vshrl.u32 %v2756, 16
          %v3215 = vrot.slane %v3213, 5
          %v3216 = vshll.u32 %v2756, 16
          %v3218 = vrot.slane %v3216, 6
          %v3219 = vor.u32 %v3215, %v3218
          %v3220 = vrot.slane %v3219, 4
          %v3221 = vrot.slane %v2662, 5
          %v3222 = vrot.slane %v2658, 6
          %v3223 = vor.u32 %v3221, %v3222
          %v3224 = vsel %vm949, %v3220, %v3223
          %v3225 = vrot.slane %v3223, 4
          %v3227 = vshrl.u32 %v2932, 16
          %v3229 = vrot.slane %v3227, 5
          %v3230 = vshll.u32 %v2932, 16
          %v3232 = vrot.slane %v3230, 6
          %v3233 = vor.u32 %v3229, %v3232
          %v3234 = vsel %vm949, %v3225, %v3233
          %v3236 = vshrl.u32 %v2757, 16
          %v3238 = vrot.slane %v3236, 5
          %v3239 = vshll.u32 %v2757, 16
          %v3241 = vrot.slane %v3239, 6
          %v3242 = vor.u32 %v3238, %v3241
          %v3243 = vrot.slane %v3242, 4
          %v3244 = vrot.slane %v2686, 5
          %v3245 = vrot.slane %v2682, 6
          %v3246 = vor.u32 %v3244, %v3245
          %v3247 = vsel %vm949, %v3243, %v3246
          %v3248 = vrot.slane %v3246, 4
          %v3250 = vshrl.u32 %v2933, 16
          %v3252 = vrot.slane %v3250, 5
          %v3253 = vshll.u32 %v2933, 16
          %v3255 = vrot.slane %v3253, 6
          %v3256 = vor.u32 %v3252, %v3255
          %v3257 = vsel %vm949, %v3248, %v3256
          %v3259 = vshrl.u32 %v2758, 16
          %v3261 = vrot.slane %v3259, 5
          %v3262 = vshll.u32 %v2758, 16
          %v3264 = vrot.slane %v3262, 6
          %v3265 = vor.u32 %v3261, %v3264
          %v3266 = vrot.slane %v3265, 4
          %v3267 = vrot.slane %v2710, 5
          %v3268 = vrot.slane %v2706, 6
          %v3269 = vor.u32 %v3267, %v3268
          %v3270 = vsel %vm949, %v3266, %v3269
          %v3271 = vrot.slane %v3269, 4
          %v3273 = vshrl.u32 %v2934, 16
          %v3275 = vrot.slane %v3273, 5
          %v3276 = vshll.u32 %v2934, 16
          %v3278 = vrot.slane %v3276, 6
          %v3279 = vor.u32 %v3275, %v3278
          %v3280 = vsel %vm949, %v3271, %v3279
          %v3282 = vshrl.u32 %v2759, 16
          %v3284 = vrot.slane %v3282, 5
          %v3285 = vshll.u32 %v2759, 16
          %v3287 = vrot.slane %v3285, 6
          %v3288 = vor.u32 %v3284, %v3287
          %v3289 = vrot.slane %v3288, 4
          %v3290 = vrot.slane %v2734, 5
          %v3291 = vrot.slane %v2730, 6
          %v3292 = vor.u32 %v3290, %v3291
          %v3293 = vsel %vm949, %v3289, %v3292
          %v3294 = vrot.slane %v3292, 4
          %v3296 = vshrl.u32 %v2935, 16
          %v3298 = vrot.slane %v3296, 5
          %v3299 = vshll.u32 %v2935, 16
          %v3301 = vrot.slane %v3299, 6
          %v3302 = vor.u32 %v3298, %v3301
          %v3303 = vsel %vm949, %v3294, %v3302
          %v3304 = vunpack.c.l.b16 %v381
          %v3305 = vunpack.c.l.b16 %v391
          %v3306 = vunpack.c.l.b16 %v405
          %v3307 = vunpack.c.l.b16 %v415
          %v3308 = vunpack.c.l.b16 %v429
          %v3309 = vunpack.c.l.b16 %v439
          %v3310 = vunpack.c.l.b16 %v453
          %v3311 = vunpack.c.l.b16 %v463
          %v3312 = vunpack.c.l.b16 %v477
          %v3313 = vunpack.c.l.b16 %v487
          %v3314 = vunpack.c.l.b16 %v501
          %v3315 = vunpack.c.l.b16 %v511
          %v3316 = vunpack.c.l.b16 %v525
          %v3317 = vunpack.c.l.b16 %v535
          %v3318 = vunpack.c.l.b16 %v549
          %v3319 = vunpack.c.l.b16 %v559
          %v3320 = vunpack.c.l.b16 %v573
          %v3321 = vunpack.c.l.b16 %v583
          %v3322 = vunpack.c.l.b16 %v597
          %v3323 = vunpack.c.l.b16 %v607
          %v3324 = vunpack.c.l.b16 %v621
          %v3325 = vunpack.c.l.b16 %v631
          %v3326 = vunpack.c.l.b16 %v645
          %v3327 = vunpack.c.l.b16 %v655
          %v3328 = vunpack.c.l.b16 %v669
          %v3329 = vunpack.c.l.b16 %v679
          %v3330 = vunpack.c.l.b16 %v693
          %v3331 = vunpack.c.l.b16 %v703
          %v3332 = vunpack.c.l.b16 %v717
          %v3333 = vunpack.c.l.b16 %v727
          %v3334 = vunpack.c.l.b16 %v741
          %v3335 = vunpack.c.l.b16 %v751
          %v3336 = vpack.c.b16 %v3305, %v3304
          %v3337 = vpack.c.b16 %v3307, %v3306
          %v3338 = vpack.c.b16 %v3309, %v3308
          %v3339 = vpack.c.b16 %v3311, %v3310
          %v3340 = vpack.c.b16 %v3313, %v3312
          %v3341 = vpack.c.b16 %v3315, %v3314
          %v3342 = vpack.c.b16 %v3317, %v3316
          %v3343 = vpack.c.b16 %v3319, %v3318
          %v3344 = vpack.c.b16 %v3321, %v3320
          %v3345 = vpack.c.b16 %v3323, %v3322
          %v3346 = vpack.c.b16 %v3325, %v3324
          %v3347 = vpack.c.b16 %v3327, %v3326
          %v3348 = vpack.c.b16 %v3329, %v3328
          %v3349 = vpack.c.b16 %v3331, %v3330
          %v3350 = vpack.c.b16 %v3333, %v3332
          %v3351 = vpack.c.b16 %v3335, %v3334
          %v3352 = vunpack.c.l.b16 %v822
          %v3353 = vunpack.c.l.b16 %v825
          %v3354 = vunpack.c.l.b16 %v829
          %v3355 = vunpack.c.l.b16 %v832
          %v3356 = vunpack.c.l.b16 %v836
          %v3357 = vunpack.c.l.b16 %v839
          %v3358 = vunpack.c.l.b16 %v843
          %v3359 = vunpack.c.l.b16 %v846
          %v3360 = vunpack.c.l.b16 %v850
          %v3361 = vunpack.c.l.b16 %v853
          %v3362 = vunpack.c.l.b16 %v857
          %v3363 = vunpack.c.l.b16 %v860
          %v3364 = vunpack.c.l.b16 %v864
          %v3365 = vunpack.c.l.b16 %v867
          %v3366 = vunpack.c.l.b16 %v871
          %v3367 = vunpack.c.l.b16 %v874
          %v3368 = vunpack.c.l.b16 %v878
          %v3369 = vunpack.c.l.b16 %v881
          %v3370 = vunpack.c.l.b16 %v885
          %v3371 = vunpack.c.l.b16 %v888
          %v3372 = vunpack.c.l.b16 %v892
          %v3373 = vunpack.c.l.b16 %v895
          %v3374 = vunpack.c.l.b16 %v899
          %v3375 = vunpack.c.l.b16 %v902
          %v3376 = vunpack.c.l.b16 %v906
          %v3377 = vunpack.c.l.b16 %v909
          %v3378 = vunpack.c.l.b16 %v913
          %v3379 = vunpack.c.l.b16 %v916
          %v3380 = vunpack.c.l.b16 %v920
          %v3381 = vunpack.c.l.b16 %v923
          %v3382 = vunpack.c.l.b16 %v927
          %v3383 = vunpack.c.l.b16 %v930
          %v3384 = vpack.c.b16 %v3353, %v3352
          %v3385 = vpack.c.b16 %v3355, %v3354
          %v3386 = vpack.c.b16 %v3357, %v3356
          %v3387 = vpack.c.b16 %v3359, %v3358
          %v3388 = vpack.c.b16 %v3361, %v3360
          %v3389 = vpack.c.b16 %v3363, %v3362
          %v3390 = vpack.c.b16 %v3365, %v3364
          %v3391 = vpack.c.b16 %v3367, %v3366
          %v3392 = vpack.c.b16 %v3369, %v3368
          %v3393 = vpack.c.b16 %v3371, %v3370
          %v3394 = vpack.c.b16 %v3373, %v3372
          %v3395 = vpack.c.b16 %v3375, %v3374
          %v3396 = vpack.c.b16 %v3377, %v3376
          %v3397 = vpack.c.b16 %v3379, %v3378
          %v3398 = vpack.c.b16 %v3381, %v3380
          %v3399 = vpack.c.b16 %v3383, %v3382
          %3400 = vrot.lane.b32.xlu0 %v3384, 64
          %v3401 = vpop.permute.xlu0 %3400
          %3402 = vrot.lane.b32.xlu0 %v3385, 64
          %v3403 = vpop.permute.xlu0 %3402
          %3404 = vrot.lane.b32.xlu0 %v3386, 64
          %v3405 = vpop.permute.xlu0 %3404
          %3406 = vrot.lane.b32.xlu0 %v3387, 64
          %v3407 = vpop.permute.xlu0 %3406
          %3408 = vrot.lane.b32.xlu0 %v3388, 64
          %v3409 = vpop.permute.xlu0 %3408
          %3410 = vrot.lane.b32.xlu0 %v3389, 64
          %v3411 = vpop.permute.xlu0 %3410
          %3412 = vrot.lane.b32.xlu0 %v3390, 64
          %v3413 = vpop.permute.xlu0 %3412
          %3414 = vrot.lane.b32.xlu0 %v3391, 64
          %v3415 = vpop.permute.xlu0 %3414
          %3416 = vrot.lane.b32.xlu0 %v3392, 64
          %v3417 = vpop.permute.xlu0 %3416
          %3418 = vrot.lane.b32.xlu0 %v3393, 64
          %v3419 = vpop.permute.xlu0 %3418
          %3420 = vrot.lane.b32.xlu0 %v3394, 64
          %v3421 = vpop.permute.xlu0 %3420
          %3422 = vrot.lane.b32.xlu0 %v3395, 64
          %v3423 = vpop.permute.xlu0 %3422
          %3424 = vrot.lane.b32.xlu0 %v3396, 64
          %v3425 = vpop.permute.xlu0 %3424
          %3426 = vrot.lane.b32.xlu0 %v3397, 64
          %v3427 = vpop.permute.xlu0 %3426
          %3428 = vrot.lane.b32.xlu0 %v3398, 64
          %v3429 = vpop.permute.xlu0 %3428
          %3430 = vrot.lane.b32.xlu0 %v3399, 64
          %v3431 = vpop.permute.xlu0 %3430
          %v3432 = vunpack.c.l.b16 %v962
          %v3433 = vunpack.c.l.b16 %v972
          %v3434 = vunpack.c.l.b16 %v985
          %v3435 = vunpack.c.l.b16 %v995
          %v3436 = vunpack.c.l.b16 %v1008
          %v3437 = vunpack.c.l.b16 %v1018
          %v3438 = vunpack.c.l.b16 %v1031
          %v3439 = vunpack.c.l.b16 %v1041
          %v3440 = vunpack.c.l.b16 %v1054
          %v3441 = vunpack.c.l.b16 %v1064
          %v3442 = vunpack.c.l.b16 %v1077
          %v3443 = vunpack.c.l.b16 %v1087
          %v3444 = vunpack.c.l.b16 %v1100
          %v3445 = vunpack.c.l.b16 %v1110
          %v3446 = vunpack.c.l.b16 %v1123
          %v3447 = vunpack.c.l.b16 %v1133
          %v3448 = vunpack.c.l.b16 %v1146
          %v3449 = vunpack.c.l.b16 %v1156
          %v3450 = vunpack.c.l.b16 %v1169
          %v3451 = vunpack.c.l.b16 %v1179
          %v3452 = vunpack.c.l.b16 %v1192
          %v3453 = vunpack.c.l.b16 %v1202
          %v3454 = vunpack.c.l.b16 %v1215
          %v3455 = vunpack.c.l.b16 %v1225
          %v3456 = vunpack.c.l.b16 %v1238
          %v3457 = vunpack.c.l.b16 %v1248
          %v3458 = vunpack.c.l.b16 %v1261
          %v3459 = vunpack.c.l.b16 %v1271
          %v3460 = vunpack.c.l.b16 %v1284
          %v3461 = vunpack.c.l.b16 %v1294
          %v3462 = vunpack.c.l.b16 %v1307
          %v3463 = vunpack.c.l.b16 %v1317
          %v3464 = vpack.c.b16 %v3433, %v3432
          %v3465 = vpack.c.b16 %v3435, %v3434
          %v3466 = vpack.c.b16 %v3437, %v3436
          %v3467 = vpack.c.b16 %v3439, %v3438
          %v3468 = vpack.c.b16 %v3441, %v3440
          %v3469 = vpack.c.b16 %v3443, %v3442
          %v3470 = vpack.c.b16 %v3445, %v3444
          %v3471 = vpack.c.b16 %v3447, %v3446
          %v3472 = vpack.c.b16 %v3449, %v3448
          %v3473 = vpack.c.b16 %v3451, %v3450
          %v3474 = vpack.c.b16 %v3453, %v3452
          %v3475 = vpack.c.b16 %v3455, %v3454
          %v3476 = vpack.c.b16 %v3457, %v3456
          %v3477 = vpack.c.b16 %v3459, %v3458
          %v3478 = vpack.c.b16 %v3461, %v3460
          %v3479 = vpack.c.b16 %v3463, %v3462
          %v3480 = vunpack.c.l.b16 %v1380
          %v3481 = vunpack.c.l.b16 %v1390
          %v3482 = vunpack.c.l.b16 %v1404
          %v3483 = vunpack.c.l.b16 %v1414
          %v3484 = vunpack.c.l.b16 %v1428
          %v3485 = vunpack.c.l.b16 %v1438
          %v3486 = vunpack.c.l.b16 %v1452
          %v3487 = vunpack.c.l.b16 %v1462
          %v3488 = vunpack.c.l.b16 %v1476
          %v3489 = vunpack.c.l.b16 %v1486
          %v3490 = vunpack.c.l.b16 %v1500
          %v3491 = vunpack.c.l.b16 %v1510
          %v3492 = vunpack.c.l.b16 %v1524
          %v3493 = vunpack.c.l.b16 %v1534
          %v3494 = vunpack.c.l.b16 %v1548
          %v3495 = vunpack.c.l.b16 %v1558
          %v3496 = vunpack.c.l.b16 %v1572
          %v3497 = vunpack.c.l.b16 %v1582
          %v3498 = vunpack.c.l.b16 %v1596
          %v3499 = vunpack.c.l.b16 %v1606
          %v3500 = vunpack.c.l.b16 %v1620
          %v3501 = vunpack.c.l.b16 %v1630
          %v3502 = vunpack.c.l.b16 %v1644
          %v3503 = vunpack.c.l.b16 %v1654
          %v3504 = vunpack.c.l.b16 %v1668
          %v3505 = vunpack.c.l.b16 %v1678
          %v3506 = vunpack.c.l.b16 %v1692
          %v3507 = vunpack.c.l.b16 %v1702
          %v3508 = vunpack.c.l.b16 %v1716
          %v3509 = vunpack.c.l.b16 %v1726
          %v3510 = vunpack.c.l.b16 %v1740
          %v3511 = vunpack.c.l.b16 %v1750
          %v3512 = vpack.c.b16 %v3481, %v3480
          %v3513 = vpack.c.b16 %v3483, %v3482
          %v3514 = vpack.c.b16 %v3485, %v3484
          %v3515 = vpack.c.b16 %v3487, %v3486
          %v3516 = vpack.c.b16 %v3489, %v3488
          %v3517 = vpack.c.b16 %v3491, %v3490
          %v3518 = vpack.c.b16 %v3493, %v3492
          %v3519 = vpack.c.b16 %v3495, %v3494
          %v3520 = vpack.c.b16 %v3497, %v3496
          %v3521 = vpack.c.b16 %v3499, %v3498
          %v3522 = vpack.c.b16 %v3501, %v3500
          %v3523 = vpack.c.b16 %v3503, %v3502
          %v3524 = vpack.c.b16 %v3505, %v3504
          %v3525 = vpack.c.b16 %v3507, %v3506
          %v3526 = vpack.c.b16 %v3509, %v3508
          %v3527 = vpack.c.b16 %v3511, %v3510
          %3528 = vrot.lane.b32.xlu0 %v3512, 64
          %v3529 = vpop.permute.xlu0 %3528
          %3530 = vrot.lane.b32.xlu0 %v3513, 64
          %v3531 = vpop.permute.xlu0 %3530
          %3532 = vrot.lane.b32.xlu0 %v3514, 64
          %v3533 = vpop.permute.xlu0 %3532
          %3534 = vrot.lane.b32.xlu0 %v3515, 64
          %v3535 = vpop.permute.xlu0 %3534
          %3536 = vrot.lane.b32.xlu0 %v3516, 64
          %v3537 = vpop.permute.xlu0 %3536
          %3538 = vrot.lane.b32.xlu0 %v3517, 64
          %v3539 = vpop.permute.xlu0 %3538
          %3540 = vrot.lane.b32.xlu0 %v3518, 64
          %v3541 = vpop.permute.xlu0 %3540
          %3542 = vrot.lane.b32.xlu0 %v3519, 64
          %v3543 = vpop.permute.xlu0 %3542
          %3544 = vrot.lane.b32.xlu0 %v3520, 64
          %v3545 = vpop.permute.xlu0 %3544
          %3546 = vrot.lane.b32.xlu0 %v3521, 64
          %v3547 = vpop.permute.xlu0 %3546
          %3548 = vrot.lane.b32.xlu0 %v3522, 64
          %v3549 = vpop.permute.xlu0 %3548
          %3550 = vrot.lane.b32.xlu0 %v3523, 64
          %v3551 = vpop.permute.xlu0 %3550
          %3552 = vrot.lane.b32.xlu0 %v3524, 64
          %v3553 = vpop.permute.xlu0 %3552
          %3554 = vrot.lane.b32.xlu0 %v3525, 64
          %v3555 = vpop.permute.xlu0 %3554
          %3556 = vrot.lane.b32.xlu0 %v3526, 64
          %v3557 = vpop.permute.xlu0 %3556
          %3558 = vrot.lane.b32.xlu0 %v3527, 64
          %v3559 = vpop.permute.xlu0 %3558
          %v3560 = vunpack.c.l.b16 %v1818
          %v3561 = vunpack.c.l.b16 %v1821
          %v3562 = vunpack.c.l.b16 %v1825
          %v3563 = vunpack.c.l.b16 %v1828
          %v3564 = vunpack.c.l.b16 %v1832
          %v3565 = vunpack.c.l.b16 %v1835
          %v3566 = vunpack.c.l.b16 %v1839
          %v3567 = vunpack.c.l.b16 %v1842
          %v3568 = vunpack.c.l.b16 %v1846
          %v3569 = vunpack.c.l.b16 %v1849
          %v3570 = vunpack.c.l.b16 %v1853
          %v3571 = vunpack.c.l.b16 %v1856
          %v3572 = vunpack.c.l.b16 %v1860
          %v3573 = vunpack.c.l.b16 %v1863
          %v3574 = vunpack.c.l.b16 %v1867
          %v3575 = vunpack.c.l.b16 %v1870
          %v3576 = vunpack.c.l.b16 %v1874
          %v3577 = vunpack.c.l.b16 %v1877
          %v3578 = vunpack.c.l.b16 %v1881
          %v3579 = vunpack.c.l.b16 %v1884
          %v3580 = vunpack.c.l.b16 %v1888
          %v3581 = vunpack.c.l.b16 %v1891
          %v3582 = vunpack.c.l.b16 %v1895
          %v3583 = vunpack.c.l.b16 %v1898
          %v3584 = vunpack.c.l.b16 %v1902
          %v3585 = vunpack.c.l.b16 %v1905
          %v3586 = vunpack.c.l.b16 %v1909
          %v3587 = vunpack.c.l.b16 %v1912
          %v3588 = vunpack.c.l.b16 %v1916
          %v3589 = vunpack.c.l.b16 %v1919
          %v3590 = vunpack.c.l.b16 %v1923
          %v3591 = vunpack.c.l.b16 %v1926
          %v3592 = vpack.c.b16 %v3561, %v3560
          %v3593 = vpack.c.b16 %v3563, %v3562
          %v3594 = vpack.c.b16 %v3565, %v3564
          %v3595 = vpack.c.b16 %v3567, %v3566
          %v3596 = vpack.c.b16 %v3569, %v3568
          %v3597 = vpack.c.b16 %v3571, %v3570
          %v3598 = vpack.c.b16 %v3573, %v3572
          %v3599 = vpack.c.b16 %v3575, %v3574
          %v3600 = vpack.c.b16 %v3577, %v3576
          %v3601 = vpack.c.b16 %v3579, %v3578
          %v3602 = vpack.c.b16 %v3581, %v3580
          %v3603 = vpack.c.b16 %v3583, %v3582
          %v3604 = vpack.c.b16 %v3585, %v3584
          %v3605 = vpack.c.b16 %v3587, %v3586
          %v3606 = vpack.c.b16 %v3589, %v3588
          %v3607 = vpack.c.b16 %v3591, %v3590
          %v3608 = vunpack.c.l.b16 %v1955
          %v3609 = vunpack.c.l.b16 %v1965
          %v3610 = vunpack.c.l.b16 %v1978
          %v3611 = vunpack.c.l.b16 %v1988
          %v3612 = vunpack.c.l.b16 %v2001
          %v3613 = vunpack.c.l.b16 %v2011
          %v3614 = vunpack.c.l.b16 %v2024
          %v3615 = vunpack.c.l.b16 %v2034
          %v3616 = vunpack.c.l.b16 %v2047
          %v3617 = vunpack.c.l.b16 %v2057
          %v3618 = vunpack.c.l.b16 %v2070
          %v3619 = vunpack.c.l.b16 %v2080
          %v3620 = vunpack.c.l.b16 %v2093
          %v3621 = vunpack.c.l.b16 %v2103
          %v3622 = vunpack.c.l.b16 %v2116
          %v3623 = vunpack.c.l.b16 %v2126
          %v3624 = vunpack.c.l.b16 %v2139
          %v3625 = vunpack.c.l.b16 %v2149
          %v3626 = vunpack.c.l.b16 %v2162
          %v3627 = vunpack.c.l.b16 %v2172
          %v3628 = vunpack.c.l.b16 %v2185
          %v3629 = vunpack.c.l.b16 %v2195
          %v3630 = vunpack.c.l.b16 %v2208
          %v3631 = vunpack.c.l.b16 %v2218
          %v3632 = vunpack.c.l.b16 %v2231
          %v3633 = vunpack.c.l.b16 %v2241
          %v3634 = vunpack.c.l.b16 %v2254
          %v3635 = vunpack.c.l.b16 %v2264
          %v3636 = vunpack.c.l.b16 %v2277
          %v3637 = vunpack.c.l.b16 %v2287
          %v3638 = vunpack.c.l.b16 %v2300
          %v3639 = vunpack.c.l.b16 %v2310
          %v3640 = vpack.c.b16 %v3609, %v3608
          %v3641 = vpack.c.b16 %v3611, %v3610
          %v3642 = vpack.c.b16 %v3613, %v3612
          %v3643 = vpack.c.b16 %v3615, %v3614
          %v3644 = vpack.c.b16 %v3617, %v3616
          %v3645 = vpack.c.b16 %v3619, %v3618
          %v3646 = vpack.c.b16 %v3621, %v3620
          %v3647 = vpack.c.b16 %v3623, %v3622
          %v3648 = vpack.c.b16 %v3625, %v3624
          %v3649 = vpack.c.b16 %v3627, %v3626
          %v3650 = vpack.c.b16 %v3629, %v3628
          %v3651 = vpack.c.b16 %v3631, %v3630
          %v3652 = vpack.c.b16 %v3633, %v3632
          %v3653 = vpack.c.b16 %v3635, %v3634
          %v3654 = vpack.c.b16 %v3637, %v3636
          %v3655 = vpack.c.b16 %v3639, %v3638
          %3656 = vrot.lane.b32.xlu0 %v3640, 64
          %v3657 = vpop.permute.xlu0 %3656
          %3658 = vrot.lane.b32.xlu0 %v3641, 64
          %v3659 = vpop.permute.xlu0 %3658
          %3660 = vrot.lane.b32.xlu0 %v3642, 64
          %v3661 = vpop.permute.xlu0 %3660
          %3662 = vrot.lane.b32.xlu0 %v3643, 64
          %v3663 = vpop.permute.xlu0 %3662
          %3664 = vrot.lane.b32.xlu0 %v3644, 64
          %v3665 = vpop.permute.xlu0 %3664
          %3666 = vrot.lane.b32.xlu0 %v3645, 64
          %v3667 = vpop.permute.xlu0 %3666
          %3668 = vrot.lane.b32.xlu0 %v3646, 64
          %v3669 = vpop.permute.xlu0 %3668
          %3670 = vrot.lane.b32.xlu0 %v3647, 64
          %v3671 = vpop.permute.xlu0 %3670
          %3672 = vrot.lane.b32.xlu0 %v3648, 64
          %v3673 = vpop.permute.xlu0 %3672
          %3674 = vrot.lane.b32.xlu0 %v3649, 64
          %v3675 = vpop.permute.xlu0 %3674
          %3676 = vrot.lane.b32.xlu0 %v3650, 64
          %v3677 = vpop.permute.xlu0 %3676
          %3678 = vrot.lane.b32.xlu0 %v3651, 64
          %v3679 = vpop.permute.xlu0 %3678
          %3680 = vrot.lane.b32.xlu0 %v3652, 64
          %v3681 = vpop.permute.xlu0 %3680
          %3682 = vrot.lane.b32.xlu0 %v3653, 64
          %v3683 = vpop.permute.xlu0 %3682
          %3684 = vrot.lane.b32.xlu0 %v3654, 64
          %v3685 = vpop.permute.xlu0 %3684
          %3686 = vrot.lane.b32.xlu0 %v3655, 64
          %v3687 = vpop.permute.xlu0 %3686
          %v3688 = vunpack.c.l.b16 %v2373
          %v3689 = vunpack.c.l.b16 %v2383
          %v3690 = vunpack.c.l.b16 %v2397
          %v3691 = vunpack.c.l.b16 %v2407
          %v3692 = vunpack.c.l.b16 %v2421
          %v3693 = vunpack.c.l.b16 %v2431
          %v3694 = vunpack.c.l.b16 %v2445
          %v3695 = vunpack.c.l.b16 %v2455
          %v3696 = vunpack.c.l.b16 %v2469
          %v3697 = vunpack.c.l.b16 %v2479
          %v3698 = vunpack.c.l.b16 %v2493
          %v3699 = vunpack.c.l.b16 %v2503
          %v3700 = vunpack.c.l.b16 %v2517
          %v3701 = vunpack.c.l.b16 %v2527
          %v3702 = vunpack.c.l.b16 %v2541
          %v3703 = vunpack.c.l.b16 %v2551
          %v3704 = vunpack.c.l.b16 %v2565
          %v3705 = vunpack.c.l.b16 %v2575
          %v3706 = vunpack.c.l.b16 %v2589
          %v3707 = vunpack.c.l.b16 %v2599
          %v3708 = vunpack.c.l.b16 %v2613
          %v3709 = vunpack.c.l.b16 %v2623
          %v3710 = vunpack.c.l.b16 %v2637
          %v3711 = vunpack.c.l.b16 %v2647
          %v3712 = vunpack.c.l.b16 %v2661
          %v3713 = vunpack.c.l.b16 %v2671
          %v3714 = vunpack.c.l.b16 %v2685
          %v3715 = vunpack.c.l.b16 %v2695
          %v3716 = vunpack.c.l.b16 %v2709
          %v3717 = vunpack.c.l.b16 %v2719
          %v3718 = vunpack.c.l.b16 %v2733
          %v3719 = vunpack.c.l.b16 %v2743
          %v3720 = vpack.c.b16 %v3689, %v3688
          %v3721 = vpack.c.b16 %v3691, %v3690
          %v3722 = vpack.c.b16 %v3693, %v3692
          %v3723 = vpack.c.b16 %v3695, %v3694
          %v3724 = vpack.c.b16 %v3697, %v3696
          %v3725 = vpack.c.b16 %v3699, %v3698
          %v3726 = vpack.c.b16 %v3701, %v3700
          %v3727 = vpack.c.b16 %v3703, %v3702
          %v3728 = vpack.c.b16 %v3705, %v3704
          %v3729 = vpack.c.b16 %v3707, %v3706
          %v3730 = vpack.c.b16 %v3709, %v3708
          %v3731 = vpack.c.b16 %v3711, %v3710
          %v3732 = vpack.c.b16 %v3713, %v3712
          %v3733 = vpack.c.b16 %v3715, %v3714
          %v3734 = vpack.c.b16 %v3717, %v3716
          %v3735 = vpack.c.b16 %v3719, %v3718
          %v3736 = vunpack.c.l.b16 %v2811
          %v3737 = vunpack.c.l.b16 %v2814
          %v3738 = vunpack.c.l.b16 %v2818
          %v3739 = vunpack.c.l.b16 %v2821
          %v3740 = vunpack.c.l.b16 %v2825
          %v3741 = vunpack.c.l.b16 %v2828
          %v3742 = vunpack.c.l.b16 %v2832
          %v3743 = vunpack.c.l.b16 %v2835
          %v3744 = vunpack.c.l.b16 %v2839
          %v3745 = vunpack.c.l.b16 %v2842
          %v3746 = vunpack.c.l.b16 %v2846
          %v3747 = vunpack.c.l.b16 %v2849
          %v3748 = vunpack.c.l.b16 %v2853
          %v3749 = vunpack.c.l.b16 %v2856
          %v3750 = vunpack.c.l.b16 %v2860
          %v3751 = vunpack.c.l.b16 %v2863
          %v3752 = vunpack.c.l.b16 %v2867
          %v3753 = vunpack.c.l.b16 %v2870
          %v3754 = vunpack.c.l.b16 %v2874
          %v3755 = vunpack.c.l.b16 %v2877
          %v3756 = vunpack.c.l.b16 %v2881
          %v3757 = vunpack.c.l.b16 %v2884
          %v3758 = vunpack.c.l.b16 %v2888
          %v3759 = vunpack.c.l.b16 %v2891
          %v3760 = vunpack.c.l.b16 %v2895
          %v3761 = vunpack.c.l.b16 %v2898
          %v3762 = vunpack.c.l.b16 %v2902
          %v3763 = vunpack.c.l.b16 %v2905
          %v3764 = vunpack.c.l.b16 %v2909
          %v3765 = vunpack.c.l.b16 %v2912
          %v3766 = vunpack.c.l.b16 %v2916
          %v3767 = vunpack.c.l.b16 %v2919
          %v3768 = vpack.c.b16 %v3737, %v3736
          %v3769 = vpack.c.b16 %v3739, %v3738
          %v3770 = vpack.c.b16 %v3741, %v3740
          %v3771 = vpack.c.b16 %v3743, %v3742
          %v3772 = vpack.c.b16 %v3745, %v3744
          %v3773 = vpack.c.b16 %v3747, %v3746
          %v3774 = vpack.c.b16 %v3749, %v3748
          %v3775 = vpack.c.b16 %v3751, %v3750
          %v3776 = vpack.c.b16 %v3753, %v3752
          %v3777 = vpack.c.b16 %v3755, %v3754
          %v3778 = vpack.c.b16 %v3757, %v3756
          %v3779 = vpack.c.b16 %v3759, %v3758
          %v3780 = vpack.c.b16 %v3761, %v3760
          %v3781 = vpack.c.b16 %v3763, %v3762
          %v3782 = vpack.c.b16 %v3765, %v3764
          %v3783 = vpack.c.b16 %v3767, %v3766
          %3784 = vrot.lane.b32.xlu0 %v3768, 64
          %v3785 = vpop.permute.xlu0 %3784
          %3786 = vrot.lane.b32.xlu0 %v3769, 64
          %v3787 = vpop.permute.xlu0 %3786
          %3788 = vrot.lane.b32.xlu0 %v3770, 64
          %v3789 = vpop.permute.xlu0 %3788
          %3790 = vrot.lane.b32.xlu0 %v3771, 64
          %v3791 = vpop.permute.xlu0 %3790
          %3792 = vrot.lane.b32.xlu0 %v3772, 64
          %v3793 = vpop.permute.xlu0 %3792
          %3794 = vrot.lane.b32.xlu0 %v3773, 64
          %v3795 = vpop.permute.xlu0 %3794
          %3796 = vrot.lane.b32.xlu0 %v3774, 64
          %v3797 = vpop.permute.xlu0 %3796
          %3798 = vrot.lane.b32.xlu0 %v3775, 64
          %v3799 = vpop.permute.xlu0 %3798
          %3800 = vrot.lane.b32.xlu0 %v3776, 64
          %v3801 = vpop.permute.xlu0 %3800
          %3802 = vrot.lane.b32.xlu0 %v3777, 64
          %v3803 = vpop.permute.xlu0 %3802
          %3804 = vrot.lane.b32.xlu0 %v3778, 64
          %v3805 = vpop.permute.xlu0 %3804
          %3806 = vrot.lane.b32.xlu0 %v3779, 64
          %v3807 = vpop.permute.xlu0 %3806
          %3808 = vrot.lane.b32.xlu0 %v3780, 64
          %v3809 = vpop.permute.xlu0 %3808
          %3810 = vrot.lane.b32.xlu0 %v3781, 64
          %v3811 = vpop.permute.xlu0 %3810
          %3812 = vrot.lane.b32.xlu0 %v3782, 64
          %v3813 = vpop.permute.xlu0 %3812
          %3814 = vrot.lane.b32.xlu0 %v3783, 64
          %v3815 = vpop.permute.xlu0 %3814
          %v3816 = vunpack.c.l.b16 %v2948
          %v3817 = vunpack.c.l.b16 %v2958
          %v3818 = vunpack.c.l.b16 %v2971
          %v3819 = vunpack.c.l.b16 %v2981
          %v3820 = vunpack.c.l.b16 %v2994
          %v3821 = vunpack.c.l.b16 %v3004
          %v3822 = vunpack.c.l.b16 %v3017
          %v3823 = vunpack.c.l.b16 %v3027
          %v3824 = vunpack.c.l.b16 %v3040
          %v3825 = vunpack.c.l.b16 %v3050
          %v3826 = vunpack.c.l.b16 %v3063
          %v3827 = vunpack.c.l.b16 %v3073
          %v3828 = vunpack.c.l.b16 %v3086
          %v3829 = vunpack.c.l.b16 %v3096
          %v3830 = vunpack.c.l.b16 %v3109
          %v3831 = vunpack.c.l.b16 %v3119
          %v3832 = vunpack.c.l.b16 %v3132
          %v3833 = vunpack.c.l.b16 %v3142
          %v3834 = vunpack.c.l.b16 %v3155
          %v3835 = vunpack.c.l.b16 %v3165
          %v3836 = vunpack.c.l.b16 %v3178
          %v3837 = vunpack.c.l.b16 %v3188
          %v3838 = vunpack.c.l.b16 %v3201
          %v3839 = vunpack.c.l.b16 %v3211
          %v3840 = vunpack.c.l.b16 %v3224
          %v3841 = vunpack.c.l.b16 %v3234
          %v3842 = vunpack.c.l.b16 %v3247
          %v3843 = vunpack.c.l.b16 %v3257
          %v3844 = vunpack.c.l.b16 %v3270
          %v3845 = vunpack.c.l.b16 %v3280
          %v3846 = vunpack.c.l.b16 %v3293
          %v3847 = vunpack.c.l.b16 %v3303
          %v3848 = vpack.c.b16 %v3817, %v3816
          %v3849 = vpack.c.b16 %v3819, %v3818
          %v3850 = vpack.c.b16 %v3821, %v3820
          %v3851 = vpack.c.b16 %v3823, %v3822
          %v3852 = vpack.c.b16 %v3825, %v3824
          %v3853 = vpack.c.b16 %v3827, %v3826
          %v3854 = vpack.c.b16 %v3829, %v3828
          %v3855 = vpack.c.b16 %v3831, %v3830
          %v3856 = vpack.c.b16 %v3833, %v3832
          %v3857 = vpack.c.b16 %v3835, %v3834
          %v3858 = vpack.c.b16 %v3837, %v3836
          %v3859 = vpack.c.b16 %v3839, %v3838
          %v3860 = vpack.c.b16 %v3841, %v3840
          %v3861 = vpack.c.b16 %v3843, %v3842
          %v3862 = vpack.c.b16 %v3845, %v3844
          %v3863 = vpack.c.b16 %v3847, %v3846
          %vm3864 = vcmask 523264
          %v3867 = vsel %vm3864, %v3336, %v3401
          %v3871 = vsel %vm3864, %v3337, %v3403
          %v3875 = vsel %vm3864, %v3338, %v3405
          %v3879 = vsel %vm3864, %v3339, %v3407
          %v3883 = vsel %vm3864, %v3340, %v3409
          %v3887 = vsel %vm3864, %v3341, %v3411
          %v3891 = vsel %vm3864, %v3342, %v3413
          %v3895 = vsel %vm3864, %v3343, %v3415
          %v3899 = vsel %vm3864, %v3344, %v3417
          %v3903 = vsel %vm3864, %v3345, %v3419
          %v3907 = vsel %vm3864, %v3346, %v3421
          %v3911 = vsel %vm3864, %v3347, %v3423
          %v3915 = vsel %vm3864, %v3348, %v3425
          %v3919 = vsel %vm3864, %v3349, %v3427
          %v3923 = vsel %vm3864, %v3350, %v3429
          %v3927 = vsel %vm3864, %v3351, %v3431
          %v3931 = vsel %vm3864, %v3464, %v3529
          %v3935 = vsel %vm3864, %v3465, %v3531
          %v3939 = vsel %vm3864, %v3466, %v3533
          %v3943 = vsel %vm3864, %v3467, %v3535
          %v3947 = vsel %vm3864, %v3468, %v3537
          %v3951 = vsel %vm3864, %v3469, %v3539
          %v3955 = vsel %vm3864, %v3470, %v3541
          %v3959 = vsel %vm3864, %v3471, %v3543
          %v3963 = vsel %vm3864, %v3472, %v3545
          %v3967 = vsel %vm3864, %v3473, %v3547
          %v3971 = vsel %vm3864, %v3474, %v3549
          %v3975 = vsel %vm3864, %v3475, %v3551
          %v3979 = vsel %vm3864, %v3476, %v3553
          %v3983 = vsel %vm3864, %v3477, %v3555
          %v3987 = vsel %vm3864, %v3478, %v3557
          %v3991 = vsel %vm3864, %v3479, %v3559
          %v3995 = vsel %vm3864, %v3592, %v3657
          %v3999 = vsel %vm3864, %v3593, %v3659
          %v4003 = vsel %vm3864, %v3594, %v3661
          %v4007 = vsel %vm3864, %v3595, %v3663
          %v4011 = vsel %vm3864, %v3596, %v3665
          %v4015 = vsel %vm3864, %v3597, %v3667
          %v4019 = vsel %vm3864, %v3598, %v3669
          %v4023 = vsel %vm3864, %v3599, %v3671
          %v4027 = vsel %vm3864, %v3600, %v3673
          %v4031 = vsel %vm3864, %v3601, %v3675
          %v4035 = vsel %vm3864, %v3602, %v3677
          %v4039 = vsel %vm3864, %v3603, %v3679
          %v4043 = vsel %vm3864, %v3604, %v3681
          %v4047 = vsel %vm3864, %v3605, %v3683
          %v4051 = vsel %vm3864, %v3606, %v3685
          %v4055 = vsel %vm3864, %v3607, %v3687
          %v4059 = vsel %vm3864, %v3720, %v3785
          %v4063 = vsel %vm3864, %v3721, %v3787
          %v4067 = vsel %vm3864, %v3722, %v3789
          %v4071 = vsel %vm3864, %v3723, %v3791
          %v4075 = vsel %vm3864, %v3724, %v3793
          %v4079 = vsel %vm3864, %v3725, %v3795
          %v4083 = vsel %vm3864, %v3726, %v3797
          %v4087 = vsel %vm3864, %v3727, %v3799
          %v4091 = vsel %vm3864, %v3728, %v3801
          %v4095 = vsel %vm3864, %v3729, %v3803
          %v4099 = vsel %vm3864, %v3730, %v3805
          %v4103 = vsel %vm3864, %v3731, %v3807
          %v4107 = vsel %vm3864, %v3732, %v3809
          %v4111 = vsel %vm3864, %v3733, %v3811
          %v4115 = vsel %vm3864, %v3734, %v3813
          %v4119 = vsel %vm3864, %v3735, %v3815
          %v4121 = vld [vmem:[%s308] sm:$0xf]
          %v4122 = vld [vmem:[%s308 + $0x4] sm:$0xf]
          %v4123 = vld [vmem:[%s308 + $0x8] sm:$0xf]
          %v4124 = vld [vmem:[%s308 + $0xc] sm:$0xf]
          %v4125 = vld [vmem:[%s308 + $0x10] sm:$0xf]
          %v4126 = vld [vmem:[%s308 + $0x14] sm:$0xf]
          %v4127 = vld [vmem:[%s308 + $0x18] sm:$0xf]
          %v4128 = vld [vmem:[%s308 + $0x1c] sm:$0xf]
          %v4129 = vld [vmem:[%s308 + $0x20] sm:$0xf]
          %v4130 = vld [vmem:[%s308 + $0x24] sm:$0xf]
          %v4131 = vld [vmem:[%s308 + $0x28] sm:$0xf]
          %v4132 = vld [vmem:[%s308 + $0x2c] sm:$0xf]
          %v4133 = vld [vmem:[%s308 + $0x30] sm:$0xf]
          %v4134 = vld [vmem:[%s308 + $0x34] sm:$0xf]
          %v4135 = vld [vmem:[%s308 + $0x38] sm:$0xf]
          %v4136 = vld [vmem:[%s308 + $0x3c] sm:$0xf]
          %v4137 = vld [vmem:[%s308 + $0x40] sm:$0xf]
          %v4138 = vld [vmem:[%s308 + $0x44] sm:$0xf]
          %v4139 = vld [vmem:[%s308 + $0x48] sm:$0xf]
          %v4140 = vld [vmem:[%s308 + $0x4c] sm:$0xf]
          %v4141 = vld [vmem:[%s308 + $0x50] sm:$0xf]
          %v4142 = vld [vmem:[%s308 + $0x54] sm:$0xf]
          %v4143 = vld [vmem:[%s308 + $0x58] sm:$0xf]
          %v4144 = vld [vmem:[%s308 + $0x5c] sm:$0xf]
          %v4145 = vld [vmem:[%s308 + $0x60] sm:$0xf]
          %v4146 = vld [vmem:[%s308 + $0x64] sm:$0xf]
          %v4147 = vld [vmem:[%s308 + $0x68] sm:$0xf]
          %v4148 = vld [vmem:[%s308 + $0x6c] sm:$0xf]
          %v4149 = vld [vmem:[%s308 + $0x70] sm:$0xf]
          %v4150 = vld [vmem:[%s308 + $0x74] sm:$0xf]
          %v4151 = vld [vmem:[%s308 + $0x78] sm:$0xf]
          %v4152 = vld [vmem:[%s308 + $0x7c] sm:$0xf]
          %v4153 = vld [vmem:[%s308 + $0x80] sm:$0xf]
          %v4154 = vld [vmem:[%s308 + $0x84] sm:$0xf]
          %v4155 = vld [vmem:[%s308 + $0x88] sm:$0xf]
          %v4156 = vld [vmem:[%s308 + $0x8c] sm:$0xf]
          %v4157 = vld [vmem:[%s308 + $0x90] sm:$0xf]
          %v4158 = vld [vmem:[%s308 + $0x94] sm:$0xf]
          %v4159 = vld [vmem:[%s308 + $0x98] sm:$0xf]
          %v4160 = vld [vmem:[%s308 + $0x9c] sm:$0xf]
          %v4161 = vld [vmem:[%s308 + $0xa0] sm:$0xf]
          %v4162 = vld [vmem:[%s308 + $0xa4] sm:$0xf]
          %v4163 = vld [vmem:[%s308 + $0xa8] sm:$0xf]
          %v4164 = vld [vmem:[%s308 + $0xac] sm:$0xf]
          %v4165 = vld [vmem:[%s308 + $0xb0] sm:$0xf]
          %v4166 = vld [vmem:[%s308 + $0xb4] sm:$0xf]
          %v4167 = vld [vmem:[%s308 + $0xb8] sm:$0xf]
          %v4168 = vld [vmem:[%s308 + $0xbc] sm:$0xf]
          %v4169 = vld [vmem:[%s308 + $0xc0] sm:$0xf]
          %v4170 = vld [vmem:[%s308 + $0xc4] sm:$0xf]
          %v4171 = vld [vmem:[%s308 + $0xc8] sm:$0xf]
          %v4172 = vld [vmem:[%s308 + $0xcc] sm:$0xf]
          %v4173 = vld [vmem:[%s308 + $0xd0] sm:$0xf]
          %v4174 = vld [vmem:[%s308 + $0xd4] sm:$0xf]
          %v4175 = vld [vmem:[%s308 + $0xd8] sm:$0xf]
          %v4176 = vld [vmem:[%s308 + $0xdc] sm:$0xf]
          %v4177 = vld [vmem:[%s308 + $0xe0] sm:$0xf]
          %v4178 = vld [vmem:[%s308 + $0xe4] sm:$0xf]
          %v4179 = vld [vmem:[%s308 + $0xe8] sm:$0xf]
          %v4180 = vld [vmem:[%s308 + $0xec] sm:$0xf]
          %v4181 = vld [vmem:[%s308 + $0xf0] sm:$0xf]
          %v4182 = vld [vmem:[%s308 + $0xf4] sm:$0xf]
          %v4183 = vld [vmem:[%s308 + $0xf8] sm:$0xf]
          %v4184 = vld [vmem:[%s308 + $0xfc] sm:$0xf]
          %v4185 = vld [vmem:[%s308 + $0x100] sm:$0xf]
          %v4186 = vld [vmem:[%s308 + $0x104] sm:$0xf]
          %v4187 = vld [vmem:[%s308 + $0x108] sm:$0xf]
          %v4188 = vld [vmem:[%s308 + $0x10c] sm:$0xf]
          %v4189 = vld [vmem:[%s308 + $0x110] sm:$0xf]
          %v4190 = vld [vmem:[%s308 + $0x114] sm:$0xf]
          %v4191 = vld [vmem:[%s308 + $0x118] sm:$0xf]
          %v4192 = vld [vmem:[%s308 + $0x11c] sm:$0xf]
          %v4193 = vld [vmem:[%s2] sm:$0x1]
          %v4194 = vlaneseq
          %v4195 = vshrl.u32 %v4194, 7
          %v4196 = vsub.s32 0, %v4195
          %v4197 = vrot.slane %v4193, %v4196
          %v4270 = vunpack.c.l.b16 %v4121
          %v4271 = vunpack.c.l.b16 %v4122
          %v4272 = vunpack.c.l.b16 %v4123
          %v4273 = vunpack.c.l.b16 %v4124
          %v4274 = vunpack.c.l.b16 %v4125
          %v4275 = vunpack.c.l.b16 %v4126
          %v4276 = vunpack.c.l.b16 %v4127
          %v4277 = vunpack.c.l.b16 %v4128
          %v4278 = vunpack.c.l.b16 %v4129
          %v4279 = vunpack.c.l.b16 %v4130
          %v4280 = vunpack.c.l.b16 %v4131
          %v4281 = vunpack.c.l.b16 %v4132
          %v4282 = vunpack.c.l.b16 %v4133
          %v4283 = vunpack.c.l.b16 %v4134
          %v4284 = vunpack.c.l.b16 %v4135
          %v4285 = vunpack.c.l.b16 %v4136
          %v4286 = vunpack.c.l.b16 %v4137
          %v4287 = vunpack.c.l.b16 %v4138
          %v4288 = vunpack.c.l.b16 %v4139
          %v4289 = vunpack.c.l.b16 %v4140
          %v4290 = vunpack.c.l.b16 %v4141
          %v4291 = vunpack.c.l.b16 %v4142
          %v4292 = vunpack.c.l.b16 %v4143
          %v4293 = vunpack.c.l.b16 %v4144
          %v4294 = vunpack.c.l.b16 %v4145
          %v4295 = vunpack.c.l.b16 %v4146
          %v4296 = vunpack.c.l.b16 %v4147
          %v4297 = vunpack.c.l.b16 %v4148
          %v4298 = vunpack.c.l.b16 %v4149
          %v4299 = vunpack.c.l.b16 %v4150
          %v4300 = vunpack.c.l.b16 %v4151
          %v4301 = vunpack.c.l.b16 %v4152
          %v4302 = vunpack.c.l.b16 %v4153
          %v4303 = vunpack.c.l.b16 %v4154
          %v4304 = vunpack.c.l.b16 %v4155
          %v4305 = vunpack.c.l.b16 %v4156
          %v4306 = vunpack.c.l.b16 %v4157
          %v4307 = vunpack.c.l.b16 %v4158
          %v4308 = vunpack.c.l.b16 %v4159
          %v4309 = vunpack.c.l.b16 %v4160
          %v4310 = vunpack.c.l.b16 %v4161
          %v4311 = vunpack.c.l.b16 %v4162
          %v4312 = vunpack.c.l.b16 %v4163
          %v4313 = vunpack.c.l.b16 %v4164
          %v4314 = vunpack.c.l.b16 %v4165
          %v4315 = vunpack.c.l.b16 %v4166
          %v4316 = vunpack.c.l.b16 %v4167
          %v4317 = vunpack.c.l.b16 %v4168
          %v4318 = vunpack.c.l.b16 %v4169
          %v4319 = vunpack.c.l.b16 %v4170
          %v4320 = vunpack.c.l.b16 %v4171
          %v4321 = vunpack.c.l.b16 %v4172
          %v4322 = vunpack.c.l.b16 %v4173
          %v4323 = vunpack.c.l.b16 %v4174
          %v4324 = vunpack.c.l.b16 %v4175
          %v4325 = vunpack.c.l.b16 %v4176
          %v4326 = vunpack.c.l.b16 %v4177
          %v4327 = vunpack.c.l.b16 %v4178
          %v4328 = vunpack.c.l.b16 %v4179
          %v4329 = vunpack.c.l.b16 %v4180
          %v4330 = vunpack.c.l.b16 %v4181
          %v4331 = vunpack.c.l.b16 %v4182
          %v4332 = vunpack.c.l.b16 %v4183
          %v4333 = vunpack.c.l.b16 %v4184
          %v4334 = vunpack.c.l.b16 %v4185
          %v4335 = vunpack.c.l.b16 %v4186
          %v4336 = vunpack.c.l.b16 %v4187
          %v4337 = vunpack.c.l.b16 %v4188
          %v4338 = vunpack.c.l.b16 %v4189
          %v4339 = vunpack.c.l.b16 %v4190
          %v4340 = vunpack.c.l.b16 %v4191
          %v4341 = vunpack.c.l.b16 %v4192
          %v4342 = vpack.c.b16 %v4271, %v4270
          %v4343 = vpack.c.b16 %v4273, %v4272
          %v4344 = vpack.c.b16 %v4275, %v4274
          %v4345 = vpack.c.b16 %v4277, %v4276
          %v4346 = vpack.c.b16 %v4279, %v4278
          %v4347 = vpack.c.b16 %v4281, %v4280
          %v4348 = vpack.c.b16 %v4283, %v4282
          %v4349 = vpack.c.b16 %v4285, %v4284
          %v4350 = vpack.c.b16 %v4287, %v4286
          %v4351 = vpack.c.b16 %v4289, %v4288
          %v4352 = vpack.c.b16 %v4291, %v4290
          %v4353 = vpack.c.b16 %v4293, %v4292
          %v4354 = vpack.c.b16 %v4295, %v4294
          %v4355 = vpack.c.b16 %v4297, %v4296
          %v4356 = vpack.c.b16 %v4299, %v4298
          %v4357 = vpack.c.b16 %v4301, %v4300
          %v4358 = vpack.c.b16 %v4303, %v4302
          %v4359 = vpack.c.b16 %v4305, %v4304
          %v4360 = vpack.c.b16 %v4307, %v4306
          %v4361 = vpack.c.b16 %v4309, %v4308
          %v4362 = vpack.c.b16 %v4311, %v4310
          %v4363 = vpack.c.b16 %v4313, %v4312
          %v4364 = vpack.c.b16 %v4315, %v4314
          %v4365 = vpack.c.b16 %v4317, %v4316
          %v4366 = vpack.c.b16 %v4319, %v4318
          %v4367 = vpack.c.b16 %v4321, %v4320
          %v4368 = vpack.c.b16 %v4323, %v4322
          %v4369 = vpack.c.b16 %v4325, %v4324
          %v4370 = vpack.c.b16 %v4327, %v4326
          %v4371 = vpack.c.b16 %v4329, %v4328
          %v4372 = vpack.c.b16 %v4331, %v4330
          %v4373 = vpack.c.b16 %v4333, %v4332
          %v4374 = vpack.c.b16 %v4335, %v4334
          %v4375 = vpack.c.b16 %v4337, %v4336
          %v4376 = vpack.c.b16 %v4339, %v4338
          %v4377 = vpack.c.b16 %v4341, %v4340
          %v4415 = vsel %vm3864, %v3848, 0
          %v4418 = vsel %vm3864, %v3849, 0
          %v4421 = vsel %vm3864, %v3850, 0
          %v4424 = vsel %vm3864, %v3851, 0
          %v4427 = vsel %vm3864, %v3852, 0
          %v4430 = vsel %vm3864, %v3853, 0
          %v4433 = vsel %vm3864, %v3854, 0
          %v4436 = vsel %vm3864, %v3855, 0
          %v4439 = vsel %vm3864, %v3856, 0
          %v4442 = vsel %vm3864, %v3857, 0
          %v4445 = vsel %vm3864, %v3858, 0
          %v4448 = vsel %vm3864, %v3859, 0
          %v4451 = vsel %vm3864, %v3860, 0
          %v4454 = vsel %vm3864, %v3861, 0
          %v4457 = vsel %vm3864, %v3862, 0
          %v4460 = vsel %vm3864, %v3863, 0
          %4462 = vmatprep.subr.bf16.mxu0 0
          %4463 = vmatpush1.bf16.msra.mxu0 %v4342
          %4464 = vmatprep.subr.bf16.mxu0 0
          %4465 = vmatpush1.bf16.msra.mxu0 %v4343
          %4466 = vmatprep.subr.bf16.mxu0 0
          %4467 = vmatpush1.bf16.msra.mxu0 %v4344
          %4468 = vmatprep.subr.bf16.mxu0 0
          %4469 = vmatpush1.bf16.msra.mxu0 %v4345
          %4470 = vmatprep.subr.bf16.mxu0 0
          %4471 = vmatpush1.bf16.msra.mxu0 %v4346
          %4472 = vmatprep.subr.bf16.mxu0 0
          %4473 = vmatpush1.bf16.msra.mxu0 %v4347
          %4474 = vmatprep.subr.bf16.mxu0 0
          %4475 = vmatpush1.bf16.msra.mxu0 %v4348
          %4476 = vmatprep.subr.bf16.mxu0 0
          %4477 = vmatpush1.bf16.msra.mxu0 %v4349
          %4478 = vmatprep.subr.bf16.mxu0 0
          %4479 = vmatpush1.bf16.msra.mxu0 %v4350
          %4480 = vmatprep.subr.bf16.mxu0 0
          %4481 = vmatpush1.bf16.msra.mxu0 %v4351
          %4482 = vmatprep.subr.bf16.mxu0 0
          %4483 = vmatpush1.bf16.msra.mxu0 %v4352
          %4484 = vmatprep.subr.bf16.mxu0 0
          %4485 = vmatpush1.bf16.msra.mxu0 %v4353
          %4486 = vmatprep.subr.bf16.mxu0 0
          %4487 = vmatpush1.bf16.msra.mxu0 %v4354
          %4488 = vmatprep.subr.bf16.mxu0 0
          %4489 = vmatpush1.bf16.msra.mxu0 %v4355
          %4490 = vmatprep.subr.bf16.mxu0 0
          %4491 = vmatpush1.bf16.msra.mxu0 %v4356
          %4492 = vmatprep.subr.bf16.mxu0 0
          %4493 = vmatpush1.bf16.msra.mxu0 %v4357
          %4494 = vmatprep.mubr.bf16.mxu0 %v3931
          %4495 = vmatmul.mubr.bf16.gmra.mrb[0].mxu0 %v3867
          %v4496 = vpop.f32.mrb[0].mxu0
          %v4497 = vadd.f32 %v4197, %v4496
          %v4498 = vpop.f32.mrb[0].mxu0
          %v4499 = vpop.f32.mrb[0].mxu0
          %v4500 = vadd.f32 %v4197, %v4499
          %v4501 = vpop.f32.mrb[0].mxu0
          %4502 = vmatprep.mubr.bf16.mxu0 %v3935
          %4503 = vmatmul.mubr.bf16.gmra.mrb[0].mxu0 %v3871
          %v4504 = vpop.f32.mrb[0].mxu0
          %v4505 = vadd.f32 %v4197, %v4504
          %v4506 = vpop.f32.mrb[0].mxu0
          %v4507 = vpop.f32.mrb[0].mxu0
          %v4508 = vadd.f32 %v4197, %v4507
          %v4509 = vpop.f32.mrb[0].mxu0
          %4510 = vmatprep.mubr.bf16.mxu0 %v3939
          %4511 = vmatmul.mubr.bf16.gmra.mrb[0].mxu0 %v3875
          %v4512 = vpop.f32.mrb[0].mxu0
          %v4513 = vadd.f32 %v4197, %v4512
          %v4514 = vpop.f32.mrb[0].mxu0
          %v4515 = vpop.f32.mrb[0].mxu0
          %v4516 = vadd.f32 %v4197, %v4515
          %v4517 = vpop.f32.mrb[0].mxu0
          %4518 = vmatprep.mubr.bf16.mxu0 %v3943
          %4519 = vmatmul.mubr.bf16.gmra.mrb[0].mxu0 %v3879
          %v4520 = vpop.f32.mrb[0].mxu0
          %v4521 = vadd.f32 %v4197, %v4520
          %v4522 = vpop.f32.mrb[0].mxu0
          %v4523 = vpop.f32.mrb[0].mxu0
          %v4524 = vadd.f32 %v4197, %v4523
          %v4525 = vpop.f32.mrb[0].mxu0
          %4526 = vmatprep.mubr.bf16.mxu0 %v3947
          %4527 = vmatmul.mubr.bf16.gmra.mrb[0].mxu0 %v3883
          %v4528 = vpop.f32.mrb[0].mxu0
          %v4529 = vadd.f32 %v4197, %v4528
          %v4530 = vpop.f32.mrb[0].mxu0
          %v4531 = vpop.f32.mrb[0].mxu0
          %v4532 = vadd.f32 %v4197, %v4531
          %v4533 = vpop.f32.mrb[0].mxu0
          %4534 = vmatprep.mubr.bf16.mxu0 %v3951
          %4535 = vmatmul.mubr.bf16.gmra.mrb[0].mxu0 %v3887
          %v4536 = vpop.f32.mrb[0].mxu0
          %v4537 = vadd.f32 %v4197, %v4536
          %v4538 = vpop.f32.mrb[0].mxu0
          %v4539 = vpop.f32.mrb[0].mxu0
          %v4540 = vadd.f32 %v4197, %v4539
          %v4541 = vpop.f32.mrb[0].mxu0
          %4542 = vmatprep.mubr.bf16.mxu0 %v3955
          %4543 = vmatmul.mubr.bf16.gmra.mrb[0].mxu0 %v3891
          %v4544 = vpop.f32.mrb[0].mxu0
          %v4545 = vadd.f32 %v4197, %v4544
          %v4546 = vpop.f32.mrb[0].mxu0
          %v4547 = vpop.f32.mrb[0].mxu0
          %v4548 = vadd.f32 %v4197, %v4547
          %v4549 = vpop.f32.mrb[0].mxu0
          %4550 = vmatprep.mubr.bf16.mxu0 %v3959
          %4551 = vmatmul.mubr.bf16.gmra.mrb[0].mxu0 %v3895
          %v4552 = vpop.f32.mrb[0].mxu0
          %v4553 = vadd.f32 %v4197, %v4552
          %v4554 = vpop.f32.mrb[0].mxu0
          %v4555 = vpop.f32.mrb[0].mxu0
          %v4556 = vadd.f32 %v4197, %v4555
          %v4557 = vpop.f32.mrb[0].mxu0
          %4558 = vmatprep.mubr.bf16.mxu0 %v3963
          %4559 = vmatmul.mubr.bf16.gmra.mrb[0].mxu0 %v3899
          %v4560 = vpop.f32.mrb[0].mxu0
          %v4561 = vadd.f32 %v4197, %v4560
          %v4562 = vpop.f32.mrb[0].mxu0
          %v4563 = vpop.f32.mrb[0].mxu0
          %v4564 = vadd.f32 %v4197, %v4563
          %v4565 = vpop.f32.mrb[0].mxu0
          %4566 = vmatprep.mubr.bf16.mxu0 %v3967
          %4567 = vmatmul.mubr.bf16.gmra.mrb[0].mxu0 %v3903
          %v4568 = vpop.f32.mrb[0].mxu0
          %v4569 = vadd.f32 %v4197, %v4568
          %v4570 = vpop.f32.mrb[0].mxu0
          %v4571 = vpop.f32.mrb[0].mxu0
          %v4572 = vadd.f32 %v4197, %v4571
          %v4573 = vpop.f32.mrb[0].mxu0
          %4574 = vmatprep.mubr.bf16.mxu0 %v3971
          %4575 = vmatmul.mubr.bf16.gmra.mrb[0].mxu0 %v3907
          %v4576 = vpop.f32.mrb[0].mxu0
          %v4577 = vadd.f32 %v4197, %v4576
          %v4578 = vpop.f32.mrb[0].mxu0
          %v4579 = vpop.f32.mrb[0].mxu0
          %v4580 = vadd.f32 %v4197, %v4579
          %v4581 = vpop.f32.mrb[0].mxu0
          %4582 = vmatprep.mubr.bf16.mxu0 %v3975
          %4583 = vmatmul.mubr.bf16.gmra.mrb[0].mxu0 %v3911
          %v4584 = vpop.f32.mrb[0].mxu0
          %v4585 = vadd.f32 %v4197, %v4584
          %v4586 = vpop.f32.mrb[0].mxu0
          %v4587 = vpop.f32.mrb[0].mxu0
          %v4588 = vadd.f32 %v4197, %v4587
          %v4589 = vpop.f32.mrb[0].mxu0
          %4590 = vmatprep.mubr.bf16.mxu0 %v3979
          %4591 = vmatmul.mubr.bf16.gmra.mrb[0].mxu0 %v3915
          %v4592 = vpop.f32.mrb[0].mxu0
          %v4593 = vadd.f32 %v4197, %v4592
          %v4594 = vpop.f32.mrb[0].mxu0
          %v4595 = vpop.f32.mrb[0].mxu0
          %v4596 = vadd.f32 %v4197, %v4595
          %v4597 = vpop.f32.mrb[0].mxu0
          %4598 = vmatprep.mubr.bf16.mxu0 %v3983
          %4599 = vmatmul.mubr.bf16.gmra.mrb[0].mxu0 %v3919
          %v4600 = vpop.f32.mrb[0].mxu0
          %v4601 = vadd.f32 %v4197, %v4600
          %v4602 = vpop.f32.mrb[0].mxu0
          %v4603 = vpop.f32.mrb[0].mxu0
          %v4604 = vadd.f32 %v4197, %v4603
          %v4605 = vpop.f32.mrb[0].mxu0
          %4606 = vmatprep.mubr.bf16.mxu0 %v3987
          %4607 = vmatmul.mubr.bf16.gmra.mrb[0].mxu0 %v3923
          %v4608 = vpop.f32.mrb[0].mxu0
          %v4609 = vadd.f32 %v4197, %v4608
          %v4610 = vpop.f32.mrb[0].mxu0
          %v4611 = vpop.f32.mrb[0].mxu0
          %v4612 = vadd.f32 %v4197, %v4611
          %v4613 = vpop.f32.mrb[0].mxu0
          %4614 = vmatprep.mubr.bf16.mxu0 %v3991
          %4615 = vmatmul.mubr.bf16.gmra.mrb[0].mxu0 %v3927
          %v4616 = vpop.f32.mrb[0].mxu0
          %v4617 = vadd.f32 %v4197, %v4616
          %v4618 = vpop.f32.mrb[0].mxu0
          %v4619 = vpop.f32.mrb[0].mxu0
          %v4620 = vadd.f32 %v4197, %v4619
          %v4621 = vpop.f32.mrb[0].mxu0
          %4622 = vdwg.mxu0
          %4623 = vmatprep.subr.bf16.mxu0 0
          %4624 = vmatpush1.bf16.msra.mxu0 %v4358
          %4625 = vmatprep.subr.bf16.mxu0 0
          %4626 = vmatpush1.bf16.msra.mxu0 %v4359
          %4627 = vmatprep.subr.bf16.mxu0 0
          %4628 = vmatpush1.bf16.msra.mxu0 %v4360
          %4629 = vmatprep.subr.bf16.mxu0 0
          %4630 = vmatpush1.bf16.msra.mxu0 %v4361
          %4631 = vmatprep.subr.bf16.mxu0 0
          %4632 = vmatpush1.bf16.msra.mxu0 %v4362
          %4633 = vmatprep.subr.bf16.mxu0 0
          %4634 = vmatpush1.bf16.msra.mxu0 %v4363
          %4635 = vmatprep.subr.bf16.mxu0 0
          %4636 = vmatpush1.bf16.msra.mxu0 %v4364
          %4637 = vmatprep.subr.bf16.mxu0 0
          %4638 = vmatpush1.bf16.msra.mxu0 %v4365
          %4639 = vmatprep.subr.bf16.mxu0 0
          %4640 = vmatpush1.bf16.msra.mxu0 %v4366
          %4641 = vmatprep.subr.bf16.mxu0 0
          %4642 = vmatpush1.bf16.msra.mxu0 %v4367
          %4643 = vmatprep.subr.bf16.mxu0 0
          %4644 = vmatpush1.bf16.msra.mxu0 %v4368
          %4645 = vmatprep.subr.bf16.mxu0 0
          %4646 = vmatpush1.bf16.msra.mxu0 %v4369
          %4647 = vmatprep.subr.bf16.mxu0 0
          %4648 = vmatpush1.bf16.msra.mxu0 %v4370
          %4649 = vmatprep.subr.bf16.mxu0 0
          %4650 = vmatpush1.bf16.msra.mxu0 %v4371
          %4651 = vmatprep.subr.bf16.mxu0 0
          %4652 = vmatpush1.bf16.msra.mxu0 %v4372
          %4653 = vmatprep.subr.bf16.mxu0 0
          %4654 = vmatpush1.bf16.msra.mxu0 %v4373
          %4655 = vmatprep.mubr.bf16.mxu0 %v4059
          %4656 = vmatmul.mubr.bf16.gmra.mrb[0].mxu0 %v3995
          %v4657 = vpop.f32.mrb[0].mxu0
          %v4658 = vadd.f32 %v4497, %v4657
          %v4659 = vpop.f32.mrb[0].mxu0
          %v4660 = vpop.f32.mrb[0].mxu0
          %v4661 = vadd.f32 %v4500, %v4660
          %v4662 = vpop.f32.mrb[0].mxu0
          %4663 = vmatprep.mubr.bf16.mxu0 %v4063
          %4664 = vmatmul.mubr.bf16.gmra.mrb[0].mxu0 %v3999
          %v4665 = vpop.f32.mrb[0].mxu0
          %v4666 = vadd.f32 %v4505, %v4665
          %v4667 = vpop.f32.mrb[0].mxu0
          %v4668 = vpop.f32.mrb[0].mxu0
          %v4669 = vadd.f32 %v4508, %v4668
          %v4670 = vpop.f32.mrb[0].mxu0
          %4671 = vmatprep.mubr.bf16.mxu0 %v4067
          %4672 = vmatmul.mubr.bf16.gmra.mrb[0].mxu0 %v4003
          %v4673 = vpop.f32.mrb[0].mxu0
          %v4674 = vadd.f32 %v4513, %v4673
          %v4675 = vpop.f32.mrb[0].mxu0
          %v4676 = vpop.f32.mrb[0].mxu0
          %v4677 = vadd.f32 %v4516, %v4676
          %v4678 = vpop.f32.mrb[0].mxu0
          %4679 = vmatprep.mubr.bf16.mxu0 %v4071
          %4680 = vmatmul.mubr.bf16.gmra.mrb[0].mxu0 %v4007
          %v4681 = vpop.f32.mrb[0].mxu0
          %v4682 = vadd.f32 %v4521, %v4681
          %v4683 = vpop.f32.mrb[0].mxu0
          %v4684 = vpop.f32.mrb[0].mxu0
          %v4685 = vadd.f32 %v4524, %v4684
          %v4686 = vpop.f32.mrb[0].mxu0
          %4687 = vmatprep.mubr.bf16.mxu0 %v4075
          %4688 = vmatmul.mubr.bf16.gmra.mrb[0].mxu0 %v4011
          %v4689 = vpop.f32.mrb[0].mxu0
          %v4690 = vadd.f32 %v4529, %v4689
          %v4691 = vpop.f32.mrb[0].mxu0
          %v4692 = vpop.f32.mrb[0].mxu0
          %v4693 = vadd.f32 %v4532, %v4692
          %v4694 = vpop.f32.mrb[0].mxu0
          %4695 = vmatprep.mubr.bf16.mxu0 %v4079
          %4696 = vmatmul.mubr.bf16.gmra.mrb[0].mxu0 %v4015
          %v4697 = vpop.f32.mrb[0].mxu0
          %v4698 = vadd.f32 %v4537, %v4697
          %v4699 = vpop.f32.mrb[0].mxu0
          %v4700 = vpop.f32.mrb[0].mxu0
          %v4701 = vadd.f32 %v4540, %v4700
          %v4702 = vpop.f32.mrb[0].mxu0
          %4703 = vmatprep.mubr.bf16.mxu0 %v4083
          %4704 = vmatmul.mubr.bf16.gmra.mrb[0].mxu0 %v4019
          %v4705 = vpop.f32.mrb[0].mxu0
          %v4706 = vadd.f32 %v4545, %v4705
          %v4707 = vpop.f32.mrb[0].mxu0
          %v4708 = vpop.f32.mrb[0].mxu0
          %v4709 = vadd.f32 %v4548, %v4708
          %v4710 = vpop.f32.mrb[0].mxu0
          %4711 = vmatprep.mubr.bf16.mxu0 %v4087
          %4712 = vmatmul.mubr.bf16.gmra.mrb[0].mxu0 %v4023
          %v4713 = vpop.f32.mrb[0].mxu0
          %v4714 = vadd.f32 %v4553, %v4713
          %v4715 = vpop.f32.mrb[0].mxu0
          %v4716 = vpop.f32.mrb[0].mxu0
          %v4717 = vadd.f32 %v4556, %v4716
          %v4718 = vpop.f32.mrb[0].mxu0
          %4719 = vmatprep.mubr.bf16.mxu0 %v4091
          %4720 = vmatmul.mubr.bf16.gmra.mrb[0].mxu0 %v4027
          %v4721 = vpop.f32.mrb[0].mxu0
          %v4722 = vadd.f32 %v4561, %v4721
          %v4723 = vpop.f32.mrb[0].mxu0
          %v4724 = vpop.f32.mrb[0].mxu0
          %v4725 = vadd.f32 %v4564, %v4724
          %v4726 = vpop.f32.mrb[0].mxu0
          %4727 = vmatprep.mubr.bf16.mxu0 %v4095
          %4728 = vmatmul.mubr.bf16.gmra.mrb[0].mxu0 %v4031
          %v4729 = vpop.f32.mrb[0].mxu0
          %v4730 = vadd.f32 %v4569, %v4729
          %v4731 = vpop.f32.mrb[0].mxu0
          %v4732 = vpop.f32.mrb[0].mxu0
          %v4733 = vadd.f32 %v4572, %v4732
          %v4734 = vpop.f32.mrb[0].mxu0
          %4735 = vmatprep.mubr.bf16.mxu0 %v4099
          %4736 = vmatmul.mubr.bf16.gmra.mrb[0].mxu0 %v4035
          %v4737 = vpop.f32.mrb[0].mxu0
          %v4738 = vadd.f32 %v4577, %v4737
          %v4739 = vpop.f32.mrb[0].mxu0
          %v4740 = vpop.f32.mrb[0].mxu0
          %v4741 = vadd.f32 %v4580, %v4740
          %v4742 = vpop.f32.mrb[0].mxu0
          %4743 = vmatprep.mubr.bf16.mxu0 %v4103
          %4744 = vmatmul.mubr.bf16.gmra.mrb[0].mxu0 %v4039
          %v4745 = vpop.f32.mrb[0].mxu0
          %v4746 = vadd.f32 %v4585, %v4745
          %v4747 = vpop.f32.mrb[0].mxu0
          %v4748 = vpop.f32.mrb[0].mxu0
          %v4749 = vadd.f32 %v4588, %v4748
          %v4750 = vpop.f32.mrb[0].mxu0
          %4751 = vmatprep.mubr.bf16.mxu0 %v4107
          %4752 = vmatmul.mubr.bf16.gmra.mrb[0].mxu0 %v4043
          %v4753 = vpop.f32.mrb[0].mxu0
          %v4754 = vadd.f32 %v4593, %v4753
          %v4755 = vpop.f32.mrb[0].mxu0
          %v4756 = vpop.f32.mrb[0].mxu0
          %v4757 = vadd.f32 %v4596, %v4756
          %v4758 = vpop.f32.mrb[0].mxu0
          %4759 = vmatprep.mubr.bf16.mxu0 %v4111
          %4760 = vmatmul.mubr.bf16.gmra.mrb[0].mxu0 %v4047
          %v4761 = vpop.f32.mrb[0].mxu0
          %v4762 = vadd.f32 %v4601, %v4761
          %v4763 = vpop.f32.mrb[0].mxu0
          %v4764 = vpop.f32.mrb[0].mxu0
          %v4765 = vadd.f32 %v4604, %v4764
          %v4766 = vpop.f32.mrb[0].mxu0
          %4767 = vmatprep.mubr.bf16.mxu0 %v4115
          %4768 = vmatmul.mubr.bf16.gmra.mrb[0].mxu0 %v4051
          %v4769 = vpop.f32.mrb[0].mxu0
          %v4770 = vadd.f32 %v4609, %v4769
          %v4771 = vpop.f32.mrb[0].mxu0
          %v4772 = vpop.f32.mrb[0].mxu0
          %v4773 = vadd.f32 %v4612, %v4772
          %v4774 = vpop.f32.mrb[0].mxu0
          %4775 = vmatprep.mubr.bf16.mxu0 %v4119
          %4776 = vmatmul.mubr.bf16.gmra.mrb[0].mxu0 %v4055
          %v4777 = vpop.f32.mrb[0].mxu0
          %v4778 = vadd.f32 %v4617, %v4777
          %v4779 = vpop.f32.mrb[0].mxu0
          %v4780 = vpop.f32.mrb[0].mxu0
          %v4781 = vadd.f32 %v4620, %v4780
          %v4782 = vpop.f32.mrb[0].mxu0
          %4783 = vdwg.mxu0
          %4784 = vmatprep.subr.bf16.mxu0 0
          %4785 = vmatpush1.bf16.msra.mxu0 %v4374
          %4786 = vmatprep.subr.bf16.mxu0 0
          %4787 = vmatpush1.bf16.msra.mxu0 %v4375
          %4788 = vmatprep.subr.bf16.mxu0 0
          %4789 = vmatpush1.bf16.msra.mxu0 %v4376
          %4790 = vmatprep.subr.bf16.mxu0 0
          %4791 = vmatpush1.bf16.msra.mxu0 %v4377
          %4792 = vmatprep.subr.bf16.mxu0 0
          %4793 = vmatpush1.bf16.msra.mxu0 0
          %4794 = vmatprep.subr.bf16.mxu0 0
          %4795 = vmatpush1.bf16.msra.mxu0 0
          %4796 = vmatprep.subr.bf16.mxu0 0
          %4797 = vmatpush1.bf16.msra.mxu0 0
          %4798 = vmatprep.subr.bf16.mxu0 0
          %4799 = vmatpush1.bf16.msra.mxu0 0
          %4800 = vmatprep.subr.bf16.mxu0 0
          %4801 = vmatpush1.bf16.msra.mxu0 0
          %4802 = vmatprep.subr.bf16.mxu0 0
          %4803 = vmatpush1.bf16.msra.mxu0 0
          %4804 = vmatprep.subr.bf16.mxu0 0
          %4805 = vmatpush1.bf16.msra.mxu0 0
          %4806 = vmatprep.subr.bf16.mxu0 0
          %4807 = vmatpush1.bf16.msra.mxu0 0
          %4808 = vmatprep.subr.bf16.mxu0 0
          %4809 = vmatpush1.bf16.msra.mxu0 0
          %4810 = vmatprep.subr.bf16.mxu0 0
          %4811 = vmatpush1.bf16.msra.mxu0 0
          %4812 = vmatprep.subr.bf16.mxu0 0
          %4813 = vmatpush1.bf16.msra.mxu0 0
          %4814 = vmatprep.subr.bf16.mxu0 0
          %4815 = vmatpush1.bf16.msra.mxu0 0
          %4816 = vmatprep.mubr.bf16.mxu0 0
          %4817 = vmatmul.mubr.bf16.gmra.mrb[0].mxu0 %v4415
          %v4818 = vpop.f32.mrb[0].mxu0
          %v4819 = vadd.f32 %v4658, %v4818
          %v4820 = vpop.f32.mrb[0].mxu0
          %v4821 = vpop.f32.mrb[0].mxu0
          %v4822 = vadd.f32 %v4661, %v4821
          %v4823 = vpop.f32.mrb[0].mxu0
          %4824 = vmatprep.mubr.bf16.mxu0 0
          %4825 = vmatmul.mubr.bf16.gmra.mrb[0].mxu0 %v4418
          %v4826 = vpop.f32.mrb[0].mxu0
          %v4827 = vadd.f32 %v4666, %v4826
          %v4828 = vpop.f32.mrb[0].mxu0
          %v4829 = vpop.f32.mrb[0].mxu0
          %v4830 = vadd.f32 %v4669, %v4829
          %v4831 = vpop.f32.mrb[0].mxu0
          %4832 = vmatprep.mubr.bf16.mxu0 0
          %4833 = vmatmul.mubr.bf16.gmra.mrb[0].mxu0 %v4421
          %v4834 = vpop.f32.mrb[0].mxu0
          %v4835 = vadd.f32 %v4674, %v4834
          %v4836 = vpop.f32.mrb[0].mxu0
          %v4837 = vpop.f32.mrb[0].mxu0
          %v4838 = vadd.f32 %v4677, %v4837
          %v4839 = vpop.f32.mrb[0].mxu0
          %4840 = vmatprep.mubr.bf16.mxu0 0
          %4841 = vmatmul.mubr.bf16.gmra.mrb[0].mxu0 %v4424
          %v4842 = vpop.f32.mrb[0].mxu0
          %v4843 = vadd.f32 %v4682, %v4842
          %v4844 = vpop.f32.mrb[0].mxu0
          %v4845 = vpop.f32.mrb[0].mxu0
          %v4846 = vadd.f32 %v4685, %v4845
          %v4847 = vpop.f32.mrb[0].mxu0
          %4848 = vmatprep.mubr.bf16.mxu0 0
          %4849 = vmatmul.mubr.bf16.gmra.mrb[0].mxu0 %v4427
          %v4850 = vpop.f32.mrb[0].mxu0
          %v4851 = vadd.f32 %v4690, %v4850
          %v4852 = vpop.f32.mrb[0].mxu0
          %v4853 = vpop.f32.mrb[0].mxu0
          %v4854 = vadd.f32 %v4693, %v4853
          %v4855 = vpop.f32.mrb[0].mxu0
          %4856 = vmatprep.mubr.bf16.mxu0 0
          %4857 = vmatmul.mubr.bf16.gmra.mrb[0].mxu0 %v4430
          %v4858 = vpop.f32.mrb[0].mxu0
          %v4859 = vadd.f32 %v4698, %v4858
          %v4860 = vpop.f32.mrb[0].mxu0
          %v4861 = vpop.f32.mrb[0].mxu0
          %v4862 = vadd.f32 %v4701, %v4861
          %v4863 = vpop.f32.mrb[0].mxu0
          %4864 = vmatprep.mubr.bf16.mxu0 0
          %4865 = vmatmul.mubr.bf16.gmra.mrb[0].mxu0 %v4433
          %v4866 = vpop.f32.mrb[0].mxu0
          %v4867 = vadd.f32 %v4706, %v4866
          %v4868 = vpop.f32.mrb[0].mxu0
          %v4869 = vpop.f32.mrb[0].mxu0
          %v4870 = vadd.f32 %v4709, %v4869
          %v4871 = vpop.f32.mrb[0].mxu0
          %4872 = vmatprep.mubr.bf16.mxu0 0
          %4873 = vmatmul.mubr.bf16.gmra.mrb[0].mxu0 %v4436
          %v4874 = vpop.f32.mrb[0].mxu0
          %v4875 = vadd.f32 %v4714, %v4874
          %v4876 = vpop.f32.mrb[0].mxu0
          %v4877 = vpop.f32.mrb[0].mxu0
          %v4878 = vadd.f32 %v4717, %v4877
          %v4879 = vpop.f32.mrb[0].mxu0
          %4880 = vmatprep.mubr.bf16.mxu0 0
          %4881 = vmatmul.mubr.bf16.gmra.mrb[0].mxu0 %v4439
          %v4882 = vpop.f32.mrb[0].mxu0
          %v4883 = vadd.f32 %v4722, %v4882
          %v4884 = vpop.f32.mrb[0].mxu0
          %v4885 = vpop.f32.mrb[0].mxu0
          %v4886 = vadd.f32 %v4725, %v4885
          %v4887 = vpop.f32.mrb[0].mxu0
          %4888 = vmatprep.mubr.bf16.mxu0 0
          %4889 = vmatmul.mubr.bf16.gmra.mrb[0].mxu0 %v4442
          %v4890 = vpop.f32.mrb[0].mxu0
          %v4891 = vadd.f32 %v4730, %v4890
          %v4892 = vpop.f32.mrb[0].mxu0
          %v4893 = vpop.f32.mrb[0].mxu0
          %v4894 = vadd.f32 %v4733, %v4893
          %v4895 = vpop.f32.mrb[0].mxu0
          %4896 = vmatprep.mubr.bf16.mxu0 0
          %4897 = vmatmul.mubr.bf16.gmra.mrb[0].mxu0 %v4445
          %v4898 = vpop.f32.mrb[0].mxu0
          %v4899 = vadd.f32 %v4738, %v4898
          %v4900 = vpop.f32.mrb[0].mxu0
          %v4901 = vpop.f32.mrb[0].mxu0
          %v4902 = vadd.f32 %v4741, %v4901
          %v4903 = vpop.f32.mrb[0].mxu0
          %4904 = vmatprep.mubr.bf16.mxu0 0
          %4905 = vmatmul.mubr.bf16.gmra.mrb[0].mxu0 %v4448
          %v4906 = vpop.f32.mrb[0].mxu0
          %v4907 = vadd.f32 %v4746, %v4906
          %v4908 = vpop.f32.mrb[0].mxu0
          %v4909 = vpop.f32.mrb[0].mxu0
          %v4910 = vadd.f32 %v4749, %v4909
          %v4911 = vpop.f32.mrb[0].mxu0
          %4912 = vmatprep.mubr.bf16.mxu0 0
          %4913 = vmatmul.mubr.bf16.gmra.mrb[0].mxu0 %v4451
          %v4914 = vpop.f32.mrb[0].mxu0
          %v4915 = vadd.f32 %v4754, %v4914
          %v4916 = vpop.f32.mrb[0].mxu0
          %v4917 = vpop.f32.mrb[0].mxu0
          %v4918 = vadd.f32 %v4757, %v4917
          %v4919 = vpop.f32.mrb[0].mxu0
          %4920 = vmatprep.mubr.bf16.mxu0 0
          %4921 = vmatmul.mubr.bf16.gmra.mrb[0].mxu0 %v4454
          %v4922 = vpop.f32.mrb[0].mxu0
          %v4923 = vadd.f32 %v4762, %v4922
          %v4924 = vpop.f32.mrb[0].mxu0
          %v4925 = vpop.f32.mrb[0].mxu0
          %v4926 = vadd.f32 %v4765, %v4925
          %v4927 = vpop.f32.mrb[0].mxu0
          %4928 = vmatprep.mubr.bf16.mxu0 0
          %4929 = vmatmul.mubr.bf16.gmra.mrb[0].mxu0 %v4457
          %v4930 = vpop.f32.mrb[0].mxu0
          %v4931 = vadd.f32 %v4770, %v4930
          %v4932 = vpop.f32.mrb[0].mxu0
          %v4933 = vpop.f32.mrb[0].mxu0
          %v4934 = vadd.f32 %v4773, %v4933
          %v4935 = vpop.f32.mrb[0].mxu0
          %4936 = vmatprep.mubr.bf16.mxu0 0
          %4937 = vmatmul.mubr.bf16.gmra.mrb[0].mxu0 %v4460
          %v4938 = vpop.f32.mrb[0].mxu0
          %v4939 = vadd.f32 %v4778, %v4938
          %v4940 = vpop.f32.mrb[0].mxu0
          %v4941 = vpop.f32.mrb[0].mxu0
          %v4942 = vadd.f32 %v4781, %v4941
          %v4943 = vpop.f32.mrb[0].mxu0
          %4944 = vdwg.mxu0
          %v4945 = vmax.f32 %v4819, 0.0
          %v4946 = vmax.f32 %v4822, 0.0
          %v4947 = vmax.f32 %v4827, 0.0
          %v4948 = vmax.f32 %v4830, 0.0
          %v4949 = vmax.f32 %v4835, 0.0
          %v4950 = vmax.f32 %v4838, 0.0
          %v4951 = vmax.f32 %v4843, 0.0
          %v4952 = vmax.f32 %v4846, 0.0
          %v4953 = vmax.f32 %v4851, 0.0
          %v4954 = vmax.f32 %v4854, 0.0
          %v4955 = vmax.f32 %v4859, 0.0
          %v4956 = vmax.f32 %v4862, 0.0
          %v4957 = vmax.f32 %v4867, 0.0
          %v4958 = vmax.f32 %v4870, 0.0
          %v4959 = vmax.f32 %v4875, 0.0
          %v4960 = vmax.f32 %v4878, 0.0
          %v4961 = vmax.f32 %v4883, 0.0
          %v4962 = vmax.f32 %v4886, 0.0
          %v4963 = vmax.f32 %v4891, 0.0
          %v4964 = vmax.f32 %v4894, 0.0
          %v4965 = vmax.f32 %v4899, 0.0
          %v4966 = vmax.f32 %v4902, 0.0
          %v4967 = vmax.f32 %v4907, 0.0
          %v4968 = vmax.f32 %v4910, 0.0
          %v4969 = vmax.f32 %v4915, 0.0
          %v4970 = vmax.f32 %v4918, 0.0
          %v4971 = vmax.f32 %v4923, 0.0
          %v4972 = vmax.f32 %v4926, 0.0
          %v4973 = vmax.f32 %v4931, 0.0
          %v4974 = vmax.f32 %v4934, 0.0
          %v4975 = vmax.f32 %v4939, 0.0
          %v4976 = vmax.f32 %v4942, 0.0
          %v4977 = vld [vmem:[#allocation3] sm:$0x1]
          %v4978 = vsel %vm3864, %v4945, 0.0
          %v4979 = vsel %vm3864, %v4946, 0.0
          %v4980 = vadd.f32 %v4978, %v4979
          %v4981 = vsel %vm3864, %v4947, 0.0
          %v4982 = vadd.f32 %v4980, %v4981
          %v4983 = vsel %vm3864, %v4948, 0.0
          %v4984 = vadd.f32 %v4982, %v4983
          %v4985 = vsel %vm3864, %v4949, 0.0
          %v4986 = vadd.f32 %v4984, %v4985
          %v4987 = vsel %vm3864, %v4950, 0.0
          %v4988 = vadd.f32 %v4986, %v4987
          %v4989 = vsel %vm3864, %v4951, 0.0
          %v4990 = vadd.f32 %v4988, %v4989
          %v4991 = vsel %vm3864, %v4952, 0.0
          %v4992 = vadd.f32 %v4990, %v4991
          %v4993 = vsel %vm3864, %v4953, 0.0
          %v4994 = vadd.f32 %v4992, %v4993
          %v4995 = vsel %vm3864, %v4954, 0.0
          %v4996 = vadd.f32 %v4994, %v4995
          %v4997 = vsel %vm3864, %v4955, 0.0
          %v4998 = vadd.f32 %v4996, %v4997
          %v4999 = vsel %vm3864, %v4956, 0.0
          %v5000 = vadd.f32 %v4998, %v4999
          %v5001 = vsel %vm3864, %v4957, 0.0
          %v5002 = vadd.f32 %v5000, %v5001
          %v5003 = vsel %vm3864, %v4958, 0.0
          %v5004 = vadd.f32 %v5002, %v5003
          %v5005 = vsel %vm3864, %v4959, 0.0
          %v5006 = vadd.f32 %v5004, %v5005
          %v5007 = vsel %vm3864, %v4960, 0.0
          %v5008 = vadd.f32 %v5006, %v5007
          %v5009 = vsel %vm3864, %v4961, 0.0
          %v5010 = vadd.f32 %v5008, %v5009
          %v5011 = vsel %vm3864, %v4962, 0.0
          %v5012 = vadd.f32 %v5010, %v5011
          %v5013 = vsel %vm3864, %v4963, 0.0
          %v5014 = vadd.f32 %v5012, %v5013
          %v5015 = vsel %vm3864, %v4964, 0.0
          %v5016 = vadd.f32 %v5014, %v5015
          %v5017 = vsel %vm3864, %v4965, 0.0
          %v5018 = vadd.f32 %v5016, %v5017
          %v5019 = vsel %vm3864, %v4966, 0.0
          %v5020 = vadd.f32 %v5018, %v5019
          %v5021 = vsel %vm3864, %v4967, 0.0
          %v5022 = vadd.f32 %v5020, %v5021
          %v5023 = vsel %vm3864, %v4968, 0.0
          %v5024 = vadd.f32 %v5022, %v5023
          %v5025 = vsel %vm3864, %v4969, 0.0
          %v5026 = vadd.f32 %v5024, %v5025
          %v5027 = vsel %vm3864, %v4970, 0.0
          %v5028 = vadd.f32 %v5026, %v5027
          %v5029 = vsel %vm3864, %v4971, 0.0
          %v5030 = vadd.f32 %v5028, %v5029
          %v5031 = vsel %vm3864, %v4972, 0.0
          %v5032 = vadd.f32 %v5030, %v5031
          %v5033 = vsel %vm3864, %v4973, 0.0
          %v5034 = vadd.f32 %v5032, %v5033
          %v5035 = vsel %vm3864, %v4974, 0.0
          %v5036 = vadd.f32 %v5034, %v5035
          %v5037 = vsel %vm3864, %v4975, 0.0
          %v5038 = vadd.f32 %v5036, %v5037
          %v5039 = vsel %vm3864, %v4976, 0.0
          %v5040 = vadd.f32 %v5038, %v5039
          %v5041 = vrot.slane %v5040, 4
          %v5042 = vadd.f32 %v5040, %v5041
          %v5043 = vrot.slane %v5042, 2
          %v5044 = vadd.f32 %v5042, %v5043
          %v5045 = vrot.slane %v5044, 1
          %v5046 = vadd.f32 %v5044, %v5045
          %v5047 = vadd.f32 %v4977, %v5046
          %5048 = vst.msk [vmem:[#allocation3] sm:$0x1] %vm314, %v5047
          %v5049 = vpack.c.bf16 %v4946, %v4945
          %v5050 = vpack.c.bf16 %v4948, %v4947
          %v5051 = vpack.c.bf16 %v4950, %v4949
          %v5052 = vpack.c.bf16 %v4952, %v4951
          %v5053 = vpack.c.bf16 %v4954, %v4953
          %v5054 = vpack.c.bf16 %v4956, %v4955
          %v5055 = vpack.c.bf16 %v4958, %v4957
          %v5056 = vpack.c.bf16 %v4960, %v4959
          %v5057 = vpack.c.bf16 %v4962, %v4961
          %v5058 = vpack.c.bf16 %v4964, %v4963
          %v5059 = vpack.c.bf16 %v4966, %v4965
          %v5060 = vpack.c.bf16 %v4968, %v4967
          %v5061 = vpack.c.bf16 %v4970, %v4969
          %v5062 = vpack.c.bf16 %v4972, %v4971
          %v5063 = vpack.c.bf16 %v4974, %v4973
          %v5064 = vpack.c.bf16 %v4976, %v4975
          %5065 = vst.msk [vmem:[#allocation2] sm:$0xff] %vm3864, %v5049
          %5066 = vst.msk [vmem:[#allocation2 + $0x8] sm:$0xff] %vm3864, %v5050
          %5067 = vst.msk [vmem:[#allocation2 + $0x10] sm:$0xff] %vm3864, %v5051
          %5068 = vst.msk [vmem:[#allocation2 + $0x18] sm:$0xff] %vm3864, %v5052
          %5069 = vst.msk [vmem:[#allocation2 + $0x20] sm:$0xff] %vm3864, %v5053
          %5070 = vst.msk [vmem:[#allocation2 + $0x28] sm:$0xff] %vm3864, %v5054
          %5071 = vst.msk [vmem:[#allocation2 + $0x30] sm:$0xff] %vm3864, %v5055
          %5072 = vst.msk [vmem:[#allocation2 + $0x38] sm:$0xff] %vm3864, %v5056
          %5073 = vst.msk [vmem:[#allocation2 + $0x40] sm:$0xff] %vm3864, %v5057
          %5074 = vst.msk [vmem:[#allocation2 + $0x48] sm:$0xff] %vm3864, %v5058
          %5075 = vst.msk [vmem:[#allocation2 + $0x50] sm:$0xff] %vm3864, %v5059
          %5076 = vst.msk [vmem:[#allocation2 + $0x58] sm:$0xff] %vm3864, %v5060
          %5077 = vst.msk [vmem:[#allocation2 + $0x60] sm:$0xff] %vm3864, %v5061
          %5078 = vst.msk [vmem:[#allocation2 + $0x68] sm:$0xff] %vm3864, %v5062
          %5079 = vst.msk [vmem:[#allocation2 + $0x70] sm:$0xff] %vm3864, %v5063
          %5080 = vst.msk [vmem:[#allocation2 + $0x78] sm:$0xff] %vm3864, %v5064
        $region52: #{tpu_custom_call.1} parent=47 // pred_fallthru
          _
        %p5081 = scmp.eq.s32.totalorder %s26, 1
        // Predicated region
        $region53: #{tpu_custom_call.1} parent=47 // pred_check
          %p5082 = pneg %p5081
        $region54: #{tpu_custom_call.1} parent=47 // pred_check_branch
          %5084 = sbr.rel (%p5082) target = $region56
        $region55: #{tpu_custom_call.1} parent=47 // pred_region
          %v5085 = vld [vmem:[%s303] sm:$0xf]
          %v5086 = vld [vmem:[%s303 + $0x4] sm:$0xf]
          %v5087 = vld [vmem:[%s303 + $0xc] sm:$0xf]
          %v5088 = vld [vmem:[%s303 + $0x10] sm:$0xf]
          %v5089 = vld [vmem:[%s303 + $0x18] sm:$0xf]
          %v5090 = vld [vmem:[%s303 + $0x1c] sm:$0xf]
          %v5091 = vld [vmem:[%s303 + $0x24] sm:$0xf]
          %v5092 = vld [vmem:[%s303 + $0x28] sm:$0xf]
          %v5093 = vld [vmem:[%s303 + $0x30] sm:$0xf]
          %v5094 = vld [vmem:[%s303 + $0x34] sm:$0xf]
          %v5095 = vld [vmem:[%s303 + $0x3c] sm:$0xf]
          %v5096 = vld [vmem:[%s303 + $0x40] sm:$0xf]
          %v5097 = vld [vmem:[%s303 + $0x48] sm:$0xf]
          %v5098 = vld [vmem:[%s303 + $0x4c] sm:$0xf]
          %v5099 = vld [vmem:[%s303 + $0x54] sm:$0xf]
          %v5100 = vld [vmem:[%s303 + $0x58] sm:$0xf]
          %v5101 = vld [vmem:[%s303 + $0x60] sm:$0xf]
          %v5102 = vld [vmem:[%s303 + $0x64] sm:$0xf]
          %v5103 = vld [vmem:[%s303 + $0x6c] sm:$0xf]
          %v5104 = vld [vmem:[%s303 + $0x70] sm:$0xf]
          %v5105 = vld [vmem:[%s303 + $0x78] sm:$0xf]
          %v5106 = vld [vmem:[%s303 + $0x7c] sm:$0xf]
          %v5107 = vld [vmem:[%s303 + $0x84] sm:$0xf]
          %v5108 = vld [vmem:[%s303 + $0x88] sm:$0xf]
          %v5109 = vld [vmem:[%s303 + $0x90] sm:$0xf]
          %v5110 = vld [vmem:[%s303 + $0x94] sm:$0xf]
          %v5111 = vld [vmem:[%s303 + $0x9c] sm:$0xf]
          %v5112 = vld [vmem:[%s303 + $0xa0] sm:$0xf]
          %v5113 = vld [vmem:[%s303 + $0xa8] sm:$0xf]
          %v5114 = vld [vmem:[%s303 + $0xac] sm:$0xf]
          %v5115 = vld [vmem:[%s303 + $0xb4] sm:$0xf]
          %v5116 = vld [vmem:[%s303 + $0xb8] sm:$0xf]
          %v5117 = vld [vmem:[%s303] sm:$0xe]
          %v5118 = vld [vmem:[%s303 + $0x8] sm:$0x1]
          %v5119 = vld [vmem:[%s303 + $0xc] sm:$0xe]
          %v5120 = vld [vmem:[%s303 + $0x14] sm:$0x1]
          %v5121 = vld [vmem:[%s303 + $0x18] sm:$0xe]
          %v5122 = vld [vmem:[%s303 + $0x20] sm:$0x1]
          %v5123 = vld [vmem:[%s303 + $0x24] sm:$0xe]
          %v5124 = vld [vmem:[%s303 + $0x2c] sm:$0x1]
          %v5125 = vld [vmem:[%s303 + $0x30] sm:$0xe]
          %v5126 = vld [vmem:[%s303 + $0x38] sm:$0x1]
          %v5127 = vld [vmem:[%s303 + $0x3c] sm:$0xe]
          %v5128 = vld [vmem:[%s303 + $0x44] sm:$0x1]
          %v5129 = vld [vmem:[%s303 + $0x48] sm:$0xe]
          %v5130 = vld [vmem:[%s303 + $0x50] sm:$0x1]
          %v5131 = vld [vmem:[%s303 + $0x54] sm:$0xe]
          %v5132 = vld [vmem:[%s303 + $0x5c] sm:$0x1]
          %v5133 = vld [vmem:[%s303 + $0x60] sm:$0xe]
          %v5134 = vld [vmem:[%s303 + $0x68] sm:$0x1]
          %v5135 = vld [vmem:[%s303 + $0x6c] sm:$0xe]
          %v5136 = vld [vmem:[%s303 + $0x74] sm:$0x1]
          %v5137 = vld [vmem:[%s303 + $0x78] sm:$0xe]
          %v5138 = vld [vmem:[%s303 + $0x80] sm:$0x1]
          %v5139 = vld [vmem:[%s303 + $0x84] sm:$0xe]
          %v5140 = vld [vmem:[%s303 + $0x8c] sm:$0x1]
          %v5141 = vld [vmem:[%s303 + $0x90] sm:$0xe]
          %v5142 = vld [vmem:[%s303 + $0x98] sm:$0x1]
          %v5143 = vld [vmem:[%s303 + $0x9c] sm:$0xe]
          %v5144 = vld [vmem:[%s303 + $0xa4] sm:$0x1]
          %v5145 = vld [vmem:[%s303 + $0xa8] sm:$0xe]
          %v5146 = vld [vmem:[%s303 + $0xb0] sm:$0x1]
          %v5147 = vld [vmem:[%s303 + $0xb4] sm:$0xe]
          %v5148 = vld [vmem:[%s303 + $0xbc] sm:$0x1]
          %vm5197 = vcmask 1042432
          %vm5198 = vcmask 1046532
          %vm5199 = vmor %vm5197, %vm5198
          %v5200 = vrot.slane %v5117, 5
          %v5201 = vrot.slane %v5200, 4
          %v5202 = vrot.slane %v5086, 5
          %v5203 = vsel %vm5199, %v5201, %v5202
          %v5204 = vrot.slane %v5202, 4
          %v5205 = vrot.slane %v5118, 5
          %v5206 = vsel %vm5199, %v5204, %v5205
          %v5207 = vrot.slane %v5119, 5
          %v5208 = vrot.slane %v5207, 4
          %v5209 = vrot.slane %v5088, 5
          %v5210 = vsel %vm5199, %v5208, %v5209
          %v5211 = vrot.slane %v5209, 4
          %v5212 = vrot.slane %v5120, 5
          %v5213 = vsel %vm5199, %v5211, %v5212
          %v5214 = vrot.slane %v5121, 5
          %v5215 = vrot.slane %v5214, 4
          %v5216 = vrot.slane %v5090, 5
          %v5217 = vsel %vm5199, %v5215, %v5216
          %v5218 = vrot.slane %v5216, 4
          %v5219 = vrot.slane %v5122, 5
          %v5220 = vsel %vm5199, %v5218, %v5219
          %v5221 = vrot.slane %v5123, 5
          %v5222 = vrot.slane %v5221, 4
          %v5223 = vrot.slane %v5092, 5
          %v5224 = vsel %vm5199, %v5222, %v5223
          %v5225 = vrot.slane %v5223, 4
          %v5226 = vrot.slane %v5124, 5
          %v5227 = vsel %vm5199, %v5225, %v5226
          %v5228 = vrot.slane %v5125, 5
          %v5229 = vrot.slane %v5228, 4
          %v5230 = vrot.slane %v5094, 5
          %v5231 = vsel %vm5199, %v5229, %v5230
          %v5232 = vrot.slane %v5230, 4
          %v5233 = vrot.slane %v5126, 5
          %v5234 = vsel %vm5199, %v5232, %v5233
          %v5235 = vrot.slane %v5127, 5
          %v5236 = vrot.slane %v5235, 4
          %v5237 = vrot.slane %v5096, 5
          %v5238 = vsel %vm5199, %v5236, %v5237
          %v5239 = vrot.slane %v5237, 4
          %v5240 = vrot.slane %v5128, 5
          %v5241 = vsel %vm5199, %v5239, %v5240
          %v5242 = vrot.slane %v5129, 5
          %v5243 = vrot.slane %v5242, 4
          %v5244 = vrot.slane %v5098, 5
          %v5245 = vsel %vm5199, %v5243, %v5244
          %v5246 = vrot.slane %v5244, 4
          %v5247 = vrot.slane %v5130, 5
          %v5248 = vsel %vm5199, %v5246, %v5247
          %v5249 = vrot.slane %v5131, 5
          %v5250 = vrot.slane %v5249, 4
          %v5251 = vrot.slane %v5100, 5
          %v5252 = vsel %vm5199, %v5250, %v5251
          %v5253 = vrot.slane %v5251, 4
          %v5254 = vrot.slane %v5132, 5
          %v5255 = vsel %vm5199, %v5253, %v5254
          %v5256 = vrot.slane %v5133, 5
          %v5257 = vrot.slane %v5256, 4
          %v5258 = vrot.slane %v5102, 5
          %v5259 = vsel %vm5199, %v5257, %v5258
          %v5260 = vrot.slane %v5258, 4
          %v5261 = vrot.slane %v5134, 5
          %v5262 = vsel %vm5199, %v5260, %v5261
          %v5263 = vrot.slane %v5135, 5
          %v5264 = vrot.slane %v5263, 4
          %v5265 = vrot.slane %v5104, 5
          %v5266 = vsel %vm5199, %v5264, %v5265
          %v5267 = vrot.slane %v5265, 4
          %v5268 = vrot.slane %v5136, 5
          %v5269 = vsel %vm5199, %v5267, %v5268
          %v5270 = vrot.slane %v5137, 5
          %v5271 = vrot.slane %v5270, 4
          %v5272 = vrot.slane %v5106, 5
          %v5273 = vsel %vm5199, %v5271, %v5272
          %v5274 = vrot.slane %v5272, 4
          %v5275 = vrot.slane %v5138, 5
          %v5276 = vsel %vm5199, %v5274, %v5275
          %v5277 = vrot.slane %v5139, 5
          %v5278 = vrot.slane %v5277, 4
          %v5279 = vrot.slane %v5108, 5
          %v5280 = vsel %vm5199, %v5278, %v5279
          %v5281 = vrot.slane %v5279, 4
          %v5282 = vrot.slane %v5140, 5
          %v5283 = vsel %vm5199, %v5281, %v5282
          %v5284 = vrot.slane %v5141, 5
          %v5285 = vrot.slane %v5284, 4
          %v5286 = vrot.slane %v5110, 5
          %v5287 = vsel %vm5199, %v5285, %v5286
          %v5288 = vrot.slane %v5286, 4
          %v5289 = vrot.slane %v5142, 5
          %v5290 = vsel %vm5199, %v5288, %v5289
          %v5291 = vrot.slane %v5143, 5
          %v5292 = vrot.slane %v5291, 4
          %v5293 = vrot.slane %v5112, 5
          %v5294 = vsel %vm5199, %v5292, %v5293
          %v5295 = vrot.slane %v5293, 4
          %v5296 = vrot.slane %v5144, 5
          %v5297 = vsel %vm5199, %v5295, %v5296
          %v5298 = vrot.slane %v5145, 5
          %v5299 = vrot.slane %v5298, 4
          %v5300 = vrot.slane %v5114, 5
          %v5301 = vsel %vm5199, %v5299, %v5300
          %v5302 = vrot.slane %v5300, 4
          %v5303 = vrot.slane %v5146, 5
          %v5304 = vsel %vm5199, %v5302, %v5303
          %v5305 = vrot.slane %v5147, 5
          %v5306 = vrot.slane %v5305, 4
          %v5307 = vrot.slane %v5116, 5
          %v5308 = vsel %vm5199, %v5306, %v5307
          %v5309 = vrot.slane %v5307, 4
          %v5310 = vrot.slane %v5148, 5
          %v5311 = vsel %vm5199, %v5309, %v5310
          %v5312 = vld [vmem:[%s303] sm:$0xc]
          %v5313 = vld [vmem:[%s303 + $0x8] sm:$0x3]
          %v5314 = vld [vmem:[%s303 + $0xc] sm:$0xc]
          %v5315 = vld [vmem:[%s303 + $0x14] sm:$0x3]
          %v5316 = vld [vmem:[%s303 + $0x18] sm:$0xc]
          %v5317 = vld [vmem:[%s303 + $0x20] sm:$0x3]
          %v5318 = vld [vmem:[%s303 + $0x24] sm:$0xc]
          %v5319 = vld [vmem:[%s303 + $0x2c] sm:$0x3]
          %v5320 = vld [vmem:[%s303 + $0x30] sm:$0xc]
          %v5321 = vld [vmem:[%s303 + $0x38] sm:$0x3]
          %v5322 = vld [vmem:[%s303 + $0x3c] sm:$0xc]
          %v5323 = vld [vmem:[%s303 + $0x44] sm:$0x3]
          %v5324 = vld [vmem:[%s303 + $0x48] sm:$0xc]
          %v5325 = vld [vmem:[%s303 + $0x50] sm:$0x3]
          %v5326 = vld [vmem:[%s303 + $0x54] sm:$0xc]
          %v5327 = vld [vmem:[%s303 + $0x5c] sm:$0x3]
          %v5328 = vld [vmem:[%s303 + $0x60] sm:$0xc]
          %v5329 = vld [vmem:[%s303 + $0x68] sm:$0x3]
          %v5330 = vld [vmem:[%s303 + $0x6c] sm:$0xc]
          %v5331 = vld [vmem:[%s303 + $0x74] sm:$0x3]
          %v5332 = vld [vmem:[%s303 + $0x78] sm:$0xc]
          %v5333 = vld [vmem:[%s303 + $0x80] sm:$0x3]
          %v5334 = vld [vmem:[%s303 + $0x84] sm:$0xc]
          %v5335 = vld [vmem:[%s303 + $0x8c] sm:$0x3]
          %v5336 = vld [vmem:[%s303 + $0x90] sm:$0xc]
          %v5337 = vld [vmem:[%s303 + $0x98] sm:$0x3]
          %v5338 = vld [vmem:[%s303 + $0x9c] sm:$0xc]
          %v5339 = vld [vmem:[%s303 + $0xa4] sm:$0x3]
          %v5340 = vld [vmem:[%s303 + $0xa8] sm:$0xc]
          %v5341 = vld [vmem:[%s303 + $0xb0] sm:$0x3]
          %v5342 = vld [vmem:[%s303 + $0xb4] sm:$0xc]
          %v5343 = vld [vmem:[%s303 + $0xbc] sm:$0x3]
          %vm5376 = vcmask 1041408
          %vm5377 = vcmask 1045508
          %vm5378 = vmor %vm5376, %vm5377
          %v5379 = vrot.slane %v5312, 6
          %v5380 = vrot.slane %v5379, 4
          %v5381 = vrot.slane %v5086, 6
          %v5382 = vsel %vm5378, %v5380, %v5381
          %v5383 = vrot.slane %v5381, 4
          %v5384 = vrot.slane %v5313, 6
          %v5385 = vsel %vm5378, %v5383, %v5384
          %v5386 = vrot.slane %v5314, 6
          %v5387 = vrot.slane %v5386, 4
          %v5388 = vrot.slane %v5088, 6
          %v5389 = vsel %vm5378, %v5387, %v5388
          %v5390 = vrot.slane %v5388, 4
          %v5391 = vrot.slane %v5315, 6
          %v5392 = vsel %vm5378, %v5390, %v5391
          %v5393 = vrot.slane %v5316, 6
          %v5394 = vrot.slane %v5393, 4
          %v5395 = vrot.slane %v5090, 6
          %v5396 = vsel %vm5378, %v5394, %v5395
          %v5397 = vrot.slane %v5395, 4
          %v5398 = vrot.slane %v5317, 6
          %v5399 = vsel %vm5378, %v5397, %v5398
          %v5400 = vrot.slane %v5318, 6
          %v5401 = vrot.slane %v5400, 4
          %v5402 = vrot.slane %v5092, 6
          %v5403 = vsel %vm5378, %v5401, %v5402
          %v5404 = vrot.slane %v5402, 4
          %v5405 = vrot.slane %v5319, 6
          %v5406 = vsel %vm5378, %v5404, %v5405
          %v5407 = vrot.slane %v5320, 6
          %v5408 = vrot.slane %v5407, 4
          %v5409 = vrot.slane %v5094, 6
          %v5410 = vsel %vm5378, %v5408, %v5409
          %v5411 = vrot.slane %v5409, 4
          %v5412 = vrot.slane %v5321, 6
          %v5413 = vsel %vm5378, %v5411, %v5412
          %v5414 = vrot.slane %v5322, 6
          %v5415 = vrot.slane %v5414, 4
          %v5416 = vrot.slane %v5096, 6
          %v5417 = vsel %vm5378, %v5415, %v5416
          %v5418 = vrot.slane %v5416, 4
          %v5419 = vrot.slane %v5323, 6
          %v5420 = vsel %vm5378, %v5418, %v5419
          %v5421 = vrot.slane %v5324, 6
          %v5422 = vrot.slane %v5421, 4
          %v5423 = vrot.slane %v5098, 6
          %v5424 = vsel %vm5378, %v5422, %v5423
          %v5425 = vrot.slane %v5423, 4
          %v5426 = vrot.slane %v5325, 6
          %v5427 = vsel %vm5378, %v5425, %v5426
          %v5428 = vrot.slane %v5326, 6
          %v5429 = vrot.slane %v5428, 4
          %v5430 = vrot.slane %v5100, 6
          %v5431 = vsel %vm5378, %v5429, %v5430
          %v5432 = vrot.slane %v5430, 4
          %v5433 = vrot.slane %v5327, 6
          %v5434 = vsel %vm5378, %v5432, %v5433
          %v5435 = vrot.slane %v5328, 6
          %v5436 = vrot.slane %v5435, 4
          %v5437 = vrot.slane %v5102, 6
          %v5438 = vsel %vm5378, %v5436, %v5437
          %v5439 = vrot.slane %v5437, 4
          %v5440 = vrot.slane %v5329, 6
          %v5441 = vsel %vm5378, %v5439, %v5440
          %v5442 = vrot.slane %v5330, 6
          %v5443 = vrot.slane %v5442, 4
          %v5444 = vrot.slane %v5104, 6
          %v5445 = vsel %vm5378, %v5443, %v5444
          %v5446 = vrot.slane %v5444, 4
          %v5447 = vrot.slane %v5331, 6
          %v5448 = vsel %vm5378, %v5446, %v5447
          %v5449 = vrot.slane %v5332, 6
          %v5450 = vrot.slane %v5449, 4
          %v5451 = vrot.slane %v5106, 6
          %v5452 = vsel %vm5378, %v5450, %v5451
          %v5453 = vrot.slane %v5451, 4
          %v5454 = vrot.slane %v5333, 6
          %v5455 = vsel %vm5378, %v5453, %v5454
          %v5456 = vrot.slane %v5334, 6
          %v5457 = vrot.slane %v5456, 4
          %v5458 = vrot.slane %v5108, 6
          %v5459 = vsel %vm5378, %v5457, %v5458
          %v5460 = vrot.slane %v5458, 4
          %v5461 = vrot.slane %v5335, 6
          %v5462 = vsel %vm5378, %v5460, %v5461
          %v5463 = vrot.slane %v5336, 6
          %v5464 = vrot.slane %v5463, 4
          %v5465 = vrot.slane %v5110, 6
          %v5466 = vsel %vm5378, %v5464, %v5465
          %v5467 = vrot.slane %v5465, 4
          %v5468 = vrot.slane %v5337, 6
          %v5469 = vsel %vm5378, %v5467, %v5468
          %v5470 = vrot.slane %v5338, 6
          %v5471 = vrot.slane %v5470, 4
          %v5472 = vrot.slane %v5112, 6
          %v5473 = vsel %vm5378, %v5471, %v5472
          %v5474 = vrot.slane %v5472, 4
          %v5475 = vrot.slane %v5339, 6
          %v5476 = vsel %vm5378, %v5474, %v5475
          %v5477 = vrot.slane %v5340, 6
          %v5478 = vrot.slane %v5477, 4
          %v5479 = vrot.slane %v5114, 6
          %v5480 = vsel %vm5378, %v5478, %v5479
          %v5481 = vrot.slane %v5479, 4
          %v5482 = vrot.slane %v5341, 6
          %v5483 = vsel %vm5378, %v5481, %v5482
          %v5484 = vrot.slane %v5342, 6
          %v5485 = vrot.slane %v5484, 4
          %v5486 = vrot.slane %v5116, 6
          %v5487 = vsel %vm5378, %v5485, %v5486
          %v5488 = vrot.slane %v5486, 4
          %v5489 = vrot.slane %v5343, 6
          %v5490 = vsel %vm5378, %v5488, %v5489
          %s5491 = scalar_lea.vmem %s303, 24
          %v5492 = vld [vmem:[%s5491] sm:$0xf]
          %v5493 = vld [vmem:[%s5491 + $0x4] sm:$0xf]
          %v5494 = vld [vmem:[%s5491 + $0xc] sm:$0xf]
          %v5495 = vld [vmem:[%s5491 + $0x10] sm:$0xf]
          %v5496 = vld [vmem:[%s5491 + $0x18] sm:$0xf]
          %v5497 = vld [vmem:[%s5491 + $0x1c] sm:$0xf]
          %v5498 = vld [vmem:[%s5491 + $0x24] sm:$0xf]
          %v5499 = vld [vmem:[%s5491 + $0x28] sm:$0xf]
          %v5500 = vld [vmem:[%s5491 + $0x30] sm:$0xf]
          %v5501 = vld [vmem:[%s5491 + $0x34] sm:$0xf]
          %v5502 = vld [vmem:[%s5491 + $0x3c] sm:$0xf]
          %v5503 = vld [vmem:[%s5491 + $0x40] sm:$0xf]
          %v5504 = vld [vmem:[%s5491 + $0x48] sm:$0xf]
          %v5505 = vld [vmem:[%s5491 + $0x4c] sm:$0xf]
          %v5506 = vld [vmem:[%s5491 + $0x54] sm:$0xf]
          %v5507 = vld [vmem:[%s5491 + $0x58] sm:$0xf]
          %v5508 = vld [vmem:[%s5491 + $0x60] sm:$0xf]
          %v5509 = vld [vmem:[%s5491 + $0x64] sm:$0xf]
          %v5510 = vld [vmem:[%s5491 + $0x6c] sm:$0xf]
          %v5511 = vld [vmem:[%s5491 + $0x70] sm:$0xf]
          %v5512 = vld [vmem:[%s5491 + $0x78] sm:$0xf]
          %v5513 = vld [vmem:[%s5491 + $0x7c] sm:$0xf]
          %v5514 = vld [vmem:[%s5491 + $0x84] sm:$0xf]
          %v5515 = vld [vmem:[%s5491 + $0x88] sm:$0xf]
          %v5516 = vld [vmem:[%s5491 + $0x90] sm:$0xf]
          %v5517 = vld [vmem:[%s5491 + $0x94] sm:$0xf]
          %v5518 = vld [vmem:[%s5491 + $0x9c] sm:$0xf]
          %v5519 = vld [vmem:[%s5491 + $0xa0] sm:$0xf]
          %v5520 = vld [vmem:[%s5491 + $0xa8] sm:$0xf]
          %v5521 = vld [vmem:[%s5491 + $0xac] sm:$0xf]
          %v5522 = vld [vmem:[%s5491 + $0xb4] sm:$0xf]
          %v5523 = vld [vmem:[%s5491 + $0xb8] sm:$0xf]
          %v5524 = vld [vmem:[%s5491] sm:$0xe]
          %v5525 = vld [vmem:[%s5491 + $0x8] sm:$0x1]
          %v5526 = vld [vmem:[%s5491 + $0xc] sm:$0xe]
          %v5527 = vld [vmem:[%s5491 + $0x14] sm:$0x1]
          %v5528 = vld [vmem:[%s5491 + $0x18] sm:$0xe]
          %v5529 = vld [vmem:[%s5491 + $0x20] sm:$0x1]
          %v5530 = vld [vmem:[%s5491 + $0x24] sm:$0xe]
          %v5531 = vld [vmem:[%s5491 + $0x2c] sm:$0x1]
          %v5532 = vld [vmem:[%s5491 + $0x30] sm:$0xe]
          %v5533 = vld [vmem:[%s5491 + $0x38] sm:$0x1]
          %v5534 = vld [vmem:[%s5491 + $0x3c] sm:$0xe]
          %v5535 = vld [vmem:[%s5491 + $0x44] sm:$0x1]
          %v5536 = vld [vmem:[%s5491 + $0x48] sm:$0xe]
          %v5537 = vld [vmem:[%s5491 + $0x50] sm:$0x1]
          %v5538 = vld [vmem:[%s5491 + $0x54] sm:$0xe]
          %v5539 = vld [vmem:[%s5491 + $0x5c] sm:$0x1]
          %v5540 = vld [vmem:[%s5491 + $0x60] sm:$0xe]
          %v5541 = vld [vmem:[%s5491 + $0x68] sm:$0x1]
          %v5542 = vld [vmem:[%s5491 + $0x6c] sm:$0xe]
          %v5543 = vld [vmem:[%s5491 + $0x74] sm:$0x1]
          %v5544 = vld [vmem:[%s5491 + $0x78] sm:$0xe]
          %v5545 = vld [vmem:[%s5491 + $0x80] sm:$0x1]
          %v5546 = vld [vmem:[%s5491 + $0x84] sm:$0xe]
          %v5547 = vld [vmem:[%s5491 + $0x8c] sm:$0x1]
          %v5548 = vld [vmem:[%s5491 + $0x90] sm:$0xe]
          %v5549 = vld [vmem:[%s5491 + $0x98] sm:$0x1]
          %v5550 = vld [vmem:[%s5491 + $0x9c] sm:$0xe]
          %v5551 = vld [vmem:[%s5491 + $0xa4] sm:$0x1]
          %v5552 = vld [vmem:[%s5491 + $0xa8] sm:$0xe]
          %v5553 = vld [vmem:[%s5491 + $0xb0] sm:$0x1]
          %v5554 = vld [vmem:[%s5491 + $0xb4] sm:$0xe]
          %v5555 = vld [vmem:[%s5491 + $0xbc] sm:$0x1]
          %v5604 = vrot.slane %v5524, 5
          %v5605 = vrot.slane %v5604, 4
          %v5606 = vrot.slane %v5493, 5
          %v5607 = vsel %vm5199, %v5605, %v5606
          %v5608 = vrot.slane %v5606, 4
          %v5609 = vrot.slane %v5525, 5
          %v5610 = vsel %vm5199, %v5608, %v5609
          %v5611 = vrot.slane %v5526, 5
          %v5612 = vrot.slane %v5611, 4
          %v5613 = vrot.slane %v5495, 5
          %v5614 = vsel %vm5199, %v5612, %v5613
          %v5615 = vrot.slane %v5613, 4
          %v5616 = vrot.slane %v5527, 5
          %v5617 = vsel %vm5199, %v5615, %v5616
          %v5618 = vrot.slane %v5528, 5
          %v5619 = vrot.slane %v5618, 4
          %v5620 = vrot.slane %v5497, 5
          %v5621 = vsel %vm5199, %v5619, %v5620
          %v5622 = vrot.slane %v5620, 4
          %v5623 = vrot.slane %v5529, 5
          %v5624 = vsel %vm5199, %v5622, %v5623
          %v5625 = vrot.slane %v5530, 5
          %v5626 = vrot.slane %v5625, 4
          %v5627 = vrot.slane %v5499, 5
          %v5628 = vsel %vm5199, %v5626, %v5627
          %v5629 = vrot.slane %v5627, 4
          %v5630 = vrot.slane %v5531, 5
          %v5631 = vsel %vm5199, %v5629, %v5630
          %v5632 = vrot.slane %v5532, 5
          %v5633 = vrot.slane %v5632, 4
          %v5634 = vrot.slane %v5501, 5
          %v5635 = vsel %vm5199, %v5633, %v5634
          %v5636 = vrot.slane %v5634, 4
          %v5637 = vrot.slane %v5533, 5
          %v5638 = vsel %vm5199, %v5636, %v5637
          %v5639 = vrot.slane %v5534, 5
          %v5640 = vrot.slane %v5639, 4
          %v5641 = vrot.slane %v5503, 5
          %v5642 = vsel %vm5199, %v5640, %v5641
          %v5643 = vrot.slane %v5641, 4
          %v5644 = vrot.slane %v5535, 5
          %v5645 = vsel %vm5199, %v5643, %v5644
          %v5646 = vrot.slane %v5536, 5
          %v5647 = vrot.slane %v5646, 4
          %v5648 = vrot.slane %v5505, 5
          %v5649 = vsel %vm5199, %v5647, %v5648
          %v5650 = vrot.slane %v5648, 4
          %v5651 = vrot.slane %v5537, 5
          %v5652 = vsel %vm5199, %v5650, %v5651
          %v5653 = vrot.slane %v5538, 5
          %v5654 = vrot.slane %v5653, 4
          %v5655 = vrot.slane %v5507, 5
          %v5656 = vsel %vm5199, %v5654, %v5655
          %v5657 = vrot.slane %v5655, 4
          %v5658 = vrot.slane %v5539, 5
          %v5659 = vsel %vm5199, %v5657, %v5658
          %v5660 = vrot.slane %v5540, 5
          %v5661 = vrot.slane %v5660, 4
          %v5662 = vrot.slane %v5509, 5
          %v5663 = vsel %vm5199, %v5661, %v5662
          %v5664 = vrot.slane %v5662, 4
          %v5665 = vrot.slane %v5541, 5
          %v5666 = vsel %vm5199, %v5664, %v5665
          %v5667 = vrot.slane %v5542, 5
          %v5668 = vrot.slane %v5667, 4
          %v5669 = vrot.slane %v5511, 5
          %v5670 = vsel %vm5199, %v5668, %v5669
          %v5671 = vrot.slane %v5669, 4
          %v5672 = vrot.slane %v5543, 5
          %v5673 = vsel %vm5199, %v5671, %v5672
          %v5674 = vrot.slane %v5544, 5
          %v5675 = vrot.slane %v5674, 4
          %v5676 = vrot.slane %v5513, 5
          %v5677 = vsel %vm5199, %v5675, %v5676
          %v5678 = vrot.slane %v5676, 4
          %v5679 = vrot.slane %v5545, 5
          %v5680 = vsel %vm5199, %v5678, %v5679
          %v5681 = vrot.slane %v5546, 5
          %v5682 = vrot.slane %v5681, 4
          %v5683 = vrot.slane %v5515, 5
          %v5684 = vsel %vm5199, %v5682, %v5683
          %v5685 = vrot.slane %v5683, 4
          %v5686 = vrot.slane %v5547, 5
          %v5687 = vsel %vm5199, %v5685, %v5686
          %v5688 = vrot.slane %v5548, 5
          %v5689 = vrot.slane %v5688, 4
          %v5690 = vrot.slane %v5517, 5
          %v5691 = vsel %vm5199, %v5689, %v5690
          %v5692 = vrot.slane %v5690, 4
          %v5693 = vrot.slane %v5549, 5
          %v5694 = vsel %vm5199, %v5692, %v5693
          %v5695 = vrot.slane %v5550, 5
          %v5696 = vrot.slane %v5695, 4
          %v5697 = vrot.slane %v5519, 5
          %v5698 = vsel %vm5199, %v5696, %v5697
          %v5699 = vrot.slane %v5697, 4
          %v5700 = vrot.slane %v5551, 5
          %v5701 = vsel %vm5199, %v5699, %v5700
          %v5702 = vrot.slane %v5552, 5
          %v5703 = vrot.slane %v5702, 4
          %v5704 = vrot.slane %v5521, 5
          %v5705 = vsel %vm5199, %v5703, %v5704
          %v5706 = vrot.slane %v5704, 4
          %v5707 = vrot.slane %v5553, 5
          %v5708 = vsel %vm5199, %v5706, %v5707
          %v5709 = vrot.slane %v5554, 5
          %v5710 = vrot.slane %v5709, 4
          %v5711 = vrot.slane %v5523, 5
          %v5712 = vsel %vm5199, %v5710, %v5711
          %v5713 = vrot.slane %v5711, 4
          %v5714 = vrot.slane %v5555, 5
          %v5715 = vsel %vm5199, %v5713, %v5714
          %v5716 = vld [vmem:[%s5491] sm:$0xc]
          %v5717 = vld [vmem:[%s5491 + $0x8] sm:$0x3]
          %v5718 = vld [vmem:[%s5491 + $0xc] sm:$0xc]
          %v5719 = vld [vmem:[%s5491 + $0x14] sm:$0x3]
          %v5720 = vld [vmem:[%s5491 + $0x18] sm:$0xc]
          %v5721 = vld [vmem:[%s5491 + $0x20] sm:$0x3]
          %v5722 = vld [vmem:[%s5491 + $0x24] sm:$0xc]
          %v5723 = vld [vmem:[%s5491 + $0x2c] sm:$0x3]
          %v5724 = vld [vmem:[%s5491 + $0x30] sm:$0xc]
          %v5725 = vld [vmem:[%s5491 + $0x38] sm:$0x3]
          %v5726 = vld [vmem:[%s5491 + $0x3c] sm:$0xc]
          %v5727 = vld [vmem:[%s5491 + $0x44] sm:$0x3]
          %v5728 = vld [vmem:[%s5491 + $0x48] sm:$0xc]
          %v5729 = vld [vmem:[%s5491 + $0x50] sm:$0x3]
          %v5730 = vld [vmem:[%s5491 + $0x54] sm:$0xc]
          %v5731 = vld [vmem:[%s5491 + $0x5c] sm:$0x3]
          %v5732 = vld [vmem:[%s5491 + $0x60] sm:$0xc]
          %v5733 = vld [vmem:[%s5491 + $0x68] sm:$0x3]
          %v5734 = vld [vmem:[%s5491 + $0x6c] sm:$0xc]
          %v5735 = vld [vmem:[%s5491 + $0x74] sm:$0x3]
          %v5736 = vld [vmem:[%s5491 + $0x78] sm:$0xc]
          %v5737 = vld [vmem:[%s5491 + $0x80] sm:$0x3]
          %v5738 = vld [vmem:[%s5491 + $0x84] sm:$0xc]
          %v5739 = vld [vmem:[%s5491 + $0x8c] sm:$0x3]
          %v5740 = vld [vmem:[%s5491 + $0x90] sm:$0xc]
          %v5741 = vld [vmem:[%s5491 + $0x98] sm:$0x3]
          %v5742 = vld [vmem:[%s5491 + $0x9c] sm:$0xc]
          %v5743 = vld [vmem:[%s5491 + $0xa4] sm:$0x3]
          %v5744 = vld [vmem:[%s5491 + $0xa8] sm:$0xc]
          %v5745 = vld [vmem:[%s5491 + $0xb0] sm:$0x3]
          %v5746 = vld [vmem:[%s5491 + $0xb4] sm:$0xc]
          %v5747 = vld [vmem:[%s5491 + $0xbc] sm:$0x3]
          %v5780 = vrot.slane %v5716, 6
          %v5781 = vrot.slane %v5780, 4
          %v5782 = vrot.slane %v5493, 6
          %v5783 = vsel %vm5378, %v5781, %v5782
          %v5784 = vrot.slane %v5782, 4
          %v5785 = vrot.slane %v5717, 6
          %v5786 = vsel %vm5378, %v5784, %v5785
          %v5787 = vrot.slane %v5718, 6
          %v5788 = vrot.slane %v5787, 4
          %v5789 = vrot.slane %v5495, 6
          %v5790 = vsel %vm5378, %v5788, %v5789
          %v5791 = vrot.slane %v5789, 4
          %v5792 = vrot.slane %v5719, 6
          %v5793 = vsel %vm5378, %v5791, %v5792
          %v5794 = vrot.slane %v5720, 6
          %v5795 = vrot.slane %v5794, 4
          %v5796 = vrot.slane %v5497, 6
          %v5797 = vsel %vm5378, %v5795, %v5796
          %v5798 = vrot.slane %v5796, 4
          %v5799 = vrot.slane %v5721, 6
          %v5800 = vsel %vm5378, %v5798, %v5799
          %v5801 = vrot.slane %v5722, 6
          %v5802 = vrot.slane %v5801, 4
          %v5803 = vrot.slane %v5499, 6
          %v5804 = vsel %vm5378, %v5802, %v5803
          %v5805 = vrot.slane %v5803, 4
          %v5806 = vrot.slane %v5723, 6
          %v5807 = vsel %vm5378, %v5805, %v5806
          %v5808 = vrot.slane %v5724, 6
          %v5809 = vrot.slane %v5808, 4
          %v5810 = vrot.slane %v5501, 6
          %v5811 = vsel %vm5378, %v5809, %v5810
          %v5812 = vrot.slane %v5810, 4
          %v5813 = vrot.slane %v5725, 6
          %v5814 = vsel %vm5378, %v5812, %v5813
          %v5815 = vrot.slane %v5726, 6
          %v5816 = vrot.slane %v5815, 4
          %v5817 = vrot.slane %v5503, 6
          %v5818 = vsel %vm5378, %v5816, %v5817
          %v5819 = vrot.slane %v5817, 4
          %v5820 = vrot.slane %v5727, 6
          %v5821 = vsel %vm5378, %v5819, %v5820
          %v5822 = vrot.slane %v5728, 6
          %v5823 = vrot.slane %v5822, 4
          %v5824 = vrot.slane %v5505, 6
          %v5825 = vsel %vm5378, %v5823, %v5824
          %v5826 = vrot.slane %v5824, 4
          %v5827 = vrot.slane %v5729, 6
          %v5828 = vsel %vm5378, %v5826, %v5827
          %v5829 = vrot.slane %v5730, 6
          %v5830 = vrot.slane %v5829, 4
          %v5831 = vrot.slane %v5507, 6
          %v5832 = vsel %vm5378, %v5830, %v5831
          %v5833 = vrot.slane %v5831, 4
          %v5834 = vrot.slane %v5731, 6
          %v5835 = vsel %vm5378, %v5833, %v5834
          %v5836 = vrot.slane %v5732, 6
          %v5837 = vrot.slane %v5836, 4
          %v5838 = vrot.slane %v5509, 6
          %v5839 = vsel %vm5378, %v5837, %v5838
          %v5840 = vrot.slane %v5838, 4
          %v5841 = vrot.slane %v5733, 6
          %v5842 = vsel %vm5378, %v5840, %v5841
          %v5843 = vrot.slane %v5734, 6
          %v5844 = vrot.slane %v5843, 4
          %v5845 = vrot.slane %v5511, 6
          %v5846 = vsel %vm5378, %v5844, %v5845
          %v5847 = vrot.slane %v5845, 4
          %v5848 = vrot.slane %v5735, 6
          %v5849 = vsel %vm5378, %v5847, %v5848
          %v5850 = vrot.slane %v5736, 6
          %v5851 = vrot.slane %v5850, 4
          %v5852 = vrot.slane %v5513, 6
          %v5853 = vsel %vm5378, %v5851, %v5852
          %v5854 = vrot.slane %v5852, 4
          %v5855 = vrot.slane %v5737, 6
          %v5856 = vsel %vm5378, %v5854, %v5855
          %v5857 = vrot.slane %v5738, 6
          %v5858 = vrot.slane %v5857, 4
          %v5859 = vrot.slane %v5515, 6
          %v5860 = vsel %vm5378, %v5858, %v5859
          %v5861 = vrot.slane %v5859, 4
          %v5862 = vrot.slane %v5739, 6
          %v5863 = vsel %vm5378, %v5861, %v5862
          %v5864 = vrot.slane %v5740, 6
          %v5865 = vrot.slane %v5864, 4
          %v5866 = vrot.slane %v5517, 6
          %v5867 = vsel %vm5378, %v5865, %v5866
          %v5868 = vrot.slane %v5866, 4
          %v5869 = vrot.slane %v5741, 6
          %v5870 = vsel %vm5378, %v5868, %v5869
          %v5871 = vrot.slane %v5742, 6
          %v5872 = vrot.slane %v5871, 4
          %v5873 = vrot.slane %v5519, 6
          %v5874 = vsel %vm5378, %v5872, %v5873
          %v5875 = vrot.slane %v5873, 4
          %v5876 = vrot.slane %v5743, 6
          %v5877 = vsel %vm5378, %v5875, %v5876
          %v5878 = vrot.slane %v5744, 6
          %v5879 = vrot.slane %v5878, 4
          %v5880 = vrot.slane %v5521, 6
          %v5881 = vsel %vm5378, %v5879, %v5880
          %v5882 = vrot.slane %v5880, 4
          %v5883 = vrot.slane %v5745, 6
          %v5884 = vsel %vm5378, %v5882, %v5883
          %v5885 = vrot.slane %v5746, 6
          %v5886 = vrot.slane %v5885, 4
          %v5887 = vrot.slane %v5523, 6
          %v5888 = vsel %vm5378, %v5886, %v5887
          %v5889 = vrot.slane %v5887, 4
          %v5890 = vrot.slane %v5747, 6
          %v5891 = vsel %vm5378, %v5889, %v5890
          %s5892 = scalar_lea.vmem %s303, 48
          %v5893 = vld [vmem:[%s5892] sm:$0xf]
          %v5894 = vld [vmem:[%s5892 + $0x4] sm:$0xf]
          %v5895 = vld [vmem:[%s5892 + $0xc] sm:$0xf]
          %v5896 = vld [vmem:[%s5892 + $0x10] sm:$0xf]
          %v5897 = vld [vmem:[%s5892 + $0x18] sm:$0xf]
          %v5898 = vld [vmem:[%s5892 + $0x1c] sm:$0xf]
          %v5899 = vld [vmem:[%s5892 + $0x24] sm:$0xf]
          %v5900 = vld [vmem:[%s5892 + $0x28] sm:$0xf]
          %v5901 = vld [vmem:[%s5892 + $0x30] sm:$0xf]
          %v5902 = vld [vmem:[%s5892 + $0x34] sm:$0xf]
          %v5903 = vld [vmem:[%s5892 + $0x3c] sm:$0xf]
          %v5904 = vld [vmem:[%s5892 + $0x40] sm:$0xf]
          %v5905 = vld [vmem:[%s5892 + $0x48] sm:$0xf]
          %v5906 = vld [vmem:[%s5892 + $0x4c] sm:$0xf]
          %v5907 = vld [vmem:[%s5892 + $0x54] sm:$0xf]
          %v5908 = vld [vmem:[%s5892 + $0x58] sm:$0xf]
          %v5909 = vld [vmem:[%s5892 + $0x60] sm:$0xf]
          %v5910 = vld [vmem:[%s5892 + $0x64] sm:$0xf]
          %v5911 = vld [vmem:[%s5892 + $0x6c] sm:$0xf]
          %v5912 = vld [vmem:[%s5892 + $0x70] sm:$0xf]
          %v5913 = vld [vmem:[%s5892 + $0x78] sm:$0xf]
          %v5914 = vld [vmem:[%s5892 + $0x7c] sm:$0xf]
          %v5915 = vld [vmem:[%s5892 + $0x84] sm:$0xf]
          %v5916 = vld [vmem:[%s5892 + $0x88] sm:$0xf]
          %v5917 = vld [vmem:[%s5892 + $0x90] sm:$0xf]
          %v5918 = vld [vmem:[%s5892 + $0x94] sm:$0xf]
          %v5919 = vld [vmem:[%s5892 + $0x9c] sm:$0xf]
          %v5920 = vld [vmem:[%s5892 + $0xa0] sm:$0xf]
          %v5921 = vld [vmem:[%s5892 + $0xa8] sm:$0xf]
          %v5922 = vld [vmem:[%s5892 + $0xac] sm:$0xf]
          %v5923 = vld [vmem:[%s5892 + $0xb4] sm:$0xf]
          %v5924 = vld [vmem:[%s5892 + $0xb8] sm:$0xf]
          %v5925 = vld [vmem:[%s5892] sm:$0xe]
          %v5926 = vld [vmem:[%s5892 + $0x8] sm:$0x1]
          %v5927 = vld [vmem:[%s5892 + $0xc] sm:$0xe]
          %v5928 = vld [vmem:[%s5892 + $0x14] sm:$0x1]
          %v5929 = vld [vmem:[%s5892 + $0x18] sm:$0xe]
          %v5930 = vld [vmem:[%s5892 + $0x20] sm:$0x1]
          %v5931 = vld [vmem:[%s5892 + $0x24] sm:$0xe]
          %v5932 = vld [vmem:[%s5892 + $0x2c] sm:$0x1]
          %v5933 = vld [vmem:[%s5892 + $0x30] sm:$0xe]
          %v5934 = vld [vmem:[%s5892 + $0x38] sm:$0x1]
          %v5935 = vld [vmem:[%s5892 + $0x3c] sm:$0xe]
          %v5936 = vld [vmem:[%s5892 + $0x44] sm:$0x1]
          %v5937 = vld [vmem:[%s5892 + $0x48] sm:$0xe]
          %v5938 = vld [vmem:[%s5892 + $0x50] sm:$0x1]
          %v5939 = vld [vmem:[%s5892 + $0x54] sm:$0xe]
          %v5940 = vld [vmem:[%s5892 + $0x5c] sm:$0x1]
          %v5941 = vld [vmem:[%s5892 + $0x60] sm:$0xe]
          %v5942 = vld [vmem:[%s5892 + $0x68] sm:$0x1]
          %v5943 = vld [vmem:[%s5892 + $0x6c] sm:$0xe]
          %v5944 = vld [vmem:[%s5892 + $0x74] sm:$0x1]
          %v5945 = vld [vmem:[%s5892 + $0x78] sm:$0xe]
          %v5946 = vld [vmem:[%s5892 + $0x80] sm:$0x1]
          %v5947 = vld [vmem:[%s5892 + $0x84] sm:$0xe]
          %v5948 = vld [vmem:[%s5892 + $0x8c] sm:$0x1]
          %v5949 = vld [vmem:[%s5892 + $0x90] sm:$0xe]
          %v5950 = vld [vmem:[%s5892 + $0x98] sm:$0x1]
          %v5951 = vld [vmem:[%s5892 + $0x9c] sm:$0xe]
          %v5952 = vld [vmem:[%s5892 + $0xa4] sm:$0x1]
          %v5953 = vld [vmem:[%s5892 + $0xa8] sm:$0xe]
          %v5954 = vld [vmem:[%s5892 + $0xb0] sm:$0x1]
          %v5955 = vld [vmem:[%s5892 + $0xb4] sm:$0xe]
          %v5956 = vld [vmem:[%s5892 + $0xbc] sm:$0x1]
          %v6005 = vrot.slane %v5925, 5
          %v6006 = vrot.slane %v6005, 4
          %v6007 = vrot.slane %v5894, 5
          %v6008 = vsel %vm5199, %v6006, %v6007
          %v6009 = vrot.slane %v6007, 4
          %v6010 = vrot.slane %v5926, 5
          %v6011 = vsel %vm5199, %v6009, %v6010
          %v6012 = vrot.slane %v5927, 5
          %v6013 = vrot.slane %v6012, 4
          %v6014 = vrot.slane %v5896, 5
          %v6015 = vsel %vm5199, %v6013, %v6014
          %v6016 = vrot.slane %v6014, 4
          %v6017 = vrot.slane %v5928, 5
          %v6018 = vsel %vm5199, %v6016, %v6017
          %v6019 = vrot.slane %v5929, 5
          %v6020 = vrot.slane %v6019, 4
          %v6021 = vrot.slane %v5898, 5
          %v6022 = vsel %vm5199, %v6020, %v6021
          %v6023 = vrot.slane %v6021, 4
          %v6024 = vrot.slane %v5930, 5
          %v6025 = vsel %vm5199, %v6023, %v6024
          %v6026 = vrot.slane %v5931, 5
          %v6027 = vrot.slane %v6026, 4
          %v6028 = vrot.slane %v5900, 5
          %v6029 = vsel %vm5199, %v6027, %v6028
          %v6030 = vrot.slane %v6028, 4
          %v6031 = vrot.slane %v5932, 5
          %v6032 = vsel %vm5199, %v6030, %v6031
          %v6033 = vrot.slane %v5933, 5
          %v6034 = vrot.slane %v6033, 4
          %v6035 = vrot.slane %v5902, 5
          %v6036 = vsel %vm5199, %v6034, %v6035
          %v6037 = vrot.slane %v6035, 4
          %v6038 = vrot.slane %v5934, 5
          %v6039 = vsel %vm5199, %v6037, %v6038
          %v6040 = vrot.slane %v5935, 5
          %v6041 = vrot.slane %v6040, 4
          %v6042 = vrot.slane %v5904, 5
          %v6043 = vsel %vm5199, %v6041, %v6042
          %v6044 = vrot.slane %v6042, 4
          %v6045 = vrot.slane %v5936, 5
          %v6046 = vsel %vm5199, %v6044, %v6045
          %v6047 = vrot.slane %v5937, 5
          %v6048 = vrot.slane %v6047, 4
          %v6049 = vrot.slane %v5906, 5
          %v6050 = vsel %vm5199, %v6048, %v6049
          %v6051 = vrot.slane %v6049, 4
          %v6052 = vrot.slane %v5938, 5
          %v6053 = vsel %vm5199, %v6051, %v6052
          %v6054 = vrot.slane %v5939, 5
          %v6055 = vrot.slane %v6054, 4
          %v6056 = vrot.slane %v5908, 5
          %v6057 = vsel %vm5199, %v6055, %v6056
          %v6058 = vrot.slane %v6056, 4
          %v6059 = vrot.slane %v5940, 5
          %v6060 = vsel %vm5199, %v6058, %v6059
          %v6061 = vrot.slane %v5941, 5
          %v6062 = vrot.slane %v6061, 4
          %v6063 = vrot.slane %v5910, 5
          %v6064 = vsel %vm5199, %v6062, %v6063
          %v6065 = vrot.slane %v6063, 4
          %v6066 = vrot.slane %v5942, 5
          %v6067 = vsel %vm5199, %v6065, %v6066
          %v6068 = vrot.slane %v5943, 5
          %v6069 = vrot.slane %v6068, 4
          %v6070 = vrot.slane %v5912, 5
          %v6071 = vsel %vm5199, %v6069, %v6070
          %v6072 = vrot.slane %v6070, 4
          %v6073 = vrot.slane %v5944, 5
          %v6074 = vsel %vm5199, %v6072, %v6073
          %v6075 = vrot.slane %v5945, 5
          %v6076 = vrot.slane %v6075, 4
          %v6077 = vrot.slane %v5914, 5
          %v6078 = vsel %vm5199, %v6076, %v6077
          %v6079 = vrot.slane %v6077, 4
          %v6080 = vrot.slane %v5946, 5
          %v6081 = vsel %vm5199, %v6079, %v6080
          %v6082 = vrot.slane %v5947, 5
          %v6083 = vrot.slane %v6082, 4
          %v6084 = vrot.slane %v5916, 5
          %v6085 = vsel %vm5199, %v6083, %v6084
          %v6086 = vrot.slane %v6084, 4
          %v6087 = vrot.slane %v5948, 5
          %v6088 = vsel %vm5199, %v6086, %v6087
          %v6089 = vrot.slane %v5949, 5
          %v6090 = vrot.slane %v6089, 4
          %v6091 = vrot.slane %v5918, 5
          %v6092 = vsel %vm5199, %v6090, %v6091
          %v6093 = vrot.slane %v6091, 4
          %v6094 = vrot.slane %v5950, 5
          %v6095 = vsel %vm5199, %v6093, %v6094
          %v6096 = vrot.slane %v5951, 5
          %v6097 = vrot.slane %v6096, 4
          %v6098 = vrot.slane %v5920, 5
          %v6099 = vsel %vm5199, %v6097, %v6098
          %v6100 = vrot.slane %v6098, 4
          %v6101 = vrot.slane %v5952, 5
          %v6102 = vsel %vm5199, %v6100, %v6101
          %v6103 = vrot.slane %v5953, 5
          %v6104 = vrot.slane %v6103, 4
          %v6105 = vrot.slane %v5922, 5
          %v6106 = vsel %vm5199, %v6104, %v6105
          %v6107 = vrot.slane %v6105, 4
          %v6108 = vrot.slane %v5954, 5
          %v6109 = vsel %vm5199, %v6107, %v6108
          %v6110 = vrot.slane %v5955, 5
          %v6111 = vrot.slane %v6110, 4
          %v6112 = vrot.slane %v5924, 5
          %v6113 = vsel %vm5199, %v6111, %v6112
          %v6114 = vrot.slane %v6112, 4
          %v6115 = vrot.slane %v5956, 5
          %v6116 = vsel %vm5199, %v6114, %v6115
          %v6117 = vld [vmem:[%s5892] sm:$0xc]
          %v6118 = vld [vmem:[%s5892 + $0x8] sm:$0x3]
          %v6119 = vld [vmem:[%s5892 + $0xc] sm:$0xc]
          %v6120 = vld [vmem:[%s5892 + $0x14] sm:$0x3]
          %v6121 = vld [vmem:[%s5892 + $0x18] sm:$0xc]
          %v6122 = vld [vmem:[%s5892 + $0x20] sm:$0x3]
          %v6123 = vld [vmem:[%s5892 + $0x24] sm:$0xc]
          %v6124 = vld [vmem:[%s5892 + $0x2c] sm:$0x3]
          %v6125 = vld [vmem:[%s5892 + $0x30] sm:$0xc]
          %v6126 = vld [vmem:[%s5892 + $0x38] sm:$0x3]
          %v6127 = vld [vmem:[%s5892 + $0x3c] sm:$0xc]
          %v6128 = vld [vmem:[%s5892 + $0x44] sm:$0x3]
          %v6129 = vld [vmem:[%s5892 + $0x48] sm:$0xc]
          %v6130 = vld [vmem:[%s5892 + $0x50] sm:$0x3]
          %v6131 = vld [vmem:[%s5892 + $0x54] sm:$0xc]
          %v6132 = vld [vmem:[%s5892 + $0x5c] sm:$0x3]
          %v6133 = vld [vmem:[%s5892 + $0x60] sm:$0xc]
          %v6134 = vld [vmem:[%s5892 + $0x68] sm:$0x3]
          %v6135 = vld [vmem:[%s5892 + $0x6c] sm:$0xc]
          %v6136 = vld [vmem:[%s5892 + $0x74] sm:$0x3]
          %v6137 = vld [vmem:[%s5892 + $0x78] sm:$0xc]
          %v6138 = vld [vmem:[%s5892 + $0x80] sm:$0x3]
          %v6139 = vld [vmem:[%s5892 + $0x84] sm:$0xc]
          %v6140 = vld [vmem:[%s5892 + $0x8c] sm:$0x3]
          %v6141 = vld [vmem:[%s5892 + $0x90] sm:$0xc]
          %v6142 = vld [vmem:[%s5892 + $0x98] sm:$0x3]
          %v6143 = vld [vmem:[%s5892 + $0x9c] sm:$0xc]
          %v6144 = vld [vmem:[%s5892 + $0xa4] sm:$0x3]
          %v6145 = vld [vmem:[%s5892 + $0xa8] sm:$0xc]
          %v6146 = vld [vmem:[%s5892 + $0xb0] sm:$0x3]
          %v6147 = vld [vmem:[%s5892 + $0xb4] sm:$0xc]
          %v6148 = vld [vmem:[%s5892 + $0xbc] sm:$0x3]
          %v6181 = vrot.slane %v6117, 6
          %v6182 = vrot.slane %v6181, 4
          %v6183 = vrot.slane %v5894, 6
          %v6184 = vsel %vm5378, %v6182, %v6183
          %v6185 = vrot.slane %v6183, 4
          %v6186 = vrot.slane %v6118, 6
          %v6187 = vsel %vm5378, %v6185, %v6186
          %v6188 = vrot.slane %v6119, 6
          %v6189 = vrot.slane %v6188, 4
          %v6190 = vrot.slane %v5896, 6
          %v6191 = vsel %vm5378, %v6189, %v6190
          %v6192 = vrot.slane %v6190, 4
          %v6193 = vrot.slane %v6120, 6
          %v6194 = vsel %vm5378, %v6192, %v6193
          %v6195 = vrot.slane %v6121, 6
          %v6196 = vrot.slane %v6195, 4
          %v6197 = vrot.slane %v5898, 6
          %v6198 = vsel %vm5378, %v6196, %v6197
          %v6199 = vrot.slane %v6197, 4
          %v6200 = vrot.slane %v6122, 6
          %v6201 = vsel %vm5378, %v6199, %v6200
          %v6202 = vrot.slane %v6123, 6
          %v6203 = vrot.slane %v6202, 4
          %v6204 = vrot.slane %v5900, 6
          %v6205 = vsel %vm5378, %v6203, %v6204
          %v6206 = vrot.slane %v6204, 4
          %v6207 = vrot.slane %v6124, 6
          %v6208 = vsel %vm5378, %v6206, %v6207
          %v6209 = vrot.slane %v6125, 6
          %v6210 = vrot.slane %v6209, 4
          %v6211 = vrot.slane %v5902, 6
          %v6212 = vsel %vm5378, %v6210, %v6211
          %v6213 = vrot.slane %v6211, 4
          %v6214 = vrot.slane %v6126, 6
          %v6215 = vsel %vm5378, %v6213, %v6214
          %v6216 = vrot.slane %v6127, 6
          %v6217 = vrot.slane %v6216, 4
          %v6218 = vrot.slane %v5904, 6
          %v6219 = vsel %vm5378, %v6217, %v6218
          %v6220 = vrot.slane %v6218, 4
          %v6221 = vrot.slane %v6128, 6
          %v6222 = vsel %vm5378, %v6220, %v6221
          %v6223 = vrot.slane %v6129, 6
          %v6224 = vrot.slane %v6223, 4
          %v6225 = vrot.slane %v5906, 6
          %v6226 = vsel %vm5378, %v6224, %v6225
          %v6227 = vrot.slane %v6225, 4
          %v6228 = vrot.slane %v6130, 6
          %v6229 = vsel %vm5378, %v6227, %v6228
          %v6230 = vrot.slane %v6131, 6
          %v6231 = vrot.slane %v6230, 4
          %v6232 = vrot.slane %v5908, 6
          %v6233 = vsel %vm5378, %v6231, %v6232
          %v6234 = vrot.slane %v6232, 4
          %v6235 = vrot.slane %v6132, 6
          %v6236 = vsel %vm5378, %v6234, %v6235
          %v6237 = vrot.slane %v6133, 6
          %v6238 = vrot.slane %v6237, 4
          %v6239 = vrot.slane %v5910, 6
          %v6240 = vsel %vm5378, %v6238, %v6239
          %v6241 = vrot.slane %v6239, 4
          %v6242 = vrot.slane %v6134, 6
          %v6243 = vsel %vm5378, %v6241, %v6242
          %v6244 = vrot.slane %v6135, 6
          %v6245 = vrot.slane %v6244, 4
          %v6246 = vrot.slane %v5912, 6
          %v6247 = vsel %vm5378, %v6245, %v6246
          %v6248 = vrot.slane %v6246, 4
          %v6249 = vrot.slane %v6136, 6
          %v6250 = vsel %vm5378, %v6248, %v6249
          %v6251 = vrot.slane %v6137, 6
          %v6252 = vrot.slane %v6251, 4
          %v6253 = vrot.slane %v5914, 6
          %v6254 = vsel %vm5378, %v6252, %v6253
          %v6255 = vrot.slane %v6253, 4
          %v6256 = vrot.slane %v6138, 6
          %v6257 = vsel %vm5378, %v6255, %v6256
          %v6258 = vrot.slane %v6139, 6
          %v6259 = vrot.slane %v6258, 4
          %v6260 = vrot.slane %v5916, 6
          %v6261 = vsel %vm5378, %v6259, %v6260
          %v6262 = vrot.slane %v6260, 4
          %v6263 = vrot.slane %v6140, 6
          %v6264 = vsel %vm5378, %v6262, %v6263
          %v6265 = vrot.slane %v6141, 6
          %v6266 = vrot.slane %v6265, 4
          %v6267 = vrot.slane %v5918, 6
          %v6268 = vsel %vm5378, %v6266, %v6267
          %v6269 = vrot.slane %v6267, 4
          %v6270 = vrot.slane %v6142, 6
          %v6271 = vsel %vm5378, %v6269, %v6270
          %v6272 = vrot.slane %v6143, 6
          %v6273 = vrot.slane %v6272, 4
          %v6274 = vrot.slane %v5920, 6
          %v6275 = vsel %vm5378, %v6273, %v6274
          %v6276 = vrot.slane %v6274, 4
          %v6277 = vrot.slane %v6144, 6
          %v6278 = vsel %vm5378, %v6276, %v6277
          %v6279 = vrot.slane %v6145, 6
          %v6280 = vrot.slane %v6279, 4
          %v6281 = vrot.slane %v5922, 6
          %v6282 = vsel %vm5378, %v6280, %v6281
          %v6283 = vrot.slane %v6281, 4
          %v6284 = vrot.slane %v6146, 6
          %v6285 = vsel %vm5378, %v6283, %v6284
          %v6286 = vrot.slane %v6147, 6
          %v6287 = vrot.slane %v6286, 4
          %v6288 = vrot.slane %v5924, 6
          %v6289 = vsel %vm5378, %v6287, %v6288
          %v6290 = vrot.slane %v6288, 4
          %v6291 = vrot.slane %v6148, 6
          %v6292 = vsel %vm5378, %v6290, %v6291
          %v6309 = vunpack.c.l.b16 %v5085
          %v6310 = vunpack.c.l.b16 %v5086
          %v6311 = vunpack.c.l.b16 %v5087
          %v6312 = vunpack.c.l.b16 %v5088
          %v6313 = vunpack.c.l.b16 %v5089
          %v6314 = vunpack.c.l.b16 %v5090
          %v6315 = vunpack.c.l.b16 %v5091
          %v6316 = vunpack.c.l.b16 %v5092
          %v6317 = vunpack.c.l.b16 %v5093
          %v6318 = vunpack.c.l.b16 %v5094
          %v6319 = vunpack.c.l.b16 %v5095
          %v6320 = vunpack.c.l.b16 %v5096
          %v6321 = vunpack.c.l.b16 %v5097
          %v6322 = vunpack.c.l.b16 %v5098
          %v6323 = vunpack.c.l.b16 %v5099
          %v6324 = vunpack.c.l.b16 %v5100
          %v6325 = vunpack.c.l.b16 %v5101
          %v6326 = vunpack.c.l.b16 %v5102
          %v6327 = vunpack.c.l.b16 %v5103
          %v6328 = vunpack.c.l.b16 %v5104
          %v6329 = vunpack.c.l.b16 %v5105
          %v6330 = vunpack.c.l.b16 %v5106
          %v6331 = vunpack.c.l.b16 %v5107
          %v6332 = vunpack.c.l.b16 %v5108
          %v6333 = vunpack.c.l.b16 %v5109
          %v6334 = vunpack.c.l.b16 %v5110
          %v6335 = vunpack.c.l.b16 %v5111
          %v6336 = vunpack.c.l.b16 %v5112
          %v6337 = vunpack.c.l.b16 %v5113
          %v6338 = vunpack.c.l.b16 %v5114
          %v6339 = vunpack.c.l.b16 %v5115
          %v6340 = vunpack.c.l.b16 %v5116
          %v6341 = vpack.c.b16 %v6310, %v6309
          %v6342 = vpack.c.b16 %v6312, %v6311
          %v6343 = vpack.c.b16 %v6314, %v6313
          %v6344 = vpack.c.b16 %v6316, %v6315
          %v6345 = vpack.c.b16 %v6318, %v6317
          %v6346 = vpack.c.b16 %v6320, %v6319
          %v6347 = vpack.c.b16 %v6322, %v6321
          %v6348 = vpack.c.b16 %v6324, %v6323
          %v6349 = vpack.c.b16 %v6326, %v6325
          %v6350 = vpack.c.b16 %v6328, %v6327
          %v6351 = vpack.c.b16 %v6330, %v6329
          %v6352 = vpack.c.b16 %v6332, %v6331
          %v6353 = vpack.c.b16 %v6334, %v6333
          %v6354 = vpack.c.b16 %v6336, %v6335
          %v6355 = vpack.c.b16 %v6338, %v6337
          %v6356 = vpack.c.b16 %v6340, %v6339
          %v6357 = vunpack.c.l.b16 %v5203
          %v6358 = vunpack.c.l.b16 %v5206
          %v6359 = vunpack.c.l.b16 %v5210
          %v6360 = vunpack.c.l.b16 %v5213
          %v6361 = vunpack.c.l.b16 %v5217
          %v6362 = vunpack.c.l.b16 %v5220
          %v6363 = vunpack.c.l.b16 %v5224
          %v6364 = vunpack.c.l.b16 %v5227
          %v6365 = vunpack.c.l.b16 %v5231
          %v6366 = vunpack.c.l.b16 %v5234
          %v6367 = vunpack.c.l.b16 %v5238
          %v6368 = vunpack.c.l.b16 %v5241
          %v6369 = vunpack.c.l.b16 %v5245
          %v6370 = vunpack.c.l.b16 %v5248
          %v6371 = vunpack.c.l.b16 %v5252
          %v6372 = vunpack.c.l.b16 %v5255
          %v6373 = vunpack.c.l.b16 %v5259
          %v6374 = vunpack.c.l.b16 %v5262
          %v6375 = vunpack.c.l.b16 %v5266
          %v6376 = vunpack.c.l.b16 %v5269
          %v6377 = vunpack.c.l.b16 %v5273
          %v6378 = vunpack.c.l.b16 %v5276
          %v6379 = vunpack.c.l.b16 %v5280
          %v6380 = vunpack.c.l.b16 %v5283
          %v6381 = vunpack.c.l.b16 %v5287
          %v6382 = vunpack.c.l.b16 %v5290
          %v6383 = vunpack.c.l.b16 %v5294
          %v6384 = vunpack.c.l.b16 %v5297
          %v6385 = vunpack.c.l.b16 %v5301
          %v6386 = vunpack.c.l.b16 %v5304
          %v6387 = vunpack.c.l.b16 %v5308
          %v6388 = vunpack.c.l.b16 %v5311
          %v6389 = vpack.c.b16 %v6358, %v6357
          %v6390 = vpack.c.b16 %v6360, %v6359
          %v6391 = vpack.c.b16 %v6362, %v6361
          %v6392 = vpack.c.b16 %v6364, %v6363
          %v6393 = vpack.c.b16 %v6366, %v6365
          %v6394 = vpack.c.b16 %v6368, %v6367
          %v6395 = vpack.c.b16 %v6370, %v6369
          %v6396 = vpack.c.b16 %v6372, %v6371
          %v6397 = vpack.c.b16 %v6374, %v6373
          %v6398 = vpack.c.b16 %v6376, %v6375
          %v6399 = vpack.c.b16 %v6378, %v6377
          %v6400 = vpack.c.b16 %v6380, %v6379
          %v6401 = vpack.c.b16 %v6382, %v6381
          %v6402 = vpack.c.b16 %v6384, %v6383
          %v6403 = vpack.c.b16 %v6386, %v6385
          %v6404 = vpack.c.b16 %v6388, %v6387
          %6405 = vrot.lane.b32.xlu0 %v6389, 64
          %v6406 = vpop.permute.xlu0 %6405
          %6407 = vrot.lane.b32.xlu0 %v6390, 64
          %v6408 = vpop.permute.xlu0 %6407
          %6409 = vrot.lane.b32.xlu0 %v6391, 64
          %v6410 = vpop.permute.xlu0 %6409
          %6411 = vrot.lane.b32.xlu0 %v6392, 64
          %v6412 = vpop.permute.xlu0 %6411
          %6413 = vrot.lane.b32.xlu0 %v6393, 64
          %v6414 = vpop.permute.xlu0 %6413
          %6415 = vrot.lane.b32.xlu0 %v6394, 64
          %v6416 = vpop.permute.xlu0 %6415
          %6417 = vrot.lane.b32.xlu0 %v6395, 64
          %v6418 = vpop.permute.xlu0 %6417
          %6419 = vrot.lane.b32.xlu0 %v6396, 64
          %v6420 = vpop.permute.xlu0 %6419
          %6421 = vrot.lane.b32.xlu0 %v6397, 64
          %v6422 = vpop.permute.xlu0 %6421
          %6423 = vrot.lane.b32.xlu0 %v6398, 64
          %v6424 = vpop.permute.xlu0 %6423
          %6425 = vrot.lane.b32.xlu0 %v6399, 64
          %v6426 = vpop.permute.xlu0 %6425
          %6427 = vrot.lane.b32.xlu0 %v6400, 64
          %v6428 = vpop.permute.xlu0 %6427
          %6429 = vrot.lane.b32.xlu0 %v6401, 64
          %v6430 = vpop.permute.xlu0 %6429
          %6431 = vrot.lane.b32.xlu0 %v6402, 64
          %v6432 = vpop.permute.xlu0 %6431
          %6433 = vrot.lane.b32.xlu0 %v6403, 64
          %v6434 = vpop.permute.xlu0 %6433
          %6435 = vrot.lane.b32.xlu0 %v6404, 64
          %v6436 = vpop.permute.xlu0 %6435
          %v6437 = vunpack.c.l.b16 %v5382
          %v6438 = vunpack.c.l.b16 %v5385
          %v6439 = vunpack.c.l.b16 %v5389
          %v6440 = vunpack.c.l.b16 %v5392
          %v6441 = vunpack.c.l.b16 %v5396
          %v6442 = vunpack.c.l.b16 %v5399
          %v6443 = vunpack.c.l.b16 %v5403
          %v6444 = vunpack.c.l.b16 %v5406
          %v6445 = vunpack.c.l.b16 %v5410
          %v6446 = vunpack.c.l.b16 %v5413
          %v6447 = vunpack.c.l.b16 %v5417
          %v6448 = vunpack.c.l.b16 %v5420
          %v6449 = vunpack.c.l.b16 %v5424
          %v6450 = vunpack.c.l.b16 %v5427
          %v6451 = vunpack.c.l.b16 %v5431
          %v6452 = vunpack.c.l.b16 %v5434
          %v6453 = vunpack.c.l.b16 %v5438
          %v6454 = vunpack.c.l.b16 %v5441
          %v6455 = vunpack.c.l.b16 %v5445
          %v6456 = vunpack.c.l.b16 %v5448
          %v6457 = vunpack.c.l.b16 %v5452
          %v6458 = vunpack.c.l.b16 %v5455
          %v6459 = vunpack.c.l.b16 %v5459
          %v6460 = vunpack.c.l.b16 %v5462
          %v6461 = vunpack.c.l.b16 %v5466
          %v6462 = vunpack.c.l.b16 %v5469
          %v6463 = vunpack.c.l.b16 %v5473
          %v6464 = vunpack.c.l.b16 %v5476
          %v6465 = vunpack.c.l.b16 %v5480
          %v6466 = vunpack.c.l.b16 %v5483
          %v6467 = vunpack.c.l.b16 %v5487
          %v6468 = vunpack.c.l.b16 %v5490
          %v6469 = vpack.c.b16 %v6438, %v6437
          %v6470 = vpack.c.b16 %v6440, %v6439
          %v6471 = vpack.c.b16 %v6442, %v6441
          %v6472 = vpack.c.b16 %v6444, %v6443
          %v6473 = vpack.c.b16 %v6446, %v6445
          %v6474 = vpack.c.b16 %v6448, %v6447
          %v6475 = vpack.c.b16 %v6450, %v6449
          %v6476 = vpack.c.b16 %v6452, %v6451
          %v6477 = vpack.c.b16 %v6454, %v6453
          %v6478 = vpack.c.b16 %v6456, %v6455
          %v6479 = vpack.c.b16 %v6458, %v6457
          %v6480 = vpack.c.b16 %v6460, %v6459
          %v6481 = vpack.c.b16 %v6462, %v6461
          %v6482 = vpack.c.b16 %v6464, %v6463
          %v6483 = vpack.c.b16 %v6466, %v6465
          %v6484 = vpack.c.b16 %v6468, %v6467
          %v6501 = vunpack.c.l.b16 %v5492
          %v6502 = vunpack.c.l.b16 %v5493
          %v6503 = vunpack.c.l.b16 %v5494
          %v6504 = vunpack.c.l.b16 %v5495
          %v6505 = vunpack.c.l.b16 %v5496
          %v6506 = vunpack.c.l.b16 %v5497
          %v6507 = vunpack.c.l.b16 %v5498
          %v6508 = vunpack.c.l.b16 %v5499
          %v6509 = vunpack.c.l.b16 %v5500
          %v6510 = vunpack.c.l.b16 %v5501
          %v6511 = vunpack.c.l.b16 %v5502
          %v6512 = vunpack.c.l.b16 %v5503
          %v6513 = vunpack.c.l.b16 %v5504
          %v6514 = vunpack.c.l.b16 %v5505
          %v6515 = vunpack.c.l.b16 %v5506
          %v6516 = vunpack.c.l.b16 %v5507
          %v6517 = vunpack.c.l.b16 %v5508
          %v6518 = vunpack.c.l.b16 %v5509
          %v6519 = vunpack.c.l.b16 %v5510
          %v6520 = vunpack.c.l.b16 %v5511
          %v6521 = vunpack.c.l.b16 %v5512
          %v6522 = vunpack.c.l.b16 %v5513
          %v6523 = vunpack.c.l.b16 %v5514
          %v6524 = vunpack.c.l.b16 %v5515
          %v6525 = vunpack.c.l.b16 %v5516
          %v6526 = vunpack.c.l.b16 %v5517
          %v6527 = vunpack.c.l.b16 %v5518
          %v6528 = vunpack.c.l.b16 %v5519
          %v6529 = vunpack.c.l.b16 %v5520
          %v6530 = vunpack.c.l.b16 %v5521
          %v6531 = vunpack.c.l.b16 %v5522
          %v6532 = vunpack.c.l.b16 %v5523
          %v6533 = vpack.c.b16 %v6502, %v6501
          %v6534 = vpack.c.b16 %v6504, %v6503
          %v6535 = vpack.c.b16 %v6506, %v6505
          %v6536 = vpack.c.b16 %v6508, %v6507
          %v6537 = vpack.c.b16 %v6510, %v6509
          %v6538 = vpack.c.b16 %v6512, %v6511
          %v6539 = vpack.c.b16 %v6514, %v6513
          %v6540 = vpack.c.b16 %v6516, %v6515
          %v6541 = vpack.c.b16 %v6518, %v6517
          %v6542 = vpack.c.b16 %v6520, %v6519
          %v6543 = vpack.c.b16 %v6522, %v6521
          %v6544 = vpack.c.b16 %v6524, %v6523
          %v6545 = vpack.c.b16 %v6526, %v6525
          %v6546 = vpack.c.b16 %v6528, %v6527
          %v6547 = vpack.c.b16 %v6530, %v6529
          %v6548 = vpack.c.b16 %v6532, %v6531
          %6549 = vrot.lane.b32.xlu0 %v6533, 64
          %v6550 = vpop.permute.xlu0 %6549
          %6551 = vrot.lane.b32.xlu0 %v6534, 64
          %v6552 = vpop.permute.xlu0 %6551
          %6553 = vrot.lane.b32.xlu0 %v6535, 64
          %v6554 = vpop.permute.xlu0 %6553
          %6555 = vrot.lane.b32.xlu0 %v6536, 64
          %v6556 = vpop.permute.xlu0 %6555
          %6557 = vrot.lane.b32.xlu0 %v6537, 64
          %v6558 = vpop.permute.xlu0 %6557
          %6559 = vrot.lane.b32.xlu0 %v6538, 64
          %v6560 = vpop.permute.xlu0 %6559
          %6561 = vrot.lane.b32.xlu0 %v6539, 64
          %v6562 = vpop.permute.xlu0 %6561
          %6563 = vrot.lane.b32.xlu0 %v6540, 64
          %v6564 = vpop.permute.xlu0 %6563
          %6565 = vrot.lane.b32.xlu0 %v6541, 64
          %v6566 = vpop.permute.xlu0 %6565
          %6567 = vrot.lane.b32.xlu0 %v6542, 64
          %v6568 = vpop.permute.xlu0 %6567
          %6569 = vrot.lane.b32.xlu0 %v6543, 64
          %v6570 = vpop.permute.xlu0 %6569
          %6571 = vrot.lane.b32.xlu0 %v6544, 64
          %v6572 = vpop.permute.xlu0 %6571
          %6573 = vrot.lane.b32.xlu0 %v6545, 64
          %v6574 = vpop.permute.xlu0 %6573
          %6575 = vrot.lane.b32.xlu0 %v6546, 64
          %v6576 = vpop.permute.xlu0 %6575
          %6577 = vrot.lane.b32.xlu0 %v6547, 64
          %v6578 = vpop.permute.xlu0 %6577
          %6579 = vrot.lane.b32.xlu0 %v6548, 64
          %v6580 = vpop.permute.xlu0 %6579
          %v6581 = vunpack.c.l.b16 %v5607
          %v6582 = vunpack.c.l.b16 %v5610
          %v6583 = vunpack.c.l.b16 %v5614
          %v6584 = vunpack.c.l.b16 %v5617
          %v6585 = vunpack.c.l.b16 %v5621
          %v6586 = vunpack.c.l.b16 %v5624
          %v6587 = vunpack.c.l.b16 %v5628
          %v6588 = vunpack.c.l.b16 %v5631
          %v6589 = vunpack.c.l.b16 %v5635
          %v6590 = vunpack.c.l.b16 %v5638
          %v6591 = vunpack.c.l.b16 %v5642
          %v6592 = vunpack.c.l.b16 %v5645
          %v6593 = vunpack.c.l.b16 %v5649
          %v6594 = vunpack.c.l.b16 %v5652
          %v6595 = vunpack.c.l.b16 %v5656
          %v6596 = vunpack.c.l.b16 %v5659
          %v6597 = vunpack.c.l.b16 %v5663
          %v6598 = vunpack.c.l.b16 %v5666
          %v6599 = vunpack.c.l.b16 %v5670
          %v6600 = vunpack.c.l.b16 %v5673
          %v6601 = vunpack.c.l.b16 %v5677
          %v6602 = vunpack.c.l.b16 %v5680
          %v6603 = vunpack.c.l.b16 %v5684
          %v6604 = vunpack.c.l.b16 %v5687
          %v6605 = vunpack.c.l.b16 %v5691
          %v6606 = vunpack.c.l.b16 %v5694
          %v6607 = vunpack.c.l.b16 %v5698
          %v6608 = vunpack.c.l.b16 %v5701
          %v6609 = vunpack.c.l.b16 %v5705
          %v6610 = vunpack.c.l.b16 %v5708
          %v6611 = vunpack.c.l.b16 %v5712
          %v6612 = vunpack.c.l.b16 %v5715
          %v6613 = vpack.c.b16 %v6582, %v6581
          %v6614 = vpack.c.b16 %v6584, %v6583
          %v6615 = vpack.c.b16 %v6586, %v6585
          %v6616 = vpack.c.b16 %v6588, %v6587
          %v6617 = vpack.c.b16 %v6590, %v6589
          %v6618 = vpack.c.b16 %v6592, %v6591
          %v6619 = vpack.c.b16 %v6594, %v6593
          %v6620 = vpack.c.b16 %v6596, %v6595
          %v6621 = vpack.c.b16 %v6598, %v6597
          %v6622 = vpack.c.b16 %v6600, %v6599
          %v6623 = vpack.c.b16 %v6602, %v6601
          %v6624 = vpack.c.b16 %v6604, %v6603
          %v6625 = vpack.c.b16 %v6606, %v6605
          %v6626 = vpack.c.b16 %v6608, %v6607
          %v6627 = vpack.c.b16 %v6610, %v6609
          %v6628 = vpack.c.b16 %v6612, %v6611
          %v6629 = vunpack.c.l.b16 %v5783
          %v6630 = vunpack.c.l.b16 %v5786
          %v6631 = vunpack.c.l.b16 %v5790
          %v6632 = vunpack.c.l.b16 %v5793
          %v6633 = vunpack.c.l.b16 %v5797
          %v6634 = vunpack.c.l.b16 %v5800
          %v6635 = vunpack.c.l.b16 %v5804
          %v6636 = vunpack.c.l.b16 %v5807
          %v6637 = vunpack.c.l.b16 %v5811
          %v6638 = vunpack.c.l.b16 %v5814
          %v6639 = vunpack.c.l.b16 %v5818
          %v6640 = vunpack.c.l.b16 %v5821
          %v6641 = vunpack.c.l.b16 %v5825
          %v6642 = vunpack.c.l.b16 %v5828
          %v6643 = vunpack.c.l.b16 %v5832
          %v6644 = vunpack.c.l.b16 %v5835
          %v6645 = vunpack.c.l.b16 %v5839
          %v6646 = vunpack.c.l.b16 %v5842
          %v6647 = vunpack.c.l.b16 %v5846
          %v6648 = vunpack.c.l.b16 %v5849
          %v6649 = vunpack.c.l.b16 %v5853
          %v6650 = vunpack.c.l.b16 %v5856
          %v6651 = vunpack.c.l.b16 %v5860
          %v6652 = vunpack.c.l.b16 %v5863
          %v6653 = vunpack.c.l.b16 %v5867
          %v6654 = vunpack.c.l.b16 %v5870
          %v6655 = vunpack.c.l.b16 %v5874
          %v6656 = vunpack.c.l.b16 %v5877
          %v6657 = vunpack.c.l.b16 %v5881
          %v6658 = vunpack.c.l.b16 %v5884
          %v6659 = vunpack.c.l.b16 %v5888
          %v6660 = vunpack.c.l.b16 %v5891
          %v6661 = vpack.c.b16 %v6630, %v6629
          %v6662 = vpack.c.b16 %v6632, %v6631
          %v6663 = vpack.c.b16 %v6634, %v6633
          %v6664 = vpack.c.b16 %v6636, %v6635
          %v6665 = vpack.c.b16 %v6638, %v6637
          %v6666 = vpack.c.b16 %v6640, %v6639
          %v6667 = vpack.c.b16 %v6642, %v6641
          %v6668 = vpack.c.b16 %v6644, %v6643
          %v6669 = vpack.c.b16 %v6646, %v6645
          %v6670 = vpack.c.b16 %v6648, %v6647
          %v6671 = vpack.c.b16 %v6650, %v6649
          %v6672 = vpack.c.b16 %v6652, %v6651
          %v6673 = vpack.c.b16 %v6654, %v6653
          %v6674 = vpack.c.b16 %v6656, %v6655
          %v6675 = vpack.c.b16 %v6658, %v6657
          %v6676 = vpack.c.b16 %v6660, %v6659
          %6677 = vrot.lane.b32.xlu0 %v6661, 64
          %v6678 = vpop.permute.xlu0 %6677
          %6679 = vrot.lane.b32.xlu0 %v6662, 64
          %v6680 = vpop.permute.xlu0 %6679
          %6681 = vrot.lane.b32.xlu0 %v6663, 64
          %v6682 = vpop.permute.xlu0 %6681
          %6683 = vrot.lane.b32.xlu0 %v6664, 64
          %v6684 = vpop.permute.xlu0 %6683
          %6685 = vrot.lane.b32.xlu0 %v6665, 64
          %v6686 = vpop.permute.xlu0 %6685
          %6687 = vrot.lane.b32.xlu0 %v6666, 64
          %v6688 = vpop.permute.xlu0 %6687
          %6689 = vrot.lane.b32.xlu0 %v6667, 64
          %v6690 = vpop.permute.xlu0 %6689
          %6691 = vrot.lane.b32.xlu0 %v6668, 64
          %v6692 = vpop.permute.xlu0 %6691
          %6693 = vrot.lane.b32.xlu0 %v6669, 64
          %v6694 = vpop.permute.xlu0 %6693
          %6695 = vrot.lane.b32.xlu0 %v6670, 64
          %v6696 = vpop.permute.xlu0 %6695
          %6697 = vrot.lane.b32.xlu0 %v6671, 64
          %v6698 = vpop.permute.xlu0 %6697
          %6699 = vrot.lane.b32.xlu0 %v6672, 64
          %v6700 = vpop.permute.xlu0 %6699
          %6701 = vrot.lane.b32.xlu0 %v6673, 64
          %v6702 = vpop.permute.xlu0 %6701
          %6703 = vrot.lane.b32.xlu0 %v6674, 64
          %v6704 = vpop.permute.xlu0 %6703
          %6705 = vrot.lane.b32.xlu0 %v6675, 64
          %v6706 = vpop.permute.xlu0 %6705
          %6707 = vrot.lane.b32.xlu0 %v6676, 64
          %v6708 = vpop.permute.xlu0 %6707
          %v6725 = vunpack.c.l.b16 %v5893
          %v6726 = vunpack.c.l.b16 %v5894
          %v6727 = vunpack.c.l.b16 %v5895
          %v6728 = vunpack.c.l.b16 %v5896
          %v6729 = vunpack.c.l.b16 %v5897
          %v6730 = vunpack.c.l.b16 %v5898
          %v6731 = vunpack.c.l.b16 %v5899
          %v6732 = vunpack.c.l.b16 %v5900
          %v6733 = vunpack.c.l.b16 %v5901
          %v6734 = vunpack.c.l.b16 %v5902
          %v6735 = vunpack.c.l.b16 %v5903
          %v6736 = vunpack.c.l.b16 %v5904
          %v6737 = vunpack.c.l.b16 %v5905
          %v6738 = vunpack.c.l.b16 %v5906
          %v6739 = vunpack.c.l.b16 %v5907
          %v6740 = vunpack.c.l.b16 %v5908
          %v6741 = vunpack.c.l.b16 %v5909
          %v6742 = vunpack.c.l.b16 %v5910
          %v6743 = vunpack.c.l.b16 %v5911
          %v6744 = vunpack.c.l.b16 %v5912
          %v6745 = vunpack.c.l.b16 %v5913
          %v6746 = vunpack.c.l.b16 %v5914
          %v6747 = vunpack.c.l.b16 %v5915
          %v6748 = vunpack.c.l.b16 %v5916
          %v6749 = vunpack.c.l.b16 %v5917
          %v6750 = vunpack.c.l.b16 %v5918
          %v6751 = vunpack.c.l.b16 %v5919
          %v6752 = vunpack.c.l.b16 %v5920
          %v6753 = vunpack.c.l.b16 %v5921
          %v6754 = vunpack.c.l.b16 %v5922
          %v6755 = vunpack.c.l.b16 %v5923
          %v6756 = vunpack.c.l.b16 %v5924
          %v6757 = vpack.c.b16 %v6726, %v6725
          %v6758 = vpack.c.b16 %v6728, %v6727
          %v6759 = vpack.c.b16 %v6730, %v6729
          %v6760 = vpack.c.b16 %v6732, %v6731
          %v6761 = vpack.c.b16 %v6734, %v6733
          %v6762 = vpack.c.b16 %v6736, %v6735
          %v6763 = vpack.c.b16 %v6738, %v6737
          %v6764 = vpack.c.b16 %v6740, %v6739
          %v6765 = vpack.c.b16 %v6742, %v6741
          %v6766 = vpack.c.b16 %v6744, %v6743
          %v6767 = vpack.c.b16 %v6746, %v6745
          %v6768 = vpack.c.b16 %v6748, %v6747
          %v6769 = vpack.c.b16 %v6750, %v6749
          %v6770 = vpack.c.b16 %v6752, %v6751
          %v6771 = vpack.c.b16 %v6754, %v6753
          %v6772 = vpack.c.b16 %v6756, %v6755
          %v6773 = vunpack.c.l.b16 %v6008
          %v6774 = vunpack.c.l.b16 %v6011
          %v6775 = vunpack.c.l.b16 %v6015
          %v6776 = vunpack.c.l.b16 %v6018
          %v6777 = vunpack.c.l.b16 %v6022
          %v6778 = vunpack.c.l.b16 %v6025
          %v6779 = vunpack.c.l.b16 %v6029
          %v6780 = vunpack.c.l.b16 %v6032
          %v6781 = vunpack.c.l.b16 %v6036
          %v6782 = vunpack.c.l.b16 %v6039
          %v6783 = vunpack.c.l.b16 %v6043
          %v6784 = vunpack.c.l.b16 %v6046
          %v6785 = vunpack.c.l.b16 %v6050
          %v6786 = vunpack.c.l.b16 %v6053
          %v6787 = vunpack.c.l.b16 %v6057
          %v6788 = vunpack.c.l.b16 %v6060
          %v6789 = vunpack.c.l.b16 %v6064
          %v6790 = vunpack.c.l.b16 %v6067
          %v6791 = vunpack.c.l.b16 %v6071
          %v6792 = vunpack.c.l.b16 %v6074
          %v6793 = vunpack.c.l.b16 %v6078
          %v6794 = vunpack.c.l.b16 %v6081
          %v6795 = vunpack.c.l.b16 %v6085
          %v6796 = vunpack.c.l.b16 %v6088
          %v6797 = vunpack.c.l.b16 %v6092
          %v6798 = vunpack.c.l.b16 %v6095
          %v6799 = vunpack.c.l.b16 %v6099
          %v6800 = vunpack.c.l.b16 %v6102
          %v6801 = vunpack.c.l.b16 %v6106
          %v6802 = vunpack.c.l.b16 %v6109
          %v6803 = vunpack.c.l.b16 %v6113
          %v6804 = vunpack.c.l.b16 %v6116
          %v6805 = vpack.c.b16 %v6774, %v6773
          %v6806 = vpack.c.b16 %v6776, %v6775
          %v6807 = vpack.c.b16 %v6778, %v6777
          %v6808 = vpack.c.b16 %v6780, %v6779
          %v6809 = vpack.c.b16 %v6782, %v6781
          %v6810 = vpack.c.b16 %v6784, %v6783
          %v6811 = vpack.c.b16 %v6786, %v6785
          %v6812 = vpack.c.b16 %v6788, %v6787
          %v6813 = vpack.c.b16 %v6790, %v6789
          %v6814 = vpack.c.b16 %v6792, %v6791
          %v6815 = vpack.c.b16 %v6794, %v6793
          %v6816 = vpack.c.b16 %v6796, %v6795
          %v6817 = vpack.c.b16 %v6798, %v6797
          %v6818 = vpack.c.b16 %v6800, %v6799
          %v6819 = vpack.c.b16 %v6802, %v6801
          %v6820 = vpack.c.b16 %v6804, %v6803
          %6821 = vrot.lane.b32.xlu0 %v6805, 64
          %v6822 = vpop.permute.xlu0 %6821
          %6823 = vrot.lane.b32.xlu0 %v6806, 64
          %v6824 = vpop.permute.xlu0 %6823
          %6825 = vrot.lane.b32.xlu0 %v6807, 64
          %v6826 = vpop.permute.xlu0 %6825
          %6827 = vrot.lane.b32.xlu0 %v6808, 64
          %v6828 = vpop.permute.xlu0 %6827
          %6829 = vrot.lane.b32.xlu0 %v6809, 64
          %v6830 = vpop.permute.xlu0 %6829
          %6831 = vrot.lane.b32.xlu0 %v6810, 64
          %v6832 = vpop.permute.xlu0 %6831
          %6833 = vrot.lane.b32.xlu0 %v6811, 64
          %v6834 = vpop.permute.xlu0 %6833
          %6835 = vrot.lane.b32.xlu0 %v6812, 64
          %v6836 = vpop.permute.xlu0 %6835
          %6837 = vrot.lane.b32.xlu0 %v6813, 64
          %v6838 = vpop.permute.xlu0 %6837
          %6839 = vrot.lane.b32.xlu0 %v6814, 64
          %v6840 = vpop.permute.xlu0 %6839
          %6841 = vrot.lane.b32.xlu0 %v6815, 64
          %v6842 = vpop.permute.xlu0 %6841
          %6843 = vrot.lane.b32.xlu0 %v6816, 64
          %v6844 = vpop.permute.xlu0 %6843
          %6845 = vrot.lane.b32.xlu0 %v6817, 64
          %v6846 = vpop.permute.xlu0 %6845
          %6847 = vrot.lane.b32.xlu0 %v6818, 64
          %v6848 = vpop.permute.xlu0 %6847
          %6849 = vrot.lane.b32.xlu0 %v6819, 64
          %v6850 = vpop.permute.xlu0 %6849
          %6851 = vrot.lane.b32.xlu0 %v6820, 64
          %v6852 = vpop.permute.xlu0 %6851
          %v6853 = vunpack.c.l.b16 %v6184
          %v6854 = vunpack.c.l.b16 %v6187
          %v6855 = vunpack.c.l.b16 %v6191
          %v6856 = vunpack.c.l.b16 %v6194
          %v6857 = vunpack.c.l.b16 %v6198
          %v6858 = vunpack.c.l.b16 %v6201
          %v6859 = vunpack.c.l.b16 %v6205
          %v6860 = vunpack.c.l.b16 %v6208
          %v6861 = vunpack.c.l.b16 %v6212
          %v6862 = vunpack.c.l.b16 %v6215
          %v6863 = vunpack.c.l.b16 %v6219
          %v6864 = vunpack.c.l.b16 %v6222
          %v6865 = vunpack.c.l.b16 %v6226
          %v6866 = vunpack.c.l.b16 %v6229
          %v6867 = vunpack.c.l.b16 %v6233
          %v6868 = vunpack.c.l.b16 %v6236
          %v6869 = vunpack.c.l.b16 %v6240
          %v6870 = vunpack.c.l.b16 %v6243
          %v6871 = vunpack.c.l.b16 %v6247
          %v6872 = vunpack.c.l.b16 %v6250
          %v6873 = vunpack.c.l.b16 %v6254
          %v6874 = vunpack.c.l.b16 %v6257
          %v6875 = vunpack.c.l.b16 %v6261
          %v6876 = vunpack.c.l.b16 %v6264
          %v6877 = vunpack.c.l.b16 %v6268
          %v6878 = vunpack.c.l.b16 %v6271
          %v6879 = vunpack.c.l.b16 %v6275
          %v6880 = vunpack.c.l.b16 %v6278
          %v6881 = vunpack.c.l.b16 %v6282
          %v6882 = vunpack.c.l.b16 %v6285
          %v6883 = vunpack.c.l.b16 %v6289
          %v6884 = vunpack.c.l.b16 %v6292
          %v6885 = vpack.c.b16 %v6854, %v6853
          %v6886 = vpack.c.b16 %v6856, %v6855
          %v6887 = vpack.c.b16 %v6858, %v6857
          %v6888 = vpack.c.b16 %v6860, %v6859
          %v6889 = vpack.c.b16 %v6862, %v6861
          %v6890 = vpack.c.b16 %v6864, %v6863
          %v6891 = vpack.c.b16 %v6866, %v6865
          %v6892 = vpack.c.b16 %v6868, %v6867
          %v6893 = vpack.c.b16 %v6870, %v6869
          %v6894 = vpack.c.b16 %v6872, %v6871
          %v6895 = vpack.c.b16 %v6874, %v6873
          %v6896 = vpack.c.b16 %v6876, %v6875
          %v6897 = vpack.c.b16 %v6878, %v6877
          %v6898 = vpack.c.b16 %v6880, %v6879
          %v6899 = vpack.c.b16 %v6882, %v6881
          %v6900 = vpack.c.b16 %v6884, %v6883
          %vm6901 = vcmask 523264
          %v6904 = vsel %vm6901, %v6341, %v6406
          %v6908 = vsel %vm6901, %v6342, %v6408
          %v6912 = vsel %vm6901, %v6343, %v6410
          %v6916 = vsel %vm6901, %v6344, %v6412
          %v6920 = vsel %vm6901, %v6345, %v6414
          %v6924 = vsel %vm6901, %v6346, %v6416
          %v6928 = vsel %vm6901, %v6347, %v6418
          %v6932 = vsel %vm6901, %v6348, %v6420
          %v6936 = vsel %vm6901, %v6349, %v6422
          %v6940 = vsel %vm6901, %v6350, %v6424
          %v6944 = vsel %vm6901, %v6351, %v6426
          %v6948 = vsel %vm6901, %v6352, %v6428
          %v6952 = vsel %vm6901, %v6353, %v6430
          %v6956 = vsel %vm6901, %v6354, %v6432
          %v6960 = vsel %vm6901, %v6355, %v6434
          %v6964 = vsel %vm6901, %v6356, %v6436
          %v6968 = vsel %vm6901, %v6469, %v6550
          %v6972 = vsel %vm6901, %v6470, %v6552
          %v6976 = vsel %vm6901, %v6471, %v6554
          %v6980 = vsel %vm6901, %v6472, %v6556
          %v6984 = vsel %vm6901, %v6473, %v6558
          %v6988 = vsel %vm6901, %v6474, %v6560
          %v6992 = vsel %vm6901, %v6475, %v6562
          %v6996 = vsel %vm6901, %v6476, %v6564
          %v7000 = vsel %vm6901, %v6477, %v6566
          %v7004 = vsel %vm6901, %v6478, %v6568
          %v7008 = vsel %vm6901, %v6479, %v6570
          %v7012 = vsel %vm6901, %v6480, %v6572
          %v7016 = vsel %vm6901, %v6481, %v6574
          %v7020 = vsel %vm6901, %v6482, %v6576
          %v7024 = vsel %vm6901, %v6483, %v6578
          %v7028 = vsel %vm6901, %v6484, %v6580
          %v7032 = vsel %vm6901, %v6613, %v6678
          %v7036 = vsel %vm6901, %v6614, %v6680
          %v7040 = vsel %vm6901, %v6615, %v6682
          %v7044 = vsel %vm6901, %v6616, %v6684
          %v7048 = vsel %vm6901, %v6617, %v6686
          %v7052 = vsel %vm6901, %v6618, %v6688
          %v7056 = vsel %vm6901, %v6619, %v6690
          %v7060 = vsel %vm6901, %v6620, %v6692
          %v7064 = vsel %vm6901, %v6621, %v6694
          %v7068 = vsel %vm6901, %v6622, %v6696
          %v7072 = vsel %vm6901, %v6623, %v6698
          %v7076 = vsel %vm6901, %v6624, %v6700
          %v7080 = vsel %vm6901, %v6625, %v6702
          %v7084 = vsel %vm6901, %v6626, %v6704
          %v7088 = vsel %vm6901, %v6627, %v6706
          %v7092 = vsel %vm6901, %v6628, %v6708
          %v7096 = vsel %vm6901, %v6757, %v6822
          %v7100 = vsel %vm6901, %v6758, %v6824
          %v7104 = vsel %vm6901, %v6759, %v6826
          %v7108 = vsel %vm6901, %v6760, %v6828
          %v7112 = vsel %vm6901, %v6761, %v6830
          %v7116 = vsel %vm6901, %v6762, %v6832
          %v7120 = vsel %vm6901, %v6763, %v6834
          %v7124 = vsel %vm6901, %v6764, %v6836
          %v7128 = vsel %vm6901, %v6765, %v6838
          %v7132 = vsel %vm6901, %v6766, %v6840
          %v7136 = vsel %vm6901, %v6767, %v6842
          %v7140 = vsel %vm6901, %v6768, %v6844
          %v7144 = vsel %vm6901, %v6769, %v6846
          %v7148 = vsel %vm6901, %v6770, %v6848
          %v7152 = vsel %vm6901, %v6771, %v6850
          %v7156 = vsel %vm6901, %v6772, %v6852
          %v7158 = vld [vmem:[%s308] sm:$0xf]
          %v7159 = vld [vmem:[%s308 + $0x4] sm:$0xf]
          %v7160 = vld [vmem:[%s308 + $0x8] sm:$0xf]
          %v7161 = vld [vmem:[%s308 + $0xc] sm:$0xf]
          %v7162 = vld [vmem:[%s308 + $0x10] sm:$0xf]
          %v7163 = vld [vmem:[%s308 + $0x14] sm:$0xf]
          %v7164 = vld [vmem:[%s308 + $0x18] sm:$0xf]
          %v7165 = vld [vmem:[%s308 + $0x1c] sm:$0xf]
          %v7166 = vld [vmem:[%s308 + $0x20] sm:$0xf]
          %v7167 = vld [vmem:[%s308 + $0x24] sm:$0xf]
          %v7168 = vld [vmem:[%s308 + $0x28] sm:$0xf]
          %v7169 = vld [vmem:[%s308 + $0x2c] sm:$0xf]
          %v7170 = vld [vmem:[%s308 + $0x30] sm:$0xf]
          %v7171 = vld [vmem:[%s308 + $0x34] sm:$0xf]
          %v7172 = vld [vmem:[%s308 + $0x38] sm:$0xf]
          %v7173 = vld [vmem:[%s308 + $0x3c] sm:$0xf]
          %v7174 = vld [vmem:[%s308 + $0x40] sm:$0xf]
          %v7175 = vld [vmem:[%s308 + $0x44] sm:$0xf]
          %v7176 = vld [vmem:[%s308 + $0x48] sm:$0xf]
          %v7177 = vld [vmem:[%s308 + $0x4c] sm:$0xf]
          %v7178 = vld [vmem:[%s308 + $0x50] sm:$0xf]
          %v7179 = vld [vmem:[%s308 + $0x54] sm:$0xf]
          %v7180 = vld [vmem:[%s308 + $0x58] sm:$0xf]
          %v7181 = vld [vmem:[%s308 + $0x5c] sm:$0xf]
          %v7182 = vld [vmem:[%s308 + $0x60] sm:$0xf]
          %v7183 = vld [vmem:[%s308 + $0x64] sm:$0xf]
          %v7184 = vld [vmem:[%s308 + $0x68] sm:$0xf]
          %v7185 = vld [vmem:[%s308 + $0x6c] sm:$0xf]
          %v7186 = vld [vmem:[%s308 + $0x70] sm:$0xf]
          %v7187 = vld [vmem:[%s308 + $0x74] sm:$0xf]
          %v7188 = vld [vmem:[%s308 + $0x78] sm:$0xf]
          %v7189 = vld [vmem:[%s308 + $0x7c] sm:$0xf]
          %v7190 = vld [vmem:[%s308 + $0x80] sm:$0xf]
          %v7191 = vld [vmem:[%s308 + $0x84] sm:$0xf]
          %v7192 = vld [vmem:[%s308 + $0x88] sm:$0xf]
          %v7193 = vld [vmem:[%s308 + $0x8c] sm:$0xf]
          %v7194 = vld [vmem:[%s308 + $0x90] sm:$0xf]
          %v7195 = vld [vmem:[%s308 + $0x94] sm:$0xf]
          %v7196 = vld [vmem:[%s308 + $0x98] sm:$0xf]
          %v7197 = vld [vmem:[%s308 + $0x9c] sm:$0xf]
          %v7198 = vld [vmem:[%s308 + $0xa0] sm:$0xf]
          %v7199 = vld [vmem:[%s308 + $0xa4] sm:$0xf]
          %v7200 = vld [vmem:[%s308 + $0xa8] sm:$0xf]
          %v7201 = vld [vmem:[%s308 + $0xac] sm:$0xf]
          %v7202 = vld [vmem:[%s308 + $0xb0] sm:$0xf]
          %v7203 = vld [vmem:[%s308 + $0xb4] sm:$0xf]
          %v7204 = vld [vmem:[%s308 + $0xb8] sm:$0xf]
          %v7205 = vld [vmem:[%s308 + $0xbc] sm:$0xf]
          %v7206 = vld [vmem:[%s308 + $0xc0] sm:$0xf]
          %v7207 = vld [vmem:[%s308 + $0xc4] sm:$0xf]
          %v7208 = vld [vmem:[%s308 + $0xc8] sm:$0xf]
          %v7209 = vld [vmem:[%s308 + $0xcc] sm:$0xf]
          %v7210 = vld [vmem:[%s308 + $0xd0] sm:$0xf]
          %v7211 = vld [vmem:[%s308 + $0xd4] sm:$0xf]
          %v7212 = vld [vmem:[%s308 + $0xd8] sm:$0xf]
          %v7213 = vld [vmem:[%s308 + $0xdc] sm:$0xf]
          %v7214 = vld [vmem:[%s308 + $0xe0] sm:$0xf]
          %v7215 = vld [vmem:[%s308 + $0xe4] sm:$0xf]
          %v7216 = vld [vmem:[%s308 + $0xe8] sm:$0xf]
          %v7217 = vld [vmem:[%s308 + $0xec] sm:$0xf]
          %v7218 = vld [vmem:[%s308 + $0xf0] sm:$0xf]
          %v7219 = vld [vmem:[%s308 + $0xf4] sm:$0xf]
          %v7220 = vld [vmem:[%s308 + $0xf8] sm:$0xf]
          %v7221 = vld [vmem:[%s308 + $0xfc] sm:$0xf]
          %v7222 = vld [vmem:[%s308 + $0x100] sm:$0xf]
          %v7223 = vld [vmem:[%s308 + $0x104] sm:$0xf]
          %v7224 = vld [vmem:[%s308 + $0x108] sm:$0xf]
          %v7225 = vld [vmem:[%s308 + $0x10c] sm:$0xf]
          %v7226 = vld [vmem:[%s308 + $0x110] sm:$0xf]
          %v7227 = vld [vmem:[%s308 + $0x114] sm:$0xf]
          %v7228 = vld [vmem:[%s308 + $0x118] sm:$0xf]
          %v7229 = vld [vmem:[%s308 + $0x11c] sm:$0xf]
          %v7230 = vld [vmem:[%s2 + $0x1] sm:$0x1]
          %v7231 = vlaneseq
          %v7232 = vshrl.u32 %v7231, 7
          %v7233 = vsub.s32 0, %v7232
          %v7234 = vrot.slane %v7230, %v7233
          %v7307 = vunpack.c.l.b16 %v7158
          %v7308 = vunpack.c.l.b16 %v7159
          %v7309 = vunpack.c.l.b16 %v7160
          %v7310 = vunpack.c.l.b16 %v7161
          %v7311 = vunpack.c.l.b16 %v7162
          %v7312 = vunpack.c.l.b16 %v7163
          %v7313 = vunpack.c.l.b16 %v7164
          %v7314 = vunpack.c.l.b16 %v7165
          %v7315 = vunpack.c.l.b16 %v7166
          %v7316 = vunpack.c.l.b16 %v7167
          %v7317 = vunpack.c.l.b16 %v7168
          %v7318 = vunpack.c.l.b16 %v7169
          %v7319 = vunpack.c.l.b16 %v7170
          %v7320 = vunpack.c.l.b16 %v7171
          %v7321 = vunpack.c.l.b16 %v7172
          %v7322 = vunpack.c.l.b16 %v7173
          %v7323 = vunpack.c.l.b16 %v7174
          %v7324 = vunpack.c.l.b16 %v7175
          %v7325 = vunpack.c.l.b16 %v7176
          %v7326 = vunpack.c.l.b16 %v7177
          %v7327 = vunpack.c.l.b16 %v7178
          %v7328 = vunpack.c.l.b16 %v7179
          %v7329 = vunpack.c.l.b16 %v7180
          %v7330 = vunpack.c.l.b16 %v7181
          %v7331 = vunpack.c.l.b16 %v7182
          %v7332 = vunpack.c.l.b16 %v7183
          %v7333 = vunpack.c.l.b16 %v7184
          %v7334 = vunpack.c.l.b16 %v7185
          %v7335 = vunpack.c.l.b16 %v7186
          %v7336 = vunpack.c.l.b16 %v7187
          %v7337 = vunpack.c.l.b16 %v7188
          %v7338 = vunpack.c.l.b16 %v7189
          %v7339 = vunpack.c.l.b16 %v7190
          %v7340 = vunpack.c.l.b16 %v7191
          %v7341 = vunpack.c.l.b16 %v7192
          %v7342 = vunpack.c.l.b16 %v7193
          %v7343 = vunpack.c.l.b16 %v7194
          %v7344 = vunpack.c.l.b16 %v7195
          %v7345 = vunpack.c.l.b16 %v7196
          %v7346 = vunpack.c.l.b16 %v7197
          %v7347 = vunpack.c.l.b16 %v7198
          %v7348 = vunpack.c.l.b16 %v7199
          %v7349 = vunpack.c.l.b16 %v7200
          %v7350 = vunpack.c.l.b16 %v7201
          %v7351 = vunpack.c.l.b16 %v7202
          %v7352 = vunpack.c.l.b16 %v7203
          %v7353 = vunpack.c.l.b16 %v7204
          %v7354 = vunpack.c.l.b16 %v7205
          %v7355 = vunpack.c.l.b16 %v7206
          %v7356 = vunpack.c.l.b16 %v7207
          %v7357 = vunpack.c.l.b16 %v7208
          %v7358 = vunpack.c.l.b16 %v7209
          %v7359 = vunpack.c.l.b16 %v7210
          %v7360 = vunpack.c.l.b16 %v7211
          %v7361 = vunpack.c.l.b16 %v7212
          %v7362 = vunpack.c.l.b16 %v7213
          %v7363 = vunpack.c.l.b16 %v7214
          %v7364 = vunpack.c.l.b16 %v7215
          %v7365 = vunpack.c.l.b16 %v7216
          %v7366 = vunpack.c.l.b16 %v7217
          %v7367 = vunpack.c.l.b16 %v7218
          %v7368 = vunpack.c.l.b16 %v7219
          %v7369 = vunpack.c.l.b16 %v7220
          %v7370 = vunpack.c.l.b16 %v7221
          %v7371 = vunpack.c.l.b16 %v7222
          %v7372 = vunpack.c.l.b16 %v7223
          %v7373 = vunpack.c.l.b16 %v7224
          %v7374 = vunpack.c.l.b16 %v7225
          %v7375 = vunpack.c.l.b16 %v7226
          %v7376 = vunpack.c.l.b16 %v7227
          %v7377 = vunpack.c.l.b16 %v7228
          %v7378 = vunpack.c.l.b16 %v7229
          %v7379 = vpack.c.b16 %v7308, %v7307
          %v7380 = vpack.c.b16 %v7310, %v7309
          %v7381 = vpack.c.b16 %v7312, %v7311
          %v7382 = vpack.c.b16 %v7314, %v7313
          %v7383 = vpack.c.b16 %v7316, %v7315
          %v7384 = vpack.c.b16 %v7318, %v7317
          %v7385 = vpack.c.b16 %v7320, %v7319
          %v7386 = vpack.c.b16 %v7322, %v7321
          %v7387 = vpack.c.b16 %v7324, %v7323
          %v7388 = vpack.c.b16 %v7326, %v7325
          %v7389 = vpack.c.b16 %v7328, %v7327
          %v7390 = vpack.c.b16 %v7330, %v7329
          %v7391 = vpack.c.b16 %v7332, %v7331
          %v7392 = vpack.c.b16 %v7334, %v7333
          %v7393 = vpack.c.b16 %v7336, %v7335
          %v7394 = vpack.c.b16 %v7338, %v7337
          %v7395 = vpack.c.b16 %v7340, %v7339
          %v7396 = vpack.c.b16 %v7342, %v7341
          %v7397 = vpack.c.b16 %v7344, %v7343
          %v7398 = vpack.c.b16 %v7346, %v7345
          %v7399 = vpack.c.b16 %v7348, %v7347
          %v7400 = vpack.c.b16 %v7350, %v7349
          %v7401 = vpack.c.b16 %v7352, %v7351
          %v7402 = vpack.c.b16 %v7354, %v7353
          %v7403 = vpack.c.b16 %v7356, %v7355
          %v7404 = vpack.c.b16 %v7358, %v7357
          %v7405 = vpack.c.b16 %v7360, %v7359
          %v7406 = vpack.c.b16 %v7362, %v7361
          %v7407 = vpack.c.b16 %v7364, %v7363
          %v7408 = vpack.c.b16 %v7366, %v7365
          %v7409 = vpack.c.b16 %v7368, %v7367
          %v7410 = vpack.c.b16 %v7370, %v7369
          %v7411 = vpack.c.b16 %v7372, %v7371
          %v7412 = vpack.c.b16 %v7374, %v7373
          %v7413 = vpack.c.b16 %v7376, %v7375
          %v7414 = vpack.c.b16 %v7378, %v7377
          %v7452 = vsel %vm6901, %v6885, 0
          %v7455 = vsel %vm6901, %v6886, 0
          %v7458 = vsel %vm6901, %v6887, 0
          %v7461 = vsel %vm6901, %v6888, 0
          %v7464 = vsel %vm6901, %v6889, 0
          %v7467 = vsel %vm6901, %v6890, 0
          %v7470 = vsel %vm6901, %v6891, 0
          %v7473 = vsel %vm6901, %v6892, 0
          %v7476 = vsel %vm6901, %v6893, 0
          %v7479 = vsel %vm6901, %v6894, 0
          %v7482 = vsel %vm6901, %v6895, 0
          %v7485 = vsel %vm6901, %v6896, 0
          %v7488 = vsel %vm6901, %v6897, 0
          %v7491 = vsel %vm6901, %v6898, 0
          %v7494 = vsel %vm6901, %v6899, 0
          %v7497 = vsel %vm6901, %v6900, 0
          %7499 = vmatprep.subr.bf16.mxu0 0
          %7500 = vmatpush1.bf16.msra.mxu0 %v7379
          %7501 = vmatprep.subr.bf16.mxu0 0
          %7502 = vmatpush1.bf16.msra.mxu0 %v7380
          %7503 = vmatprep.subr.bf16.mxu0 0
          %7504 = vmatpush1.bf16.msra.mxu0 %v7381
          %7505 = vmatprep.subr.bf16.mxu0 0
          %7506 = vmatpush1.bf16.msra.mxu0 %v7382
          %7507 = vmatprep.subr.bf16.mxu0 0
          %7508 = vmatpush1.bf16.msra.mxu0 %v7383
          %7509 = vmatprep.subr.bf16.mxu0 0
          %7510 = vmatpush1.bf16.msra.mxu0 %v7384
          %7511 = vmatprep.subr.bf16.mxu0 0
          %7512 = vmatpush1.bf16.msra.mxu0 %v7385
          %7513 = vmatprep.subr.bf16.mxu0 0
          %7514 = vmatpush1.bf16.msra.mxu0 %v7386
          %7515 = vmatprep.subr.bf16.mxu0 0
          %7516 = vmatpush1.bf16.msra.mxu0 %v7387
          %7517 = vmatprep.subr.bf16.mxu0 0
          %7518 = vmatpush1.bf16.msra.mxu0 %v7388
          %7519 = vmatprep.subr.bf16.mxu0 0
          %7520 = vmatpush1.bf16.msra.mxu0 %v7389
          %7521 = vmatprep.subr.bf16.mxu0 0
          %7522 = vmatpush1.bf16.msra.mxu0 %v7390
          %7523 = vmatprep.subr.bf16.mxu0 0
          %7524 = vmatpush1.bf16.msra.mxu0 %v7391
          %7525 = vmatprep.subr.bf16.mxu0 0
          %7526 = vmatpush1.bf16.msra.mxu0 %v7392
          %7527 = vmatprep.subr.bf16.mxu0 0
          %7528 = vmatpush1.bf16.msra.mxu0 %v7393
          %7529 = vmatprep.subr.bf16.mxu0 0
          %7530 = vmatpush1.bf16.msra.mxu0 %v7394
          %7531 = vmatprep.mubr.bf16.mxu0 %v6968
          %7532 = vmatmul.mubr.bf16.gmra.mrb[0].mxu0 %v6904
          %v7533 = vpop.f32.mrb[0].mxu0
          %v7534 = vadd.f32 %v7234, %v7533
          %v7535 = vpop.f32.mrb[0].mxu0
          %v7536 = vpop.f32.mrb[0].mxu0
          %v7537 = vadd.f32 %v7234, %v7536
          %v7538 = vpop.f32.mrb[0].mxu0
          %7539 = vmatprep.mubr.bf16.mxu0 %v6972
          %7540 = vmatmul.mubr.bf16.gmra.mrb[0].mxu0 %v6908
          %v7541 = vpop.f32.mrb[0].mxu0
          %v7542 = vadd.f32 %v7234, %v7541
          %v7543 = vpop.f32.mrb[0].mxu0
          %v7544 = vpop.f32.mrb[0].mxu0
          %v7545 = vadd.f32 %v7234, %v7544
          %v7546 = vpop.f32.mrb[0].mxu0
          %7547 = vmatprep.mubr.bf16.mxu0 %v6976
          %7548 = vmatmul.mubr.bf16.gmra.mrb[0].mxu0 %v6912
          %v7549 = vpop.f32.mrb[0].mxu0
          %v7550 = vadd.f32 %v7234, %v7549
          %v7551 = vpop.f32.mrb[0].mxu0
          %v7552 = vpop.f32.mrb[0].mxu0
          %v7553 = vadd.f32 %v7234, %v7552
          %v7554 = vpop.f32.mrb[0].mxu0
          %7555 = vmatprep.mubr.bf16.mxu0 %v6980
          %7556 = vmatmul.mubr.bf16.gmra.mrb[0].mxu0 %v6916
          %v7557 = vpop.f32.mrb[0].mxu0
          %v7558 = vadd.f32 %v7234, %v7557
          %v7559 = vpop.f32.mrb[0].mxu0
          %v7560 = vpop.f32.mrb[0].mxu0
          %v7561 = vadd.f32 %v7234, %v7560
          %v7562 = vpop.f32.mrb[0].mxu0
          %7563 = vmatprep.mubr.bf16.mxu0 %v6984
          %7564 = vmatmul.mubr.bf16.gmra.mrb[0].mxu0 %v6920
          %v7565 = vpop.f32.mrb[0].mxu0
          %v7566 = vadd.f32 %v7234, %v7565
          %v7567 = vpop.f32.mrb[0].mxu0
          %v7568 = vpop.f32.mrb[0].mxu0
          %v7569 = vadd.f32 %v7234, %v7568
          %v7570 = vpop.f32.mrb[0].mxu0
          %7571 = vmatprep.mubr.bf16.mxu0 %v6988
          %7572 = vmatmul.mubr.bf16.gmra.mrb[0].mxu0 %v6924
          %v7573 = vpop.f32.mrb[0].mxu0
          %v7574 = vadd.f32 %v7234, %v7573
          %v7575 = vpop.f32.mrb[0].mxu0
          %v7576 = vpop.f32.mrb[0].mxu0
          %v7577 = vadd.f32 %v7234, %v7576
          %v7578 = vpop.f32.mrb[0].mxu0
          %7579 = vmatprep.mubr.bf16.mxu0 %v6992
          %7580 = vmatmul.mubr.bf16.gmra.mrb[0].mxu0 %v6928
          %v7581 = vpop.f32.mrb[0].mxu0
          %v7582 = vadd.f32 %v7234, %v7581
          %v7583 = vpop.f32.mrb[0].mxu0
          %v7584 = vpop.f32.mrb[0].mxu0
          %v7585 = vadd.f32 %v7234, %v7584
          %v7586 = vpop.f32.mrb[0].mxu0
          %7587 = vmatprep.mubr.bf16.mxu0 %v6996
          %7588 = vmatmul.mubr.bf16.gmra.mrb[0].mxu0 %v6932
          %v7589 = vpop.f32.mrb[0].mxu0
          %v7590 = vadd.f32 %v7234, %v7589
          %v7591 = vpop.f32.mrb[0].mxu0
          %v7592 = vpop.f32.mrb[0].mxu0
          %v7593 = vadd.f32 %v7234, %v7592
          %v7594 = vpop.f32.mrb[0].mxu0
          %7595 = vmatprep.mubr.bf16.mxu0 %v7000
          %7596 = vmatmul.mubr.bf16.gmra.mrb[0].mxu0 %v6936
          %v7597 = vpop.f32.mrb[0].mxu0
          %v7598 = vadd.f32 %v7234, %v7597
          %v7599 = vpop.f32.mrb[0].mxu0
          %v7600 = vpop.f32.mrb[0].mxu0
          %v7601 = vadd.f32 %v7234, %v7600
          %v7602 = vpop.f32.mrb[0].mxu0
          %7603 = vmatprep.mubr.bf16.mxu0 %v7004
          %7604 = vmatmul.mubr.bf16.gmra.mrb[0].mxu0 %v6940
          %v7605 = vpop.f32.mrb[0].mxu0
          %v7606 = vadd.f32 %v7234, %v7605
          %v7607 = vpop.f32.mrb[0].mxu0
          %v7608 = vpop.f32.mrb[0].mxu0
          %v7609 = vadd.f32 %v7234, %v7608
          %v7610 = vpop.f32.mrb[0].mxu0
          %7611 = vmatprep.mubr.bf16.mxu0 %v7008
          %7612 = vmatmul.mubr.bf16.gmra.mrb[0].mxu0 %v6944
          %v7613 = vpop.f32.mrb[0].mxu0
          %v7614 = vadd.f32 %v7234, %v7613
          %v7615 = vpop.f32.mrb[0].mxu0
          %v7616 = vpop.f32.mrb[0].mxu0
          %v7617 = vadd.f32 %v7234, %v7616
          %v7618 = vpop.f32.mrb[0].mxu0
          %7619 = vmatprep.mubr.bf16.mxu0 %v7012
          %7620 = vmatmul.mubr.bf16.gmra.mrb[0].mxu0 %v6948
          %v7621 = vpop.f32.mrb[0].mxu0
          %v7622 = vadd.f32 %v7234, %v7621
          %v7623 = vpop.f32.mrb[0].mxu0
          %v7624 = vpop.f32.mrb[0].mxu0
          %v7625 = vadd.f32 %v7234, %v7624
          %v7626 = vpop.f32.mrb[0].mxu0
          %7627 = vmatprep.mubr.bf16.mxu0 %v7016
          %7628 = vmatmul.mubr.bf16.gmra.mrb[0].mxu0 %v6952
          %v7629 = vpop.f32.mrb[0].mxu0
          %v7630 = vadd.f32 %v7234, %v7629
          %v7631 = vpop.f32.mrb[0].mxu0
          %v7632 = vpop.f32.mrb[0].mxu0
          %v7633 = vadd.f32 %v7234, %v7632
          %v7634 = vpop.f32.mrb[0].mxu0
          %7635 = vmatprep.mubr.bf16.mxu0 %v7020
          %7636 = vmatmul.mubr.bf16.gmra.mrb[0].mxu0 %v6956
          %v7637 = vpop.f32.mrb[0].mxu0
          %v7638 = vadd.f32 %v7234, %v7637
          %v7639 = vpop.f32.mrb[0].mxu0
          %v7640 = vpop.f32.mrb[0].mxu0
          %v7641 = vadd.f32 %v7234, %v7640
          %v7642 = vpop.f32.mrb[0].mxu0
          %7643 = vmatprep.mubr.bf16.mxu0 %v7024
          %7644 = vmatmul.mubr.bf16.gmra.mrb[0].mxu0 %v6960
          %v7645 = vpop.f32.mrb[0].mxu0
          %v7646 = vadd.f32 %v7234, %v7645
          %v7647 = vpop.f32.mrb[0].mxu0
          %v7648 = vpop.f32.mrb[0].mxu0
          %v7649 = vadd.f32 %v7234, %v7648
          %v7650 = vpop.f32.mrb[0].mxu0
          %7651 = vmatprep.mubr.bf16.mxu0 %v7028
          %7652 = vmatmul.mubr.bf16.gmra.mrb[0].mxu0 %v6964
          %v7653 = vpop.f32.mrb[0].mxu0
          %v7654 = vadd.f32 %v7234, %v7653
          %v7655 = vpop.f32.mrb[0].mxu0
          %v7656 = vpop.f32.mrb[0].mxu0
          %v7657 = vadd.f32 %v7234, %v7656
          %v7658 = vpop.f32.mrb[0].mxu0
          %7659 = vdwg.mxu0
          %7660 = vmatprep.subr.bf16.mxu0 0
          %7661 = vmatpush1.bf16.msra.mxu0 %v7395
          %7662 = vmatprep.subr.bf16.mxu0 0
          %7663 = vmatpush1.bf16.msra.mxu0 %v7396
          %7664 = vmatprep.subr.bf16.mxu0 0
          %7665 = vmatpush1.bf16.msra.mxu0 %v7397
          %7666 = vmatprep.subr.bf16.mxu0 0
          %7667 = vmatpush1.bf16.msra.mxu0 %v7398
          %7668 = vmatprep.subr.bf16.mxu0 0
          %7669 = vmatpush1.bf16.msra.mxu0 %v7399
          %7670 = vmatprep.subr.bf16.mxu0 0
          %7671 = vmatpush1.bf16.msra.mxu0 %v7400
          %7672 = vmatprep.subr.bf16.mxu0 0
          %7673 = vmatpush1.bf16.msra.mxu0 %v7401
          %7674 = vmatprep.subr.bf16.mxu0 0
          %7675 = vmatpush1.bf16.msra.mxu0 %v7402
          %7676 = vmatprep.subr.bf16.mxu0 0
          %7677 = vmatpush1.bf16.msra.mxu0 %v7403
          %7678 = vmatprep.subr.bf16.mxu0 0
          %7679 = vmatpush1.bf16.msra.mxu0 %v7404
          %7680 = vmatprep.subr.bf16.mxu0 0
          %7681 = vmatpush1.bf16.msra.mxu0 %v7405
          %7682 = vmatprep.subr.bf16.mxu0 0
          %7683 = vmatpush1.bf16.msra.mxu0 %v7406
          %7684 = vmatprep.subr.bf16.mxu0 0
          %7685 = vmatpush1.bf16.msra.mxu0 %v7407
          %7686 = vmatprep.subr.bf16.mxu0 0
          %7687 = vmatpush1.bf16.msra.mxu0 %v7408
          %7688 = vmatprep.subr.bf16.mxu0 0
          %7689 = vmatpush1.bf16.msra.mxu0 %v7409
          %7690 = vmatprep.subr.bf16.mxu0 0
          %7691 = vmatpush1.bf16.msra.mxu0 %v7410
          %7692 = vmatprep.mubr.bf16.mxu0 %v7096
          %7693 = vmatmul.mubr.bf16.gmra.mrb[0].mxu0 %v7032
          %v7694 = vpop.f32.mrb[0].mxu0
          %v7695 = vadd.f32 %v7534, %v7694
          %v7696 = vpop.f32.mrb[0].mxu0
          %v7697 = vpop.f32.mrb[0].mxu0
          %v7698 = vadd.f32 %v7537, %v7697
          %v7699 = vpop.f32.mrb[0].mxu0
          %7700 = vmatprep.mubr.bf16.mxu0 %v7100
          %7701 = vmatmul.mubr.bf16.gmra.mrb[0].mxu0 %v7036
          %v7702 = vpop.f32.mrb[0].mxu0
          %v7703 = vadd.f32 %v7542, %v7702
          %v7704 = vpop.f32.mrb[0].mxu0
          %v7705 = vpop.f32.mrb[0].mxu0
          %v7706 = vadd.f32 %v7545, %v7705
          %v7707 = vpop.f32.mrb[0].mxu0
          %7708 = vmatprep.mubr.bf16.mxu0 %v7104
          %7709 = vmatmul.mubr.bf16.gmra.mrb[0].mxu0 %v7040
          %v7710 = vpop.f32.mrb[0].mxu0
          %v7711 = vadd.f32 %v7550, %v7710
          %v7712 = vpop.f32.mrb[0].mxu0
          %v7713 = vpop.f32.mrb[0].mxu0
          %v7714 = vadd.f32 %v7553, %v7713
          %v7715 = vpop.f32.mrb[0].mxu0
          %7716 = vmatprep.mubr.bf16.mxu0 %v7108
          %7717 = vmatmul.mubr.bf16.gmra.mrb[0].mxu0 %v7044
          %v7718 = vpop.f32.mrb[0].mxu0
          %v7719 = vadd.f32 %v7558, %v7718
          %v7720 = vpop.f32.mrb[0].mxu0
          %v7721 = vpop.f32.mrb[0].mxu0
          %v7722 = vadd.f32 %v7561, %v7721
          %v7723 = vpop.f32.mrb[0].mxu0
          %7724 = vmatprep.mubr.bf16.mxu0 %v7112
          %7725 = vmatmul.mubr.bf16.gmra.mrb[0].mxu0 %v7048
          %v7726 = vpop.f32.mrb[0].mxu0
          %v7727 = vadd.f32 %v7566, %v7726
          %v7728 = vpop.f32.mrb[0].mxu0
          %v7729 = vpop.f32.mrb[0].mxu0
          %v7730 = vadd.f32 %v7569, %v7729
          %v7731 = vpop.f32.mrb[0].mxu0
          %7732 = vmatprep.mubr.bf16.mxu0 %v7116
          %7733 = vmatmul.mubr.bf16.gmra.mrb[0].mxu0 %v7052
          %v7734 = vpop.f32.mrb[0].mxu0
          %v7735 = vadd.f32 %v7574, %v7734
          %v7736 = vpop.f32.mrb[0].mxu0
          %v7737 = vpop.f32.mrb[0].mxu0
          %v7738 = vadd.f32 %v7577, %v7737
          %v7739 = vpop.f32.mrb[0].mxu0
          %7740 = vmatprep.mubr.bf16.mxu0 %v7120
          %7741 = vmatmul.mubr.bf16.gmra.mrb[0].mxu0 %v7056
          %v7742 = vpop.f32.mrb[0].mxu0
          %v7743 = vadd.f32 %v7582, %v7742
          %v7744 = vpop.f32.mrb[0].mxu0
          %v7745 = vpop.f32.mrb[0].mxu0
          %v7746 = vadd.f32 %v7585, %v7745
          %v7747 = vpop.f32.mrb[0].mxu0
          %7748 = vmatprep.mubr.bf16.mxu0 %v7124
          %7749 = vmatmul.mubr.bf16.gmra.mrb[0].mxu0 %v7060
          %v7750 = vpop.f32.mrb[0].mxu0
          %v7751 = vadd.f32 %v7590, %v7750
          %v7752 = vpop.f32.mrb[0].mxu0
          %v7753 = vpop.f32.mrb[0].mxu0
          %v7754 = vadd.f32 %v7593, %v7753
          %v7755 = vpop.f32.mrb[0].mxu0
          %7756 = vmatprep.mubr.bf16.mxu0 %v7128
          %7757 = vmatmul.mubr.bf16.gmra.mrb[0].mxu0 %v7064
          %v7758 = vpop.f32.mrb[0].mxu0
          %v7759 = vadd.f32 %v7598, %v7758
          %v7760 = vpop.f32.mrb[0].mxu0
          %v7761 = vpop.f32.mrb[0].mxu0
          %v7762 = vadd.f32 %v7601, %v7761
          %v7763 = vpop.f32.mrb[0].mxu0
          %7764 = vmatprep.mubr.bf16.mxu0 %v7132
          %7765 = vmatmul.mubr.bf16.gmra.mrb[0].mxu0 %v7068
          %v7766 = vpop.f32.mrb[0].mxu0
          %v7767 = vadd.f32 %v7606, %v7766
          %v7768 = vpop.f32.mrb[0].mxu0
          %v7769 = vpop.f32.mrb[0].mxu0
          %v7770 = vadd.f32 %v7609, %v7769
          %v7771 = vpop.f32.mrb[0].mxu0
          %7772 = vmatprep.mubr.bf16.mxu0 %v7136
          %7773 = vmatmul.mubr.bf16.gmra.mrb[0].mxu0 %v7072
          %v7774 = vpop.f32.mrb[0].mxu0
          %v7775 = vadd.f32 %v7614, %v7774
          %v7776 = vpop.f32.mrb[0].mxu0
          %v7777 = vpop.f32.mrb[0].mxu0
          %v7778 = vadd.f32 %v7617, %v7777
          %v7779 = vpop.f32.mrb[0].mxu0
          %7780 = vmatprep.mubr.bf16.mxu0 %v7140
          %7781 = vmatmul.mubr.bf16.gmra.mrb[0].mxu0 %v7076
          %v7782 = vpop.f32.mrb[0].mxu0
          %v7783 = vadd.f32 %v7622, %v7782
          %v7784 = vpop.f32.mrb[0].mxu0
          %v7785 = vpop.f32.mrb[0].mxu0
          %v7786 = vadd.f32 %v7625, %v7785
          %v7787 = vpop.f32.mrb[0].mxu0
          %7788 = vmatprep.mubr.bf16.mxu0 %v7144
          %7789 = vmatmul.mubr.bf16.gmra.mrb[0].mxu0 %v7080
          %v7790 = vpop.f32.mrb[0].mxu0
          %v7791 = vadd.f32 %v7630, %v7790
          %v7792 = vpop.f32.mrb[0].mxu0
          %v7793 = vpop.f32.mrb[0].mxu0
          %v7794 = vadd.f32 %v7633, %v7793
          %v7795 = vpop.f32.mrb[0].mxu0
          %7796 = vmatprep.mubr.bf16.mxu0 %v7148
          %7797 = vmatmul.mubr.bf16.gmra.mrb[0].mxu0 %v7084
          %v7798 = vpop.f32.mrb[0].mxu0
          %v7799 = vadd.f32 %v7638, %v7798
          %v7800 = vpop.f32.mrb[0].mxu0
          %v7801 = vpop.f32.mrb[0].mxu0
          %v7802 = vadd.f32 %v7641, %v7801
          %v7803 = vpop.f32.mrb[0].mxu0
          %7804 = vmatprep.mubr.bf16.mxu0 %v7152
          %7805 = vmatmul.mubr.bf16.gmra.mrb[0].mxu0 %v7088
          %v7806 = vpop.f32.mrb[0].mxu0
          %v7807 = vadd.f32 %v7646, %v7806
          %v7808 = vpop.f32.mrb[0].mxu0
          %v7809 = vpop.f32.mrb[0].mxu0
          %v7810 = vadd.f32 %v7649, %v7809
          %v7811 = vpop.f32.mrb[0].mxu0
          %7812 = vmatprep.mubr.bf16.mxu0 %v7156
          %7813 = vmatmul.mubr.bf16.gmra.mrb[0].mxu0 %v7092
          %v7814 = vpop.f32.mrb[0].mxu0
          %v7815 = vadd.f32 %v7654, %v7814
          %v7816 = vpop.f32.mrb[0].mxu0
          %v7817 = vpop.f32.mrb[0].mxu0
          %v7818 = vadd.f32 %v7657, %v7817
          %v7819 = vpop.f32.mrb[0].mxu0
          %7820 = vdwg.mxu0
          %7821 = vmatprep.subr.bf16.mxu0 0
          %7822 = vmatpush1.bf16.msra.mxu0 %v7411
          %7823 = vmatprep.subr.bf16.mxu0 0
          %7824 = vmatpush1.bf16.msra.mxu0 %v7412
          %7825 = vmatprep.subr.bf16.mxu0 0
          %7826 = vmatpush1.bf16.msra.mxu0 %v7413
          %7827 = vmatprep.subr.bf16.mxu0 0
          %7828 = vmatpush1.bf16.msra.mxu0 %v7414
          %7829 = vmatprep.subr.bf16.mxu0 0
          %7830 = vmatpush1.bf16.msra.mxu0 0
          %7831 = vmatprep.subr.bf16.mxu0 0
          %7832 = vmatpush1.bf16.msra.mxu0 0
          %7833 = vmatprep.subr.bf16.mxu0 0
          %7834 = vmatpush1.bf16.msra.mxu0 0
          %7835 = vmatprep.subr.bf16.mxu0 0
          %7836 = vmatpush1.bf16.msra.mxu0 0
          %7837 = vmatprep.subr.bf16.mxu0 0
          %7838 = vmatpush1.bf16.msra.mxu0 0
          %7839 = vmatprep.subr.bf16.mxu0 0
          %7840 = vmatpush1.bf16.msra.mxu0 0
          %7841 = vmatprep.subr.bf16.mxu0 0
          %7842 = vmatpush1.bf16.msra.mxu0 0
          %7843 = vmatprep.subr.bf16.mxu0 0
          %7844 = vmatpush1.bf16.msra.mxu0 0
          %7845 = vmatprep.subr.bf16.mxu0 0
          %7846 = vmatpush1.bf16.msra.mxu0 0
          %7847 = vmatprep.subr.bf16.mxu0 0
          %7848 = vmatpush1.bf16.msra.mxu0 0
          %7849 = vmatprep.subr.bf16.mxu0 0
          %7850 = vmatpush1.bf16.msra.mxu0 0
          %7851 = vmatprep.subr.bf16.mxu0 0
          %7852 = vmatpush1.bf16.msra.mxu0 0
          %7853 = vmatprep.mubr.bf16.mxu0 0
          %7854 = vmatmul.mubr.bf16.gmra.mrb[0].mxu0 %v7452
          %v7855 = vpop.f32.mrb[0].mxu0
          %v7856 = vadd.f32 %v7695, %v7855
          %v7857 = vpop.f32.mrb[0].mxu0
          %v7858 = vpop.f32.mrb[0].mxu0
          %v7859 = vadd.f32 %v7698, %v7858
          %v7860 = vpop.f32.mrb[0].mxu0
          %7861 = vmatprep.mubr.bf16.mxu0 0
          %7862 = vmatmul.mubr.bf16.gmra.mrb[0].mxu0 %v7455
          %v7863 = vpop.f32.mrb[0].mxu0
          %v7864 = vadd.f32 %v7703, %v7863
          %v7865 = vpop.f32.mrb[0].mxu0
          %v7866 = vpop.f32.mrb[0].mxu0
          %v7867 = vadd.f32 %v7706, %v7866
          %v7868 = vpop.f32.mrb[0].mxu0
          %7869 = vmatprep.mubr.bf16.mxu0 0
          %7870 = vmatmul.mubr.bf16.gmra.mrb[0].mxu0 %v7458
          %v7871 = vpop.f32.mrb[0].mxu0
          %v7872 = vadd.f32 %v7711, %v7871
          %v7873 = vpop.f32.mrb[0].mxu0
          %v7874 = vpop.f32.mrb[0].mxu0
          %v7875 = vadd.f32 %v7714, %v7874
          %v7876 = vpop.f32.mrb[0].mxu0
          %7877 = vmatprep.mubr.bf16.mxu0 0
          %7878 = vmatmul.mubr.bf16.gmra.mrb[0].mxu0 %v7461
          %v7879 = vpop.f32.mrb[0].mxu0
          %v7880 = vadd.f32 %v7719, %v7879
          %v7881 = vpop.f32.mrb[0].mxu0
          %v7882 = vpop.f32.mrb[0].mxu0
          %v7883 = vadd.f32 %v7722, %v7882
          %v7884 = vpop.f32.mrb[0].mxu0
          %7885 = vmatprep.mubr.bf16.mxu0 0
          %7886 = vmatmul.mubr.bf16.gmra.mrb[0].mxu0 %v7464
          %v7887 = vpop.f32.mrb[0].mxu0
          %v7888 = vadd.f32 %v7727, %v7887
          %v7889 = vpop.f32.mrb[0].mxu0
          %v7890 = vpop.f32.mrb[0].mxu0
          %v7891 = vadd.f32 %v7730, %v7890
          %v7892 = vpop.f32.mrb[0].mxu0
          %7893 = vmatprep.mubr.bf16.mxu0 0
          %7894 = vmatmul.mubr.bf16.gmra.mrb[0].mxu0 %v7467
          %v7895 = vpop.f32.mrb[0].mxu0
          %v7896 = vadd.f32 %v7735, %v7895
          %v7897 = vpop.f32.mrb[0].mxu0
          %v7898 = vpop.f32.mrb[0].mxu0
          %v7899 = vadd.f32 %v7738, %v7898
          %v7900 = vpop.f32.mrb[0].mxu0
          %7901 = vmatprep.mubr.bf16.mxu0 0
          %7902 = vmatmul.mubr.bf16.gmra.mrb[0].mxu0 %v7470
          %v7903 = vpop.f32.mrb[0].mxu0
          %v7904 = vadd.f32 %v7743, %v7903
          %v7905 = vpop.f32.mrb[0].mxu0
          %v7906 = vpop.f32.mrb[0].mxu0
          %v7907 = vadd.f32 %v7746, %v7906
          %v7908 = vpop.f32.mrb[0].mxu0
          %7909 = vmatprep.mubr.bf16.mxu0 0
          %7910 = vmatmul.mubr.bf16.gmra.mrb[0].mxu0 %v7473
          %v7911 = vpop.f32.mrb[0].mxu0
          %v7912 = vadd.f32 %v7751, %v7911
          %v7913 = vpop.f32.mrb[0].mxu0
          %v7914 = vpop.f32.mrb[0].mxu0
          %v7915 = vadd.f32 %v7754, %v7914
          %v7916 = vpop.f32.mrb[0].mxu0
          %7917 = vmatprep.mubr.bf16.mxu0 0
          %7918 = vmatmul.mubr.bf16.gmra.mrb[0].mxu0 %v7476
          %v7919 = vpop.f32.mrb[0].mxu0
          %v7920 = vadd.f32 %v7759, %v7919
          %v7921 = vpop.f32.mrb[0].mxu0
          %v7922 = vpop.f32.mrb[0].mxu0
          %v7923 = vadd.f32 %v7762, %v7922
          %v7924 = vpop.f32.mrb[0].mxu0
          %7925 = vmatprep.mubr.bf16.mxu0 0
          %7926 = vmatmul.mubr.bf16.gmra.mrb[0].mxu0 %v7479
          %v7927 = vpop.f32.mrb[0].mxu0
          %v7928 = vadd.f32 %v7767, %v7927
          %v7929 = vpop.f32.mrb[0].mxu0
          %v7930 = vpop.f32.mrb[0].mxu0
          %v7931 = vadd.f32 %v7770, %v7930
          %v7932 = vpop.f32.mrb[0].mxu0
          %7933 = vmatprep.mubr.bf16.mxu0 0
          %7934 = vmatmul.mubr.bf16.gmra.mrb[0].mxu0 %v7482
          %v7935 = vpop.f32.mrb[0].mxu0
          %v7936 = vadd.f32 %v7775, %v7935
          %v7937 = vpop.f32.mrb[0].mxu0
          %v7938 = vpop.f32.mrb[0].mxu0
          %v7939 = vadd.f32 %v7778, %v7938
          %v7940 = vpop.f32.mrb[0].mxu0
          %7941 = vmatprep.mubr.bf16.mxu0 0
          %7942 = vmatmul.mubr.bf16.gmra.mrb[0].mxu0 %v7485
          %v7943 = vpop.f32.mrb[0].mxu0
          %v7944 = vadd.f32 %v7783, %v7943
          %v7945 = vpop.f32.mrb[0].mxu0
          %v7946 = vpop.f32.mrb[0].mxu0
          %v7947 = vadd.f32 %v7786, %v7946
          %v7948 = vpop.f32.mrb[0].mxu0
          %7949 = vmatprep.mubr.bf16.mxu0 0
          %7950 = vmatmul.mubr.bf16.gmra.mrb[0].mxu0 %v7488
          %v7951 = vpop.f32.mrb[0].mxu0
          %v7952 = vadd.f32 %v7791, %v7951
          %v7953 = vpop.f32.mrb[0].mxu0
          %v7954 = vpop.f32.mrb[0].mxu0
          %v7955 = vadd.f32 %v7794, %v7954
          %v7956 = vpop.f32.mrb[0].mxu0
          %7957 = vmatprep.mubr.bf16.mxu0 0
          %7958 = vmatmul.mubr.bf16.gmra.mrb[0].mxu0 %v7491
          %v7959 = vpop.f32.mrb[0].mxu0
          %v7960 = vadd.f32 %v7799, %v7959
          %v7961 = vpop.f32.mrb[0].mxu0
          %v7962 = vpop.f32.mrb[0].mxu0
          %v7963 = vadd.f32 %v7802, %v7962
          %v7964 = vpop.f32.mrb[0].mxu0
          %7965 = vmatprep.mubr.bf16.mxu0 0
          %7966 = vmatmul.mubr.bf16.gmra.mrb[0].mxu0 %v7494
          %v7967 = vpop.f32.mrb[0].mxu0
          %v7968 = vadd.f32 %v7807, %v7967
          %v7969 = vpop.f32.mrb[0].mxu0
          %v7970 = vpop.f32.mrb[0].mxu0
          %v7971 = vadd.f32 %v7810, %v7970
          %v7972 = vpop.f32.mrb[0].mxu0
          %7973 = vmatprep.mubr.bf16.mxu0 0
          %7974 = vmatmul.mubr.bf16.gmra.mrb[0].mxu0 %v7497
          %v7975 = vpop.f32.mrb[0].mxu0
          %v7976 = vadd.f32 %v7815, %v7975
          %v7977 = vpop.f32.mrb[0].mxu0
          %v7978 = vpop.f32.mrb[0].mxu0
          %v7979 = vadd.f32 %v7818, %v7978
          %v7980 = vpop.f32.mrb[0].mxu0
          %7981 = vdwg.mxu0
          %v7982 = vmax.f32 %v7856, 0.0
          %v7983 = vmax.f32 %v7859, 0.0
          %v7984 = vmax.f32 %v7864, 0.0
          %v7985 = vmax.f32 %v7867, 0.0
          %v7986 = vmax.f32 %v7872, 0.0
          %v7987 = vmax.f32 %v7875, 0.0
          %v7988 = vmax.f32 %v7880, 0.0
          %v7989 = vmax.f32 %v7883, 0.0
          %v7990 = vmax.f32 %v7888, 0.0
          %v7991 = vmax.f32 %v7891, 0.0
          %v7992 = vmax.f32 %v7896, 0.0
          %v7993 = vmax.f32 %v7899, 0.0
          %v7994 = vmax.f32 %v7904, 0.0
          %v7995 = vmax.f32 %v7907, 0.0
          %v7996 = vmax.f32 %v7912, 0.0
          %v7997 = vmax.f32 %v7915, 0.0
          %v7998 = vmax.f32 %v7920, 0.0
          %v7999 = vmax.f32 %v7923, 0.0
          %v8000 = vmax.f32 %v7928, 0.0
          %v8001 = vmax.f32 %v7931, 0.0
          %v8002 = vmax.f32 %v7936, 0.0
          %v8003 = vmax.f32 %v7939, 0.0
          %v8004 = vmax.f32 %v7944, 0.0
          %v8005 = vmax.f32 %v7947, 0.0
          %v8006 = vmax.f32 %v7952, 0.0
          %v8007 = vmax.f32 %v7955, 0.0
          %v8008 = vmax.f32 %v7960, 0.0
          %v8009 = vmax.f32 %v7963, 0.0
          %v8010 = vmax.f32 %v7968, 0.0
          %v8011 = vmax.f32 %v7971, 0.0
          %v8012 = vmax.f32 %v7976, 0.0
          %v8013 = vmax.f32 %v7979, 0.0
          %v8014 = vld [vmem:[#allocation3] sm:$0x1]
          %v8015 = vsel %vm6901, %v7982, 0.0
          %v8016 = vsel %vm6901, %v7983, 0.0
          %v8017 = vadd.f32 %v8015, %v8016
          %v8018 = vsel %vm6901, %v7984, 0.0
          %v8019 = vadd.f32 %v8017, %v8018
          %v8020 = vsel %vm6901, %v7985, 0.0
          %v8021 = vadd.f32 %v8019, %v8020
          %v8022 = vsel %vm6901, %v7986, 0.0
          %v8023 = vadd.f32 %v8021, %v8022
          %v8024 = vsel %vm6901, %v7987, 0.0
          %v8025 = vadd.f32 %v8023, %v8024
          %v8026 = vsel %vm6901, %v7988, 0.0
          %v8027 = vadd.f32 %v8025, %v8026
          %v8028 = vsel %vm6901, %v7989, 0.0
          %v8029 = vadd.f32 %v8027, %v8028
          %v8030 = vsel %vm6901, %v7990, 0.0
          %v8031 = vadd.f32 %v8029, %v8030
          %v8032 = vsel %vm6901, %v7991, 0.0
          %v8033 = vadd.f32 %v8031, %v8032
          %v8034 = vsel %vm6901, %v7992, 0.0
          %v8035 = vadd.f32 %v8033, %v8034
          %v8036 = vsel %vm6901, %v7993, 0.0
          %v8037 = vadd.f32 %v8035, %v8036
          %v8038 = vsel %vm6901, %v7994, 0.0
          %v8039 = vadd.f32 %v8037, %v8038
          %v8040 = vsel %vm6901, %v7995, 0.0
          %v8041 = vadd.f32 %v8039, %v8040
          %v8042 = vsel %vm6901, %v7996, 0.0
          %v8043 = vadd.f32 %v8041, %v8042
          %v8044 = vsel %vm6901, %v7997, 0.0
          %v8045 = vadd.f32 %v8043, %v8044
          %v8046 = vsel %vm6901, %v7998, 0.0
          %v8047 = vadd.f32 %v8045, %v8046
          %v8048 = vsel %vm6901, %v7999, 0.0
          %v8049 = vadd.f32 %v8047, %v8048
          %v8050 = vsel %vm6901, %v8000, 0.0
          %v8051 = vadd.f32 %v8049, %v8050
          %v8052 = vsel %vm6901, %v8001, 0.0
          %v8053 = vadd.f32 %v8051, %v8052
          %v8054 = vsel %vm6901, %v8002, 0.0
          %v8055 = vadd.f32 %v8053, %v8054
          %v8056 = vsel %vm6901, %v8003, 0.0
          %v8057 = vadd.f32 %v8055, %v8056
          %v8058 = vsel %vm6901, %v8004, 0.0
          %v8059 = vadd.f32 %v8057, %v8058
          %v8060 = vsel %vm6901, %v8005, 0.0
          %v8061 = vadd.f32 %v8059, %v8060
          %v8062 = vsel %vm6901, %v8006, 0.0
          %v8063 = vadd.f32 %v8061, %v8062
          %v8064 = vsel %vm6901, %v8007, 0.0
          %v8065 = vadd.f32 %v8063, %v8064
          %v8066 = vsel %vm6901, %v8008, 0.0
          %v8067 = vadd.f32 %v8065, %v8066
          %v8068 = vsel %vm6901, %v8009, 0.0
          %v8069 = vadd.f32 %v8067, %v8068
          %v8070 = vsel %vm6901, %v8010, 0.0
          %v8071 = vadd.f32 %v8069, %v8070
          %v8072 = vsel %vm6901, %v8011, 0.0
          %v8073 = vadd.f32 %v8071, %v8072
          %v8074 = vsel %vm6901, %v8012, 0.0
          %v8075 = vadd.f32 %v8073, %v8074
          %v8076 = vsel %vm6901, %v8013, 0.0
          %v8077 = vadd.f32 %v8075, %v8076
          %v8078 = vrot.slane %v8077, 4
          %v8079 = vadd.f32 %v8077, %v8078
          %v8080 = vrot.slane %v8079, 2
          %v8081 = vadd.f32 %v8079, %v8080
          %v8082 = vrot.slane %v8081, 1
          %v8083 = vadd.f32 %v8081, %v8082
          %v8084 = vadd.f32 %v8014, %v8083
          %vm8085 = vcmask 516096
          %8086 = vst.msk [vmem:[#allocation3] sm:$0x1] %vm8085, %v8084
          %v8087 = vpack.c.bf16 %v7983, %v7982
          %v8088 = vpack.c.bf16 %v7985, %v7984
          %v8089 = vpack.c.bf16 %v7987, %v7986
          %v8090 = vpack.c.bf16 %v7989, %v7988
          %v8091 = vpack.c.bf16 %v7991, %v7990
          %v8092 = vpack.c.bf16 %v7993, %v7992
          %v8093 = vpack.c.bf16 %v7995, %v7994
          %v8094 = vpack.c.bf16 %v7997, %v7996
          %v8095 = vpack.c.bf16 %v7999, %v7998
          %v8096 = vpack.c.bf16 %v8001, %v8000
          %v8097 = vpack.c.bf16 %v8003, %v8002
          %v8098 = vpack.c.bf16 %v8005, %v8004
          %v8099 = vpack.c.bf16 %v8007, %v8006
          %v8100 = vpack.c.bf16 %v8009, %v8008
          %v8101 = vpack.c.bf16 %v8011, %v8010
          %v8102 = vpack.c.bf16 %v8013, %v8012
          %s8103 = scalar_lea.vmem [#allocation2], 128
          %8104 = vst.msk [vmem:[%s8103] sm:$0xff] %vm6901, %v8087
          %8105 = vst.msk [vmem:[%s8103 + $0x8] sm:$0xff] %vm6901, %v8088
          %8106 = vst.msk [vmem:[%s8103 + $0x10] sm:$0xff] %vm6901, %v8089
          %8107 = vst.msk [vmem:[%s8103 + $0x18] sm:$0xff] %vm6901, %v8090
          %8108 = vst.msk [vmem:[%s8103 + $0x20] sm:$0xff] %vm6901, %v8091
          %8109 = vst.msk [vmem:[%s8103 + $0x28] sm:$0xff] %vm6901, %v8092
          %8110 = vst.msk [vmem:[%s8103 + $0x30] sm:$0xff] %vm6901, %v8093
          %8111 = vst.msk [vmem:[%s8103 + $0x38] sm:$0xff] %vm6901, %v8094
          %8112 = vst.msk [vmem:[%s8103 + $0x40] sm:$0xff] %vm6901, %v8095
          %8113 = vst.msk [vmem:[%s8103 + $0x48] sm:$0xff] %vm6901, %v8096
          %8114 = vst.msk [vmem:[%s8103 + $0x50] sm:$0xff] %vm6901, %v8097
          %8115 = vst.msk [vmem:[%s8103 + $0x58] sm:$0xff] %vm6901, %v8098
          %8116 = vst.msk [vmem:[%s8103 + $0x60] sm:$0xff] %vm6901, %v8099
          %8117 = vst.msk [vmem:[%s8103 + $0x68] sm:$0xff] %vm6901, %v8100
          %8118 = vst.msk [vmem:[%s8103 + $0x70] sm:$0xff] %vm6901, %v8101
          %8119 = vst.msk [vmem:[%s8103 + $0x78] sm:$0xff] %vm6901, %v8102
          %v8120 = vld [vmem:[#allocation3] sm:$0x1]
          %v8121 = vmul.f32 %v8120, 0.00390625
          %v8122 = vld [vmem:[%s3] sm:$0xff]
          %v8123 = vld [vmem:[%s3 + $0x8] sm:$0xff]
          %v8124 = vld [vmem:[%s3 + $0x10] sm:$0xff]
          %v8125 = vld [vmem:[%s3 + $0x18] sm:$0xff]
          %v8126 = vld [vmem:[%s3 + $0x20] sm:$0xff]
          %v8127 = vld [vmem:[%s3 + $0x28] sm:$0xff]
          %v8128 = vld [vmem:[%s3 + $0x30] sm:$0xff]
          %v8129 = vld [vmem:[%s3 + $0x38] sm:$0xff]
          %v8130 = vld [vmem:[%s4] sm:$0x1]
          %v8132 = vsel %vm6901, %v8121, 0
          %8134 = vmatprep.subr.mxu0 0.0
          %8135 = vmatpush1.msra.mxu0 %v8122
          %8136 = vmatprep.subr.mxu0 0.0
          %8137 = vmatpush1.msra.mxu0 %v8123
          %8138 = vmatprep.subr.mxu0 0.0
          %8139 = vmatpush1.msra.mxu0 %v8124
          %8140 = vmatprep.subr.mxu0 0.0
          %8141 = vmatpush1.msra.mxu0 %v8125
          %8142 = vmatprep.subr.mxu0 0.0
          %8143 = vmatpush1.msra.mxu0 %v8126
          %8144 = vmatprep.subr.mxu0 0.0
          %8145 = vmatpush1.msra.mxu0 %v8127
          %8146 = vmatprep.subr.mxu0 0.0
          %8147 = vmatpush1.msra.mxu0 %v8128
          %8148 = vmatprep.subr.mxu0 0.0
          %8149 = vmatpush1.msra.mxu0 %v8129
          %8150 = vmatprep.subr.mxu0 0.0
          %8151 = vmatpush1.msra.mxu0 0.0
          %8152 = vmatprep.subr.mxu0 0.0
          %8153 = vmatpush1.msra.mxu0 0.0
          %8154 = vmatprep.subr.mxu0 0.0
          %8155 = vmatpush1.msra.mxu0 0.0
          %8156 = vmatprep.subr.mxu0 0.0
          %8157 = vmatpush1.msra.mxu0 0.0
          %8158 = vmatprep.subr.mxu0 0.0
          %8159 = vmatpush1.msra.mxu0 0.0
          %8160 = vmatprep.subr.mxu0 0.0
          %8161 = vmatpush1.msra.mxu0 0.0
          %8162 = vmatprep.subr.mxu0 0.0
          %8163 = vmatpush1.msra.mxu0 0.0
          %8164 = vmatprep.subr.mxu0 0.0
          %8165 = vmatpush1.msra.mxu0 0.0
          %8166 = vmatprep.subr.mxu0 0.0
          %8167 = vmatpush1.msra.mxu0 0.0
          %8168 = vmatprep.subr.mxu0 0.0
          %8169 = vmatpush1.msra.mxu0 0.0
          %8170 = vmatprep.subr.mxu0 0.0
          %8171 = vmatpush1.msra.mxu0 0.0
          %8172 = vmatprep.subr.mxu0 0.0
          %8173 = vmatpush1.msra.mxu0 0.0
          %8174 = vmatprep.subr.mxu0 0.0
          %8175 = vmatpush1.msra.mxu0 0.0
          %8176 = vmatprep.subr.mxu0 0.0
          %8177 = vmatpush1.msra.mxu0 0.0
          %8178 = vmatprep.subr.mxu0 0.0
          %8179 = vmatpush1.msra.mxu0 0.0
          %8180 = vmatprep.subr.mxu0 0.0
          %8181 = vmatpush1.msra.mxu0 0.0
          %8182 = vmatprep.subr.mxu0 0.0
          %8183 = vmatpush1.msra.mxu0 0.0
          %8184 = vmatprep.subr.mxu0 0.0
          %8185 = vmatpush1.msra.mxu0 0.0
          %8186 = vmatprep.subr.mxu0 0.0
          %8187 = vmatpush1.msra.mxu0 0.0
          %8188 = vmatprep.subr.mxu0 0.0
          %8189 = vmatpush1.msra.mxu0 0.0
          %8190 = vmatprep.subr.mxu0 0.0
          %8191 = vmatpush1.msra.mxu0 0.0
          %8192 = vmatprep.subr.mxu0 0.0
          %8193 = vmatpush1.msra.mxu0 0.0
          %8194 = vmatprep.subr.mxu0 0.0
          %8195 = vmatpush1.msra.mxu0 0.0
          %8196 = vmatprep.subr.mxu0 0.0
          %8197 = vmatpush1.msra.mxu0 0.0
          %8198 = vmatprep.mubr.f32.mxu0 0.0
          %8199 = vmatmul.mubr.f32.gmra.mrb[0].mxu0 %v8132
          %v8200 = vpop.f32.mrb[0].mxu0
          %v8201 = vadd.f32 %v8130, %v8200
          %v8202 = vpop.f32.mrb[0].mxu0
          %8203 = vdwg.mxu0
          %v8204 = vmax.f32 %v8201, 0.0
          %v8205 = vld [vmem:[%s5] sm:$0xff]
          %v8206 = vld [vmem:[%s5 + $0x8] sm:$0xff]
          %v8207 = vld [vmem:[%s5 + $0x10] sm:$0xff]
          %v8208 = vld [vmem:[%s5 + $0x18] sm:$0xff]
          %v8209 = vld [vmem:[%s6] sm:$0x1]
          %vm8210 = vcmask 261120
          %v8212 = vsel %vm8210, %v8204, 0
          %8214 = vmatprep.subr.mxu0 0.0
          %8215 = vmatpush1.msra.mxu0 %v8205
          %8216 = vmatprep.subr.mxu0 0.0
          %8217 = vmatpush1.msra.mxu0 %v8206
          %8218 = vmatprep.subr.mxu0 0.0
          %8219 = vmatpush1.msra.mxu0 %v8207
          %8220 = vmatprep.subr.mxu0 0.0
          %8221 = vmatpush1.msra.mxu0 %v8208
          %8222 = vmatprep.subr.mxu0 0.0
          %8223 = vmatpush1.msra.mxu0 0.0
          %8224 = vmatprep.subr.mxu0 0.0
          %8225 = vmatpush1.msra.mxu0 0.0
          %8226 = vmatprep.subr.mxu0 0.0
          %8227 = vmatpush1.msra.mxu0 0.0
          %8228 = vmatprep.subr.mxu0 0.0
          %8229 = vmatpush1.msra.mxu0 0.0
          %8230 = vmatprep.subr.mxu0 0.0
          %8231 = vmatpush1.msra.mxu0 0.0
          %8232 = vmatprep.subr.mxu0 0.0
          %8233 = vmatpush1.msra.mxu0 0.0
          %8234 = vmatprep.subr.mxu0 0.0
          %8235 = vmatpush1.msra.mxu0 0.0
          %8236 = vmatprep.subr.mxu0 0.0
          %8237 = vmatpush1.msra.mxu0 0.0
          %8238 = vmatprep.subr.mxu0 0.0
          %8239 = vmatpush1.msra.mxu0 0.0
          %8240 = vmatprep.subr.mxu0 0.0
          %8241 = vmatpush1.msra.mxu0 0.0
          %8242 = vmatprep.subr.mxu0 0.0
          %8243 = vmatpush1.msra.mxu0 0.0
          %8244 = vmatprep.subr.mxu0 0.0
          %8245 = vmatpush1.msra.mxu0 0.0
          %8246 = vmatprep.subr.mxu0 0.0
          %8247 = vmatpush1.msra.mxu0 0.0
          %8248 = vmatprep.subr.mxu0 0.0
          %8249 = vmatpush1.msra.mxu0 0.0
          %8250 = vmatprep.subr.mxu0 0.0
          %8251 = vmatpush1.msra.mxu0 0.0
          %8252 = vmatprep.subr.mxu0 0.0
          %8253 = vmatpush1.msra.mxu0 0.0
          %8254 = vmatprep.subr.mxu0 0.0
          %8255 = vmatpush1.msra.mxu0 0.0
          %8256 = vmatprep.subr.mxu0 0.0
          %8257 = vmatpush1.msra.mxu0 0.0
          %8258 = vmatprep.subr.mxu0 0.0
          %8259 = vmatpush1.msra.mxu0 0.0
          %8260 = vmatprep.subr.mxu0 0.0
          %8261 = vmatpush1.msra.mxu0 0.0
          %8262 = vmatprep.subr.mxu0 0.0
          %8263 = vmatpush1.msra.mxu0 0.0
          %8264 = vmatprep.subr.mxu0 0.0
          %8265 = vmatpush1.msra.mxu0 0.0
          %8266 = vmatprep.subr.mxu0 0.0
          %8267 = vmatpush1.msra.mxu0 0.0
          %8268 = vmatprep.subr.mxu0 0.0
          %8269 = vmatpush1.msra.mxu0 0.0
          %8270 = vmatprep.subr.mxu0 0.0
          %8271 = vmatpush1.msra.mxu0 0.0
          %8272 = vmatprep.subr.mxu0 0.0
          %8273 = vmatpush1.msra.mxu0 0.0
          %8274 = vmatprep.subr.mxu0 0.0
          %8275 = vmatpush1.msra.mxu0 0.0
          %8276 = vmatprep.subr.mxu0 0.0
          %8277 = vmatpush1.msra.mxu0 0.0
          %8278 = vmatprep.mubr.f32.mxu0 0.0
          %8279 = vmatmul.mubr.f32.gmra.mrb[0].mxu0 %v8212
          %v8280 = vpop.f32.mrb[0].mxu0
          %v8281 = vadd.f32 %v8209, %v8280
          %v8282 = vpop.f32.mrb[0].mxu0
          %8283 = vdwg.mxu0
          %s8284 = scalar_lea.vmem %s5, 32
          %v8285 = vld [vmem:[%s8284] sm:$0xff]
          %v8286 = vld [vmem:[%s8284 + $0x8] sm:$0xff]
          %v8287 = vld [vmem:[%s8284 + $0x10] sm:$0xff]
          %v8288 = vld [vmem:[%s8284 + $0x18] sm:$0xff]
          %v8289 = vld [vmem:[%s6 + $0x1] sm:$0x1]
          %8290 = vmatprep.subr.mxu0 0.0
          %8291 = vmatpush1.msra.mxu0 %v8285
          %8292 = vmatprep.subr.mxu0 0.0
          %8293 = vmatpush1.msra.mxu0 %v8286
          %8294 = vmatprep.subr.mxu0 0.0
          %8295 = vmatpush1.msra.mxu0 %v8287
          %8296 = vmatprep.subr.mxu0 0.0
          %8297 = vmatpush1.msra.mxu0 %v8288
          %8298 = vmatprep.subr.mxu0 0.0
          %8299 = vmatpush1.msra.mxu0 0.0
          %8300 = vmatprep.subr.mxu0 0.0
          %8301 = vmatpush1.msra.mxu0 0.0
          %8302 = vmatprep.subr.mxu0 0.0
          %8303 = vmatpush1.msra.mxu0 0.0
          %8304 = vmatprep.subr.mxu0 0.0
          %8305 = vmatpush1.msra.mxu0 0.0
          %8306 = vmatprep.subr.mxu0 0.0
          %8307 = vmatpush1.msra.mxu0 0.0
          %8308 = vmatprep.subr.mxu0 0.0
          %8309 = vmatpush1.msra.mxu0 0.0
          %8310 = vmatprep.subr.mxu0 0.0
          %8311 = vmatpush1.msra.mxu0 0.0
          %8312 = vmatprep.subr.mxu0 0.0
          %8313 = vmatpush1.msra.mxu0 0.0
          %8314 = vmatprep.subr.mxu0 0.0
          %8315 = vmatpush1.msra.mxu0 0.0
          %8316 = vmatprep.subr.mxu0 0.0
          %8317 = vmatpush1.msra.mxu0 0.0
          %8318 = vmatprep.subr.mxu0 0.0
          %8319 = vmatpush1.msra.mxu0 0.0
          %8320 = vmatprep.subr.mxu0 0.0
          %8321 = vmatpush1.msra.mxu0 0.0
          %8322 = vmatprep.subr.mxu0 0.0
          %8323 = vmatpush1.msra.mxu0 0.0
          %8324 = vmatprep.subr.mxu0 0.0
          %8325 = vmatpush1.msra.mxu0 0.0
          %8326 = vmatprep.subr.mxu0 0.0
          %8327 = vmatpush1.msra.mxu0 0.0
          %8328 = vmatprep.subr.mxu0 0.0
          %8329 = vmatpush1.msra.mxu0 0.0
          %8330 = vmatprep.subr.mxu0 0.0
          %8331 = vmatpush1.msra.mxu0 0.0
          %8332 = vmatprep.subr.mxu0 0.0
          %8333 = vmatpush1.msra.mxu0 0.0
          %8334 = vmatprep.subr.mxu0 0.0
          %8335 = vmatpush1.msra.mxu0 0.0
          %8336 = vmatprep.subr.mxu0 0.0
          %8337 = vmatpush1.msra.mxu0 0.0
          %8338 = vmatprep.subr.mxu0 0.0
          %8339 = vmatpush1.msra.mxu0 0.0
          %8340 = vmatprep.subr.mxu0 0.0
          %8341 = vmatpush1.msra.mxu0 0.0
          %8342 = vmatprep.subr.mxu0 0.0
          %8343 = vmatpush1.msra.mxu0 0.0
          %8344 = vmatprep.subr.mxu0 0.0
          %8345 = vmatpush1.msra.mxu0 0.0
          %8346 = vmatprep.subr.mxu0 0.0
          %8347 = vmatpush1.msra.mxu0 0.0
          %8348 = vmatprep.subr.mxu0 0.0
          %8349 = vmatpush1.msra.mxu0 0.0
          %8350 = vmatprep.subr.mxu0 0.0
          %8351 = vmatpush1.msra.mxu0 0.0
          %8352 = vmatprep.subr.mxu0 0.0
          %8353 = vmatpush1.msra.mxu0 0.0
          %8354 = vmatprep.mubr.f32.mxu0 0.0
          %8355 = vmatmul.mubr.f32.gmra.mrb[0].mxu0 %v8212
          %v8356 = vpop.f32.mrb[0].mxu0
          %v8357 = vadd.f32 %v8289, %v8356
          %v8358 = vpop.f32.mrb[0].mxu0
          %8359 = vdwg.mxu0
          %v8361 = vrot.slane %v8357, 7
          %vm8363 = vcmask 1040384
          %v8364 = vsel %vm8363, %v8281, %v8361
          %vm8365 = vcmask 517120
          %v8366 = vsel %vm8365, %v8364, -inf
          %v8367 = vrot.slane %v8366, 4
          %v8368 = vmax.f32 %v8366, %v8367
          %v8369 = vrot.slane %v8368, 2
          %v8370 = vmax.f32 %v8368, %v8369
          %v8371 = vrot.slane %v8370, 1
          %v8372 = vmax.f32 %v8370, %v8371
          %v8373 = vsub.f32 %v8364, %v8372
          %v8374 = vmul.f32 %v8373, 1.442695
          %v8375 = vpow.pop %v8374
          %v8376 = vsel %vm8365, %v8375, 0.0
          %v8377 = vrot.slane %v8376, 4
          %v8378 = vadd.f32 %v8376, %v8377
          %v8379 = vrot.slane %v8378, 2
          %v8380 = vadd.f32 %v8378, %v8379
          %v8381 = vrot.slane %v8380, 1
          %v8382 = vadd.f32 %v8380, %v8381
          %v8383 = vrcp.pop %v8382
          %v8384 = vmul.f32 %v8375, %v8383
          %v8385 = vld [vmem:[#allocation2] sm:$0xff]
          %v8386 = vld [vmem:[#allocation2 + $0x8] sm:$0xff]
          %v8387 = vld [vmem:[#allocation2 + $0x10] sm:$0xff]
          %v8388 = vld [vmem:[#allocation2 + $0x18] sm:$0xff]
          %v8389 = vld [vmem:[#allocation2 + $0x20] sm:$0xff]
          %v8390 = vld [vmem:[#allocation2 + $0x28] sm:$0xff]
          %v8391 = vld [vmem:[#allocation2 + $0x30] sm:$0xff]
          %v8392 = vld [vmem:[#allocation2 + $0x38] sm:$0xff]
          %v8393 = vld [vmem:[#allocation2 + $0x40] sm:$0xff]
          %v8394 = vld [vmem:[#allocation2 + $0x48] sm:$0xff]
          %v8395 = vld [vmem:[#allocation2 + $0x50] sm:$0xff]
          %v8396 = vld [vmem:[#allocation2 + $0x58] sm:$0xff]
          %v8397 = vld [vmem:[#allocation2 + $0x60] sm:$0xff]
          %v8398 = vld [vmem:[#allocation2 + $0x68] sm:$0xff]
          %v8399 = vld [vmem:[#allocation2 + $0x70] sm:$0xff]
          %v8400 = vld [vmem:[#allocation2 + $0x78] sm:$0xff]
          %v8401 = vunpack.c.l.bf16 %v8385
          %v8402 = vunpack.c.h.bf16 %v8385
          %v8403 = vunpack.c.l.bf16 %v8386
          %v8404 = vunpack.c.h.bf16 %v8386
          %v8405 = vunpack.c.l.bf16 %v8387
          %v8406 = vunpack.c.h.bf16 %v8387
          %v8407 = vunpack.c.l.bf16 %v8388
          %v8408 = vunpack.c.h.bf16 %v8388
          %v8409 = vunpack.c.l.bf16 %v8389
          %v8410 = vunpack.c.h.bf16 %v8389
          %v8411 = vunpack.c.l.bf16 %v8390
          %v8412 = vunpack.c.h.bf16 %v8390
          %v8413 = vunpack.c.l.bf16 %v8391
          %v8414 = vunpack.c.h.bf16 %v8391
          %v8415 = vunpack.c.l.bf16 %v8392
          %v8416 = vunpack.c.h.bf16 %v8392
          %v8417 = vunpack.c.l.bf16 %v8393
          %v8418 = vunpack.c.h.bf16 %v8393
          %v8419 = vunpack.c.l.bf16 %v8394
          %v8420 = vunpack.c.h.bf16 %v8394
          %v8421 = vunpack.c.l.bf16 %v8395
          %v8422 = vunpack.c.h.bf16 %v8395
          %v8423 = vunpack.c.l.bf16 %v8396
          %v8424 = vunpack.c.h.bf16 %v8396
          %v8425 = vunpack.c.l.bf16 %v8397
          %v8426 = vunpack.c.h.bf16 %v8397
          %v8427 = vunpack.c.l.bf16 %v8398
          %v8428 = vunpack.c.h.bf16 %v8398
          %v8429 = vunpack.c.l.bf16 %v8399
          %v8430 = vunpack.c.h.bf16 %v8399
          %v8431 = vunpack.c.l.bf16 %v8400
          %v8432 = vunpack.c.h.bf16 %v8400
          %v8433 = vlaneseq
          %v8434 = vshrl.u32 %v8433, 7
          %v8435 = vsub.s32 0, %v8434
          %v8436 = vrot.slane %v8384, %v8435
          %v8437 = vmul.f32 %v8401, %v8436
          %v8438 = vmul.f32 %v8402, %v8436
          %v8439 = vmul.f32 %v8403, %v8436
          %v8440 = vmul.f32 %v8404, %v8436
          %v8441 = vmul.f32 %v8405, %v8436
          %v8442 = vmul.f32 %v8406, %v8436
          %v8443 = vmul.f32 %v8407, %v8436
          %v8444 = vmul.f32 %v8408, %v8436
          %v8445 = vmul.f32 %v8409, %v8436
          %v8446 = vmul.f32 %v8410, %v8436
          %v8447 = vmul.f32 %v8411, %v8436
          %v8448 = vmul.f32 %v8412, %v8436
          %v8449 = vmul.f32 %v8413, %v8436
          %v8450 = vmul.f32 %v8414, %v8436
          %v8451 = vmul.f32 %v8415, %v8436
          %v8452 = vmul.f32 %v8416, %v8436
          %v8453 = vmul.f32 %v8417, %v8436
          %v8454 = vmul.f32 %v8418, %v8436
          %v8455 = vmul.f32 %v8419, %v8436
          %v8456 = vmul.f32 %v8420, %v8436
          %v8457 = vmul.f32 %v8421, %v8436
          %v8458 = vmul.f32 %v8422, %v8436
          %v8459 = vmul.f32 %v8423, %v8436
          %v8460 = vmul.f32 %v8424, %v8436
          %v8461 = vmul.f32 %v8425, %v8436
          %v8462 = vmul.f32 %v8426, %v8436
          %v8463 = vmul.f32 %v8427, %v8436
          %v8464 = vmul.f32 %v8428, %v8436
          %v8465 = vmul.f32 %v8429, %v8436
          %v8466 = vmul.f32 %v8430, %v8436
          %v8467 = vmul.f32 %v8431, %v8436
          %v8468 = vmul.f32 %v8432, %v8436
          %v8469 = vld [vmem:[%s8103] sm:$0xff]
          %v8470 = vld [vmem:[%s8103 + $0x8] sm:$0xff]
          %v8471 = vld [vmem:[%s8103 + $0x10] sm:$0xff]
          %v8472 = vld [vmem:[%s8103 + $0x18] sm:$0xff]
          %v8473 = vld [vmem:[%s8103 + $0x20] sm:$0xff]
          %v8474 = vld [vmem:[%s8103 + $0x28] sm:$0xff]
          %v8475 = vld [vmem:[%s8103 + $0x30] sm:$0xff]
          %v8476 = vld [vmem:[%s8103 + $0x38] sm:$0xff]
          %v8477 = vld [vmem:[%s8103 + $0x40] sm:$0xff]
          %v8478 = vld [vmem:[%s8103 + $0x48] sm:$0xff]
          %v8479 = vld [vmem:[%s8103 + $0x50] sm:$0xff]
          %v8480 = vld [vmem:[%s8103 + $0x58] sm:$0xff]
          %v8481 = vld [vmem:[%s8103 + $0x60] sm:$0xff]
          %v8482 = vld [vmem:[%s8103 + $0x68] sm:$0xff]
          %v8483 = vld [vmem:[%s8103 + $0x70] sm:$0xff]
          %v8484 = vld [vmem:[%s8103 + $0x78] sm:$0xff]
          %v8485 = vunpack.c.l.bf16 %v8469
          %v8486 = vunpack.c.h.bf16 %v8469
          %v8487 = vunpack.c.l.bf16 %v8470
          %v8488 = vunpack.c.h.bf16 %v8470
          %v8489 = vunpack.c.l.bf16 %v8471
          %v8490 = vunpack.c.h.bf16 %v8471
          %v8491 = vunpack.c.l.bf16 %v8472
          %v8492 = vunpack.c.h.bf16 %v8472
          %v8493 = vunpack.c.l.bf16 %v8473
          %v8494 = vunpack.c.h.bf16 %v8473
          %v8495 = vunpack.c.l.bf16 %v8474
          %v8496 = vunpack.c.h.bf16 %v8474
          %v8497 = vunpack.c.l.bf16 %v8475
          %v8498 = vunpack.c.h.bf16 %v8475
          %v8499 = vunpack.c.l.bf16 %v8476
          %v8500 = vunpack.c.h.bf16 %v8476
          %v8501 = vunpack.c.l.bf16 %v8477
          %v8502 = vunpack.c.h.bf16 %v8477
          %v8503 = vunpack.c.l.bf16 %v8478
          %v8504 = vunpack.c.h.bf16 %v8478
          %v8505 = vunpack.c.l.bf16 %v8479
          %v8506 = vunpack.c.h.bf16 %v8479
          %v8507 = vunpack.c.l.bf16 %v8480
          %v8508 = vunpack.c.h.bf16 %v8480
          %v8509 = vunpack.c.l.bf16 %v8481
          %v8510 = vunpack.c.h.bf16 %v8481
          %v8511 = vunpack.c.l.bf16 %v8482
          %v8512 = vunpack.c.h.bf16 %v8482
          %v8513 = vunpack.c.l.bf16 %v8483
          %v8514 = vunpack.c.h.bf16 %v8483
          %v8515 = vunpack.c.l.bf16 %v8484
          %v8516 = vunpack.c.h.bf16 %v8484
          %v8517 = vlaneseq
          %v8518 = vshrl.u32 %v8517, 7
          %v8519 = vsub.s32 1, %v8518
          %v8520 = vrot.slane %v8384, %v8519
          %v8521 = vmul.f32 %v8485, %v8520
          %v8522 = vmul.f32 %v8486, %v8520
          %v8523 = vmul.f32 %v8487, %v8520
          %v8524 = vmul.f32 %v8488, %v8520
          %v8525 = vmul.f32 %v8489, %v8520
          %v8526 = vmul.f32 %v8490, %v8520
          %v8527 = vmul.f32 %v8491, %v8520
          %v8528 = vmul.f32 %v8492, %v8520
          %v8529 = vmul.f32 %v8493, %v8520
          %v8530 = vmul.f32 %v8494, %v8520
          %v8531 = vmul.f32 %v8495, %v8520
          %v8532 = vmul.f32 %v8496, %v8520
          %v8533 = vmul.f32 %v8497, %v8520
          %v8534 = vmul.f32 %v8498, %v8520
          %v8535 = vmul.f32 %v8499, %v8520
          %v8536 = vmul.f32 %v8500, %v8520
          %v8537 = vmul.f32 %v8501, %v8520
          %v8538 = vmul.f32 %v8502, %v8520
          %v8539 = vmul.f32 %v8503, %v8520
          %v8540 = vmul.f32 %v8504, %v8520
          %v8541 = vmul.f32 %v8505, %v8520
          %v8542 = vmul.f32 %v8506, %v8520
          %v8543 = vmul.f32 %v8507, %v8520
          %v8544 = vmul.f32 %v8508, %v8520
          %v8545 = vmul.f32 %v8509, %v8520
          %v8546 = vmul.f32 %v8510, %v8520
          %v8547 = vmul.f32 %v8511, %v8520
          %v8548 = vmul.f32 %v8512, %v8520
          %v8549 = vmul.f32 %v8513, %v8520
          %v8550 = vmul.f32 %v8514, %v8520
          %v8551 = vmul.f32 %v8515, %v8520
          %v8552 = vmul.f32 %v8516, %v8520
          %v8553 = vadd.f32 %v8437, %v8521
          %v8554 = vadd.f32 %v8438, %v8522
          %v8555 = vadd.f32 %v8439, %v8523
          %v8556 = vadd.f32 %v8440, %v8524
          %v8557 = vadd.f32 %v8441, %v8525
          %v8558 = vadd.f32 %v8442, %v8526
          %v8559 = vadd.f32 %v8443, %v8527
          %v8560 = vadd.f32 %v8444, %v8528
          %v8561 = vadd.f32 %v8445, %v8529
          %v8562 = vadd.f32 %v8446, %v8530
          %v8563 = vadd.f32 %v8447, %v8531
          %v8564 = vadd.f32 %v8448, %v8532
          %v8565 = vadd.f32 %v8449, %v8533
          %v8566 = vadd.f32 %v8450, %v8534
          %v8567 = vadd.f32 %v8451, %v8535
          %v8568 = vadd.f32 %v8452, %v8536
          %v8569 = vadd.f32 %v8453, %v8537
          %v8570 = vadd.f32 %v8454, %v8538
          %v8571 = vadd.f32 %v8455, %v8539
          %v8572 = vadd.f32 %v8456, %v8540
          %v8573 = vadd.f32 %v8457, %v8541
          %v8574 = vadd.f32 %v8458, %v8542
          %v8575 = vadd.f32 %v8459, %v8543
          %v8576 = vadd.f32 %v8460, %v8544
          %v8577 = vadd.f32 %v8461, %v8545
          %v8578 = vadd.f32 %v8462, %v8546
          %v8579 = vadd.f32 %v8463, %v8547
          %v8580 = vadd.f32 %v8464, %v8548
          %v8581 = vadd.f32 %v8465, %v8549
          %v8582 = vadd.f32 %v8466, %v8550
          %v8583 = vadd.f32 %v8467, %v8551
          %v8584 = vadd.f32 %v8468, %v8552
          %8585 = vst.msk [vmem:[%s298] sm:$0xff] %vm6901, %v8553
          %8586 = vst.msk [vmem:[%s298 + $0x8] sm:$0xff] %vm6901, %v8554
          %8587 = vst.msk [vmem:[%s298 + $0x10] sm:$0xff] %vm6901, %v8555
          %8588 = vst.msk [vmem:[%s298 + $0x18] sm:$0xff] %vm6901, %v8556
          %8589 = vst.msk [vmem:[%s298 + $0x20] sm:$0xff] %vm6901, %v8557
          %8590 = vst.msk [vmem:[%s298 + $0x28] sm:$0xff] %vm6901, %v8558
          %8591 = vst.msk [vmem:[%s298 + $0x30] sm:$0xff] %vm6901, %v8559
          %8592 = vst.msk [vmem:[%s298 + $0x38] sm:$0xff] %vm6901, %v8560
          %8593 = vst.msk [vmem:[%s298 + $0x40] sm:$0xff] %vm6901, %v8561
          %8594 = vst.msk [vmem:[%s298 + $0x48] sm:$0xff] %vm6901, %v8562
          %8595 = vst.msk [vmem:[%s298 + $0x50] sm:$0xff] %vm6901, %v8563
          %8596 = vst.msk [vmem:[%s298 + $0x58] sm:$0xff] %vm6901, %v8564
          %8597 = vst.msk [vmem:[%s298 + $0x60] sm:$0xff] %vm6901, %v8565
          %8598 = vst.msk [vmem:[%s298 + $0x68] sm:$0xff] %vm6901, %v8566
          %8599 = vst.msk [vmem:[%s298 + $0x70] sm:$0xff] %vm6901, %v8567
          %8600 = vst.msk [vmem:[%s298 + $0x78] sm:$0xff] %vm6901, %v8568
          %8601 = vst.msk [vmem:[%s298 + $0x80] sm:$0xff] %vm6901, %v8569
          %8602 = vst.msk [vmem:[%s298 + $0x88] sm:$0xff] %vm6901, %v8570
          %8603 = vst.msk [vmem:[%s298 + $0x90] sm:$0xff] %vm6901, %v8571
          %8604 = vst.msk [vmem:[%s298 + $0x98] sm:$0xff] %vm6901, %v8572
          %8605 = vst.msk [vmem:[%s298 + $0xa0] sm:$0xff] %vm6901, %v8573
          %8606 = vst.msk [vmem:[%s298 + $0xa8] sm:$0xff] %vm6901, %v8574
          %8607 = vst.msk [vmem:[%s298 + $0xb0] sm:$0xff] %vm6901, %v8575
          %8608 = vst.msk [vmem:[%s298 + $0xb8] sm:$0xff] %vm6901, %v8576
          %8609 = vst.msk [vmem:[%s298 + $0xc0] sm:$0xff] %vm6901, %v8577
          %8610 = vst.msk [vmem:[%s298 + $0xc8] sm:$0xff] %vm6901, %v8578
          %8611 = vst.msk [vmem:[%s298 + $0xd0] sm:$0xff] %vm6901, %v8579
          %8612 = vst.msk [vmem:[%s298 + $0xd8] sm:$0xff] %vm6901, %v8580
          %8613 = vst.msk [vmem:[%s298 + $0xe0] sm:$0xff] %vm6901, %v8581
          %8614 = vst.msk [vmem:[%s298 + $0xe8] sm:$0xff] %vm6901, %v8582
          %8615 = vst.msk [vmem:[%s298 + $0xf0] sm:$0xff] %vm6901, %v8583
          %8616 = vst.msk [vmem:[%s298 + $0xf8] sm:$0xff] %vm6901, %v8584
        $region56: #{tpu_custom_call.1} parent=47 // pred_fallthru
          _
        %s8617 = sand.u32 %s198, 1
        %s8618 = scalar_lea.sflag [#allocation5], %s8617
        %s8619 = sand.u32 %s198, 1
        %s8620 = smul.addr %s8619, 256
        %s8621 = scalar_lea.vmem [#allocation4], %s8620
        // Predicated region
        $region57: #{tpu_custom_call.1} parent=47 // pred_check
          %p8622 = pneg %p208
        $region58: #{tpu_custom_call.1} parent=47 // pred_check_branch
          %8624 = sbr.rel (%p8622) target = $region60
        $region59: #{tpu_custom_call.1} parent=47 // pred_region
          %s8626 = ssub.s32 4096, 4096
          %8627 = vsyncadd %s8618, %s8626
          %s8628 = smul.addr %s25, 32
          %s8629 = smul.addr %s8628, 128
          %s8630 = scalar_lea.hbm %s7, %s8629
          %s8631 = sshll.u32 %s8621, 4
          %s8632 = int_to_ptr.vmem [resolvable:$true] %s8631
          %8637 = dma.vmem_to_hbm [thread:$0]  %s8632, 4096, %s8630, %s8618, 128, 128, 8
        $region60: #{tpu_custom_call.1} parent=47 // pred_fallthru
          _
      $region48: #{tpu_custom_call.1} parent=5 // pred_fallthru
        _
      %p8638 = scmp.le.s32.totalorder 2, %s16
      // Predicated region
      $region61: #{tpu_custom_call.1} parent=5 // pred_check
        %p8639 = pneg %p8638
      $region62: #{tpu_custom_call.1} parent=5 // pred_check_branch
        %8641 = sbr.rel (%p8639) target = $region64
      $region63: #{tpu_custom_call.1} parent=5 // pred_region
        %s8642 = ssub.s32 %s16, 2
        // Predicated region
        $region65: #{tpu_custom_call.1} parent=63 // pred_check
          %p8643 = pneg %p214
        $region66: #{tpu_custom_call.1} parent=63 // pred_check_branch
          %8645 = sbr.rel (%p8643) target = $region68
        $region67: #{tpu_custom_call.1} parent=63 // pred_region
          %s8646 = sand.u32 %s199, 1
          %s8647 = scalar_lea.sflag [#allocation5], %s8646
          %s8648 = sand.u32 %s199, 1
          %s8649 = smul.addr %s8648, 256
          %s8650 = scalar_lea.vmem [#allocation4], %s8649
          %8651 = dma.done %s8647, 4096
        $region68: #{tpu_custom_call.1} parent=63 // pred_fallthru
          _
      $region64: #{tpu_custom_call.1} parent=5 // pred_fallthru
        _
    $region6: #{tpu_custom_call.1} parent=1 // loop_footer
      %s20 = sadd.s32 1, %s16
    $region7: #{tpu_custom_call.1} parent=1 // loop_footer_branch
      %15 = sbr.rel target = $region3
    $region8: #{tpu_custom_call.1} parent=1 // loop_exit
      _
    %8652 = vsyncpa [#allocation5], 1
    %s8653 = scalar_lea.sflag [#allocation5], 1
    %8654 = vsyncpa %s8653, 1

</llo_original>
